<compile_context>
chip_gen: v7x
topology: tpu7x:2x2x1
jax: 0.10.0
libtpu: 0.0.40
codegen_flags: <defaults>
</compile_context>

<pallas_src>
import functools
import math

import jax
import jax.numpy as jnp
from jax import lax
from jax.experimental import pallas as pl
from jax.experimental.pallas import tpu as pltpu

_BN_EPS = 1e-5
_LANE = 128


def _convblock_kernel(p1_ref, w1_ref, w2_ref, g1_ref, b1_ref, g2_ref, b2_ref,
                      out_ref, *, N, H, W):
    """Full ConvBlock forward, VMEM-resident, lane-dense (channels padded to 128).

    p1_ref : (R, 9*Cin)   bf16  im2col patches of the padded input, R = N*H*W
    w1_ref : (9*Cin, Cp)  bf16  conv1 weights, Cout zero-padded to Cp = 128
    w2_ref : (9*Cp, Cp)   bf16  conv2 weights (both channel axes padded)
    g*/b*  : (1, Cp)      f32   BN gamma / beta (zero-padded)
    out_ref: (N*Hh*Wh, Cp) f32  pooled output (padding stripped in wrapper)
    """
    Cp = w1_ref.shape[-1]
    R = N * H * W
    Hh, Wh = H // 2, W // 2

    # ---- conv1: one fat-K matmul (K = 9*Cin), bf16 operands, f32 accumulate --
    acc1 = jnp.dot(p1_ref[...], w1_ref[...], preferred_element_type=jnp.float32)

    # ---- bn1 (training-mode batch stats over N*H*W, biased variance,
    #      numerically-stable two-pass) + ReLU, all f32 on the VPU ----
    m1 = jnp.mean(acc1, axis=0, keepdims=True)
    d1 = acc1 - m1
    v1 = jnp.mean(d1 * d1, axis=0, keepdims=True)
    y1 = jnp.maximum(d1 * lax.rsqrt(v1 + _BN_EPS) * g1_ref[...] + b1_ref[...],
                     0.0)

    # ---- conv2: build the zero-padded intermediate once as a value (no
    #      double-written scratch), im2col once (lane-dense, Cp on the lane
    #      axis), then one K = 9*Cp matmul ----
    y1b = y1.astype(jnp.bfloat16).reshape(N, H, W, Cp)
    zcol = jnp.zeros((N, H, 1, Cp), jnp.bfloat16)
    zrow = jnp.zeros((N, 1, W + 2, Cp), jnp.bfloat16)
    y1p = jnp.concatenate([zcol, y1b, zcol], axis=2)          # pad W
    y1p = jnp.concatenate([zrow, y1p, zrow], axis=1)          # pad H
    p2 = jnp.concatenate(
        [y1p[:, kh:kh + H, kw:kw + W, :].reshape(R, Cp)
         for kh in range(3) for kw in range(3)],
        axis=-1)                                              # (R, 9*Cp) bf16
    acc2 = jnp.dot(p2, w2_ref[...], preferred_element_type=jnp.float32)

    # ---- bn2 + ReLU ----
    m2 = jnp.mean(acc2, axis=0, keepdims=True)
    d2 = acc2 - m2
    v2 = jnp.mean(d2 * d2, axis=0, keepdims=True)
    y2 = jnp.maximum(d2 * lax.rsqrt(v2 + _BN_EPS) * g2_ref[...] + b2_ref[...],
                     0.0)

    # ---- 2x2 average pool on the VPU: pair-add along W, then along H ----
    t = y2.reshape(N * H * Wh, 2, Cp)
    t = t[:, 0, :] + t[:, 1, :]                               # (N*H*Wh, Cp)
    t = t.reshape(N, Hh, 2, Wh, Cp)
    t = (t[:, :, 0, :, :] + t[:, :, 1, :, :]) * 0.25          # (N, Hh, Wh, Cp)

    # lane-dense (last dim = 128) unmasked store
    out_ref[...] = t.reshape(N * Hh * Wh, Cp)


@functools.partial(jax.jit, static_argnames=("pool_size", "pool_type"))
def conv_block_forward(x_nchw, w1_oihw, w2_oihw, g1, b1, g2, b2,
                       pool_size=(2, 2), pool_type='avg'):
    """ConvBlock.forward(input, pool_size=(2,2), pool_type='avg') in Pallas."""
    if pool_type != 'avg' or tuple(pool_size) != (2, 2):
        # TODO(synk): only the default avg / (2,2) path is implemented here.
        raise NotImplementedError("only pool_type='avg', pool_size=(2,2)")

    N, Cin, H, W = x_nchw.shape
    Cout = w1_oihw.shape[0]
    assert H % 2 == 0 and W % 2 == 0, "avg_pool2d(2,2) path assumes even H, W"
    Hh, Wh = H // 2, W // 2
    R = N * H * W
    Cp = ((Cout + _LANE - 1) // _LANE) * _LANE    # channels padded to 128 lanes

    # ---- wrapper glue: NCHW -> NHWC, pad, im2col for conv1 (K = 9*Cin) ----
    x = jnp.transpose(x_nchw, (0, 2, 3, 1)).astype(jnp.float32)
    xpad = jnp.pad(x, ((0, 0), (1, 1), (1, 1), (0, 0)))
    patches1 = jnp.concatenate(
        [xpad[:, kh:kh + H, kw:kw + W, :] for kh in range(3) for kw in range(3)],
        axis=-1).reshape(R, 9 * Cin).astype(jnp.bfloat16)

    # ---- weights: OIHW -> (kh, kw, ci, co), zero-pad channels, flatten K ----
    w1 = jnp.transpose(w1_oihw, (2, 3, 1, 0)).reshape(9 * Cin, Cout)
    w1 = jnp.pad(w1, ((0, 0), (0, Cp - Cout))).astype(jnp.bfloat16)
    w2 = jnp.transpose(w2_oihw, (2, 3, 1, 0))                 # (3,3,Cout,Cout)
    w2 = jnp.pad(w2, ((0, 0), (0, 0), (0, Cp - Cout), (0, Cp - Cout)))
    w2 = w2.reshape(9 * Cp, Cp).astype(jnp.bfloat16)

    def _pad_vec(v):
        return jnp.pad(v.reshape(1, Cout).astype(jnp.float32),
                       ((0, 0), (0, Cp - Cout)))

    g1p, b1p, g2p, b2p = _pad_vec(g1), _pad_vec(b1), _pad_vec(g2), _pad_vec(b2)

    kernel = functools.partial(_convblock_kernel, N=N, H=H, W=W)
    out_flat = pl.pallas_call(
        kernel,
        out_shape=jax.ShapeDtypeStruct((N * Hh * Wh, Cp), jnp.float32),
        in_specs=[pl.BlockSpec(memory_space=pltpu.MemorySpace.VMEM)] * 7,
        out_specs=pl.BlockSpec(memory_space=pltpu.MemorySpace.VMEM),
        compiler_params=pltpu.CompilerParams(
            vmem_limit_bytes=32 * 1024 * 1024),
    )(patches1, w1, w2, g1p, b1p, g2p, b2p)

    out = out_flat[:, :Cout].reshape(N, Hh, Wh, Cout)
    return jnp.transpose(out, (0, 3, 1, 2))                   # back to NCHW


def _reference_forward(x_nchw, w1, w2, g1, b1, g2, b2):
    """Pure-JAX f32 reference of ConvBlock.forward (train-mode BN, avg 2x2)."""
    def conv(x, w):
        return lax.conv_general_dilated(
            x, w, window_strides=(1, 1), padding=((1, 1), (1, 1)),
            dimension_numbers=('NCHW', 'OIHW', 'NCHW'))

    def bn_relu(x, g, b):
        m = jnp.mean(x, axis=(0, 2, 3), keepdims=True)
        v = jnp.mean((x - m) ** 2, axis=(0, 2, 3), keepdims=True)
        y = (x - m) * lax.rsqrt(v + _BN_EPS) * g.reshape(1, -1, 1, 1) \
            + b.reshape(1, -1, 1, 1)
        return jnp.maximum(y, 0.0)

    y = bn_relu(conv(x_nchw, w1), g1, b1)
    y = bn_relu(conv(y, w2), g2, b2)
    N, C, H, W = y.shape
    return y.reshape(N, C, H // 2, 2, W // 2, 2).mean(axis=(3, 5))


if __name__ == "__main__":
    N, Cin, Cout, H, W = 2, 4, 8, 16, 16

    key = jax.random.PRNGKey(0)
    k1, k2, kx = jax.random.split(key, 3)

    # Deterministic He-uniform init, exactly as init_layer() (fan_in = ci*kh*kw).
    n1 = Cin * 3 * 3
    s1 = math.sqrt(2.0 / n1) * math.sqrt(3.0)
    w1 = jax.random.uniform(k1, (Cout, Cin, 3, 3), jnp.float32, -s1, s1)
    n2 = Cout * 3 * 3
    s2 = math.sqrt(2.0 / n2) * math.sqrt(3.0)
    w2 = jax.random.uniform(k2, (Cout, Cout, 3, 3), jnp.float32, -s2, s2)

    # init_bn(): weight = 1, bias = 0.
    g1 = jnp.ones((Cout,), jnp.float32)
    b1 = jnp.zeros((Cout,), jnp.float32)
    g2 = jnp.ones((Cout,), jnp.float32)
    b2 = jnp.zeros((Cout,), jnp.float32)

    x = jax.random.normal(kx, (N, Cin, H, W), jnp.float32)

    out = conv_block_forward(x, w1, w2, g1, b1, g2, b2)
    out = jax.block_until_ready(out)

    ref = _reference_forward(x, w1, w2, g1, b1, g2, b2)
    assert out.shape == (N, Cout, H // 2, W // 2), out.shape
    # Tolerance accounts for bf16 MXU operands (f32 reference); the f32-operand
    # version matches to ~1e-5.
    assert bool(jnp.allclose(out, ref, atol=2e-2, rtol=2e-2)), \
        "Pallas ConvBlock output mismatch vs. JAX reference"

    print("KERNEL_OK")
</pallas_src>

<mosaic_0001>
module attributes {stable_mosaic.version = 11 : i64} {
  func.func @_convblock_kernel(%arg0: memref<512x36xbf16, #tpu.memory_space<vmem>>, %arg1: memref<36x128xbf16, #tpu.memory_space<vmem>>, %arg2: memref<1152x128xbf16, #tpu.memory_space<vmem>>, %arg3: memref<1x128xf32, #tpu.memory_space<vmem>>, %arg4: memref<1x128xf32, #tpu.memory_space<vmem>>, %arg5: memref<1x128xf32, #tpu.memory_space<vmem>>, %arg6: memref<1x128xf32, #tpu.memory_space<vmem>>, %arg7: memref<128x128xf32, #tpu.memory_space<vmem>>) attributes {dimension_semantics = [], scalar_prefetch = 0 : i64, scratch_operands = 0 : i64, tpu.core_type = #tpu.core_type<tc>} {
    %c0 = arith.constant 0 : index
    %c0_0 = arith.constant 0 : index
    %0 = vector.load %arg0[%c0, %c0_0] : memref<512x36xbf16, #tpu.memory_space<vmem>>, vector<512x36xbf16>
    %c0_1 = arith.constant 0 : index
    %c0_2 = arith.constant 0 : index
    %1 = vector.load %arg1[%c0_1, %c0_2] : memref<36x128xbf16, #tpu.memory_space<vmem>>, vector<36x128xbf16>
    %cst = arith.constant dense<0.000000e+00> : vector<512x128xf32>
    %2 = tpu.matmul %0, %1, %cst {dimension_numbers = #tpu.dot_dimension_numbers<[1], [0], [0], [1], [0, 0, 1, 1], [], []>} : vector<512x36xbf16>, vector<36x128xbf16>, vector<512x128xf32> -> vector<512x128xf32>
    %cst_3 = arith.constant dense<0.000000e+00> : vector<128xf32>
    %3 = vector.multi_reduction <add>, %2, %cst_3 [0] : vector<512x128xf32> to vector<128xf32>
    %4 = vector.shape_cast %3 : vector<128xf32> to vector<1x128xf32>
    %cst_4 = arith.constant 5.120000e+02 : f32
    %5 = vector.broadcast %cst_4 : f32 to vector<1x128xf32>
    %6 = arith.divf %4, %5 : vector<1x128xf32>
    %7 = vector.broadcast %6 : vector<1x128xf32> to vector<512x128xf32>
    %8 = arith.subf %2, %7 : vector<512x128xf32>
    %9 = arith.mulf %8, %8 : vector<512x128xf32>
    %cst_5 = arith.constant dense<0.000000e+00> : vector<128xf32>
    %10 = vector.multi_reduction <add>, %9, %cst_5 [0] : vector<512x128xf32> to vector<128xf32>
    %11 = vector.shape_cast %10 : vector<128xf32> to vector<1x128xf32>
    %cst_6 = arith.constant 5.120000e+02 : f32
    %12 = vector.broadcast %cst_6 : f32 to vector<1x128xf32>
    %13 = arith.divf %11, %12 : vector<1x128xf32>
    %cst_7 = arith.constant 9.99999974E-6 : f32
    %14 = vector.broadcast %cst_7 : f32 to vector<1x128xf32>
    %15 = arith.addf %13, %14 : vector<1x128xf32>
    %16 = math.rsqrt %15 : vector<1x128xf32>
    %17 = vector.broadcast %16 : vector<1x128xf32> to vector<512x128xf32>
    %18 = arith.mulf %8, %17 : vector<512x128xf32>
    %c0_8 = arith.constant 0 : index
    %c0_9 = arith.constant 0 : index
    %19 = vector.load %arg3[%c0_8, %c0_9] : memref<1x128xf32, #tpu.memory_space<vmem>>, vector<1x128xf32>
    %20 = vector.broadcast %19 : vector<1x128xf32> to vector<512x128xf32>
    %21 = arith.mulf %18, %20 : vector<512x128xf32>
    %c0_10 = arith.constant 0 : index
    %c0_11 = arith.constant 0 : index
    %22 = vector.load %arg4[%c0_10, %c0_11] : memref<1x128xf32, #tpu.memory_space<vmem>>, vector<1x128xf32>
    %23 = vector.broadcast %22 : vector<1x128xf32> to vector<512x128xf32>
    %24 = arith.addf %21, %23 : vector<512x128xf32>
    %cst_12 = arith.constant 0.000000e+00 : f32
    %25 = vector.broadcast %cst_12 : f32 to vector<512x128xf32>
    %26 = arith.maximumf %24, %25 : vector<512x128xf32>
    %27 = arith.truncf %26 : vector<512x128xf32> to vector<512x128xbf16>
    %28 = vector.shape_cast %27 : vector<512x128xbf16> to vector<2x16x16x128xbf16>
    %cst_13 = arith.constant 0.000000e+00 : bf16
    %29 = vector.broadcast %cst_13 : bf16 to vector<2x16x1x128xbf16>
    %cst_14 = arith.constant 0.000000e+00 : bf16
    %30 = vector.broadcast %cst_14 : bf16 to vector<2x1x18x128xbf16>
    %31 = tpu.concatenate %29, %28, %29 in 2 : vector<2x16x1x128xbf16>, vector<2x16x16x128xbf16>, vector<2x16x1x128xbf16> -> vector<2x16x18x128xbf16>
    %32 = tpu.concatenate %30, %31, %30 in 1 : vector<2x1x18x128xbf16>, vector<2x16x18x128xbf16>, vector<2x1x18x128xbf16> -> vector<2x18x18x128xbf16>
    %33 = vector.extract_strided_slice %32 {offsets = [0, 0, 0, 0], sizes = [2, 16, 16, 128], strides = [1, 1, 1, 1]} : vector<2x18x18x128xbf16> to vector<2x16x16x128xbf16>
    %34 = vector.shape_cast %33 : vector<2x16x16x128xbf16> to vector<512x128xbf16>
    %35 = vector.extract_strided_slice %32 {offsets = [0, 0, 1, 0], sizes = [2, 16, 16, 128], strides = [1, 1, 1, 1]} : vector<2x18x18x128xbf16> to vector<2x16x16x128xbf16>
    %36 = vector.shape_cast %35 : vector<2x16x16x128xbf16> to vector<512x128xbf16>
    %37 = vector.extract_strided_slice %32 {offsets = [0, 0, 2, 0], sizes = [2, 16, 16, 128], strides = [1, 1, 1, 1]} : vector<2x18x18x128xbf16> to vector<2x16x16x128xbf16>
    %38 = vector.shape_cast %37 : vector<2x16x16x128xbf16> to vector<512x128xbf16>
    %39 = vector.extract_strided_slice %32 {offsets = [0, 1, 0, 0], sizes = [2, 16, 16, 128], strides = [1, 1, 1, 1]} : vector<2x18x18x128xbf16> to vector<2x16x16x128xbf16>
    %40 = vector.shape_cast %39 : vector<2x16x16x128xbf16> to vector<512x128xbf16>
    %41 = vector.extract_strided_slice %32 {offsets = [0, 1, 1, 0], sizes = [2, 16, 16, 128], strides = [1, 1, 1, 1]} : vector<2x18x18x128xbf16> to vector<2x16x16x128xbf16>
    %42 = vector.shape_cast %41 : vector<2x16x16x128xbf16> to vector<512x128xbf16>
    %43 = vector.extract_strided_slice %32 {offsets = [0, 1, 2, 0], sizes = [2, 16, 16, 128], strides = [1, 1, 1, 1]} : vector<2x18x18x128xbf16> to vector<2x16x16x128xbf16>
    %44 = vector.shape_cast %43 : vector<2x16x16x128xbf16> to vector<512x128xbf16>
    %45 = vector.extract_strided_slice %32 {offsets = [0, 2, 0, 0], sizes = [2, 16, 16, 128], strides = [1, 1, 1, 1]} : vector<2x18x18x128xbf16> to vector<2x16x16x128xbf16>
    %46 = vector.shape_cast %45 : vector<2x16x16x128xbf16> to vector<512x128xbf16>
    %47 = vector.extract_strided_slice %32 {offsets = [0, 2, 1, 0], sizes = [2, 16, 16, 128], strides = [1, 1, 1, 1]} : vector<2x18x18x128xbf16> to vector<2x16x16x128xbf16>
    %48 = vector.shape_cast %47 : vector<2x16x16x128xbf16> to vector<512x128xbf16>
    %49 = vector.extract_strided_slice %32 {offsets = [0, 2, 2, 0], sizes = [2, 16, 16, 128], strides = [1, 1, 1, 1]} : vector<2x18x18x128xbf16> to vector<2x16x16x128xbf16>
    %50 = vector.shape_cast %49 : vector<2x16x16x128xbf16> to vector<512x128xbf16>
    %51 = tpu.concatenate %34, %36, %38, %40, %42, %44, %46, %48, %50 in 1 : vector<512x128xbf16>, vector<512x128xbf16>, vector<512x128xbf16>, vector<512x128xbf16>, vector<512x128xbf16>, vector<512x128xbf16>, vector<512x128xbf16>, vector<512x128xbf16>, vector<512x128xbf16> -> vector<512x1152xbf16>
    %c0_15 = arith.constant 0 : index
    %c0_16 = arith.constant 0 : index
    %52 = vector.load %arg2[%c0_15, %c0_16] : memref<1152x128xbf16, #tpu.memory_space<vmem>>, vector<1152x128xbf16>
    %cst_17 = arith.constant dense<0.000000e+00> : vector<512x128xf32>
    %53 = tpu.matmul %51, %52, %cst_17 {dimension_numbers = #tpu.dot_dimension_numbers<[1], [0], [0], [1], [0, 0, 1, 1], [], []>} : vector<512x1152xbf16>, vector<1152x128xbf16>, vector<512x128xf32> -> vector<512x128xf32>
    %cst_18 = arith.constant dense<0.000000e+00> : vector<128xf32>
    %54 = vector.multi_reduction <add>, %53, %cst_18 [0] : vector<512x128xf32> to vector<128xf32>
    %55 = vector.shape_cast %54 : vector<128xf32> to vector<1x128xf32>
    %cst_19 = arith.constant 5.120000e+02 : f32
    %56 = vector.broadcast %cst_19 : f32 to vector<1x128xf32>
    %57 = arith.divf %55, %56 : vector<1x128xf32>
    %58 = vector.broadcast %57 : vector<1x128xf32> to vector<512x128xf32>
    %59 = arith.subf %53, %58 : vector<512x128xf32>
    %60 = arith.mulf %59, %59 : vector<512x128xf32>
    %cst_20 = arith.constant dense<0.000000e+00> : vector<128xf32>
    %61 = vector.multi_reduction <add>, %60, %cst_20 [0] : vector<512x128xf32> to vector<128xf32>
    %62 = vector.shape_cast %61 : vector<128xf32> to vector<1x128xf32>
    %cst_21 = arith.constant 5.120000e+02 : f32
    %63 = vector.broadcast %cst_21 : f32 to vector<1x128xf32>
    %64 = arith.divf %62, %63 : vector<1x128xf32>
    %cst_22 = arith.constant 9.99999974E-6 : f32
    %65 = vector.broadcast %cst_22 : f32 to vector<1x128xf32>
    %66 = arith.addf %64, %65 : vector<1x128xf32>
    %67 = math.rsqrt %66 : vector<1x128xf32>
    %68 = vector.broadcast %67 : vector<1x128xf32> to vector<512x128xf32>
    %69 = arith.mulf %59, %68 : vector<512x128xf32>
    %c0_23 = arith.constant 0 : index
    %c0_24 = arith.constant 0 : index
    %70 = vector.load %arg5[%c0_23, %c0_24] : memref<1x128xf32, #tpu.memory_space<vmem>>, vector<1x128xf32>
    %71 = vector.broadcast %70 : vector<1x128xf32> to vector<512x128xf32>
    %72 = arith.mulf %69, %71 : vector<512x128xf32>
    %c0_25 = arith.constant 0 : index
    %c0_26 = arith.constant 0 : index
    %73 = vector.load %arg6[%c0_25, %c0_26] : memref<1x128xf32, #tpu.memory_space<vmem>>, vector<1x128xf32>
    %74 = vector.broadcast %73 : vector<1x128xf32> to vector<512x128xf32>
    %75 = arith.addf %72, %74 : vector<512x128xf32>
    %cst_27 = arith.constant 0.000000e+00 : f32
    %76 = vector.broadcast %cst_27 : f32 to vector<512x128xf32>
    %77 = arith.maximumf %75, %76 : vector<512x128xf32>
    %78 = vector.shape_cast %77 : vector<512x128xf32> to vector<256x2x128xf32>
    %79 = vector.extract_strided_slice %78 {offsets = [0, 0, 0], sizes = [256, 1, 128], strides = [1, 1, 1]} : vector<256x2x128xf32> to vector<256x1x128xf32>
    %80 = vector.shape_cast %79 : vector<256x1x128xf32> to vector<256x128xf32>
    %81 = vector.extract_strided_slice %78 {offsets = [0, 1, 0], sizes = [256, 1, 128], strides = [1, 1, 1]} : vector<256x2x128xf32> to vector<256x1x128xf32>
    %82 = vector.shape_cast %81 : vector<256x1x128xf32> to vector<256x128xf32>
    %83 = arith.addf %80, %82 : vector<256x128xf32>
    %84 = vector.shape_cast %83 : vector<256x128xf32> to vector<2x8x2x8x128xf32>
    %85 = vector.extract_strided_slice %84 {offsets = [0, 0, 0, 0, 0], sizes = [2, 8, 1, 8, 128], strides = [1, 1, 1, 1, 1]} : vector<2x8x2x8x128xf32> to vector<2x8x1x8x128xf32>
    %86 = vector.shape_cast %85 : vector<2x8x1x8x128xf32> to vector<2x8x8x128xf32>
    %87 = vector.extract_strided_slice %84 {offsets = [0, 0, 1, 0, 0], sizes = [2, 8, 1, 8, 128], strides = [1, 1, 1, 1, 1]} : vector<2x8x2x8x128xf32> to vector<2x8x1x8x128xf32>
    %88 = vector.shape_cast %87 : vector<2x8x1x8x128xf32> to vector<2x8x8x128xf32>
    %89 = arith.addf %86, %88 : vector<2x8x8x128xf32>
    %cst_28 = arith.constant 2.500000e-01 : f32
    %90 = vector.broadcast %cst_28 : f32 to vector<2x8x8x128xf32>
    %91 = arith.mulf %89, %90 : vector<2x8x8x128xf32>
    %92 = vector.shape_cast %91 : vector<2x8x8x128xf32> to vector<128x128xf32>
    %c0_29 = arith.constant 0 : index
    %c0_30 = arith.constant 0 : index
    %93 = vector.load %arg7[%c0_29, %c0_30] : memref<128x128xf32, #tpu.memory_space<vmem>>, vector<128x128xf32>
    tpu.vector_store %arg7[%c0_29, %c0_30], %92 {strides = array<i32>} : memref<128x128xf32, #tpu.memory_space<vmem>>, vector<128x128xf32>,
    return
  }
}

</mosaic_0001>

<llo_original>
// kernel: conv_block_forward.1
$region0: #{conv_block_forward.1}
  #allocation0 [shape = 'u32[]', space=smem, size = 0x4, offset = 0x4, fixed_abs, tag = 'smem constant byte address 0x4 - core index']
  #allocation1 [shape = 'u32[144,128]{1,0:T(1,128)}', space=vmem, size = 0x12000, scoped, tag = 'internal scratch']
  %s0 = inlined_call_operand.vmem [shape: bf16[512,36], index: 0, kind: input, shape index: {}]
  %s1 = inlined_call_operand.vmem [shape: bf16[36,128], index: 1, kind: input, shape index: {}]
  %s2 = inlined_call_operand.vmem [shape: bf16[1152,128], index: 2, kind: input, shape index: {}]
  %s3 = inlined_call_operand.vmem [shape: f32[1,128], index: 3, kind: input, shape index: {}]
  %s4 = inlined_call_operand.vmem [shape: f32[1,128], index: 4, kind: input, shape index: {}]
  %s5 = inlined_call_operand.vmem [shape: f32[1,128], index: 5, kind: input, shape index: {}]
  %s6 = inlined_call_operand.vmem [shape: f32[1,128], index: 6, kind: input, shape index: {}]
  %s7 = inlined_call_operand.vmem [shape: f32[128,128], index: 7, kind: output, shape index: {}]
  %s8 = sld [smem:[#allocation0]]
  $region38: #{conv_block_forward.1} parent=0
    _
  %s10 = ssub.s32 1, %s8
  %s11 = scalar_select 0, %s10, %s8
  // Predicated region
  $region2: #{conv_block_forward.1} parent=0 // pred_check
    _
  $region3: #{conv_block_forward.1} parent=0 // pred_check_branch
    %13 = sbr.rel (0) target = $region5
  $region4: #{conv_block_forward.1} parent=0 // pred_region
    _
  $region5: #{conv_block_forward.1} parent=0 // pred_fallthru
    _
  // Predicated region
  $region6: #{conv_block_forward.1} parent=0 // pred_check
    _
  $region7: #{conv_block_forward.1} parent=0 // pred_check_branch
    %15 = sbr.rel (0) target = $region9
  $region8: #{conv_block_forward.1} parent=0 // pred_region
    _
  $region9: #{conv_block_forward.1} parent=0 // pred_fallthru
    _
  // Predicated region
  $region10: #{conv_block_forward.1} parent=0 // pred_check
    _
  $region11: #{conv_block_forward.1} parent=0 // pred_check_branch
    %17 = sbr.rel (0) target = $region13
  $region12: #{conv_block_forward.1} parent=0 // pred_region
    _
  $region13: #{conv_block_forward.1} parent=0 // pred_fallthru
    _
  // Predicated region
  $region14: #{conv_block_forward.1} parent=0 // pred_check
    _
  $region15: #{conv_block_forward.1} parent=0 // pred_check_branch
    %19 = sbr.rel (0) target = $region17
  $region16: #{conv_block_forward.1} parent=0 // pred_region
    _
  $region17: #{conv_block_forward.1} parent=0 // pred_fallthru
    _
  // Predicated region
  $region18: #{conv_block_forward.1} parent=0 // pred_check
    _
  $region19: #{conv_block_forward.1} parent=0 // pred_check_branch
    %21 = sbr.rel (0) target = $region21
  $region20: #{conv_block_forward.1} parent=0 // pred_region
    _
  $region21: #{conv_block_forward.1} parent=0 // pred_fallthru
    _
  // Predicated region
  $region22: #{conv_block_forward.1} parent=0 // pred_check
    _
  $region23: #{conv_block_forward.1} parent=0 // pred_check_branch
    %23 = sbr.rel (0) target = $region25
  $region24: #{conv_block_forward.1} parent=0 // pred_region
    _
  $region25: #{conv_block_forward.1} parent=0 // pred_fallthru
    _
  // Predicated region
  $region26: #{conv_block_forward.1} parent=0 // pred_check
    _
  $region27: #{conv_block_forward.1} parent=0 // pred_check_branch
    %25 = sbr.rel (0) target = $region29
  $region28: #{conv_block_forward.1} parent=0 // pred_region
    _
  $region29: #{conv_block_forward.1} parent=0 // pred_fallthru
    _
  %v27 = vld [vmem:[%s0] sm:$0xf]
  %v28 = vld [vmem:[%s0 + $0x4] sm:$0xf]
  %v29 = vld [vmem:[%s0 + $0x8] sm:$0xf]
  %v30 = vld [vmem:[%s0 + $0xc] sm:$0xf]
  %v31 = vld [vmem:[%s0 + $0x10] sm:$0xf]
  %v32 = vld [vmem:[%s0 + $0x14] sm:$0xf]
  %v33 = vld [vmem:[%s0 + $0x18] sm:$0xf]
  %v34 = vld [vmem:[%s0 + $0x1c] sm:$0xf]
  %v35 = vld [vmem:[%s0 + $0x20] sm:$0xf]
  %v36 = vld [vmem:[%s0 + $0x24] sm:$0xf]
  %v37 = vld [vmem:[%s0 + $0x28] sm:$0xf]
  %v38 = vld [vmem:[%s0 + $0x2c] sm:$0xf]
  %v39 = vld [vmem:[%s0 + $0x30] sm:$0xf]
  %v40 = vld [vmem:[%s0 + $0x34] sm:$0xf]
  %v41 = vld [vmem:[%s0 + $0x38] sm:$0xf]
  %v42 = vld [vmem:[%s0 + $0x3c] sm:$0xf]
  %v43 = vld [vmem:[%s0 + $0x40] sm:$0xf]
  %v44 = vld [vmem:[%s0 + $0x44] sm:$0xf]
  %v45 = vld [vmem:[%s0 + $0x48] sm:$0xf]
  %v46 = vld [vmem:[%s0 + $0x4c] sm:$0xf]
  %v47 = vld [vmem:[%s0 + $0x50] sm:$0xf]
  %v48 = vld [vmem:[%s0 + $0x54] sm:$0xf]
  %v49 = vld [vmem:[%s0 + $0x58] sm:$0xf]
  %v50 = vld [vmem:[%s0 + $0x5c] sm:$0xf]
  %v51 = vld [vmem:[%s0 + $0x60] sm:$0xf]
  %v52 = vld [vmem:[%s0 + $0x64] sm:$0xf]
  %v53 = vld [vmem:[%s0 + $0x68] sm:$0xf]
  %v54 = vld [vmem:[%s0 + $0x6c] sm:$0xf]
  %v55 = vld [vmem:[%s0 + $0x70] sm:$0xf]
  %v56 = vld [vmem:[%s0 + $0x74] sm:$0xf]
  %v57 = vld [vmem:[%s0 + $0x78] sm:$0xf]
  %v58 = vld [vmem:[%s0 + $0x7c] sm:$0xf]
  %v59 = vld [vmem:[%s0 + $0x80] sm:$0xf]
  %v60 = vld [vmem:[%s0 + $0x84] sm:$0xf]
  %v61 = vld [vmem:[%s0 + $0x88] sm:$0xf]
  %v62 = vld [vmem:[%s0 + $0x8c] sm:$0xf]
  %v63 = vld [vmem:[%s0 + $0x90] sm:$0xf]
  %v64 = vld [vmem:[%s0 + $0x94] sm:$0xf]
  %v65 = vld [vmem:[%s0 + $0x98] sm:$0xf]
  %v66 = vld [vmem:[%s0 + $0x9c] sm:$0xf]
  %v67 = vld [vmem:[%s0 + $0xa0] sm:$0xf]
  %v68 = vld [vmem:[%s0 + $0xa4] sm:$0xf]
  %v69 = vld [vmem:[%s0 + $0xa8] sm:$0xf]
  %v70 = vld [vmem:[%s0 + $0xac] sm:$0xf]
  %v71 = vld [vmem:[%s0 + $0xb0] sm:$0xf]
  %v72 = vld [vmem:[%s0 + $0xb4] sm:$0xf]
  %v73 = vld [vmem:[%s0 + $0xb8] sm:$0xf]
  %v74 = vld [vmem:[%s0 + $0xbc] sm:$0xf]
  %v75 = vld [vmem:[%s0 + $0xc0] sm:$0xf]
  %v76 = vld [vmem:[%s0 + $0xc4] sm:$0xf]
  %v77 = vld [vmem:[%s0 + $0xc8] sm:$0xf]
  %v78 = vld [vmem:[%s0 + $0xcc] sm:$0xf]
  %v79 = vld [vmem:[%s0 + $0xd0] sm:$0xf]
  %v80 = vld [vmem:[%s0 + $0xd4] sm:$0xf]
  %v81 = vld [vmem:[%s0 + $0xd8] sm:$0xf]
  %v82 = vld [vmem:[%s0 + $0xdc] sm:$0xf]
  %v83 = vld [vmem:[%s0 + $0xe0] sm:$0xf]
  %v84 = vld [vmem:[%s0 + $0xe4] sm:$0xf]
  %v85 = vld [vmem:[%s0 + $0xe8] sm:$0xf]
  %v86 = vld [vmem:[%s0 + $0xec] sm:$0xf]
  %v87 = vld [vmem:[%s0 + $0xf0] sm:$0xf]
  %v88 = vld [vmem:[%s0 + $0xf4] sm:$0xf]
  %v89 = vld [vmem:[%s0 + $0xf8] sm:$0xf]
  %v90 = vld [vmem:[%s0 + $0xfc] sm:$0xf]
  %v91 = vld [vmem:[%s1] sm:$0xf]
  %v92 = vld [vmem:[%s1 + $0x4] sm:$0xf]
  %v93 = vld [vmem:[%s1 + $0x8] sm:$0xf]
  %v94 = vld [vmem:[%s1 + $0xc] sm:$0xf]
  %v95 = vld [vmem:[%s1 + $0x10] sm:$0x3]
  %v160 = vunpack.c.l.b16 %v27
  %v161 = vunpack.c.l.b16 %v28
  %v162 = vunpack.c.l.b16 %v29
  %v163 = vunpack.c.l.b16 %v30
  %v164 = vunpack.c.l.b16 %v31
  %v165 = vunpack.c.l.b16 %v32
  %v166 = vunpack.c.l.b16 %v33
  %v167 = vunpack.c.l.b16 %v34
  %v168 = vunpack.c.l.b16 %v35
  %v169 = vunpack.c.l.b16 %v36
  %v170 = vunpack.c.l.b16 %v37
  %v171 = vunpack.c.l.b16 %v38
  %v172 = vunpack.c.l.b16 %v39
  %v173 = vunpack.c.l.b16 %v40
  %v174 = vunpack.c.l.b16 %v41
  %v175 = vunpack.c.l.b16 %v42
  %v176 = vunpack.c.l.b16 %v43
  %v177 = vunpack.c.l.b16 %v44
  %v178 = vunpack.c.l.b16 %v45
  %v179 = vunpack.c.l.b16 %v46
  %v180 = vunpack.c.l.b16 %v47
  %v181 = vunpack.c.l.b16 %v48
  %v182 = vunpack.c.l.b16 %v49
  %v183 = vunpack.c.l.b16 %v50
  %v184 = vunpack.c.l.b16 %v51
  %v185 = vunpack.c.l.b16 %v52
  %v186 = vunpack.c.l.b16 %v53
  %v187 = vunpack.c.l.b16 %v54
  %v188 = vunpack.c.l.b16 %v55
  %v189 = vunpack.c.l.b16 %v56
  %v190 = vunpack.c.l.b16 %v57
  %v191 = vunpack.c.l.b16 %v58
  %v192 = vunpack.c.l.b16 %v59
  %v193 = vunpack.c.l.b16 %v60
  %v194 = vunpack.c.l.b16 %v61
  %v195 = vunpack.c.l.b16 %v62
  %v196 = vunpack.c.l.b16 %v63
  %v197 = vunpack.c.l.b16 %v64
  %v198 = vunpack.c.l.b16 %v65
  %v199 = vunpack.c.l.b16 %v66
  %v200 = vunpack.c.l.b16 %v67
  %v201 = vunpack.c.l.b16 %v68
  %v202 = vunpack.c.l.b16 %v69
  %v203 = vunpack.c.l.b16 %v70
  %v204 = vunpack.c.l.b16 %v71
  %v205 = vunpack.c.l.b16 %v72
  %v206 = vunpack.c.l.b16 %v73
  %v207 = vunpack.c.l.b16 %v74
  %v208 = vunpack.c.l.b16 %v75
  %v209 = vunpack.c.l.b16 %v76
  %v210 = vunpack.c.l.b16 %v77
  %v211 = vunpack.c.l.b16 %v78
  %v212 = vunpack.c.l.b16 %v79
  %v213 = vunpack.c.l.b16 %v80
  %v214 = vunpack.c.l.b16 %v81
  %v215 = vunpack.c.l.b16 %v82
  %v216 = vunpack.c.l.b16 %v83
  %v217 = vunpack.c.l.b16 %v84
  %v218 = vunpack.c.l.b16 %v85
  %v219 = vunpack.c.l.b16 %v86
  %v220 = vunpack.c.l.b16 %v87
  %v221 = vunpack.c.l.b16 %v88
  %v222 = vunpack.c.l.b16 %v89
  %v223 = vunpack.c.l.b16 %v90
  %v224 = vpack.c.b16 %v161, %v160
  %v225 = vpack.c.b16 %v163, %v162
  %v226 = vpack.c.b16 %v165, %v164
  %v227 = vpack.c.b16 %v167, %v166
  %v228 = vpack.c.b16 %v169, %v168
  %v229 = vpack.c.b16 %v171, %v170
  %v230 = vpack.c.b16 %v173, %v172
  %v231 = vpack.c.b16 %v175, %v174
  %v232 = vpack.c.b16 %v177, %v176
  %v233 = vpack.c.b16 %v179, %v178
  %v234 = vpack.c.b16 %v181, %v180
  %v235 = vpack.c.b16 %v183, %v182
  %v236 = vpack.c.b16 %v185, %v184
  %v237 = vpack.c.b16 %v187, %v186
  %v238 = vpack.c.b16 %v189, %v188
  %v239 = vpack.c.b16 %v191, %v190
  %v240 = vpack.c.b16 %v193, %v192
  %v241 = vpack.c.b16 %v195, %v194
  %v242 = vpack.c.b16 %v197, %v196
  %v243 = vpack.c.b16 %v199, %v198
  %v244 = vpack.c.b16 %v201, %v200
  %v245 = vpack.c.b16 %v203, %v202
  %v246 = vpack.c.b16 %v205, %v204
  %v247 = vpack.c.b16 %v207, %v206
  %v248 = vpack.c.b16 %v209, %v208
  %v249 = vpack.c.b16 %v211, %v210
  %v250 = vpack.c.b16 %v213, %v212
  %v251 = vpack.c.b16 %v215, %v214
  %v252 = vpack.c.b16 %v217, %v216
  %v253 = vpack.c.b16 %v219, %v218
  %v254 = vpack.c.b16 %v221, %v220
  %v255 = vpack.c.b16 %v223, %v222
  %v261 = vunpack.c.l.b16 %v91
  %v262 = vunpack.c.l.b16 %v92
  %v263 = vunpack.c.l.b16 %v93
  %v264 = vunpack.c.l.b16 %v94
  %v265 = vunpack.c.l.b16 %v95
  %v266 = vpack.c.b16 %v262, %v261
  %v267 = vpack.c.b16 %v264, %v263
  %v268 = vpack.c.b16 %v265, %v265
  %vm271 = vcmask 293888
  %v273 = vsel %vm271, %v224, 0
  %v276 = vsel %vm271, %v225, 0
  %v279 = vsel %vm271, %v226, 0
  %v282 = vsel %vm271, %v227, 0
  %v285 = vsel %vm271, %v228, 0
  %v288 = vsel %vm271, %v229, 0
  %v291 = vsel %vm271, %v230, 0
  %v294 = vsel %vm271, %v231, 0
  %v297 = vsel %vm271, %v232, 0
  %v300 = vsel %vm271, %v233, 0
  %v303 = vsel %vm271, %v234, 0
  %v306 = vsel %vm271, %v235, 0
  %v309 = vsel %vm271, %v236, 0
  %v312 = vsel %vm271, %v237, 0
  %v315 = vsel %vm271, %v238, 0
  %v318 = vsel %vm271, %v239, 0
  %v321 = vsel %vm271, %v240, 0
  %v324 = vsel %vm271, %v241, 0
  %v327 = vsel %vm271, %v242, 0
  %v330 = vsel %vm271, %v243, 0
  %v333 = vsel %vm271, %v244, 0
  %v336 = vsel %vm271, %v245, 0
  %v339 = vsel %vm271, %v246, 0
  %v342 = vsel %vm271, %v247, 0
  %v345 = vsel %vm271, %v248, 0
  %v348 = vsel %vm271, %v249, 0
  %v351 = vsel %vm271, %v250, 0
  %v354 = vsel %vm271, %v251, 0
  %v357 = vsel %vm271, %v252, 0
  %v360 = vsel %vm271, %v253, 0
  %v363 = vsel %vm271, %v254, 0
  %v366 = vsel %vm271, %v255, 0
  %vm368 = vcmask 1041408
  %v370 = vsel %vm368, %v268, 0
  %372 = vmatprep.subr.bf16.mxu0 0
  %373 = vmatpush1.bf16.msra.mxu0 %v266
  %374 = vmatprep.subr.bf16.mxu0 0
  %375 = vmatpush1.bf16.msra.mxu0 %v267
  %376 = vmatprep.subr.bf16.mxu0 0
  %377 = vmatpush1.bf16.msra.mxu0 %v370
  %378 = vmatprep.subr.bf16.mxu0 0
  %379 = vmatpush1.bf16.msra.mxu0 0
  %380 = vmatprep.subr.bf16.mxu0 0
  %381 = vmatpush1.bf16.msra.mxu0 0
  %382 = vmatprep.subr.bf16.mxu0 0
  %383 = vmatpush1.bf16.msra.mxu0 0
  %384 = vmatprep.subr.bf16.mxu0 0
  %385 = vmatpush1.bf16.msra.mxu0 0
  %386 = vmatprep.subr.bf16.mxu0 0
  %387 = vmatpush1.bf16.msra.mxu0 0
  %388 = vmatprep.subr.bf16.mxu0 0
  %389 = vmatpush1.bf16.msra.mxu0 0
  %390 = vmatprep.subr.bf16.mxu0 0
  %391 = vmatpush1.bf16.msra.mxu0 0
  %392 = vmatprep.subr.bf16.mxu0 0
  %393 = vmatpush1.bf16.msra.mxu0 0
  %394 = vmatprep.subr.bf16.mxu0 0
  %395 = vmatpush1.bf16.msra.mxu0 0
  %396 = vmatprep.subr.bf16.mxu0 0
  %397 = vmatpush1.bf16.msra.mxu0 0
  %398 = vmatprep.subr.bf16.mxu0 0
  %399 = vmatpush1.bf16.msra.mxu0 0
  %400 = vmatprep.subr.bf16.mxu0 0
  %401 = vmatpush1.bf16.msra.mxu0 0
  %402 = vmatprep.subr.bf16.mxu0 0
  %403 = vmatpush1.bf16.msra.mxu0 0
  %404 = vmatprep.mubr.bf16.mxu0 0
  %405 = vmatmul.mubr.bf16.gmra.mrb[0].mxu0 %v273
  %v406 = vpop.f32.mrb[0].mxu0
  %v407 = vadd.f32 0.0, %v406
  %v408 = vpop.f32.mrb[0].mxu0
  %v409 = vpop.f32.mrb[0].mxu0
  %v410 = vadd.f32 0.0, %v409
  %v411 = vpop.f32.mrb[0].mxu0
  %412 = vmatprep.mubr.bf16.mxu0 0
  %413 = vmatmul.mubr.bf16.gmra.mrb[0].mxu0 %v276
  %v414 = vpop.f32.mrb[0].mxu0
  %v415 = vadd.f32 0.0, %v414
  %v416 = vpop.f32.mrb[0].mxu0
  %v417 = vpop.f32.mrb[0].mxu0
  %v418 = vadd.f32 0.0, %v417
  %v419 = vpop.f32.mrb[0].mxu0
  %420 = vmatprep.mubr.bf16.mxu0 0
  %421 = vmatmul.mubr.bf16.gmra.mrb[0].mxu0 %v279
  %v422 = vpop.f32.mrb[0].mxu0
  %v423 = vadd.f32 0.0, %v422
  %v424 = vpop.f32.mrb[0].mxu0
  %v425 = vpop.f32.mrb[0].mxu0
  %v426 = vadd.f32 0.0, %v425
  %v427 = vpop.f32.mrb[0].mxu0
  %428 = vmatprep.mubr.bf16.mxu0 0
  %429 = vmatmul.mubr.bf16.gmra.mrb[0].mxu0 %v282
  %v430 = vpop.f32.mrb[0].mxu0
  %v431 = vadd.f32 0.0, %v430
  %v432 = vpop.f32.mrb[0].mxu0
  %v433 = vpop.f32.mrb[0].mxu0
  %v434 = vadd.f32 0.0, %v433
  %v435 = vpop.f32.mrb[0].mxu0
  %436 = vmatprep.mubr.bf16.mxu0 0
  %437 = vmatmul.mubr.bf16.gmra.mrb[0].mxu0 %v285
  %v438 = vpop.f32.mrb[0].mxu0
  %v439 = vadd.f32 0.0, %v438
  %v440 = vpop.f32.mrb[0].mxu0
  %v441 = vpop.f32.mrb[0].mxu0
  %v442 = vadd.f32 0.0, %v441
  %v443 = vpop.f32.mrb[0].mxu0
  %444 = vmatprep.mubr.bf16.mxu0 0
  %445 = vmatmul.mubr.bf16.gmra.mrb[0].mxu0 %v288
  %v446 = vpop.f32.mrb[0].mxu0
  %v447 = vadd.f32 0.0, %v446
  %v448 = vpop.f32.mrb[0].mxu0
  %v449 = vpop.f32.mrb[0].mxu0
  %v450 = vadd.f32 0.0, %v449
  %v451 = vpop.f32.mrb[0].mxu0
  %452 = vmatprep.mubr.bf16.mxu0 0
  %453 = vmatmul.mubr.bf16.gmra.mrb[0].mxu0 %v291
  %v454 = vpop.f32.mrb[0].mxu0
  %v455 = vadd.f32 0.0, %v454
  %v456 = vpop.f32.mrb[0].mxu0
  %v457 = vpop.f32.mrb[0].mxu0
  %v458 = vadd.f32 0.0, %v457
  %v459 = vpop.f32.mrb[0].mxu0
  %460 = vmatprep.mubr.bf16.mxu0 0
  %461 = vmatmul.mubr.bf16.gmra.mrb[0].mxu0 %v294
  %v462 = vpop.f32.mrb[0].mxu0
  %v463 = vadd.f32 0.0, %v462
  %v464 = vpop.f32.mrb[0].mxu0
  %v465 = vpop.f32.mrb[0].mxu0
  %v466 = vadd.f32 0.0, %v465
  %v467 = vpop.f32.mrb[0].mxu0
  %468 = vmatprep.mubr.bf16.mxu0 0
  %469 = vmatmul.mubr.bf16.gmra.mrb[0].mxu0 %v297
  %v470 = vpop.f32.mrb[0].mxu0
  %v471 = vadd.f32 0.0, %v470
  %v472 = vpop.f32.mrb[0].mxu0
  %v473 = vpop.f32.mrb[0].mxu0
  %v474 = vadd.f32 0.0, %v473
  %v475 = vpop.f32.mrb[0].mxu0
  %476 = vmatprep.mubr.bf16.mxu0 0
  %477 = vmatmul.mubr.bf16.gmra.mrb[0].mxu0 %v300
  %v478 = vpop.f32.mrb[0].mxu0
  %v479 = vadd.f32 0.0, %v478
  %v480 = vpop.f32.mrb[0].mxu0
  %v481 = vpop.f32.mrb[0].mxu0
  %v482 = vadd.f32 0.0, %v481
  %v483 = vpop.f32.mrb[0].mxu0
  %484 = vmatprep.mubr.bf16.mxu0 0
  %485 = vmatmul.mubr.bf16.gmra.mrb[0].mxu0 %v303
  %v486 = vpop.f32.mrb[0].mxu0
  %v487 = vadd.f32 0.0, %v486
  %v488 = vpop.f32.mrb[0].mxu0
  %v489 = vpop.f32.mrb[0].mxu0
  %v490 = vadd.f32 0.0, %v489
  %v491 = vpop.f32.mrb[0].mxu0
  %492 = vmatprep.mubr.bf16.mxu0 0
  %493 = vmatmul.mubr.bf16.gmra.mrb[0].mxu0 %v306
  %v494 = vpop.f32.mrb[0].mxu0
  %v495 = vadd.f32 0.0, %v494
  %v496 = vpop.f32.mrb[0].mxu0
  %v497 = vpop.f32.mrb[0].mxu0
  %v498 = vadd.f32 0.0, %v497
  %v499 = vpop.f32.mrb[0].mxu0
  %500 = vmatprep.mubr.bf16.mxu0 0
  %501 = vmatmul.mubr.bf16.gmra.mrb[0].mxu0 %v309
  %v502 = vpop.f32.mrb[0].mxu0
  %v503 = vadd.f32 0.0, %v502
  %v504 = vpop.f32.mrb[0].mxu0
  %v505 = vpop.f32.mrb[0].mxu0
  %v506 = vadd.f32 0.0, %v505
  %v507 = vpop.f32.mrb[0].mxu0
  %508 = vmatprep.mubr.bf16.mxu0 0
  %509 = vmatmul.mubr.bf16.gmra.mrb[0].mxu0 %v312
  %v510 = vpop.f32.mrb[0].mxu0
  %v511 = vadd.f32 0.0, %v510
  %v512 = vpop.f32.mrb[0].mxu0
  %v513 = vpop.f32.mrb[0].mxu0
  %v514 = vadd.f32 0.0, %v513
  %v515 = vpop.f32.mrb[0].mxu0
  %516 = vmatprep.mubr.bf16.mxu0 0
  %517 = vmatmul.mubr.bf16.gmra.mrb[0].mxu0 %v315
  %v518 = vpop.f32.mrb[0].mxu0
  %v519 = vadd.f32 0.0, %v518
  %v520 = vpop.f32.mrb[0].mxu0
  %v521 = vpop.f32.mrb[0].mxu0
  %v522 = vadd.f32 0.0, %v521
  %v523 = vpop.f32.mrb[0].mxu0
  %524 = vmatprep.mubr.bf16.mxu0 0
  %525 = vmatmul.mubr.bf16.gmra.mrb[0].mxu0 %v318
  %v526 = vpop.f32.mrb[0].mxu0
  %v527 = vadd.f32 0.0, %v526
  %v528 = vpop.f32.mrb[0].mxu0
  %v529 = vpop.f32.mrb[0].mxu0
  %v530 = vadd.f32 0.0, %v529
  %v531 = vpop.f32.mrb[0].mxu0
  %532 = vmatprep.mubr.bf16.mxu0 0
  %533 = vmatmul.mubr.bf16.gmra.mrb[0].mxu0 %v321
  %v534 = vpop.f32.mrb[0].mxu0
  %v535 = vadd.f32 0.0, %v534
  %v536 = vpop.f32.mrb[0].mxu0
  %v537 = vpop.f32.mrb[0].mxu0
  %v538 = vadd.f32 0.0, %v537
  %v539 = vpop.f32.mrb[0].mxu0
  %540 = vmatprep.mubr.bf16.mxu0 0
  %541 = vmatmul.mubr.bf16.gmra.mrb[0].mxu0 %v324
  %v542 = vpop.f32.mrb[0].mxu0
  %v543 = vadd.f32 0.0, %v542
  %v544 = vpop.f32.mrb[0].mxu0
  %v545 = vpop.f32.mrb[0].mxu0
  %v546 = vadd.f32 0.0, %v545
  %v547 = vpop.f32.mrb[0].mxu0
  %548 = vmatprep.mubr.bf16.mxu0 0
  %549 = vmatmul.mubr.bf16.gmra.mrb[0].mxu0 %v327
  %v550 = vpop.f32.mrb[0].mxu0
  %v551 = vadd.f32 0.0, %v550
  %v552 = vpop.f32.mrb[0].mxu0
  %v553 = vpop.f32.mrb[0].mxu0
  %v554 = vadd.f32 0.0, %v553
  %v555 = vpop.f32.mrb[0].mxu0
  %556 = vmatprep.mubr.bf16.mxu0 0
  %557 = vmatmul.mubr.bf16.gmra.mrb[0].mxu0 %v330
  %v558 = vpop.f32.mrb[0].mxu0
  %v559 = vadd.f32 0.0, %v558
  %v560 = vpop.f32.mrb[0].mxu0
  %v561 = vpop.f32.mrb[0].mxu0
  %v562 = vadd.f32 0.0, %v561
  %v563 = vpop.f32.mrb[0].mxu0
  %564 = vmatprep.mubr.bf16.mxu0 0
  %565 = vmatmul.mubr.bf16.gmra.mrb[0].mxu0 %v333
  %v566 = vpop.f32.mrb[0].mxu0
  %v567 = vadd.f32 0.0, %v566
  %v568 = vpop.f32.mrb[0].mxu0
  %v569 = vpop.f32.mrb[0].mxu0
  %v570 = vadd.f32 0.0, %v569
  %v571 = vpop.f32.mrb[0].mxu0
  %572 = vmatprep.mubr.bf16.mxu0 0
  %573 = vmatmul.mubr.bf16.gmra.mrb[0].mxu0 %v336
  %v574 = vpop.f32.mrb[0].mxu0
  %v575 = vadd.f32 0.0, %v574
  %v576 = vpop.f32.mrb[0].mxu0
  %v577 = vpop.f32.mrb[0].mxu0
  %v578 = vadd.f32 0.0, %v577
  %v579 = vpop.f32.mrb[0].mxu0
  %580 = vmatprep.mubr.bf16.mxu0 0
  %581 = vmatmul.mubr.bf16.gmra.mrb[0].mxu0 %v339
  %v582 = vpop.f32.mrb[0].mxu0
  %v583 = vadd.f32 0.0, %v582
  %v584 = vpop.f32.mrb[0].mxu0
  %v585 = vpop.f32.mrb[0].mxu0
  %v586 = vadd.f32 0.0, %v585
  %v587 = vpop.f32.mrb[0].mxu0
  %588 = vmatprep.mubr.bf16.mxu0 0
  %589 = vmatmul.mubr.bf16.gmra.mrb[0].mxu0 %v342
  %v590 = vpop.f32.mrb[0].mxu0
  %v591 = vadd.f32 0.0, %v590
  %v592 = vpop.f32.mrb[0].mxu0
  %v593 = vpop.f32.mrb[0].mxu0
  %v594 = vadd.f32 0.0, %v593
  %v595 = vpop.f32.mrb[0].mxu0
  %596 = vmatprep.mubr.bf16.mxu0 0
  %597 = vmatmul.mubr.bf16.gmra.mrb[0].mxu0 %v345
  %v598 = vpop.f32.mrb[0].mxu0
  %v599 = vadd.f32 0.0, %v598
  %v600 = vpop.f32.mrb[0].mxu0
  %v601 = vpop.f32.mrb[0].mxu0
  %v602 = vadd.f32 0.0, %v601
  %v603 = vpop.f32.mrb[0].mxu0
  %604 = vmatprep.mubr.bf16.mxu0 0
  %605 = vmatmul.mubr.bf16.gmra.mrb[0].mxu0 %v348
  %v606 = vpop.f32.mrb[0].mxu0
  %v607 = vadd.f32 0.0, %v606
  %v608 = vpop.f32.mrb[0].mxu0
  %v609 = vpop.f32.mrb[0].mxu0
  %v610 = vadd.f32 0.0, %v609
  %v611 = vpop.f32.mrb[0].mxu0
  %612 = vmatprep.mubr.bf16.mxu0 0
  %613 = vmatmul.mubr.bf16.gmra.mrb[0].mxu0 %v351
  %v614 = vpop.f32.mrb[0].mxu0
  %v615 = vadd.f32 0.0, %v614
  %v616 = vpop.f32.mrb[0].mxu0
  %v617 = vpop.f32.mrb[0].mxu0
  %v618 = vadd.f32 0.0, %v617
  %v619 = vpop.f32.mrb[0].mxu0
  %620 = vmatprep.mubr.bf16.mxu0 0
  %621 = vmatmul.mubr.bf16.gmra.mrb[0].mxu0 %v354
  %v622 = vpop.f32.mrb[0].mxu0
  %v623 = vadd.f32 0.0, %v622
  %v624 = vpop.f32.mrb[0].mxu0
  %v625 = vpop.f32.mrb[0].mxu0
  %v626 = vadd.f32 0.0, %v625
  %v627 = vpop.f32.mrb[0].mxu0
  %628 = vmatprep.mubr.bf16.mxu0 0
  %629 = vmatmul.mubr.bf16.gmra.mrb[0].mxu0 %v357
  %v630 = vpop.f32.mrb[0].mxu0
  %v631 = vadd.f32 0.0, %v630
  %v632 = vpop.f32.mrb[0].mxu0
  %v633 = vpop.f32.mrb[0].mxu0
  %v634 = vadd.f32 0.0, %v633
  %v635 = vpop.f32.mrb[0].mxu0
  %636 = vmatprep.mubr.bf16.mxu0 0
  %637 = vmatmul.mubr.bf16.gmra.mrb[0].mxu0 %v360
  %v638 = vpop.f32.mrb[0].mxu0
  %v639 = vadd.f32 0.0, %v638
  %v640 = vpop.f32.mrb[0].mxu0
  %v641 = vpop.f32.mrb[0].mxu0
  %v642 = vadd.f32 0.0, %v641
  %v643 = vpop.f32.mrb[0].mxu0
  %644 = vmatprep.mubr.bf16.mxu0 0
  %645 = vmatmul.mubr.bf16.gmra.mrb[0].mxu0 %v363
  %v646 = vpop.f32.mrb[0].mxu0
  %v647 = vadd.f32 0.0, %v646
  %v648 = vpop.f32.mrb[0].mxu0
  %v649 = vpop.f32.mrb[0].mxu0
  %v650 = vadd.f32 0.0, %v649
  %v651 = vpop.f32.mrb[0].mxu0
  %652 = vmatprep.mubr.bf16.mxu0 0
  %653 = vmatmul.mubr.bf16.gmra.mrb[0].mxu0 %v366
  %v654 = vpop.f32.mrb[0].mxu0
  %v655 = vadd.f32 0.0, %v654
  %v656 = vpop.f32.mrb[0].mxu0
  %v657 = vpop.f32.mrb[0].mxu0
  %v658 = vadd.f32 0.0, %v657
  %v659 = vpop.f32.mrb[0].mxu0
  %660 = vdwg.mxu0
  %v661 = vadd.f32 %v407, %v410
  %v662 = vadd.f32 %v661, %v415
  %v663 = vadd.f32 %v662, %v418
  %v664 = vadd.f32 %v663, %v423
  %v665 = vadd.f32 %v664, %v426
  %v666 = vadd.f32 %v665, %v431
  %v667 = vadd.f32 %v666, %v434
  %v668 = vadd.f32 %v667, %v439
  %v669 = vadd.f32 %v668, %v442
  %v670 = vadd.f32 %v669, %v447
  %v671 = vadd.f32 %v670, %v450
  %v672 = vadd.f32 %v671, %v455
  %v673 = vadd.f32 %v672, %v458
  %v674 = vadd.f32 %v673, %v463
  %v675 = vadd.f32 %v674, %v466
  %v676 = vadd.f32 %v675, %v471
  %v677 = vadd.f32 %v676, %v474
  %v678 = vadd.f32 %v677, %v479
  %v679 = vadd.f32 %v678, %v482
  %v680 = vadd.f32 %v679, %v487
  %v681 = vadd.f32 %v680, %v490
  %v682 = vadd.f32 %v681, %v495
  %v683 = vadd.f32 %v682, %v498
  %v684 = vadd.f32 %v683, %v503
  %v685 = vadd.f32 %v684, %v506
  %v686 = vadd.f32 %v685, %v511
  %v687 = vadd.f32 %v686, %v514
  %v688 = vadd.f32 %v687, %v519
  %v689 = vadd.f32 %v688, %v522
  %v690 = vadd.f32 %v689, %v527
  %v691 = vadd.f32 %v690, %v530
  %v692 = vadd.f32 %v691, %v535
  %v693 = vadd.f32 %v692, %v538
  %v694 = vadd.f32 %v693, %v543
  %v695 = vadd.f32 %v694, %v546
  %v696 = vadd.f32 %v695, %v551
  %v697 = vadd.f32 %v696, %v554
  %v698 = vadd.f32 %v697, %v559
  %v699 = vadd.f32 %v698, %v562
  %v700 = vadd.f32 %v699, %v567
  %v701 = vadd.f32 %v700, %v570
  %v702 = vadd.f32 %v701, %v575
  %v703 = vadd.f32 %v702, %v578
  %v704 = vadd.f32 %v703, %v583
  %v705 = vadd.f32 %v704, %v586
  %v706 = vadd.f32 %v705, %v591
  %v707 = vadd.f32 %v706, %v594
  %v708 = vadd.f32 %v707, %v599
  %v709 = vadd.f32 %v708, %v602
  %v710 = vadd.f32 %v709, %v607
  %v711 = vadd.f32 %v710, %v610
  %v712 = vadd.f32 %v711, %v615
  %v713 = vadd.f32 %v712, %v618
  %v714 = vadd.f32 %v713, %v623
  %v715 = vadd.f32 %v714, %v626
  %v716 = vadd.f32 %v715, %v631
  %v717 = vadd.f32 %v716, %v634
  %v718 = vadd.f32 %v717, %v639
  %v719 = vadd.f32 %v718, %v642
  %v720 = vadd.f32 %v719, %v647
  %v721 = vadd.f32 %v720, %v650
  %v722 = vadd.f32 %v721, %v655
  %v723 = vadd.f32 %v722, %v658
  %v724 = vrot.slane %v723, 4
  %v725 = vadd.f32 %v723, %v724
  %v726 = vrot.slane %v725, 2
  %v727 = vadd.f32 %v725, %v726
  %v728 = vrot.slane %v727, 1
  %v729 = vadd.f32 %v727, %v728
  %v730 = vrcp.pop 512.0
  %v731 = vmul.f32 %v729, %v730
  %v732 = vsub.f32 %v407, %v731
  %v733 = vsub.f32 %v410, %v731
  %v734 = vsub.f32 %v415, %v731
  %v735 = vsub.f32 %v418, %v731
  %v736 = vsub.f32 %v423, %v731
  %v737 = vsub.f32 %v426, %v731
  %v738 = vsub.f32 %v431, %v731
  %v739 = vsub.f32 %v434, %v731
  %v740 = vsub.f32 %v439, %v731
  %v741 = vsub.f32 %v442, %v731
  %v742 = vsub.f32 %v447, %v731
  %v743 = vsub.f32 %v450, %v731
  %v744 = vsub.f32 %v455, %v731
  %v745 = vsub.f32 %v458, %v731
  %v746 = vsub.f32 %v463, %v731
  %v747 = vsub.f32 %v466, %v731
  %v748 = vsub.f32 %v471, %v731
  %v749 = vsub.f32 %v474, %v731
  %v750 = vsub.f32 %v479, %v731
  %v751 = vsub.f32 %v482, %v731
  %v752 = vsub.f32 %v487, %v731
  %v753 = vsub.f32 %v490, %v731
  %v754 = vsub.f32 %v495, %v731
  %v755 = vsub.f32 %v498, %v731
  %v756 = vsub.f32 %v503, %v731
  %v757 = vsub.f32 %v506, %v731
  %v758 = vsub.f32 %v511, %v731
  %v759 = vsub.f32 %v514, %v731
  %v760 = vsub.f32 %v519, %v731
  %v761 = vsub.f32 %v522, %v731
  %v762 = vsub.f32 %v527, %v731
  %v763 = vsub.f32 %v530, %v731
  %v764 = vsub.f32 %v535, %v731
  %v765 = vsub.f32 %v538, %v731
  %v766 = vsub.f32 %v543, %v731
  %v767 = vsub.f32 %v546, %v731
  %v768 = vsub.f32 %v551, %v731
  %v769 = vsub.f32 %v554, %v731
  %v770 = vsub.f32 %v559, %v731
  %v771 = vsub.f32 %v562, %v731
  %v772 = vsub.f32 %v567, %v731
  %v773 = vsub.f32 %v570, %v731
  %v774 = vsub.f32 %v575, %v731
  %v775 = vsub.f32 %v578, %v731
  %v776 = vsub.f32 %v583, %v731
  %v777 = vsub.f32 %v586, %v731
  %v778 = vsub.f32 %v591, %v731
  %v779 = vsub.f32 %v594, %v731
  %v780 = vsub.f32 %v599, %v731
  %v781 = vsub.f32 %v602, %v731
  %v782 = vsub.f32 %v607, %v731
  %v783 = vsub.f32 %v610, %v731
  %v784 = vsub.f32 %v615, %v731
  %v785 = vsub.f32 %v618, %v731
  %v786 = vsub.f32 %v623, %v731
  %v787 = vsub.f32 %v626, %v731
  %v788 = vsub.f32 %v631, %v731
  %v789 = vsub.f32 %v634, %v731
  %v790 = vsub.f32 %v639, %v731
  %v791 = vsub.f32 %v642, %v731
  %v792 = vsub.f32 %v647, %v731
  %v793 = vsub.f32 %v650, %v731
  %v794 = vsub.f32 %v655, %v731
  %v795 = vsub.f32 %v658, %v731
  %v796 = vmul.f32 %v732, %v732
  %v797 = vmul.f32 %v733, %v733
  %v798 = vmul.f32 %v734, %v734
  %v799 = vmul.f32 %v735, %v735
  %v800 = vmul.f32 %v736, %v736
  %v801 = vmul.f32 %v737, %v737
  %v802 = vmul.f32 %v738, %v738
  %v803 = vmul.f32 %v739, %v739
  %v804 = vmul.f32 %v740, %v740
  %v805 = vmul.f32 %v741, %v741
  %v806 = vmul.f32 %v742, %v742
  %v807 = vmul.f32 %v743, %v743
  %v808 = vmul.f32 %v744, %v744
  %v809 = vmul.f32 %v745, %v745
  %v810 = vmul.f32 %v746, %v746
  %v811 = vmul.f32 %v747, %v747
  %v812 = vmul.f32 %v748, %v748
  %v813 = vmul.f32 %v749, %v749
  %v814 = vmul.f32 %v750, %v750
  %v815 = vmul.f32 %v751, %v751
  %v816 = vmul.f32 %v752, %v752
  %v817 = vmul.f32 %v753, %v753
  %v818 = vmul.f32 %v754, %v754
  %v819 = vmul.f32 %v755, %v755
  %v820 = vmul.f32 %v756, %v756
  %v821 = vmul.f32 %v757, %v757
  %v822 = vmul.f32 %v758, %v758
  %v823 = vmul.f32 %v759, %v759
  %v824 = vmul.f32 %v760, %v760
  %v825 = vmul.f32 %v761, %v761
  %v826 = vmul.f32 %v762, %v762
  %v827 = vmul.f32 %v763, %v763
  %v828 = vmul.f32 %v764, %v764
  %v829 = vmul.f32 %v765, %v765
  %v830 = vmul.f32 %v766, %v766
  %v831 = vmul.f32 %v767, %v767
  %v832 = vmul.f32 %v768, %v768
  %v833 = vmul.f32 %v769, %v769
  %v834 = vmul.f32 %v770, %v770
  %v835 = vmul.f32 %v771, %v771
  %v836 = vmul.f32 %v772, %v772
  %v837 = vmul.f32 %v773, %v773
  %v838 = vmul.f32 %v774, %v774
  %v839 = vmul.f32 %v775, %v775
  %v840 = vmul.f32 %v776, %v776
  %v841 = vmul.f32 %v777, %v777
  %v842 = vmul.f32 %v778, %v778
  %v843 = vmul.f32 %v779, %v779
  %v844 = vmul.f32 %v780, %v780
  %v845 = vmul.f32 %v781, %v781
  %v846 = vmul.f32 %v782, %v782
  %v847 = vmul.f32 %v783, %v783
  %v848 = vmul.f32 %v784, %v784
  %v849 = vmul.f32 %v785, %v785
  %v850 = vmul.f32 %v786, %v786
  %v851 = vmul.f32 %v787, %v787
  %v852 = vmul.f32 %v788, %v788
  %v853 = vmul.f32 %v789, %v789
  %v854 = vmul.f32 %v790, %v790
  %v855 = vmul.f32 %v791, %v791
  %v856 = vmul.f32 %v792, %v792
  %v857 = vmul.f32 %v793, %v793
  %v858 = vmul.f32 %v794, %v794
  %v859 = vmul.f32 %v795, %v795
  %v860 = vadd.f32 %v796, %v797
  %v861 = vadd.f32 %v860, %v798
  %v862 = vadd.f32 %v861, %v799
  %v863 = vadd.f32 %v862, %v800
  %v864 = vadd.f32 %v863, %v801
  %v865 = vadd.f32 %v864, %v802
  %v866 = vadd.f32 %v865, %v803
  %v867 = vadd.f32 %v866, %v804
  %v868 = vadd.f32 %v867, %v805
  %v869 = vadd.f32 %v868, %v806
  %v870 = vadd.f32 %v869, %v807
  %v871 = vadd.f32 %v870, %v808
  %v872 = vadd.f32 %v871, %v809
  %v873 = vadd.f32 %v872, %v810
  %v874 = vadd.f32 %v873, %v811
  %v875 = vadd.f32 %v874, %v812
  %v876 = vadd.f32 %v875, %v813
  %v877 = vadd.f32 %v876, %v814
  %v878 = vadd.f32 %v877, %v815
  %v879 = vadd.f32 %v878, %v816
  %v880 = vadd.f32 %v879, %v817
  %v881 = vadd.f32 %v880, %v818
  %v882 = vadd.f32 %v881, %v819
  %v883 = vadd.f32 %v882, %v820
  %v884 = vadd.f32 %v883, %v821
  %v885 = vadd.f32 %v884, %v822
  %v886 = vadd.f32 %v885, %v823
  %v887 = vadd.f32 %v886, %v824
  %v888 = vadd.f32 %v887, %v825
  %v889 = vadd.f32 %v888, %v826
  %v890 = vadd.f32 %v889, %v827
  %v891 = vadd.f32 %v890, %v828
  %v892 = vadd.f32 %v891, %v829
  %v893 = vadd.f32 %v892, %v830
  %v894 = vadd.f32 %v893, %v831
  %v895 = vadd.f32 %v894, %v832
  %v896 = vadd.f32 %v895, %v833
  %v897 = vadd.f32 %v896, %v834
  %v898 = vadd.f32 %v897, %v835
  %v899 = vadd.f32 %v898, %v836
  %v900 = vadd.f32 %v899, %v837
  %v901 = vadd.f32 %v900, %v838
  %v902 = vadd.f32 %v901, %v839
  %v903 = vadd.f32 %v902, %v840
  %v904 = vadd.f32 %v903, %v841
  %v905 = vadd.f32 %v904, %v842
  %v906 = vadd.f32 %v905, %v843
  %v907 = vadd.f32 %v906, %v844
  %v908 = vadd.f32 %v907, %v845
  %v909 = vadd.f32 %v908, %v846
  %v910 = vadd.f32 %v909, %v847
  %v911 = vadd.f32 %v910, %v848
  %v912 = vadd.f32 %v911, %v849
  %v913 = vadd.f32 %v912, %v850
  %v914 = vadd.f32 %v913, %v851
  %v915 = vadd.f32 %v914, %v852
  %v916 = vadd.f32 %v915, %v853
  %v917 = vadd.f32 %v916, %v854
  %v918 = vadd.f32 %v917, %v855
  %v919 = vadd.f32 %v918, %v856
  %v920 = vadd.f32 %v919, %v857
  %v921 = vadd.f32 %v920, %v858
  %v922 = vadd.f32 %v921, %v859
  %v923 = vrot.slane %v922, 4
  %v924 = vadd.f32 %v922, %v923
  %v925 = vrot.slane %v924, 2
  %v926 = vadd.f32 %v924, %v925
  %v927 = vrot.slane %v926, 1
  %v928 = vadd.f32 %v926, %v927
  %v929 = vmul.f32 %v928, %v730
  %v930 = vadd.f32 %v929, 1e-05
  %v931 = vrsqrt.pop %v930
  %v932 = vmul.f32 %v732, %v931
  %v933 = vmul.f32 %v733, %v931
  %v934 = vmul.f32 %v734, %v931
  %v935 = vmul.f32 %v735, %v931
  %v936 = vmul.f32 %v736, %v931
  %v937 = vmul.f32 %v737, %v931
  %v938 = vmul.f32 %v738, %v931
  %v939 = vmul.f32 %v739, %v931
  %v940 = vmul.f32 %v740, %v931
  %v941 = vmul.f32 %v741, %v931
  %v942 = vmul.f32 %v742, %v931
  %v943 = vmul.f32 %v743, %v931
  %v944 = vmul.f32 %v744, %v931
  %v945 = vmul.f32 %v745, %v931
  %v946 = vmul.f32 %v746, %v931
  %v947 = vmul.f32 %v747, %v931
  %v948 = vmul.f32 %v748, %v931
  %v949 = vmul.f32 %v749, %v931
  %v950 = vmul.f32 %v750, %v931
  %v951 = vmul.f32 %v751, %v931
  %v952 = vmul.f32 %v752, %v931
  %v953 = vmul.f32 %v753, %v931
  %v954 = vmul.f32 %v754, %v931
  %v955 = vmul.f32 %v755, %v931
  %v956 = vmul.f32 %v756, %v931
  %v957 = vmul.f32 %v757, %v931
  %v958 = vmul.f32 %v758, %v931
  %v959 = vmul.f32 %v759, %v931
  %v960 = vmul.f32 %v760, %v931
  %v961 = vmul.f32 %v761, %v931
  %v962 = vmul.f32 %v762, %v931
  %v963 = vmul.f32 %v763, %v931
  %v964 = vmul.f32 %v764, %v931
  %v965 = vmul.f32 %v765, %v931
  %v966 = vmul.f32 %v766, %v931
  %v967 = vmul.f32 %v767, %v931
  %v968 = vmul.f32 %v768, %v931
  %v969 = vmul.f32 %v769, %v931
  %v970 = vmul.f32 %v770, %v931
  %v971 = vmul.f32 %v771, %v931
  %v972 = vmul.f32 %v772, %v931
  %v973 = vmul.f32 %v773, %v931
  %v974 = vmul.f32 %v774, %v931
  %v975 = vmul.f32 %v775, %v931
  %v976 = vmul.f32 %v776, %v931
  %v977 = vmul.f32 %v777, %v931
  %v978 = vmul.f32 %v778, %v931
  %v979 = vmul.f32 %v779, %v931
  %v980 = vmul.f32 %v780, %v931
  %v981 = vmul.f32 %v781, %v931
  %v982 = vmul.f32 %v782, %v931
  %v983 = vmul.f32 %v783, %v931
  %v984 = vmul.f32 %v784, %v931
  %v985 = vmul.f32 %v785, %v931
  %v986 = vmul.f32 %v786, %v931
  %v987 = vmul.f32 %v787, %v931
  %v988 = vmul.f32 %v788, %v931
  %v989 = vmul.f32 %v789, %v931
  %v990 = vmul.f32 %v790, %v931
  %v991 = vmul.f32 %v791, %v931
  %v992 = vmul.f32 %v792, %v931
  %v993 = vmul.f32 %v793, %v931
  %v994 = vmul.f32 %v794, %v931
  %v995 = vmul.f32 %v795, %v931
  %v996 = vld [vmem:[%s3] sm:$0x1]
  %v998 = vlaneseq
  %v999 = vshrl.u32 %v998, 7
  %v1000 = vsub.s32 0, %v999
  %v1001 = vrot.slane %v996, %v1000
  %v1003 = vmul.f32 %v932, %v1001
  %v1004 = vmul.f32 %v933, %v1001
  %v1005 = vmul.f32 %v934, %v1001
  %v1006 = vmul.f32 %v935, %v1001
  %v1007 = vmul.f32 %v936, %v1001
  %v1008 = vmul.f32 %v937, %v1001
  %v1009 = vmul.f32 %v938, %v1001
  %v1010 = vmul.f32 %v939, %v1001
  %v1011 = vmul.f32 %v940, %v1001
  %v1012 = vmul.f32 %v941, %v1001
  %v1013 = vmul.f32 %v942, %v1001
  %v1014 = vmul.f32 %v943, %v1001
  %v1015 = vmul.f32 %v944, %v1001
  %v1016 = vmul.f32 %v945, %v1001
  %v1017 = vmul.f32 %v946, %v1001
  %v1018 = vmul.f32 %v947, %v1001
  %v1019 = vmul.f32 %v948, %v1001
  %v1020 = vmul.f32 %v949, %v1001
  %v1021 = vmul.f32 %v950, %v1001
  %v1022 = vmul.f32 %v951, %v1001
  %v1023 = vmul.f32 %v952, %v1001
  %v1024 = vmul.f32 %v953, %v1001
  %v1025 = vmul.f32 %v954, %v1001
  %v1026 = vmul.f32 %v955, %v1001
  %v1027 = vmul.f32 %v956, %v1001
  %v1028 = vmul.f32 %v957, %v1001
  %v1029 = vmul.f32 %v958, %v1001
  %v1030 = vmul.f32 %v959, %v1001
  %v1031 = vmul.f32 %v960, %v1001
  %v1032 = vmul.f32 %v961, %v1001
  %v1033 = vmul.f32 %v962, %v1001
  %v1034 = vmul.f32 %v963, %v1001
  %v1035 = vmul.f32 %v964, %v1001
  %v1036 = vmul.f32 %v965, %v1001
  %v1037 = vmul.f32 %v966, %v1001
  %v1038 = vmul.f32 %v967, %v1001
  %v1039 = vmul.f32 %v968, %v1001
  %v1040 = vmul.f32 %v969, %v1001
  %v1041 = vmul.f32 %v970, %v1001
  %v1042 = vmul.f32 %v971, %v1001
  %v1043 = vmul.f32 %v972, %v1001
  %v1044 = vmul.f32 %v973, %v1001
  %v1045 = vmul.f32 %v974, %v1001
  %v1046 = vmul.f32 %v975, %v1001
  %v1047 = vmul.f32 %v976, %v1001
  %v1048 = vmul.f32 %v977, %v1001
  %v1049 = vmul.f32 %v978, %v1001
  %v1050 = vmul.f32 %v979, %v1001
  %v1051 = vmul.f32 %v980, %v1001
  %v1052 = vmul.f32 %v981, %v1001
  %v1053 = vmul.f32 %v982, %v1001
  %v1054 = vmul.f32 %v983, %v1001
  %v1055 = vmul.f32 %v984, %v1001
  %v1056 = vmul.f32 %v985, %v1001
  %v1057 = vmul.f32 %v986, %v1001
  %v1058 = vmul.f32 %v987, %v1001
  %v1059 = vmul.f32 %v988, %v1001
  %v1060 = vmul.f32 %v989, %v1001
  %v1061 = vmul.f32 %v990, %v1001
  %v1062 = vmul.f32 %v991, %v1001
  %v1063 = vmul.f32 %v992, %v1001
  %v1064 = vmul.f32 %v993, %v1001
  %v1065 = vmul.f32 %v994, %v1001
  %v1066 = vmul.f32 %v995, %v1001
  %v1067 = vld [vmem:[%s4] sm:$0x1]
  %v1069 = vlaneseq
  %v1070 = vshrl.u32 %v1069, 7
  %v1071 = vsub.s32 0, %v1070
  %v1072 = vrot.slane %v1067, %v1071
  %v1074 = vadd.f32 %v1003, %v1072
  %v1075 = vadd.f32 %v1004, %v1072
  %v1076 = vadd.f32 %v1005, %v1072
  %v1077 = vadd.f32 %v1006, %v1072
  %v1078 = vadd.f32 %v1007, %v1072
  %v1079 = vadd.f32 %v1008, %v1072
  %v1080 = vadd.f32 %v1009, %v1072
  %v1081 = vadd.f32 %v1010, %v1072
  %v1082 = vadd.f32 %v1011, %v1072
  %v1083 = vadd.f32 %v1012, %v1072
  %v1084 = vadd.f32 %v1013, %v1072
  %v1085 = vadd.f32 %v1014, %v1072
  %v1086 = vadd.f32 %v1015, %v1072
  %v1087 = vadd.f32 %v1016, %v1072
  %v1088 = vadd.f32 %v1017, %v1072
  %v1089 = vadd.f32 %v1018, %v1072
  %v1090 = vadd.f32 %v1019, %v1072
  %v1091 = vadd.f32 %v1020, %v1072
  %v1092 = vadd.f32 %v1021, %v1072
  %v1093 = vadd.f32 %v1022, %v1072
  %v1094 = vadd.f32 %v1023, %v1072
  %v1095 = vadd.f32 %v1024, %v1072
  %v1096 = vadd.f32 %v1025, %v1072
  %v1097 = vadd.f32 %v1026, %v1072
  %v1098 = vadd.f32 %v1027, %v1072
  %v1099 = vadd.f32 %v1028, %v1072
  %v1100 = vadd.f32 %v1029, %v1072
  %v1101 = vadd.f32 %v1030, %v1072
  %v1102 = vadd.f32 %v1031, %v1072
  %v1103 = vadd.f32 %v1032, %v1072
  %v1104 = vadd.f32 %v1033, %v1072
  %v1105 = vadd.f32 %v1034, %v1072
  %v1106 = vadd.f32 %v1035, %v1072
  %v1107 = vadd.f32 %v1036, %v1072
  %v1108 = vadd.f32 %v1037, %v1072
  %v1109 = vadd.f32 %v1038, %v1072
  %v1110 = vadd.f32 %v1039, %v1072
  %v1111 = vadd.f32 %v1040, %v1072
  %v1112 = vadd.f32 %v1041, %v1072
  %v1113 = vadd.f32 %v1042, %v1072
  %v1114 = vadd.f32 %v1043, %v1072
  %v1115 = vadd.f32 %v1044, %v1072
  %v1116 = vadd.f32 %v1045, %v1072
  %v1117 = vadd.f32 %v1046, %v1072
  %v1118 = vadd.f32 %v1047, %v1072
  %v1119 = vadd.f32 %v1048, %v1072
  %v1120 = vadd.f32 %v1049, %v1072
  %v1121 = vadd.f32 %v1050, %v1072
  %v1122 = vadd.f32 %v1051, %v1072
  %v1123 = vadd.f32 %v1052, %v1072
  %v1124 = vadd.f32 %v1053, %v1072
  %v1125 = vadd.f32 %v1054, %v1072
  %v1126 = vadd.f32 %v1055, %v1072
  %v1127 = vadd.f32 %v1056, %v1072
  %v1128 = vadd.f32 %v1057, %v1072
  %v1129 = vadd.f32 %v1058, %v1072
  %v1130 = vadd.f32 %v1059, %v1072
  %v1131 = vadd.f32 %v1060, %v1072
  %v1132 = vadd.f32 %v1061, %v1072
  %v1133 = vadd.f32 %v1062, %v1072
  %v1134 = vadd.f32 %v1063, %v1072
  %v1135 = vadd.f32 %v1064, %v1072
  %v1136 = vadd.f32 %v1065, %v1072
  %v1137 = vadd.f32 %v1066, %v1072
  %v1138 = vmax.f32 %v1074, 0.0
  %v1139 = vmax.f32 %v1075, 0.0
  %v1140 = vmax.f32 %v1076, 0.0
  %v1141 = vmax.f32 %v1077, 0.0
  %v1142 = vmax.f32 %v1078, 0.0
  %v1143 = vmax.f32 %v1079, 0.0
  %v1144 = vmax.f32 %v1080, 0.0
  %v1145 = vmax.f32 %v1081, 0.0
  %v1146 = vmax.f32 %v1082, 0.0
  %v1147 = vmax.f32 %v1083, 0.0
  %v1148 = vmax.f32 %v1084, 0.0
  %v1149 = vmax.f32 %v1085, 0.0
  %v1150 = vmax.f32 %v1086, 0.0
  %v1151 = vmax.f32 %v1087, 0.0
  %v1152 = vmax.f32 %v1088, 0.0
  %v1153 = vmax.f32 %v1089, 0.0
  %v1154 = vmax.f32 %v1090, 0.0
  %v1155 = vmax.f32 %v1091, 0.0
  %v1156 = vmax.f32 %v1092, 0.0
  %v1157 = vmax.f32 %v1093, 0.0
  %v1158 = vmax.f32 %v1094, 0.0
  %v1159 = vmax.f32 %v1095, 0.0
  %v1160 = vmax.f32 %v1096, 0.0
  %v1161 = vmax.f32 %v1097, 0.0
  %v1162 = vmax.f32 %v1098, 0.0
  %v1163 = vmax.f32 %v1099, 0.0
  %v1164 = vmax.f32 %v1100, 0.0
  %v1165 = vmax.f32 %v1101, 0.0
  %v1166 = vmax.f32 %v1102, 0.0
  %v1167 = vmax.f32 %v1103, 0.0
  %v1168 = vmax.f32 %v1104, 0.0
  %v1169 = vmax.f32 %v1105, 0.0
  %v1170 = vmax.f32 %v1106, 0.0
  %v1171 = vmax.f32 %v1107, 0.0
  %v1172 = vmax.f32 %v1108, 0.0
  %v1173 = vmax.f32 %v1109, 0.0
  %v1174 = vmax.f32 %v1110, 0.0
  %v1175 = vmax.f32 %v1111, 0.0
  %v1176 = vmax.f32 %v1112, 0.0
  %v1177 = vmax.f32 %v1113, 0.0
  %v1178 = vmax.f32 %v1114, 0.0
  %v1179 = vmax.f32 %v1115, 0.0
  %v1180 = vmax.f32 %v1116, 0.0
  %v1181 = vmax.f32 %v1117, 0.0
  %v1182 = vmax.f32 %v1118, 0.0
  %v1183 = vmax.f32 %v1119, 0.0
  %v1184 = vmax.f32 %v1120, 0.0
  %v1185 = vmax.f32 %v1121, 0.0
  %v1186 = vmax.f32 %v1122, 0.0
  %v1187 = vmax.f32 %v1123, 0.0
  %v1188 = vmax.f32 %v1124, 0.0
  %v1189 = vmax.f32 %v1125, 0.0
  %v1190 = vmax.f32 %v1126, 0.0
  %v1191 = vmax.f32 %v1127, 0.0
  %v1192 = vmax.f32 %v1128, 0.0
  %v1193 = vmax.f32 %v1129, 0.0
  %v1194 = vmax.f32 %v1130, 0.0
  %v1195 = vmax.f32 %v1131, 0.0
  %v1196 = vmax.f32 %v1132, 0.0
  %v1197 = vmax.f32 %v1133, 0.0
  %v1198 = vmax.f32 %v1134, 0.0
  %v1199 = vmax.f32 %v1135, 0.0
  %v1200 = vmax.f32 %v1136, 0.0
  %v1201 = vmax.f32 %v1137, 0.0
  %v1202 = vpack.c.bf16 %v1139, %v1138
  %v1203 = vpack.c.bf16 %v1141, %v1140
  %v1204 = vpack.c.bf16 %v1143, %v1142
  %v1205 = vpack.c.bf16 %v1145, %v1144
  %v1206 = vpack.c.bf16 %v1147, %v1146
  %v1207 = vpack.c.bf16 %v1149, %v1148
  %v1208 = vpack.c.bf16 %v1151, %v1150
  %v1209 = vpack.c.bf16 %v1153, %v1152
  %v1210 = vpack.c.bf16 %v1155, %v1154
  %v1211 = vpack.c.bf16 %v1157, %v1156
  %v1212 = vpack.c.bf16 %v1159, %v1158
  %v1213 = vpack.c.bf16 %v1161, %v1160
  %v1214 = vpack.c.bf16 %v1163, %v1162
  %v1215 = vpack.c.bf16 %v1165, %v1164
  %v1216 = vpack.c.bf16 %v1167, %v1166
  %v1217 = vpack.c.bf16 %v1169, %v1168
  %v1218 = vpack.c.bf16 %v1171, %v1170
  %v1219 = vpack.c.bf16 %v1173, %v1172
  %v1220 = vpack.c.bf16 %v1175, %v1174
  %v1221 = vpack.c.bf16 %v1177, %v1176
  %v1222 = vpack.c.bf16 %v1179, %v1178
  %v1223 = vpack.c.bf16 %v1181, %v1180
  %v1224 = vpack.c.bf16 %v1183, %v1182
  %v1225 = vpack.c.bf16 %v1185, %v1184
  %v1226 = vpack.c.bf16 %v1187, %v1186
  %v1227 = vpack.c.bf16 %v1189, %v1188
  %v1228 = vpack.c.bf16 %v1191, %v1190
  %v1229 = vpack.c.bf16 %v1193, %v1192
  %v1230 = vpack.c.bf16 %v1195, %v1194
  %v1231 = vpack.c.bf16 %v1197, %v1196
  %v1232 = vpack.c.bf16 %v1199, %v1198
  %v1233 = vpack.c.bf16 %v1201, %v1200
  %v1235 = vshrl.u32 %v1202, 16
  %v1237 = vrot.slane %v1235, 7
  %v1238 = vshll.u32 %v1202, 16
  %v1240 = vor.u32 %v1237, %v1238
  %v1242 = vshrl.u32 %v1203, 16
  %v1244 = vrot.slane %v1242, 7
  %v1245 = vshll.u32 %v1203, 16
  %v1247 = vor.u32 %v1244, %v1245
  %v1249 = vshrl.u32 %v1204, 16
  %v1251 = vrot.slane %v1249, 7
  %v1252 = vshll.u32 %v1204, 16
  %v1254 = vor.u32 %v1251, %v1252
  %v1256 = vshrl.u32 %v1205, 16
  %v1258 = vrot.slane %v1256, 7
  %v1259 = vshll.u32 %v1205, 16
  %v1261 = vor.u32 %v1258, %v1259
  %v1263 = vshrl.u32 %v1206, 16
  %v1265 = vrot.slane %v1263, 7
  %v1266 = vshll.u32 %v1206, 16
  %v1268 = vor.u32 %v1265, %v1266
  %v1270 = vshrl.u32 %v1207, 16
  %v1272 = vrot.slane %v1270, 7
  %v1273 = vshll.u32 %v1207, 16
  %v1275 = vor.u32 %v1272, %v1273
  %v1277 = vshrl.u32 %v1208, 16
  %v1279 = vrot.slane %v1277, 7
  %v1280 = vshll.u32 %v1208, 16
  %v1282 = vor.u32 %v1279, %v1280
  %v1284 = vshrl.u32 %v1209, 16
  %v1286 = vrot.slane %v1284, 7
  %v1287 = vshll.u32 %v1209, 16
  %v1289 = vor.u32 %v1286, %v1287
  %v1291 = vshrl.u32 %v1210, 16
  %v1293 = vrot.slane %v1291, 7
  %v1294 = vshll.u32 %v1210, 16
  %v1296 = vor.u32 %v1293, %v1294
  %v1298 = vshrl.u32 %v1211, 16
  %v1300 = vrot.slane %v1298, 7
  %v1301 = vshll.u32 %v1211, 16
  %v1303 = vor.u32 %v1300, %v1301
  %v1305 = vshrl.u32 %v1212, 16
  %v1307 = vrot.slane %v1305, 7
  %v1308 = vshll.u32 %v1212, 16
  %v1310 = vor.u32 %v1307, %v1308
  %v1312 = vshrl.u32 %v1213, 16
  %v1314 = vrot.slane %v1312, 7
  %v1315 = vshll.u32 %v1213, 16
  %v1317 = vor.u32 %v1314, %v1315
  %v1319 = vshrl.u32 %v1214, 16
  %v1321 = vrot.slane %v1319, 7
  %v1322 = vshll.u32 %v1214, 16
  %v1324 = vor.u32 %v1321, %v1322
  %v1326 = vshrl.u32 %v1215, 16
  %v1328 = vrot.slane %v1326, 7
  %v1329 = vshll.u32 %v1215, 16
  %v1331 = vor.u32 %v1328, %v1329
  %v1333 = vshrl.u32 %v1216, 16
  %v1335 = vrot.slane %v1333, 7
  %v1336 = vshll.u32 %v1216, 16
  %v1338 = vor.u32 %v1335, %v1336
  %v1340 = vshrl.u32 %v1217, 16
  %v1342 = vrot.slane %v1340, 7
  %v1343 = vshll.u32 %v1217, 16
  %v1345 = vor.u32 %v1342, %v1343
  %v1347 = vshrl.u32 %v1218, 16
  %v1349 = vrot.slane %v1347, 7
  %v1350 = vshll.u32 %v1218, 16
  %v1352 = vor.u32 %v1349, %v1350
  %v1354 = vshrl.u32 %v1219, 16
  %v1356 = vrot.slane %v1354, 7
  %v1357 = vshll.u32 %v1219, 16
  %v1359 = vor.u32 %v1356, %v1357
  %v1361 = vshrl.u32 %v1220, 16
  %v1363 = vrot.slane %v1361, 7
  %v1364 = vshll.u32 %v1220, 16
  %v1366 = vor.u32 %v1363, %v1364
  %v1368 = vshrl.u32 %v1221, 16
  %v1370 = vrot.slane %v1368, 7
  %v1371 = vshll.u32 %v1221, 16
  %v1373 = vor.u32 %v1370, %v1371
  %v1375 = vshrl.u32 %v1222, 16
  %v1377 = vrot.slane %v1375, 7
  %v1378 = vshll.u32 %v1222, 16
  %v1380 = vor.u32 %v1377, %v1378
  %v1382 = vshrl.u32 %v1223, 16
  %v1384 = vrot.slane %v1382, 7
  %v1385 = vshll.u32 %v1223, 16
  %v1387 = vor.u32 %v1384, %v1385
  %v1389 = vshrl.u32 %v1224, 16
  %v1391 = vrot.slane %v1389, 7
  %v1392 = vshll.u32 %v1224, 16
  %v1394 = vor.u32 %v1391, %v1392
  %v1396 = vshrl.u32 %v1225, 16
  %v1398 = vrot.slane %v1396, 7
  %v1399 = vshll.u32 %v1225, 16
  %v1401 = vor.u32 %v1398, %v1399
  %v1403 = vshrl.u32 %v1226, 16
  %v1405 = vrot.slane %v1403, 7
  %v1406 = vshll.u32 %v1226, 16
  %v1408 = vor.u32 %v1405, %v1406
  %v1410 = vshrl.u32 %v1227, 16
  %v1412 = vrot.slane %v1410, 7
  %v1413 = vshll.u32 %v1227, 16
  %v1415 = vor.u32 %v1412, %v1413
  %v1417 = vshrl.u32 %v1228, 16
  %v1419 = vrot.slane %v1417, 7
  %v1420 = vshll.u32 %v1228, 16
  %v1422 = vor.u32 %v1419, %v1420
  %v1424 = vshrl.u32 %v1229, 16
  %v1426 = vrot.slane %v1424, 7
  %v1427 = vshll.u32 %v1229, 16
  %v1429 = vor.u32 %v1426, %v1427
  %v1431 = vshrl.u32 %v1230, 16
  %v1433 = vrot.slane %v1431, 7
  %v1434 = vshll.u32 %v1230, 16
  %v1436 = vor.u32 %v1433, %v1434
  %v1438 = vshrl.u32 %v1231, 16
  %v1440 = vrot.slane %v1438, 7
  %v1441 = vshll.u32 %v1231, 16
  %v1443 = vor.u32 %v1440, %v1441
  %v1445 = vshrl.u32 %v1232, 16
  %v1447 = vrot.slane %v1445, 7
  %v1448 = vshll.u32 %v1232, 16
  %v1450 = vor.u32 %v1447, %v1448
  %v1452 = vshrl.u32 %v1233, 16
  %v1454 = vrot.slane %v1452, 7
  %v1455 = vshll.u32 %v1233, 16
  %v1457 = vor.u32 %v1454, %v1455
  %vm1522 = vcmask 1040384
  %vm1523 = vsmask.f32 256
  %vm1524 = vmand %vm1522, %vm1523
  %v1525 = vsel %vm1524, 0, %v1240
  %v1526 = vsel %vm1524, 0, %v1247
  %v1527 = vsel %vm1524, 0, %v1254
  %v1528 = vsel %vm1524, 0, %v1261
  %v1529 = vsel %vm1524, 0, %v1268
  %v1530 = vsel %vm1524, 0, %v1275
  %v1531 = vsel %vm1524, 0, %v1282
  %v1532 = vsel %vm1524, 0, %v1289
  %v1533 = vsel %vm1524, 0, %v1296
  %v1534 = vsel %vm1524, 0, %v1303
  %v1535 = vsel %vm1524, 0, %v1310
  %v1536 = vsel %vm1524, 0, %v1317
  %v1537 = vsel %vm1524, 0, %v1324
  %v1538 = vsel %vm1524, 0, %v1331
  %v1539 = vsel %vm1524, 0, %v1338
  %v1540 = vsel %vm1524, 0, %v1345
  %v1541 = vsel %vm1524, 0, %v1352
  %v1542 = vsel %vm1524, 0, %v1359
  %v1543 = vsel %vm1524, 0, %v1366
  %v1544 = vsel %vm1524, 0, %v1373
  %v1545 = vsel %vm1524, 0, %v1380
  %v1546 = vsel %vm1524, 0, %v1387
  %v1547 = vsel %vm1524, 0, %v1394
  %v1548 = vsel %vm1524, 0, %v1401
  %v1549 = vsel %vm1524, 0, %v1408
  %v1550 = vsel %vm1524, 0, %v1415
  %v1551 = vsel %vm1524, 0, %v1422
  %v1552 = vsel %vm1524, 0, %v1429
  %v1553 = vsel %vm1524, 0, %v1436
  %v1554 = vsel %vm1524, 0, %v1443
  %v1555 = vsel %vm1524, 0, %v1450
  %v1556 = vsel %vm1524, 0, %v1457
  %v1557 = vsel %vm1524, %v1237, 0
  %v1558 = vsel %vm1524, %v1244, 0
  %v1559 = vsel %vm1524, %v1251, 0
  %v1560 = vsel %vm1524, %v1258, 0
  %v1561 = vsel %vm1524, %v1265, 0
  %v1562 = vsel %vm1524, %v1272, 0
  %v1563 = vsel %vm1524, %v1279, 0
  %v1564 = vsel %vm1524, %v1286, 0
  %v1565 = vsel %vm1524, %v1293, 0
  %v1566 = vsel %vm1524, %v1300, 0
  %v1567 = vsel %vm1524, %v1307, 0
  %v1568 = vsel %vm1524, %v1314, 0
  %v1569 = vsel %vm1524, %v1321, 0
  %v1570 = vsel %vm1524, %v1328, 0
  %v1571 = vsel %vm1524, %v1335, 0
  %v1572 = vsel %vm1524, %v1342, 0
  %v1573 = vsel %vm1524, %v1349, 0
  %v1574 = vsel %vm1524, %v1356, 0
  %v1575 = vsel %vm1524, %v1363, 0
  %v1576 = vsel %vm1524, %v1370, 0
  %v1577 = vsel %vm1524, %v1377, 0
  %v1578 = vsel %vm1524, %v1384, 0
  %v1579 = vsel %vm1524, %v1391, 0
  %v1580 = vsel %vm1524, %v1398, 0
  %v1581 = vsel %vm1524, %v1405, 0
  %v1582 = vsel %vm1524, %v1412, 0
  %v1583 = vsel %vm1524, %v1419, 0
  %v1584 = vsel %vm1524, %v1426, 0
  %v1585 = vsel %vm1524, %v1433, 0
  %v1586 = vsel %vm1524, %v1440, 0
  %v1587 = vsel %vm1524, %v1447, 0
  %v1588 = vsel %vm1524, %v1454, 0
  %vm1589 = vsmask.f32 7424
  %v1591 = vshrl.u32 0, 16
  %v1593 = vshll.u32 0, 16
  %v1595 = vrot.slane %v1593, 1
  %v1596 = vor.u32 %v1591, %v1595
  %v1597 = vsel %vm1589, %v1596, %v1595
  %v1599 = vshrl.u32 %v1525, 16
  %v1601 = vshll.u32 %v1525, 16
  %v1603 = vrot.slane %v1601, 1
  %v1604 = vor.u32 %v1599, %v1603
  %v1606 = vshll.u32 %v1557, 16
  %v1608 = vrot.slane %v1606, 1
  %v1609 = vsel %vm1589, %v1604, %v1608
  %v1611 = vshrl.u32 %v1526, 16
  %v1613 = vshll.u32 %v1526, 16
  %v1615 = vrot.slane %v1613, 1
  %v1616 = vor.u32 %v1611, %v1615
  %v1618 = vshll.u32 %v1558, 16
  %v1620 = vrot.slane %v1618, 1
  %v1621 = vsel %vm1589, %v1616, %v1620
  %v1623 = vshrl.u32 %v1527, 16
  %v1625 = vshll.u32 %v1527, 16
  %v1627 = vrot.slane %v1625, 1
  %v1628 = vor.u32 %v1623, %v1627
  %v1630 = vshll.u32 %v1559, 16
  %v1632 = vrot.slane %v1630, 1
  %v1633 = vsel %vm1589, %v1628, %v1632
  %v1635 = vshrl.u32 %v1528, 16
  %v1637 = vshll.u32 %v1528, 16
  %v1639 = vrot.slane %v1637, 1
  %v1640 = vor.u32 %v1635, %v1639
  %v1642 = vshll.u32 %v1560, 16
  %v1644 = vrot.slane %v1642, 1
  %v1645 = vsel %vm1589, %v1640, %v1644
  %v1647 = vshrl.u32 %v1529, 16
  %v1649 = vshll.u32 %v1529, 16
  %v1651 = vrot.slane %v1649, 1
  %v1652 = vor.u32 %v1647, %v1651
  %v1654 = vshll.u32 %v1561, 16
  %v1656 = vrot.slane %v1654, 1
  %v1657 = vsel %vm1589, %v1652, %v1656
  %v1659 = vshrl.u32 %v1530, 16
  %v1661 = vshll.u32 %v1530, 16
  %v1663 = vrot.slane %v1661, 1
  %v1664 = vor.u32 %v1659, %v1663
  %v1666 = vshll.u32 %v1562, 16
  %v1668 = vrot.slane %v1666, 1
  %v1669 = vsel %vm1589, %v1664, %v1668
  %v1671 = vshrl.u32 %v1531, 16
  %v1673 = vshll.u32 %v1531, 16
  %v1675 = vrot.slane %v1673, 1
  %v1676 = vor.u32 %v1671, %v1675
  %v1678 = vshll.u32 %v1563, 16
  %v1680 = vrot.slane %v1678, 1
  %v1681 = vsel %vm1589, %v1676, %v1680
  %v1683 = vshrl.u32 %v1532, 16
  %v1685 = vshll.u32 %v1532, 16
  %v1687 = vrot.slane %v1685, 1
  %v1688 = vor.u32 %v1683, %v1687
  %v1690 = vshll.u32 %v1564, 16
  %v1692 = vrot.slane %v1690, 1
  %v1693 = vsel %vm1589, %v1688, %v1692
  %v1695 = vshrl.u32 %v1533, 16
  %v1697 = vshll.u32 %v1533, 16
  %v1699 = vrot.slane %v1697, 1
  %v1700 = vor.u32 %v1695, %v1699
  %v1702 = vshll.u32 %v1565, 16
  %v1704 = vrot.slane %v1702, 1
  %v1705 = vsel %vm1589, %v1700, %v1704
  %v1707 = vshrl.u32 %v1534, 16
  %v1709 = vshll.u32 %v1534, 16
  %v1711 = vrot.slane %v1709, 1
  %v1712 = vor.u32 %v1707, %v1711
  %v1714 = vshll.u32 %v1566, 16
  %v1716 = vrot.slane %v1714, 1
  %v1717 = vsel %vm1589, %v1712, %v1716
  %v1719 = vshrl.u32 %v1535, 16
  %v1721 = vshll.u32 %v1535, 16
  %v1723 = vrot.slane %v1721, 1
  %v1724 = vor.u32 %v1719, %v1723
  %v1726 = vshll.u32 %v1567, 16
  %v1728 = vrot.slane %v1726, 1
  %v1729 = vsel %vm1589, %v1724, %v1728
  %v1731 = vshrl.u32 %v1536, 16
  %v1733 = vshll.u32 %v1536, 16
  %v1735 = vrot.slane %v1733, 1
  %v1736 = vor.u32 %v1731, %v1735
  %v1738 = vshll.u32 %v1568, 16
  %v1740 = vrot.slane %v1738, 1
  %v1741 = vsel %vm1589, %v1736, %v1740
  %v1743 = vshrl.u32 %v1537, 16
  %v1745 = vshll.u32 %v1537, 16
  %v1747 = vrot.slane %v1745, 1
  %v1748 = vor.u32 %v1743, %v1747
  %v1750 = vshll.u32 %v1569, 16
  %v1752 = vrot.slane %v1750, 1
  %v1753 = vsel %vm1589, %v1748, %v1752
  %v1755 = vshrl.u32 %v1538, 16
  %v1757 = vshll.u32 %v1538, 16
  %v1759 = vrot.slane %v1757, 1
  %v1760 = vor.u32 %v1755, %v1759
  %v1762 = vshll.u32 %v1570, 16
  %v1764 = vrot.slane %v1762, 1
  %v1765 = vsel %vm1589, %v1760, %v1764
  %v1767 = vshrl.u32 %v1539, 16
  %v1769 = vshll.u32 %v1539, 16
  %v1771 = vrot.slane %v1769, 1
  %v1772 = vor.u32 %v1767, %v1771
  %v1774 = vshll.u32 %v1571, 16
  %v1776 = vrot.slane %v1774, 1
  %v1777 = vsel %vm1589, %v1772, %v1776
  %v1779 = vshrl.u32 %v1541, 16
  %v1781 = vshll.u32 %v1541, 16
  %v1783 = vrot.slane %v1781, 1
  %v1784 = vor.u32 %v1779, %v1783
  %v1786 = vshll.u32 %v1573, 16
  %v1788 = vrot.slane %v1786, 1
  %v1789 = vsel %vm1589, %v1784, %v1788
  %v1791 = vshrl.u32 %v1542, 16
  %v1793 = vshll.u32 %v1542, 16
  %v1795 = vrot.slane %v1793, 1
  %v1796 = vor.u32 %v1791, %v1795
  %v1798 = vshll.u32 %v1574, 16
  %v1800 = vrot.slane %v1798, 1
  %v1801 = vsel %vm1589, %v1796, %v1800
  %v1803 = vshrl.u32 %v1543, 16
  %v1805 = vshll.u32 %v1543, 16
  %v1807 = vrot.slane %v1805, 1
  %v1808 = vor.u32 %v1803, %v1807
  %v1810 = vshll.u32 %v1575, 16
  %v1812 = vrot.slane %v1810, 1
  %v1813 = vsel %vm1589, %v1808, %v1812
  %v1815 = vshrl.u32 %v1544, 16
  %v1817 = vshll.u32 %v1544, 16
  %v1819 = vrot.slane %v1817, 1
  %v1820 = vor.u32 %v1815, %v1819
  %v1822 = vshll.u32 %v1576, 16
  %v1824 = vrot.slane %v1822, 1
  %v1825 = vsel %vm1589, %v1820, %v1824
  %v1827 = vshrl.u32 %v1545, 16
  %v1829 = vshll.u32 %v1545, 16
  %v1831 = vrot.slane %v1829, 1
  %v1832 = vor.u32 %v1827, %v1831
  %v1834 = vshll.u32 %v1577, 16
  %v1836 = vrot.slane %v1834, 1
  %v1837 = vsel %vm1589, %v1832, %v1836
  %v1839 = vshrl.u32 %v1546, 16
  %v1841 = vshll.u32 %v1546, 16
  %v1843 = vrot.slane %v1841, 1
  %v1844 = vor.u32 %v1839, %v1843
  %v1846 = vshll.u32 %v1578, 16
  %v1848 = vrot.slane %v1846, 1
  %v1849 = vsel %vm1589, %v1844, %v1848
  %v1851 = vshrl.u32 %v1547, 16
  %v1853 = vshll.u32 %v1547, 16
  %v1855 = vrot.slane %v1853, 1
  %v1856 = vor.u32 %v1851, %v1855
  %v1858 = vshll.u32 %v1579, 16
  %v1860 = vrot.slane %v1858, 1
  %v1861 = vsel %vm1589, %v1856, %v1860
  %v1863 = vshrl.u32 %v1548, 16
  %v1865 = vshll.u32 %v1548, 16
  %v1867 = vrot.slane %v1865, 1
  %v1868 = vor.u32 %v1863, %v1867
  %v1870 = vshll.u32 %v1580, 16
  %v1872 = vrot.slane %v1870, 1
  %v1873 = vsel %vm1589, %v1868, %v1872
  %v1875 = vshrl.u32 %v1549, 16
  %v1877 = vshll.u32 %v1549, 16
  %v1879 = vrot.slane %v1877, 1
  %v1880 = vor.u32 %v1875, %v1879
  %v1882 = vshll.u32 %v1581, 16
  %v1884 = vrot.slane %v1882, 1
  %v1885 = vsel %vm1589, %v1880, %v1884
  %v1887 = vshrl.u32 %v1550, 16
  %v1889 = vshll.u32 %v1550, 16
  %v1891 = vrot.slane %v1889, 1
  %v1892 = vor.u32 %v1887, %v1891
  %v1894 = vshll.u32 %v1582, 16
  %v1896 = vrot.slane %v1894, 1
  %v1897 = vsel %vm1589, %v1892, %v1896
  %v1899 = vshrl.u32 %v1551, 16
  %v1901 = vshll.u32 %v1551, 16
  %v1903 = vrot.slane %v1901, 1
  %v1904 = vor.u32 %v1899, %v1903
  %v1906 = vshll.u32 %v1583, 16
  %v1908 = vrot.slane %v1906, 1
  %v1909 = vsel %vm1589, %v1904, %v1908
  %v1911 = vshrl.u32 %v1552, 16
  %v1913 = vshll.u32 %v1552, 16
  %v1915 = vrot.slane %v1913, 1
  %v1916 = vor.u32 %v1911, %v1915
  %v1918 = vshll.u32 %v1584, 16
  %v1920 = vrot.slane %v1918, 1
  %v1921 = vsel %vm1589, %v1916, %v1920
  %v1923 = vshrl.u32 %v1553, 16
  %v1925 = vshll.u32 %v1553, 16
  %v1927 = vrot.slane %v1925, 1
  %v1928 = vor.u32 %v1923, %v1927
  %v1930 = vshll.u32 %v1585, 16
  %v1932 = vrot.slane %v1930, 1
  %v1933 = vsel %vm1589, %v1928, %v1932
  %v1935 = vshrl.u32 %v1554, 16
  %v1937 = vshll.u32 %v1554, 16
  %v1939 = vrot.slane %v1937, 1
  %v1940 = vor.u32 %v1935, %v1939
  %v1942 = vshll.u32 %v1586, 16
  %v1944 = vrot.slane %v1942, 1
  %v1945 = vsel %vm1589, %v1940, %v1944
  %v1947 = vshrl.u32 %v1555, 16
  %v1949 = vshll.u32 %v1555, 16
  %v1951 = vrot.slane %v1949, 1
  %v1952 = vor.u32 %v1947, %v1951
  %v1954 = vshll.u32 %v1587, 16
  %v1956 = vrot.slane %v1954, 1
  %v1957 = vsel %vm1589, %v1952, %v1956
  %vm2050 = vcmask 1046528
  %v2051 = vrot.slane 0, 1
  %v2052 = vsel %vm2050, %v2051, %v2051
  %v2053 = vrot.slane %v1525, 1
  %v2054 = vrot.slane %v1557, 1
  %v2055 = vsel %vm2050, %v2053, %v2054
  %v2056 = vrot.slane %v1526, 1
  %v2057 = vrot.slane %v1558, 1
  %v2058 = vsel %vm2050, %v2056, %v2057
  %v2059 = vrot.slane %v1527, 1
  %v2060 = vrot.slane %v1559, 1
  %v2061 = vsel %vm2050, %v2059, %v2060
  %v2062 = vrot.slane %v1528, 1
  %v2063 = vrot.slane %v1560, 1
  %v2064 = vsel %vm2050, %v2062, %v2063
  %v2065 = vrot.slane %v1529, 1
  %v2066 = vrot.slane %v1561, 1
  %v2067 = vsel %vm2050, %v2065, %v2066
  %v2068 = vrot.slane %v1530, 1
  %v2069 = vrot.slane %v1562, 1
  %v2070 = vsel %vm2050, %v2068, %v2069
  %v2071 = vrot.slane %v1531, 1
  %v2072 = vrot.slane %v1563, 1
  %v2073 = vsel %vm2050, %v2071, %v2072
  %v2074 = vrot.slane %v1532, 1
  %v2075 = vrot.slane %v1564, 1
  %v2076 = vsel %vm2050, %v2074, %v2075
  %v2077 = vrot.slane %v1533, 1
  %v2078 = vrot.slane %v1565, 1
  %v2079 = vsel %vm2050, %v2077, %v2078
  %v2080 = vrot.slane %v1534, 1
  %v2081 = vrot.slane %v1566, 1
  %v2082 = vsel %vm2050, %v2080, %v2081
  %v2083 = vrot.slane %v1535, 1
  %v2084 = vrot.slane %v1567, 1
  %v2085 = vsel %vm2050, %v2083, %v2084
  %v2086 = vrot.slane %v1536, 1
  %v2087 = vrot.slane %v1568, 1
  %v2088 = vsel %vm2050, %v2086, %v2087
  %v2089 = vrot.slane %v1537, 1
  %v2090 = vrot.slane %v1569, 1
  %v2091 = vsel %vm2050, %v2089, %v2090
  %v2092 = vrot.slane %v1538, 1
  %v2093 = vrot.slane %v1570, 1
  %v2094 = vsel %vm2050, %v2092, %v2093
  %v2095 = vrot.slane %v1539, 1
  %v2096 = vrot.slane %v1571, 1
  %v2097 = vsel %vm2050, %v2095, %v2096
  %v2098 = vrot.slane %v1541, 1
  %v2099 = vrot.slane %v1573, 1
  %v2100 = vsel %vm2050, %v2098, %v2099
  %v2101 = vrot.slane %v1542, 1
  %v2102 = vrot.slane %v1574, 1
  %v2103 = vsel %vm2050, %v2101, %v2102
  %v2104 = vrot.slane %v1543, 1
  %v2105 = vrot.slane %v1575, 1
  %v2106 = vsel %vm2050, %v2104, %v2105
  %v2107 = vrot.slane %v1544, 1
  %v2108 = vrot.slane %v1576, 1
  %v2109 = vsel %vm2050, %v2107, %v2108
  %v2110 = vrot.slane %v1545, 1
  %v2111 = vrot.slane %v1577, 1
  %v2112 = vsel %vm2050, %v2110, %v2111
  %v2113 = vrot.slane %v1546, 1
  %v2114 = vrot.slane %v1578, 1
  %v2115 = vsel %vm2050, %v2113, %v2114
  %v2116 = vrot.slane %v1547, 1
  %v2117 = vrot.slane %v1579, 1
  %v2118 = vsel %vm2050, %v2116, %v2117
  %v2119 = vrot.slane %v1548, 1
  %v2120 = vrot.slane %v1580, 1
  %v2121 = vsel %vm2050, %v2119, %v2120
  %v2122 = vrot.slane %v1549, 1
  %v2123 = vrot.slane %v1581, 1
  %v2124 = vsel %vm2050, %v2122, %v2123
  %v2125 = vrot.slane %v1550, 1
  %v2126 = vrot.slane %v1582, 1
  %v2127 = vsel %vm2050, %v2125, %v2126
  %v2128 = vrot.slane %v1551, 1
  %v2129 = vrot.slane %v1583, 1
  %v2130 = vsel %vm2050, %v2128, %v2129
  %v2131 = vrot.slane %v1552, 1
  %v2132 = vrot.slane %v1584, 1
  %v2133 = vsel %vm2050, %v2131, %v2132
  %v2134 = vrot.slane %v1553, 1
  %v2135 = vrot.slane %v1585, 1
  %v2136 = vsel %vm2050, %v2134, %v2135
  %v2137 = vrot.slane %v1554, 1
  %v2138 = vrot.slane %v1586, 1
  %v2139 = vsel %vm2050, %v2137, %v2138
  %v2140 = vrot.slane %v1555, 1
  %v2141 = vrot.slane %v1587, 1
  %v2142 = vsel %vm2050, %v2140, %v2141
  %v2175 = vshrl.u32 %v1540, 16
  %v2177 = vshll.u32 %v1540, 16
  %v2179 = vrot.slane %v2177, 1
  %v2180 = vor.u32 %v2175, %v2179
  %v2182 = vshll.u32 %v1572, 16
  %v2184 = vrot.slane %v2182, 1
  %v2185 = vsel %vm1589, %v2180, %v2184
  %v2187 = vshrl.u32 %v1556, 16
  %v2189 = vshll.u32 %v1556, 16
  %v2191 = vrot.slane %v2189, 1
  %v2192 = vor.u32 %v2187, %v2191
  %v2194 = vshll.u32 %v1588, 16
  %v2196 = vrot.slane %v2194, 1
  %v2197 = vsel %vm1589, %v2192, %v2196
  %v2204 = vrot.slane %v1540, 1
  %v2205 = vrot.slane %v1572, 1
  %v2206 = vsel %vm2050, %v2204, %v2205
  %v2207 = vrot.slane %v1556, 1
  %v2208 = vrot.slane %v1588, 1
  %v2209 = vsel %vm2050, %v2207, %v2208
  %v2212 = vld [vmem:[%s2] sm:$0xf]
  %v2213 = vld [vmem:[%s2 + $0x4] sm:$0xf]
  %v2214 = vld [vmem:[%s2 + $0x8] sm:$0xf]
  %v2215 = vld [vmem:[%s2 + $0xc] sm:$0xf]
  %v2216 = vld [vmem:[%s2 + $0x10] sm:$0xf]
  %v2217 = vld [vmem:[%s2 + $0x14] sm:$0xf]
  %v2218 = vld [vmem:[%s2 + $0x18] sm:$0xf]
  %v2219 = vld [vmem:[%s2 + $0x1c] sm:$0xf]
  %v2220 = vld [vmem:[%s2 + $0x20] sm:$0xf]
  %v2221 = vld [vmem:[%s2 + $0x24] sm:$0xf]
  %v2222 = vld [vmem:[%s2 + $0x28] sm:$0xf]
  %v2223 = vld [vmem:[%s2 + $0x2c] sm:$0xf]
  %v2224 = vld [vmem:[%s2 + $0x30] sm:$0xf]
  %v2225 = vld [vmem:[%s2 + $0x34] sm:$0xf]
  %v2226 = vld [vmem:[%s2 + $0x38] sm:$0xf]
  %v2227 = vld [vmem:[%s2 + $0x3c] sm:$0xf]
  %v2228 = vld [vmem:[%s2 + $0x40] sm:$0xf]
  %v2229 = vld [vmem:[%s2 + $0x44] sm:$0xf]
  %v2230 = vld [vmem:[%s2 + $0x48] sm:$0xf]
  %v2231 = vld [vmem:[%s2 + $0x4c] sm:$0xf]
  %v2232 = vld [vmem:[%s2 + $0x50] sm:$0xf]
  %v2233 = vld [vmem:[%s2 + $0x54] sm:$0xf]
  %v2234 = vld [vmem:[%s2 + $0x58] sm:$0xf]
  %v2235 = vld [vmem:[%s2 + $0x5c] sm:$0xf]
  %v2236 = vld [vmem:[%s2 + $0x60] sm:$0xf]
  %v2237 = vld [vmem:[%s2 + $0x64] sm:$0xf]
  %v2238 = vld [vmem:[%s2 + $0x68] sm:$0xf]
  %v2239 = vld [vmem:[%s2 + $0x6c] sm:$0xf]
  %v2240 = vld [vmem:[%s2 + $0x70] sm:$0xf]
  %v2241 = vld [vmem:[%s2 + $0x74] sm:$0xf]
  %v2242 = vld [vmem:[%s2 + $0x78] sm:$0xf]
  %v2243 = vld [vmem:[%s2 + $0x7c] sm:$0xf]
  %v2244 = vld [vmem:[%s2 + $0x80] sm:$0xf]
  %v2245 = vld [vmem:[%s2 + $0x84] sm:$0xf]
  %v2246 = vld [vmem:[%s2 + $0x88] sm:$0xf]
  %v2247 = vld [vmem:[%s2 + $0x8c] sm:$0xf]
  %v2248 = vld [vmem:[%s2 + $0x90] sm:$0xf]
  %v2249 = vld [vmem:[%s2 + $0x94] sm:$0xf]
  %v2250 = vld [vmem:[%s2 + $0x98] sm:$0xf]
  %v2251 = vld [vmem:[%s2 + $0x9c] sm:$0xf]
  %v2252 = vld [vmem:[%s2 + $0xa0] sm:$0xf]
  %v2253 = vld [vmem:[%s2 + $0xa4] sm:$0xf]
  %v2254 = vld [vmem:[%s2 + $0xa8] sm:$0xf]
  %v2255 = vld [vmem:[%s2 + $0xac] sm:$0xf]
  %v2256 = vld [vmem:[%s2 + $0xb0] sm:$0xf]
  %v2257 = vld [vmem:[%s2 + $0xb4] sm:$0xf]
  %v2258 = vld [vmem:[%s2 + $0xb8] sm:$0xf]
  %v2259 = vld [vmem:[%s2 + $0xbc] sm:$0xf]
  %v2260 = vld [vmem:[%s2 + $0xc0] sm:$0xf]
  %v2261 = vld [vmem:[%s2 + $0xc4] sm:$0xf]
  %v2262 = vld [vmem:[%s2 + $0xc8] sm:$0xf]
  %v2263 = vld [vmem:[%s2 + $0xcc] sm:$0xf]
  %v2264 = vld [vmem:[%s2 + $0xd0] sm:$0xf]
  %v2265 = vld [vmem:[%s2 + $0xd4] sm:$0xf]
  %v2266 = vld [vmem:[%s2 + $0xd8] sm:$0xf]
  %v2267 = vld [vmem:[%s2 + $0xdc] sm:$0xf]
  %v2268 = vld [vmem:[%s2 + $0xe0] sm:$0xf]
  %v2269 = vld [vmem:[%s2 + $0xe4] sm:$0xf]
  %v2270 = vld [vmem:[%s2 + $0xe8] sm:$0xf]
  %v2271 = vld [vmem:[%s2 + $0xec] sm:$0xf]
  %v2272 = vld [vmem:[%s2 + $0xf0] sm:$0xf]
  %v2273 = vld [vmem:[%s2 + $0xf4] sm:$0xf]
  %v2274 = vld [vmem:[%s2 + $0xf8] sm:$0xf]
  %v2275 = vld [vmem:[%s2 + $0xfc] sm:$0xf]
  %v2276 = vld [vmem:[%s2 + $0x100] sm:$0xf]
  %v2277 = vld [vmem:[%s2 + $0x104] sm:$0xf]
  %v2278 = vld [vmem:[%s2 + $0x108] sm:$0xf]
  %v2279 = vld [vmem:[%s2 + $0x10c] sm:$0xf]
  %v2280 = vld [vmem:[%s2 + $0x110] sm:$0xf]
  %v2281 = vld [vmem:[%s2 + $0x114] sm:$0xf]
  %v2282 = vld [vmem:[%s2 + $0x118] sm:$0xf]
  %v2283 = vld [vmem:[%s2 + $0x11c] sm:$0xf]
  %v2284 = vld [vmem:[%s2 + $0x120] sm:$0xf]
  %v2285 = vld [vmem:[%s2 + $0x124] sm:$0xf]
  %v2286 = vld [vmem:[%s2 + $0x128] sm:$0xf]
  %v2287 = vld [vmem:[%s2 + $0x12c] sm:$0xf]
  %v2288 = vld [vmem:[%s2 + $0x130] sm:$0xf]
  %v2289 = vld [vmem:[%s2 + $0x134] sm:$0xf]
  %v2290 = vld [vmem:[%s2 + $0x138] sm:$0xf]
  %v2291 = vld [vmem:[%s2 + $0x13c] sm:$0xf]
  %v2292 = vld [vmem:[%s2 + $0x140] sm:$0xf]
  %v2293 = vld [vmem:[%s2 + $0x144] sm:$0xf]
  %v2294 = vld [vmem:[%s2 + $0x148] sm:$0xf]
  %v2295 = vld [vmem:[%s2 + $0x14c] sm:$0xf]
  %v2296 = vld [vmem:[%s2 + $0x150] sm:$0xf]
  %v2297 = vld [vmem:[%s2 + $0x154] sm:$0xf]
  %v2298 = vld [vmem:[%s2 + $0x158] sm:$0xf]
  %v2299 = vld [vmem:[%s2 + $0x15c] sm:$0xf]
  %v2300 = vld [vmem:[%s2 + $0x160] sm:$0xf]
  %v2301 = vld [vmem:[%s2 + $0x164] sm:$0xf]
  %v2302 = vld [vmem:[%s2 + $0x168] sm:$0xf]
  %v2303 = vld [vmem:[%s2 + $0x16c] sm:$0xf]
  %v2304 = vld [vmem:[%s2 + $0x170] sm:$0xf]
  %v2305 = vld [vmem:[%s2 + $0x174] sm:$0xf]
  %v2306 = vld [vmem:[%s2 + $0x178] sm:$0xf]
  %v2307 = vld [vmem:[%s2 + $0x17c] sm:$0xf]
  %v2308 = vld [vmem:[%s2 + $0x180] sm:$0xf]
  %v2309 = vld [vmem:[%s2 + $0x184] sm:$0xf]
  %v2310 = vld [vmem:[%s2 + $0x188] sm:$0xf]
  %v2311 = vld [vmem:[%s2 + $0x18c] sm:$0xf]
  %v2312 = vld [vmem:[%s2 + $0x190] sm:$0xf]
  %v2313 = vld [vmem:[%s2 + $0x194] sm:$0xf]
  %v2314 = vld [vmem:[%s2 + $0x198] sm:$0xf]
  %v2315 = vld [vmem:[%s2 + $0x19c] sm:$0xf]
  %v2316 = vld [vmem:[%s2 + $0x1a0] sm:$0xf]
  %v2317 = vld [vmem:[%s2 + $0x1a4] sm:$0xf]
  %v2318 = vld [vmem:[%s2 + $0x1a8] sm:$0xf]
  %v2319 = vld [vmem:[%s2 + $0x1ac] sm:$0xf]
  %v2320 = vld [vmem:[%s2 + $0x1b0] sm:$0xf]
  %v2321 = vld [vmem:[%s2 + $0x1b4] sm:$0xf]
  %v2322 = vld [vmem:[%s2 + $0x1b8] sm:$0xf]
  %v2323 = vld [vmem:[%s2 + $0x1bc] sm:$0xf]
  %v2324 = vld [vmem:[%s2 + $0x1c0] sm:$0xf]
  %v2325 = vld [vmem:[%s2 + $0x1c4] sm:$0xf]
  %v2326 = vld [vmem:[%s2 + $0x1c8] sm:$0xf]
  %v2327 = vld [vmem:[%s2 + $0x1cc] sm:$0xf]
  %v2328 = vld [vmem:[%s2 + $0x1d0] sm:$0xf]
  %v2329 = vld [vmem:[%s2 + $0x1d4] sm:$0xf]
  %v2330 = vld [vmem:[%s2 + $0x1d8] sm:$0xf]
  %v2331 = vld [vmem:[%s2 + $0x1dc] sm:$0xf]
  %v2332 = vld [vmem:[%s2 + $0x1e0] sm:$0xf]
  %v2333 = vld [vmem:[%s2 + $0x1e4] sm:$0xf]
  %v2334 = vld [vmem:[%s2 + $0x1e8] sm:$0xf]
  %v2335 = vld [vmem:[%s2 + $0x1ec] sm:$0xf]
  %v2336 = vld [vmem:[%s2 + $0x1f0] sm:$0xf]
  %v2337 = vld [vmem:[%s2 + $0x1f4] sm:$0xf]
  %v2338 = vld [vmem:[%s2 + $0x1f8] sm:$0xf]
  %v2339 = vld [vmem:[%s2 + $0x1fc] sm:$0xf]
  %v2340 = vld [vmem:[%s2 + $0x200] sm:$0xf]
  %v2341 = vld [vmem:[%s2 + $0x204] sm:$0xf]
  %v2342 = vld [vmem:[%s2 + $0x208] sm:$0xf]
  %v2343 = vld [vmem:[%s2 + $0x20c] sm:$0xf]
  %v2344 = vld [vmem:[%s2 + $0x210] sm:$0xf]
  %v2345 = vld [vmem:[%s2 + $0x214] sm:$0xf]
  %v2346 = vld [vmem:[%s2 + $0x218] sm:$0xf]
  %v2347 = vld [vmem:[%s2 + $0x21c] sm:$0xf]
  %v2348 = vld [vmem:[%s2 + $0x220] sm:$0xf]
  %v2349 = vld [vmem:[%s2 + $0x224] sm:$0xf]
  %v2350 = vld [vmem:[%s2 + $0x228] sm:$0xf]
  %v2351 = vld [vmem:[%s2 + $0x22c] sm:$0xf]
  %v2352 = vld [vmem:[%s2 + $0x230] sm:$0xf]
  %v2353 = vld [vmem:[%s2 + $0x234] sm:$0xf]
  %v2354 = vld [vmem:[%s2 + $0x238] sm:$0xf]
  %v2355 = vld [vmem:[%s2 + $0x23c] sm:$0xf]
  %v2500 = vunpack.c.l.b16 %v2212
  %v2501 = vunpack.c.l.b16 %v2213
  %v2502 = vunpack.c.l.b16 %v2214
  %v2503 = vunpack.c.l.b16 %v2215
  %v2504 = vunpack.c.l.b16 %v2216
  %v2505 = vunpack.c.l.b16 %v2217
  %v2506 = vunpack.c.l.b16 %v2218
  %v2507 = vunpack.c.l.b16 %v2219
  %v2508 = vunpack.c.l.b16 %v2220
  %v2509 = vunpack.c.l.b16 %v2221
  %v2510 = vunpack.c.l.b16 %v2222
  %v2511 = vunpack.c.l.b16 %v2223
  %v2512 = vunpack.c.l.b16 %v2224
  %v2513 = vunpack.c.l.b16 %v2225
  %v2514 = vunpack.c.l.b16 %v2226
  %v2515 = vunpack.c.l.b16 %v2227
  %v2516 = vunpack.c.l.b16 %v2228
  %v2517 = vunpack.c.l.b16 %v2229
  %v2518 = vunpack.c.l.b16 %v2230
  %v2519 = vunpack.c.l.b16 %v2231
  %v2520 = vunpack.c.l.b16 %v2232
  %v2521 = vunpack.c.l.b16 %v2233
  %v2522 = vunpack.c.l.b16 %v2234
  %v2523 = vunpack.c.l.b16 %v2235
  %v2524 = vunpack.c.l.b16 %v2236
  %v2525 = vunpack.c.l.b16 %v2237
  %v2526 = vunpack.c.l.b16 %v2238
  %v2527 = vunpack.c.l.b16 %v2239
  %v2528 = vunpack.c.l.b16 %v2240
  %v2529 = vunpack.c.l.b16 %v2241
  %v2530 = vunpack.c.l.b16 %v2242
  %v2531 = vunpack.c.l.b16 %v2243
  %v2532 = vunpack.c.l.b16 %v2244
  %v2533 = vunpack.c.l.b16 %v2245
  %v2534 = vunpack.c.l.b16 %v2246
  %v2535 = vunpack.c.l.b16 %v2247
  %v2536 = vunpack.c.l.b16 %v2248
  %v2537 = vunpack.c.l.b16 %v2249
  %v2538 = vunpack.c.l.b16 %v2250
  %v2539 = vunpack.c.l.b16 %v2251
  %v2540 = vunpack.c.l.b16 %v2252
  %v2541 = vunpack.c.l.b16 %v2253
  %v2542 = vunpack.c.l.b16 %v2254
  %v2543 = vunpack.c.l.b16 %v2255
  %v2544 = vunpack.c.l.b16 %v2256
  %v2545 = vunpack.c.l.b16 %v2257
  %v2546 = vunpack.c.l.b16 %v2258
  %v2547 = vunpack.c.l.b16 %v2259
  %v2548 = vunpack.c.l.b16 %v2260
  %v2549 = vunpack.c.l.b16 %v2261
  %v2550 = vunpack.c.l.b16 %v2262
  %v2551 = vunpack.c.l.b16 %v2263
  %v2552 = vunpack.c.l.b16 %v2264
  %v2553 = vunpack.c.l.b16 %v2265
  %v2554 = vunpack.c.l.b16 %v2266
  %v2555 = vunpack.c.l.b16 %v2267
  %v2556 = vunpack.c.l.b16 %v2268
  %v2557 = vunpack.c.l.b16 %v2269
  %v2558 = vunpack.c.l.b16 %v2270
  %v2559 = vunpack.c.l.b16 %v2271
  %v2560 = vunpack.c.l.b16 %v2272
  %v2561 = vunpack.c.l.b16 %v2273
  %v2562 = vunpack.c.l.b16 %v2274
  %v2563 = vunpack.c.l.b16 %v2275
  %v2564 = vunpack.c.l.b16 %v2276
  %v2565 = vunpack.c.l.b16 %v2277
  %v2566 = vunpack.c.l.b16 %v2278
  %v2567 = vunpack.c.l.b16 %v2279
  %v2568 = vunpack.c.l.b16 %v2280
  %v2569 = vunpack.c.l.b16 %v2281
  %v2570 = vunpack.c.l.b16 %v2282
  %v2571 = vunpack.c.l.b16 %v2283
  %v2572 = vunpack.c.l.b16 %v2284
  %v2573 = vunpack.c.l.b16 %v2285
  %v2574 = vunpack.c.l.b16 %v2286
  %v2575 = vunpack.c.l.b16 %v2287
  %v2576 = vunpack.c.l.b16 %v2288
  %v2577 = vunpack.c.l.b16 %v2289
  %v2578 = vunpack.c.l.b16 %v2290
  %v2579 = vunpack.c.l.b16 %v2291
  %v2580 = vunpack.c.l.b16 %v2292
  %v2581 = vunpack.c.l.b16 %v2293
  %v2582 = vunpack.c.l.b16 %v2294
  %v2583 = vunpack.c.l.b16 %v2295
  %v2584 = vunpack.c.l.b16 %v2296
  %v2585 = vunpack.c.l.b16 %v2297
  %v2586 = vunpack.c.l.b16 %v2298
  %v2587 = vunpack.c.l.b16 %v2299
  %v2588 = vunpack.c.l.b16 %v2300
  %v2589 = vunpack.c.l.b16 %v2301
  %v2590 = vunpack.c.l.b16 %v2302
  %v2591 = vunpack.c.l.b16 %v2303
  %v2592 = vunpack.c.l.b16 %v2304
  %v2593 = vunpack.c.l.b16 %v2305
  %v2594 = vunpack.c.l.b16 %v2306
  %v2595 = vunpack.c.l.b16 %v2307
  %v2596 = vunpack.c.l.b16 %v2308
  %v2597 = vunpack.c.l.b16 %v2309
  %v2598 = vunpack.c.l.b16 %v2310
  %v2599 = vunpack.c.l.b16 %v2311
  %v2600 = vunpack.c.l.b16 %v2312
  %v2601 = vunpack.c.l.b16 %v2313
  %v2602 = vunpack.c.l.b16 %v2314
  %v2603 = vunpack.c.l.b16 %v2315
  %v2604 = vunpack.c.l.b16 %v2316
  %v2605 = vunpack.c.l.b16 %v2317
  %v2606 = vunpack.c.l.b16 %v2318
  %v2607 = vunpack.c.l.b16 %v2319
  %v2608 = vunpack.c.l.b16 %v2320
  %v2609 = vunpack.c.l.b16 %v2321
  %v2610 = vunpack.c.l.b16 %v2322
  %v2611 = vunpack.c.l.b16 %v2323
  %v2612 = vunpack.c.l.b16 %v2324
  %v2613 = vunpack.c.l.b16 %v2325
  %v2614 = vunpack.c.l.b16 %v2326
  %v2615 = vunpack.c.l.b16 %v2327
  %v2616 = vunpack.c.l.b16 %v2328
  %v2617 = vunpack.c.l.b16 %v2329
  %v2618 = vunpack.c.l.b16 %v2330
  %v2619 = vunpack.c.l.b16 %v2331
  %v2620 = vunpack.c.l.b16 %v2332
  %v2621 = vunpack.c.l.b16 %v2333
  %v2622 = vunpack.c.l.b16 %v2334
  %v2623 = vunpack.c.l.b16 %v2335
  %v2624 = vunpack.c.l.b16 %v2336
  %v2625 = vunpack.c.l.b16 %v2337
  %v2626 = vunpack.c.l.b16 %v2338
  %v2627 = vunpack.c.l.b16 %v2339
  %v2628 = vunpack.c.l.b16 %v2340
  %v2629 = vunpack.c.l.b16 %v2341
  %v2630 = vunpack.c.l.b16 %v2342
  %v2631 = vunpack.c.l.b16 %v2343
  %v2632 = vunpack.c.l.b16 %v2344
  %v2633 = vunpack.c.l.b16 %v2345
  %v2634 = vunpack.c.l.b16 %v2346
  %v2635 = vunpack.c.l.b16 %v2347
  %v2636 = vunpack.c.l.b16 %v2348
  %v2637 = vunpack.c.l.b16 %v2349
  %v2638 = vunpack.c.l.b16 %v2350
  %v2639 = vunpack.c.l.b16 %v2351
  %v2640 = vunpack.c.l.b16 %v2352
  %v2641 = vunpack.c.l.b16 %v2353
  %v2642 = vunpack.c.l.b16 %v2354
  %v2643 = vunpack.c.l.b16 %v2355
  %v2644 = vpack.c.b16 %v2501, %v2500
  %v2645 = vpack.c.b16 %v2503, %v2502
  %v2646 = vpack.c.b16 %v2505, %v2504
  %v2647 = vpack.c.b16 %v2507, %v2506
  %v2648 = vpack.c.b16 %v2509, %v2508
  %v2649 = vpack.c.b16 %v2511, %v2510
  %v2650 = vpack.c.b16 %v2513, %v2512
  %v2651 = vpack.c.b16 %v2515, %v2514
  %v2652 = vpack.c.b16 %v2517, %v2516
  %v2653 = vpack.c.b16 %v2519, %v2518
  %v2654 = vpack.c.b16 %v2521, %v2520
  %v2655 = vpack.c.b16 %v2523, %v2522
  %v2656 = vpack.c.b16 %v2525, %v2524
  %v2657 = vpack.c.b16 %v2527, %v2526
  %v2658 = vpack.c.b16 %v2529, %v2528
  %v2659 = vpack.c.b16 %v2531, %v2530
  %v2660 = vpack.c.b16 %v2533, %v2532
  %v2661 = vpack.c.b16 %v2535, %v2534
  %v2662 = vpack.c.b16 %v2537, %v2536
  %v2663 = vpack.c.b16 %v2539, %v2538
  %v2664 = vpack.c.b16 %v2541, %v2540
  %v2665 = vpack.c.b16 %v2543, %v2542
  %v2666 = vpack.c.b16 %v2545, %v2544
  %v2667 = vpack.c.b16 %v2547, %v2546
  %v2668 = vpack.c.b16 %v2549, %v2548
  %v2669 = vpack.c.b16 %v2551, %v2550
  %v2670 = vpack.c.b16 %v2553, %v2552
  %v2671 = vpack.c.b16 %v2555, %v2554
  %v2672 = vpack.c.b16 %v2557, %v2556
  %v2673 = vpack.c.b16 %v2559, %v2558
  %v2674 = vpack.c.b16 %v2561, %v2560
  %v2675 = vpack.c.b16 %v2563, %v2562
  %v2676 = vpack.c.b16 %v2565, %v2564
  %v2677 = vpack.c.b16 %v2567, %v2566
  %v2678 = vpack.c.b16 %v2569, %v2568
  %v2679 = vpack.c.b16 %v2571, %v2570
  %v2680 = vpack.c.b16 %v2573, %v2572
  %v2681 = vpack.c.b16 %v2575, %v2574
  %v2682 = vpack.c.b16 %v2577, %v2576
  %v2683 = vpack.c.b16 %v2579, %v2578
  %v2684 = vpack.c.b16 %v2581, %v2580
  %v2685 = vpack.c.b16 %v2583, %v2582
  %v2686 = vpack.c.b16 %v2585, %v2584
  %v2687 = vpack.c.b16 %v2587, %v2586
  %v2688 = vpack.c.b16 %v2589, %v2588
  %v2689 = vpack.c.b16 %v2591, %v2590
  %v2690 = vpack.c.b16 %v2593, %v2592
  %v2691 = vpack.c.b16 %v2595, %v2594
  %v2692 = vpack.c.b16 %v2597, %v2596
  %v2693 = vpack.c.b16 %v2599, %v2598
  %v2694 = vpack.c.b16 %v2601, %v2600
  %v2695 = vpack.c.b16 %v2603, %v2602
  %v2696 = vpack.c.b16 %v2605, %v2604
  %v2697 = vpack.c.b16 %v2607, %v2606
  %v2698 = vpack.c.b16 %v2609, %v2608
  %v2699 = vpack.c.b16 %v2611, %v2610
  %v2700 = vpack.c.b16 %v2613, %v2612
  %v2701 = vpack.c.b16 %v2615, %v2614
  %v2702 = vpack.c.b16 %v2617, %v2616
  %v2703 = vpack.c.b16 %v2619, %v2618
  %v2704 = vpack.c.b16 %v2621, %v2620
  %v2705 = vpack.c.b16 %v2623, %v2622
  %v2706 = vpack.c.b16 %v2625, %v2624
  %v2707 = vpack.c.b16 %v2627, %v2626
  %v2708 = vpack.c.b16 %v2629, %v2628
  %v2709 = vpack.c.b16 %v2631, %v2630
  %v2710 = vpack.c.b16 %v2633, %v2632
  %v2711 = vpack.c.b16 %v2635, %v2634
  %v2712 = vpack.c.b16 %v2637, %v2636
  %v2713 = vpack.c.b16 %v2639, %v2638
  %v2714 = vpack.c.b16 %v2641, %v2640
  %v2715 = vpack.c.b16 %v2643, %v2642
  %2788 = vmatprep.subr.bf16.mxu0 0
  %2789 = vmatpush1.bf16.msra.mxu0 %v2644
  %2790 = vmatprep.subr.bf16.mxu0 0
  %2791 = vmatpush1.bf16.msra.mxu0 %v2645
  %2792 = vmatprep.subr.bf16.mxu0 0
  %2793 = vmatpush1.bf16.msra.mxu0 %v2646
  %2794 = vmatprep.subr.bf16.mxu0 0
  %2795 = vmatpush1.bf16.msra.mxu0 %v2647
  %2796 = vmatprep.subr.bf16.mxu0 0
  %2797 = vmatpush1.bf16.msra.mxu0 %v2648
  %2798 = vmatprep.subr.bf16.mxu0 0
  %2799 = vmatpush1.bf16.msra.mxu0 %v2649
  %2800 = vmatprep.subr.bf16.mxu0 0
  %2801 = vmatpush1.bf16.msra.mxu0 %v2650
  %2802 = vmatprep.subr.bf16.mxu0 0
  %2803 = vmatpush1.bf16.msra.mxu0 %v2651
  %2804 = vmatprep.subr.bf16.mxu0 0
  %2805 = vmatpush1.bf16.msra.mxu0 %v2652
  %2806 = vmatprep.subr.bf16.mxu0 0
  %2807 = vmatpush1.bf16.msra.mxu0 %v2653
  %2808 = vmatprep.subr.bf16.mxu0 0
  %2809 = vmatpush1.bf16.msra.mxu0 %v2654
  %2810 = vmatprep.subr.bf16.mxu0 0
  %2811 = vmatpush1.bf16.msra.mxu0 %v2655
  %2812 = vmatprep.subr.bf16.mxu0 0
  %2813 = vmatpush1.bf16.msra.mxu0 %v2656
  %2814 = vmatprep.subr.bf16.mxu0 0
  %2815 = vmatpush1.bf16.msra.mxu0 %v2657
  %2816 = vmatprep.subr.bf16.mxu0 0
  %2817 = vmatpush1.bf16.msra.mxu0 %v2658
  %2818 = vmatprep.subr.bf16.mxu0 0
  %2819 = vmatpush1.bf16.msra.mxu0 %v2659
  %2820 = vmatprep.mubr.bf16.mxu0 %v1597
  %2821 = vmatmul.mubr.bf16.gmra.mrb[0].mxu0 0
  %v2822 = vpop.f32.mrb[0].mxu0
  %v2823 = vadd.f32 0.0, %v2822
  %v2824 = vpop.f32.mrb[0].mxu0
  %v2825 = vpop.f32.mrb[0].mxu0
  %v2826 = vadd.f32 0.0, %v2825
  %v2827 = vpop.f32.mrb[0].mxu0
  %2828 = vmatprep.mubr.bf16.mxu0 %v1609
  %2829 = vmatmul.mubr.bf16.gmra.mrb[0].mxu0 %v1525
  %v2830 = vpop.f32.mrb[0].mxu0
  %v2831 = vadd.f32 0.0, %v2830
  %v2832 = vpop.f32.mrb[0].mxu0
  %v2833 = vpop.f32.mrb[0].mxu0
  %v2834 = vadd.f32 0.0, %v2833
  %v2835 = vpop.f32.mrb[0].mxu0
  %2836 = vmatprep.mubr.bf16.mxu0 %v1621
  %2837 = vmatmul.mubr.bf16.gmra.mrb[0].mxu0 %v1526
  %v2838 = vpop.f32.mrb[0].mxu0
  %v2839 = vadd.f32 0.0, %v2838
  %v2840 = vpop.f32.mrb[0].mxu0
  %v2841 = vpop.f32.mrb[0].mxu0
  %v2842 = vadd.f32 0.0, %v2841
  %v2843 = vpop.f32.mrb[0].mxu0
  %2844 = vmatprep.mubr.bf16.mxu0 %v1633
  %2845 = vmatmul.mubr.bf16.gmra.mrb[0].mxu0 %v1527
  %v2846 = vpop.f32.mrb[0].mxu0
  %v2847 = vadd.f32 0.0, %v2846
  %v2848 = vpop.f32.mrb[0].mxu0
  %v2849 = vpop.f32.mrb[0].mxu0
  %v2850 = vadd.f32 0.0, %v2849
  %v2851 = vpop.f32.mrb[0].mxu0
  %2852 = vmatprep.mubr.bf16.mxu0 %v1645
  %2853 = vmatmul.mubr.bf16.gmra.mrb[0].mxu0 %v1528
  %v2854 = vpop.f32.mrb[0].mxu0
  %v2855 = vadd.f32 0.0, %v2854
  %v2856 = vpop.f32.mrb[0].mxu0
  %v2857 = vpop.f32.mrb[0].mxu0
  %v2858 = vadd.f32 0.0, %v2857
  %v2859 = vpop.f32.mrb[0].mxu0
  %2860 = vmatprep.mubr.bf16.mxu0 %v1657
  %2861 = vmatmul.mubr.bf16.gmra.mrb[0].mxu0 %v1529
  %v2862 = vpop.f32.mrb[0].mxu0
  %v2863 = vadd.f32 0.0, %v2862
  %v2864 = vpop.f32.mrb[0].mxu0
  %v2865 = vpop.f32.mrb[0].mxu0
  %v2866 = vadd.f32 0.0, %v2865
  %v2867 = vpop.f32.mrb[0].mxu0
  %2868 = vmatprep.mubr.bf16.mxu0 %v1669
  %2869 = vmatmul.mubr.bf16.gmra.mrb[0].mxu0 %v1530
  %v2870 = vpop.f32.mrb[0].mxu0
  %v2871 = vadd.f32 0.0, %v2870
  %v2872 = vpop.f32.mrb[0].mxu0
  %v2873 = vpop.f32.mrb[0].mxu0
  %v2874 = vadd.f32 0.0, %v2873
  %v2875 = vpop.f32.mrb[0].mxu0
  %2876 = vmatprep.mubr.bf16.mxu0 %v1681
  %2877 = vmatmul.mubr.bf16.gmra.mrb[0].mxu0 %v1531
  %v2878 = vpop.f32.mrb[0].mxu0
  %v2879 = vadd.f32 0.0, %v2878
  %v2880 = vpop.f32.mrb[0].mxu0
  %v2881 = vpop.f32.mrb[0].mxu0
  %v2882 = vadd.f32 0.0, %v2881
  %v2883 = vpop.f32.mrb[0].mxu0
  %2884 = vmatprep.mubr.bf16.mxu0 %v1693
  %2885 = vmatmul.mubr.bf16.gmra.mrb[0].mxu0 %v1532
  %v2886 = vpop.f32.mrb[0].mxu0
  %v2887 = vadd.f32 0.0, %v2886
  %v2888 = vpop.f32.mrb[0].mxu0
  %v2889 = vpop.f32.mrb[0].mxu0
  %v2890 = vadd.f32 0.0, %v2889
  %v2891 = vpop.f32.mrb[0].mxu0
  %2892 = vmatprep.mubr.bf16.mxu0 %v1705
  %2893 = vmatmul.mubr.bf16.gmra.mrb[0].mxu0 %v1533
  %v2894 = vpop.f32.mrb[0].mxu0
  %v2895 = vadd.f32 0.0, %v2894
  %v2896 = vpop.f32.mrb[0].mxu0
  %v2897 = vpop.f32.mrb[0].mxu0
  %v2898 = vadd.f32 0.0, %v2897
  %v2899 = vpop.f32.mrb[0].mxu0
  %2900 = vmatprep.mubr.bf16.mxu0 %v1717
  %2901 = vmatmul.mubr.bf16.gmra.mrb[0].mxu0 %v1534
  %v2902 = vpop.f32.mrb[0].mxu0
  %v2903 = vadd.f32 0.0, %v2902
  %v2904 = vpop.f32.mrb[0].mxu0
  %v2905 = vpop.f32.mrb[0].mxu0
  %v2906 = vadd.f32 0.0, %v2905
  %v2907 = vpop.f32.mrb[0].mxu0
  %2908 = vmatprep.mubr.bf16.mxu0 %v1729
  %2909 = vmatmul.mubr.bf16.gmra.mrb[0].mxu0 %v1535
  %v2910 = vpop.f32.mrb[0].mxu0
  %v2911 = vadd.f32 0.0, %v2910
  %v2912 = vpop.f32.mrb[0].mxu0
  %v2913 = vpop.f32.mrb[0].mxu0
  %v2914 = vadd.f32 0.0, %v2913
  %v2915 = vpop.f32.mrb[0].mxu0
  %2916 = vmatprep.mubr.bf16.mxu0 %v1741
  %2917 = vmatmul.mubr.bf16.gmra.mrb[0].mxu0 %v1536
  %v2918 = vpop.f32.mrb[0].mxu0
  %v2919 = vadd.f32 0.0, %v2918
  %v2920 = vpop.f32.mrb[0].mxu0
  %v2921 = vpop.f32.mrb[0].mxu0
  %v2922 = vadd.f32 0.0, %v2921
  %v2923 = vpop.f32.mrb[0].mxu0
  %2924 = vmatprep.mubr.bf16.mxu0 %v1753
  %2925 = vmatmul.mubr.bf16.gmra.mrb[0].mxu0 %v1537
  %v2926 = vpop.f32.mrb[0].mxu0
  %v2927 = vadd.f32 0.0, %v2926
  %v2928 = vpop.f32.mrb[0].mxu0
  %v2929 = vpop.f32.mrb[0].mxu0
  %v2930 = vadd.f32 0.0, %v2929
  %v2931 = vpop.f32.mrb[0].mxu0
  %2932 = vmatprep.mubr.bf16.mxu0 %v1765
  %2933 = vmatmul.mubr.bf16.gmra.mrb[0].mxu0 %v1538
  %v2934 = vpop.f32.mrb[0].mxu0
  %v2935 = vadd.f32 0.0, %v2934
  %v2936 = vpop.f32.mrb[0].mxu0
  %v2937 = vpop.f32.mrb[0].mxu0
  %v2938 = vadd.f32 0.0, %v2937
  %v2939 = vpop.f32.mrb[0].mxu0
  %2940 = vmatprep.mubr.bf16.mxu0 %v1777
  %2941 = vmatmul.mubr.bf16.gmra.mrb[0].mxu0 %v1539
  %v2942 = vpop.f32.mrb[0].mxu0
  %v2943 = vadd.f32 0.0, %v2942
  %v2944 = vpop.f32.mrb[0].mxu0
  %v2945 = vpop.f32.mrb[0].mxu0
  %v2946 = vadd.f32 0.0, %v2945
  %v2947 = vpop.f32.mrb[0].mxu0
  %2948 = vmatprep.mubr.bf16.mxu0 %v1597
  %2949 = vmatmul.mubr.bf16.gmra.mrb[0].mxu0 0
  %v2950 = vpop.f32.mrb[0].mxu0
  %v2951 = vadd.f32 0.0, %v2950
  %v2952 = vpop.f32.mrb[0].mxu0
  %v2953 = vpop.f32.mrb[0].mxu0
  %v2954 = vadd.f32 0.0, %v2953
  %v2955 = vpop.f32.mrb[0].mxu0
  %2956 = vmatprep.mubr.bf16.mxu0 %v1789
  %2957 = vmatmul.mubr.bf16.gmra.mrb[0].mxu0 %v1541
  %v2958 = vpop.f32.mrb[0].mxu0
  %v2959 = vadd.f32 0.0, %v2958
  %v2960 = vpop.f32.mrb[0].mxu0
  %v2961 = vpop.f32.mrb[0].mxu0
  %v2962 = vadd.f32 0.0, %v2961
  %v2963 = vpop.f32.mrb[0].mxu0
  %2964 = vmatprep.mubr.bf16.mxu0 %v1801
  %2965 = vmatmul.mubr.bf16.gmra.mrb[0].mxu0 %v1542
  %v2966 = vpop.f32.mrb[0].mxu0
  %v2967 = vadd.f32 0.0, %v2966
  %v2968 = vpop.f32.mrb[0].mxu0
  %v2969 = vpop.f32.mrb[0].mxu0
  %v2970 = vadd.f32 0.0, %v2969
  %v2971 = vpop.f32.mrb[0].mxu0
  %2972 = vmatprep.mubr.bf16.mxu0 %v1813
  %2973 = vmatmul.mubr.bf16.gmra.mrb[0].mxu0 %v1543
  %v2974 = vpop.f32.mrb[0].mxu0
  %v2975 = vadd.f32 0.0, %v2974
  %v2976 = vpop.f32.mrb[0].mxu0
  %v2977 = vpop.f32.mrb[0].mxu0
  %v2978 = vadd.f32 0.0, %v2977
  %v2979 = vpop.f32.mrb[0].mxu0
  %2980 = vmatprep.mubr.bf16.mxu0 %v1825
  %2981 = vmatmul.mubr.bf16.gmra.mrb[0].mxu0 %v1544
  %v2982 = vpop.f32.mrb[0].mxu0
  %v2983 = vadd.f32 0.0, %v2982
  %v2984 = vpop.f32.mrb[0].mxu0
  %v2985 = vpop.f32.mrb[0].mxu0
  %v2986 = vadd.f32 0.0, %v2985
  %v2987 = vpop.f32.mrb[0].mxu0
  %2988 = vmatprep.mubr.bf16.mxu0 %v1837
  %2989 = vmatmul.mubr.bf16.gmra.mrb[0].mxu0 %v1545
  %v2990 = vpop.f32.mrb[0].mxu0
  %v2991 = vadd.f32 0.0, %v2990
  %v2992 = vpop.f32.mrb[0].mxu0
  %v2993 = vpop.f32.mrb[0].mxu0
  %v2994 = vadd.f32 0.0, %v2993
  %v2995 = vpop.f32.mrb[0].mxu0
  %2996 = vmatprep.mubr.bf16.mxu0 %v1849
  %2997 = vmatmul.mubr.bf16.gmra.mrb[0].mxu0 %v1546
  %v2998 = vpop.f32.mrb[0].mxu0
  %v2999 = vadd.f32 0.0, %v2998
  %v3000 = vpop.f32.mrb[0].mxu0
  %v3001 = vpop.f32.mrb[0].mxu0
  %v3002 = vadd.f32 0.0, %v3001
  %v3003 = vpop.f32.mrb[0].mxu0
  %3004 = vmatprep.mubr.bf16.mxu0 %v1861
  %3005 = vmatmul.mubr.bf16.gmra.mrb[0].mxu0 %v1547
  %v3006 = vpop.f32.mrb[0].mxu0
  %v3007 = vadd.f32 0.0, %v3006
  %v3008 = vpop.f32.mrb[0].mxu0
  %v3009 = vpop.f32.mrb[0].mxu0
  %v3010 = vadd.f32 0.0, %v3009
  %v3011 = vpop.f32.mrb[0].mxu0
  %3012 = vmatprep.mubr.bf16.mxu0 %v1873
  %3013 = vmatmul.mubr.bf16.gmra.mrb[0].mxu0 %v1548
  %v3014 = vpop.f32.mrb[0].mxu0
  %v3015 = vadd.f32 0.0, %v3014
  %v3016 = vpop.f32.mrb[0].mxu0
  %v3017 = vpop.f32.mrb[0].mxu0
  %v3018 = vadd.f32 0.0, %v3017
  %v3019 = vpop.f32.mrb[0].mxu0
  %3020 = vmatprep.mubr.bf16.mxu0 %v1885
  %3021 = vmatmul.mubr.bf16.gmra.mrb[0].mxu0 %v1549
  %v3022 = vpop.f32.mrb[0].mxu0
  %v3023 = vadd.f32 0.0, %v3022
  %v3024 = vpop.f32.mrb[0].mxu0
  %v3025 = vpop.f32.mrb[0].mxu0
  %v3026 = vadd.f32 0.0, %v3025
  %v3027 = vpop.f32.mrb[0].mxu0
  %3028 = vmatprep.mubr.bf16.mxu0 %v1897
  %3029 = vmatmul.mubr.bf16.gmra.mrb[0].mxu0 %v1550
  %v3030 = vpop.f32.mrb[0].mxu0
  %v3031 = vadd.f32 0.0, %v3030
  %v3032 = vpop.f32.mrb[0].mxu0
  %v3033 = vpop.f32.mrb[0].mxu0
  %v3034 = vadd.f32 0.0, %v3033
  %v3035 = vpop.f32.mrb[0].mxu0
  %3036 = vmatprep.mubr.bf16.mxu0 %v1909
  %3037 = vmatmul.mubr.bf16.gmra.mrb[0].mxu0 %v1551
  %v3038 = vpop.f32.mrb[0].mxu0
  %v3039 = vadd.f32 0.0, %v3038
  %v3040 = vpop.f32.mrb[0].mxu0
  %v3041 = vpop.f32.mrb[0].mxu0
  %v3042 = vadd.f32 0.0, %v3041
  %v3043 = vpop.f32.mrb[0].mxu0
  %3044 = vmatprep.mubr.bf16.mxu0 %v1921
  %3045 = vmatmul.mubr.bf16.gmra.mrb[0].mxu0 %v1552
  %v3046 = vpop.f32.mrb[0].mxu0
  %v3047 = vadd.f32 0.0, %v3046
  %v3048 = vpop.f32.mrb[0].mxu0
  %v3049 = vpop.f32.mrb[0].mxu0
  %v3050 = vadd.f32 0.0, %v3049
  %v3051 = vpop.f32.mrb[0].mxu0
  %3052 = vmatprep.mubr.bf16.mxu0 %v1933
  %3053 = vmatmul.mubr.bf16.gmra.mrb[0].mxu0 %v1553
  %v3054 = vpop.f32.mrb[0].mxu0
  %v3055 = vadd.f32 0.0, %v3054
  %v3056 = vpop.f32.mrb[0].mxu0
  %v3057 = vpop.f32.mrb[0].mxu0
  %v3058 = vadd.f32 0.0, %v3057
  %v3059 = vpop.f32.mrb[0].mxu0
  %3060 = vmatprep.mubr.bf16.mxu0 %v1945
  %3061 = vmatmul.mubr.bf16.gmra.mrb[0].mxu0 %v1554
  %v3062 = vpop.f32.mrb[0].mxu0
  %v3063 = vadd.f32 0.0, %v3062
  %v3064 = vpop.f32.mrb[0].mxu0
  %v3065 = vpop.f32.mrb[0].mxu0
  %v3066 = vadd.f32 0.0, %v3065
  %v3067 = vpop.f32.mrb[0].mxu0
  %3068 = vmatprep.mubr.bf16.mxu0 %v1957
  %3069 = vmatmul.mubr.bf16.gmra.mrb[0].mxu0 %v1555
  %v3070 = vpop.f32.mrb[0].mxu0
  %v3071 = vadd.f32 0.0, %v3070
  %v3072 = vpop.f32.mrb[0].mxu0
  %v3073 = vpop.f32.mrb[0].mxu0
  %v3074 = vadd.f32 0.0, %v3073
  %v3075 = vpop.f32.mrb[0].mxu0
  %3076 = vdwg.mxu0
  %3077 = vmatprep.subr.bf16.mxu0 0
  %3078 = vmatpush1.bf16.msra.mxu0 %v2660
  %3079 = vmatprep.subr.bf16.mxu0 0
  %3080 = vmatpush1.bf16.msra.mxu0 %v2661
  %3081 = vmatprep.subr.bf16.mxu0 0
  %3082 = vmatpush1.bf16.msra.mxu0 %v2662
  %3083 = vmatprep.subr.bf16.mxu0 0
  %3084 = vmatpush1.bf16.msra.mxu0 %v2663
  %3085 = vmatprep.subr.bf16.mxu0 0
  %3086 = vmatpush1.bf16.msra.mxu0 %v2664
  %3087 = vmatprep.subr.bf16.mxu0 0
  %3088 = vmatpush1.bf16.msra.mxu0 %v2665
  %3089 = vmatprep.subr.bf16.mxu0 0
  %3090 = vmatpush1.bf16.msra.mxu0 %v2666
  %3091 = vmatprep.subr.bf16.mxu0 0
  %3092 = vmatpush1.bf16.msra.mxu0 %v2667
  %3093 = vmatprep.subr.bf16.mxu0 0
  %3094 = vmatpush1.bf16.msra.mxu0 %v2668
  %3095 = vmatprep.subr.bf16.mxu0 0
  %3096 = vmatpush1.bf16.msra.mxu0 %v2669
  %3097 = vmatprep.subr.bf16.mxu0 0
  %3098 = vmatpush1.bf16.msra.mxu0 %v2670
  %3099 = vmatprep.subr.bf16.mxu0 0
  %3100 = vmatpush1.bf16.msra.mxu0 %v2671
  %3101 = vmatprep.subr.bf16.mxu0 0
  %3102 = vmatpush1.bf16.msra.mxu0 %v2672
  %3103 = vmatprep.subr.bf16.mxu0 0
  %3104 = vmatpush1.bf16.msra.mxu0 %v2673
  %3105 = vmatprep.subr.bf16.mxu0 0
  %3106 = vmatpush1.bf16.msra.mxu0 %v2674
  %3107 = vmatprep.subr.bf16.mxu0 0
  %3108 = vmatpush1.bf16.msra.mxu0 %v2675
  %3109 = vmatprep.mubr.bf16.mxu0 %v1525
  %3110 = vmatmul.mubr.bf16.gmra.mrb[0].mxu0 %v2052
  %v3111 = vpop.f32.mrb[0].mxu0
  %v3112 = vadd.f32 %v2823, %v3111
  %v3113 = vpop.f32.mrb[0].mxu0
  %v3114 = vpop.f32.mrb[0].mxu0
  %v3115 = vadd.f32 %v2826, %v3114
  %v3116 = vpop.f32.mrb[0].mxu0
  %3117 = vmatprep.mubr.bf16.mxu0 %v1526
  %3118 = vmatmul.mubr.bf16.gmra.mrb[0].mxu0 %v2055
  %v3119 = vpop.f32.mrb[0].mxu0
  %v3120 = vadd.f32 %v2831, %v3119
  %v3121 = vpop.f32.mrb[0].mxu0
  %v3122 = vpop.f32.mrb[0].mxu0
  %v3123 = vadd.f32 %v2834, %v3122
  %v3124 = vpop.f32.mrb[0].mxu0
  %3125 = vmatprep.mubr.bf16.mxu0 %v1527
  %3126 = vmatmul.mubr.bf16.gmra.mrb[0].mxu0 %v2058
  %v3127 = vpop.f32.mrb[0].mxu0
  %v3128 = vadd.f32 %v2839, %v3127
  %v3129 = vpop.f32.mrb[0].mxu0
  %v3130 = vpop.f32.mrb[0].mxu0
  %v3131 = vadd.f32 %v2842, %v3130
  %v3132 = vpop.f32.mrb[0].mxu0
  %3133 = vmatprep.mubr.bf16.mxu0 %v1528
  %3134 = vmatmul.mubr.bf16.gmra.mrb[0].mxu0 %v2061
  %v3135 = vpop.f32.mrb[0].mxu0
  %v3136 = vadd.f32 %v2847, %v3135
  %v3137 = vpop.f32.mrb[0].mxu0
  %v3138 = vpop.f32.mrb[0].mxu0
  %v3139 = vadd.f32 %v2850, %v3138
  %v3140 = vpop.f32.mrb[0].mxu0
  %3141 = vmatprep.mubr.bf16.mxu0 %v1529
  %3142 = vmatmul.mubr.bf16.gmra.mrb[0].mxu0 %v2064
  %v3143 = vpop.f32.mrb[0].mxu0
  %v3144 = vadd.f32 %v2855, %v3143
  %v3145 = vpop.f32.mrb[0].mxu0
  %v3146 = vpop.f32.mrb[0].mxu0
  %v3147 = vadd.f32 %v2858, %v3146
  %v3148 = vpop.f32.mrb[0].mxu0
  %3149 = vmatprep.mubr.bf16.mxu0 %v1530
  %3150 = vmatmul.mubr.bf16.gmra.mrb[0].mxu0 %v2067
  %v3151 = vpop.f32.mrb[0].mxu0
  %v3152 = vadd.f32 %v2863, %v3151
  %v3153 = vpop.f32.mrb[0].mxu0
  %v3154 = vpop.f32.mrb[0].mxu0
  %v3155 = vadd.f32 %v2866, %v3154
  %v3156 = vpop.f32.mrb[0].mxu0
  %3157 = vmatprep.mubr.bf16.mxu0 %v1531
  %3158 = vmatmul.mubr.bf16.gmra.mrb[0].mxu0 %v2070
  %v3159 = vpop.f32.mrb[0].mxu0
  %v3160 = vadd.f32 %v2871, %v3159
  %v3161 = vpop.f32.mrb[0].mxu0
  %v3162 = vpop.f32.mrb[0].mxu0
  %v3163 = vadd.f32 %v2874, %v3162
  %v3164 = vpop.f32.mrb[0].mxu0
  %3165 = vmatprep.mubr.bf16.mxu0 %v1532
  %3166 = vmatmul.mubr.bf16.gmra.mrb[0].mxu0 %v2073
  %v3167 = vpop.f32.mrb[0].mxu0
  %v3168 = vadd.f32 %v2879, %v3167
  %v3169 = vpop.f32.mrb[0].mxu0
  %v3170 = vpop.f32.mrb[0].mxu0
  %v3171 = vadd.f32 %v2882, %v3170
  %v3172 = vpop.f32.mrb[0].mxu0
  %3173 = vmatprep.mubr.bf16.mxu0 %v1533
  %3174 = vmatmul.mubr.bf16.gmra.mrb[0].mxu0 %v2076
  %v3175 = vpop.f32.mrb[0].mxu0
  %v3176 = vadd.f32 %v2887, %v3175
  %v3177 = vpop.f32.mrb[0].mxu0
  %v3178 = vpop.f32.mrb[0].mxu0
  %v3179 = vadd.f32 %v2890, %v3178
  %v3180 = vpop.f32.mrb[0].mxu0
  %3181 = vmatprep.mubr.bf16.mxu0 %v1534
  %3182 = vmatmul.mubr.bf16.gmra.mrb[0].mxu0 %v2079
  %v3183 = vpop.f32.mrb[0].mxu0
  %v3184 = vadd.f32 %v2895, %v3183
  %v3185 = vpop.f32.mrb[0].mxu0
  %v3186 = vpop.f32.mrb[0].mxu0
  %v3187 = vadd.f32 %v2898, %v3186
  %v3188 = vpop.f32.mrb[0].mxu0
  %3189 = vmatprep.mubr.bf16.mxu0 %v1535
  %3190 = vmatmul.mubr.bf16.gmra.mrb[0].mxu0 %v2082
  %v3191 = vpop.f32.mrb[0].mxu0
  %v3192 = vadd.f32 %v2903, %v3191
  %v3193 = vpop.f32.mrb[0].mxu0
  %v3194 = vpop.f32.mrb[0].mxu0
  %v3195 = vadd.f32 %v2906, %v3194
  %v3196 = vpop.f32.mrb[0].mxu0
  %3197 = vmatprep.mubr.bf16.mxu0 %v1536
  %3198 = vmatmul.mubr.bf16.gmra.mrb[0].mxu0 %v2085
  %v3199 = vpop.f32.mrb[0].mxu0
  %v3200 = vadd.f32 %v2911, %v3199
  %v3201 = vpop.f32.mrb[0].mxu0
  %v3202 = vpop.f32.mrb[0].mxu0
  %v3203 = vadd.f32 %v2914, %v3202
  %v3204 = vpop.f32.mrb[0].mxu0
  %3205 = vmatprep.mubr.bf16.mxu0 %v1537
  %3206 = vmatmul.mubr.bf16.gmra.mrb[0].mxu0 %v2088
  %v3207 = vpop.f32.mrb[0].mxu0
  %v3208 = vadd.f32 %v2919, %v3207
  %v3209 = vpop.f32.mrb[0].mxu0
  %v3210 = vpop.f32.mrb[0].mxu0
  %v3211 = vadd.f32 %v2922, %v3210
  %v3212 = vpop.f32.mrb[0].mxu0
  %3213 = vmatprep.mubr.bf16.mxu0 %v1538
  %3214 = vmatmul.mubr.bf16.gmra.mrb[0].mxu0 %v2091
  %v3215 = vpop.f32.mrb[0].mxu0
  %v3216 = vadd.f32 %v2927, %v3215
  %v3217 = vpop.f32.mrb[0].mxu0
  %v3218 = vpop.f32.mrb[0].mxu0
  %v3219 = vadd.f32 %v2930, %v3218
  %v3220 = vpop.f32.mrb[0].mxu0
  %3221 = vmatprep.mubr.bf16.mxu0 %v1539
  %3222 = vmatmul.mubr.bf16.gmra.mrb[0].mxu0 %v2094
  %v3223 = vpop.f32.mrb[0].mxu0
  %v3224 = vadd.f32 %v2935, %v3223
  %v3225 = vpop.f32.mrb[0].mxu0
  %v3226 = vpop.f32.mrb[0].mxu0
  %v3227 = vadd.f32 %v2938, %v3226
  %v3228 = vpop.f32.mrb[0].mxu0
  %3229 = vmatprep.mubr.bf16.mxu0 %v1540
  %3230 = vmatmul.mubr.bf16.gmra.mrb[0].mxu0 %v2097
  %v3231 = vpop.f32.mrb[0].mxu0
  %v3232 = vadd.f32 %v2943, %v3231
  %v3233 = vpop.f32.mrb[0].mxu0
  %v3234 = vpop.f32.mrb[0].mxu0
  %v3235 = vadd.f32 %v2946, %v3234
  %v3236 = vpop.f32.mrb[0].mxu0
  %3237 = vmatprep.mubr.bf16.mxu0 %v1541
  %3238 = vmatmul.mubr.bf16.gmra.mrb[0].mxu0 %v2052
  %v3239 = vpop.f32.mrb[0].mxu0
  %v3240 = vadd.f32 %v2951, %v3239
  %v3241 = vpop.f32.mrb[0].mxu0
  %v3242 = vpop.f32.mrb[0].mxu0
  %v3243 = vadd.f32 %v2954, %v3242
  %v3244 = vpop.f32.mrb[0].mxu0
  %3245 = vmatprep.mubr.bf16.mxu0 %v1542
  %3246 = vmatmul.mubr.bf16.gmra.mrb[0].mxu0 %v2100
  %v3247 = vpop.f32.mrb[0].mxu0
  %v3248 = vadd.f32 %v2959, %v3247
  %v3249 = vpop.f32.mrb[0].mxu0
  %v3250 = vpop.f32.mrb[0].mxu0
  %v3251 = vadd.f32 %v2962, %v3250
  %v3252 = vpop.f32.mrb[0].mxu0
  %3253 = vmatprep.mubr.bf16.mxu0 %v1543
  %3254 = vmatmul.mubr.bf16.gmra.mrb[0].mxu0 %v2103
  %v3255 = vpop.f32.mrb[0].mxu0
  %v3256 = vadd.f32 %v2967, %v3255
  %v3257 = vpop.f32.mrb[0].mxu0
  %v3258 = vpop.f32.mrb[0].mxu0
  %v3259 = vadd.f32 %v2970, %v3258
  %v3260 = vpop.f32.mrb[0].mxu0
  %3261 = vmatprep.mubr.bf16.mxu0 %v1544
  %3262 = vmatmul.mubr.bf16.gmra.mrb[0].mxu0 %v2106
  %v3263 = vpop.f32.mrb[0].mxu0
  %v3264 = vadd.f32 %v2975, %v3263
  %v3265 = vpop.f32.mrb[0].mxu0
  %v3266 = vpop.f32.mrb[0].mxu0
  %v3267 = vadd.f32 %v2978, %v3266
  %v3268 = vpop.f32.mrb[0].mxu0
  %3269 = vmatprep.mubr.bf16.mxu0 %v1545
  %3270 = vmatmul.mubr.bf16.gmra.mrb[0].mxu0 %v2109
  %v3271 = vpop.f32.mrb[0].mxu0
  %v3272 = vadd.f32 %v2983, %v3271
  %v3273 = vpop.f32.mrb[0].mxu0
  %v3274 = vpop.f32.mrb[0].mxu0
  %v3275 = vadd.f32 %v2986, %v3274
  %v3276 = vpop.f32.mrb[0].mxu0
  %3277 = vmatprep.mubr.bf16.mxu0 %v1546
  %3278 = vmatmul.mubr.bf16.gmra.mrb[0].mxu0 %v2112
  %v3279 = vpop.f32.mrb[0].mxu0
  %v3280 = vadd.f32 %v2991, %v3279
  %v3281 = vpop.f32.mrb[0].mxu0
  %v3282 = vpop.f32.mrb[0].mxu0
  %v3283 = vadd.f32 %v2994, %v3282
  %v3284 = vpop.f32.mrb[0].mxu0
  %3285 = vmatprep.mubr.bf16.mxu0 %v1547
  %3286 = vmatmul.mubr.bf16.gmra.mrb[0].mxu0 %v2115
  %v3287 = vpop.f32.mrb[0].mxu0
  %v3288 = vadd.f32 %v2999, %v3287
  %v3289 = vpop.f32.mrb[0].mxu0
  %v3290 = vpop.f32.mrb[0].mxu0
  %v3291 = vadd.f32 %v3002, %v3290
  %v3292 = vpop.f32.mrb[0].mxu0
  %3293 = vmatprep.mubr.bf16.mxu0 %v1548
  %3294 = vmatmul.mubr.bf16.gmra.mrb[0].mxu0 %v2118
  %v3295 = vpop.f32.mrb[0].mxu0
  %v3296 = vadd.f32 %v3007, %v3295
  %v3297 = vpop.f32.mrb[0].mxu0
  %v3298 = vpop.f32.mrb[0].mxu0
  %v3299 = vadd.f32 %v3010, %v3298
  %v3300 = vpop.f32.mrb[0].mxu0
  %3301 = vmatprep.mubr.bf16.mxu0 %v1549
  %3302 = vmatmul.mubr.bf16.gmra.mrb[0].mxu0 %v2121
  %v3303 = vpop.f32.mrb[0].mxu0
  %v3304 = vadd.f32 %v3015, %v3303
  %v3305 = vpop.f32.mrb[0].mxu0
  %v3306 = vpop.f32.mrb[0].mxu0
  %v3307 = vadd.f32 %v3018, %v3306
  %v3308 = vpop.f32.mrb[0].mxu0
  %3309 = vmatprep.mubr.bf16.mxu0 %v1550
  %3310 = vmatmul.mubr.bf16.gmra.mrb[0].mxu0 %v2124
  %v3311 = vpop.f32.mrb[0].mxu0
  %v3312 = vadd.f32 %v3023, %v3311
  %v3313 = vpop.f32.mrb[0].mxu0
  %v3314 = vpop.f32.mrb[0].mxu0
  %v3315 = vadd.f32 %v3026, %v3314
  %v3316 = vpop.f32.mrb[0].mxu0
  %3317 = vmatprep.mubr.bf16.mxu0 %v1551
  %3318 = vmatmul.mubr.bf16.gmra.mrb[0].mxu0 %v2127
  %v3319 = vpop.f32.mrb[0].mxu0
  %v3320 = vadd.f32 %v3031, %v3319
  %v3321 = vpop.f32.mrb[0].mxu0
  %v3322 = vpop.f32.mrb[0].mxu0
  %v3323 = vadd.f32 %v3034, %v3322
  %v3324 = vpop.f32.mrb[0].mxu0
  %3325 = vmatprep.mubr.bf16.mxu0 %v1552
  %3326 = vmatmul.mubr.bf16.gmra.mrb[0].mxu0 %v2130
  %v3327 = vpop.f32.mrb[0].mxu0
  %v3328 = vadd.f32 %v3039, %v3327
  %v3329 = vpop.f32.mrb[0].mxu0
  %v3330 = vpop.f32.mrb[0].mxu0
  %v3331 = vadd.f32 %v3042, %v3330
  %v3332 = vpop.f32.mrb[0].mxu0
  %3333 = vmatprep.mubr.bf16.mxu0 %v1553
  %3334 = vmatmul.mubr.bf16.gmra.mrb[0].mxu0 %v2133
  %v3335 = vpop.f32.mrb[0].mxu0
  %v3336 = vadd.f32 %v3047, %v3335
  %v3337 = vpop.f32.mrb[0].mxu0
  %v3338 = vpop.f32.mrb[0].mxu0
  %v3339 = vadd.f32 %v3050, %v3338
  %v3340 = vpop.f32.mrb[0].mxu0
  %3341 = vmatprep.mubr.bf16.mxu0 %v1554
  %3342 = vmatmul.mubr.bf16.gmra.mrb[0].mxu0 %v2136
  %v3343 = vpop.f32.mrb[0].mxu0
  %v3344 = vadd.f32 %v3055, %v3343
  %v3345 = vpop.f32.mrb[0].mxu0
  %v3346 = vpop.f32.mrb[0].mxu0
  %v3347 = vadd.f32 %v3058, %v3346
  %v3348 = vpop.f32.mrb[0].mxu0
  %3349 = vmatprep.mubr.bf16.mxu0 %v1555
  %3350 = vmatmul.mubr.bf16.gmra.mrb[0].mxu0 %v2139
  %v3351 = vpop.f32.mrb[0].mxu0
  %v3352 = vadd.f32 %v3063, %v3351
  %v3353 = vpop.f32.mrb[0].mxu0
  %v3354 = vpop.f32.mrb[0].mxu0
  %v3355 = vadd.f32 %v3066, %v3354
  %v3356 = vpop.f32.mrb[0].mxu0
  %3357 = vmatprep.mubr.bf16.mxu0 %v1556
  %3358 = vmatmul.mubr.bf16.gmra.mrb[0].mxu0 %v2142
  %v3359 = vpop.f32.mrb[0].mxu0
  %v3360 = vadd.f32 %v3071, %v3359
  %v3361 = vpop.f32.mrb[0].mxu0
  %v3362 = vpop.f32.mrb[0].mxu0
  %v3363 = vadd.f32 %v3074, %v3362
  %v3364 = vpop.f32.mrb[0].mxu0
  %3365 = vdwg.mxu0
  %3366 = vmatprep.subr.bf16.mxu0 0
  %3367 = vmatpush1.bf16.msra.mxu0 %v2676
  %3368 = vmatprep.subr.bf16.mxu0 0
  %3369 = vmatpush1.bf16.msra.mxu0 %v2677
  %3370 = vmatprep.subr.bf16.mxu0 0
  %3371 = vmatpush1.bf16.msra.mxu0 %v2678
  %3372 = vmatprep.subr.bf16.mxu0 0
  %3373 = vmatpush1.bf16.msra.mxu0 %v2679
  %3374 = vmatprep.subr.bf16.mxu0 0
  %3375 = vmatpush1.bf16.msra.mxu0 %v2680
  %3376 = vmatprep.subr.bf16.mxu0 0
  %3377 = vmatpush1.bf16.msra.mxu0 %v2681
  %3378 = vmatprep.subr.bf16.mxu0 0
  %3379 = vmatpush1.bf16.msra.mxu0 %v2682
  %3380 = vmatprep.subr.bf16.mxu0 0
  %3381 = vmatpush1.bf16.msra.mxu0 %v2683
  %3382 = vmatprep.subr.bf16.mxu0 0
  %3383 = vmatpush1.bf16.msra.mxu0 %v2684
  %3384 = vmatprep.subr.bf16.mxu0 0
  %3385 = vmatpush1.bf16.msra.mxu0 %v2685
  %3386 = vmatprep.subr.bf16.mxu0 0
  %3387 = vmatpush1.bf16.msra.mxu0 %v2686
  %3388 = vmatprep.subr.bf16.mxu0 0
  %3389 = vmatpush1.bf16.msra.mxu0 %v2687
  %3390 = vmatprep.subr.bf16.mxu0 0
  %3391 = vmatpush1.bf16.msra.mxu0 %v2688
  %3392 = vmatprep.subr.bf16.mxu0 0
  %3393 = vmatpush1.bf16.msra.mxu0 %v2689
  %3394 = vmatprep.subr.bf16.mxu0 0
  %3395 = vmatpush1.bf16.msra.mxu0 %v2690
  %3396 = vmatprep.subr.bf16.mxu0 0
  %3397 = vmatpush1.bf16.msra.mxu0 %v2691
  %3398 = vmatprep.mubr.bf16.mxu0 %v2055
  %3399 = vmatmul.mubr.bf16.gmra.mrb[0].mxu0 %v1609
  %v3400 = vpop.f32.mrb[0].mxu0
  %v3401 = vadd.f32 %v3112, %v3400
  %v3402 = vpop.f32.mrb[0].mxu0
  %v3403 = vpop.f32.mrb[0].mxu0
  %v3404 = vadd.f32 %v3115, %v3403
  %v3405 = vpop.f32.mrb[0].mxu0
  %3406 = vmatprep.mubr.bf16.mxu0 %v2058
  %3407 = vmatmul.mubr.bf16.gmra.mrb[0].mxu0 %v1621
  %v3408 = vpop.f32.mrb[0].mxu0
  %v3409 = vadd.f32 %v3120, %v3408
  %v3410 = vpop.f32.mrb[0].mxu0
  %v3411 = vpop.f32.mrb[0].mxu0
  %v3412 = vadd.f32 %v3123, %v3411
  %v3413 = vpop.f32.mrb[0].mxu0
  %3414 = vmatprep.mubr.bf16.mxu0 %v2061
  %3415 = vmatmul.mubr.bf16.gmra.mrb[0].mxu0 %v1633
  %v3416 = vpop.f32.mrb[0].mxu0
  %v3417 = vadd.f32 %v3128, %v3416
  %v3418 = vpop.f32.mrb[0].mxu0
  %v3419 = vpop.f32.mrb[0].mxu0
  %v3420 = vadd.f32 %v3131, %v3419
  %v3421 = vpop.f32.mrb[0].mxu0
  %3422 = vmatprep.mubr.bf16.mxu0 %v2064
  %3423 = vmatmul.mubr.bf16.gmra.mrb[0].mxu0 %v1645
  %v3424 = vpop.f32.mrb[0].mxu0
  %v3425 = vadd.f32 %v3136, %v3424
  %v3426 = vpop.f32.mrb[0].mxu0
  %v3427 = vpop.f32.mrb[0].mxu0
  %v3428 = vadd.f32 %v3139, %v3427
  %v3429 = vpop.f32.mrb[0].mxu0
  %3430 = vmatprep.mubr.bf16.mxu0 %v2067
  %3431 = vmatmul.mubr.bf16.gmra.mrb[0].mxu0 %v1657
  %v3432 = vpop.f32.mrb[0].mxu0
  %v3433 = vadd.f32 %v3144, %v3432
  %v3434 = vpop.f32.mrb[0].mxu0
  %v3435 = vpop.f32.mrb[0].mxu0
  %v3436 = vadd.f32 %v3147, %v3435
  %v3437 = vpop.f32.mrb[0].mxu0
  %3438 = vmatprep.mubr.bf16.mxu0 %v2070
  %3439 = vmatmul.mubr.bf16.gmra.mrb[0].mxu0 %v1669
  %v3440 = vpop.f32.mrb[0].mxu0
  %v3441 = vadd.f32 %v3152, %v3440
  %v3442 = vpop.f32.mrb[0].mxu0
  %v3443 = vpop.f32.mrb[0].mxu0
  %v3444 = vadd.f32 %v3155, %v3443
  %v3445 = vpop.f32.mrb[0].mxu0
  %3446 = vmatprep.mubr.bf16.mxu0 %v2073
  %3447 = vmatmul.mubr.bf16.gmra.mrb[0].mxu0 %v1681
  %v3448 = vpop.f32.mrb[0].mxu0
  %v3449 = vadd.f32 %v3160, %v3448
  %v3450 = vpop.f32.mrb[0].mxu0
  %v3451 = vpop.f32.mrb[0].mxu0
  %v3452 = vadd.f32 %v3163, %v3451
  %v3453 = vpop.f32.mrb[0].mxu0
  %3454 = vmatprep.mubr.bf16.mxu0 %v2076
  %3455 = vmatmul.mubr.bf16.gmra.mrb[0].mxu0 %v1693
  %v3456 = vpop.f32.mrb[0].mxu0
  %v3457 = vadd.f32 %v3168, %v3456
  %v3458 = vpop.f32.mrb[0].mxu0
  %v3459 = vpop.f32.mrb[0].mxu0
  %v3460 = vadd.f32 %v3171, %v3459
  %v3461 = vpop.f32.mrb[0].mxu0
  %3462 = vmatprep.mubr.bf16.mxu0 %v2079
  %3463 = vmatmul.mubr.bf16.gmra.mrb[0].mxu0 %v1705
  %v3464 = vpop.f32.mrb[0].mxu0
  %v3465 = vadd.f32 %v3176, %v3464
  %v3466 = vpop.f32.mrb[0].mxu0
  %v3467 = vpop.f32.mrb[0].mxu0
  %v3468 = vadd.f32 %v3179, %v3467
  %v3469 = vpop.f32.mrb[0].mxu0
  %3470 = vmatprep.mubr.bf16.mxu0 %v2082
  %3471 = vmatmul.mubr.bf16.gmra.mrb[0].mxu0 %v1717
  %v3472 = vpop.f32.mrb[0].mxu0
  %v3473 = vadd.f32 %v3184, %v3472
  %v3474 = vpop.f32.mrb[0].mxu0
  %v3475 = vpop.f32.mrb[0].mxu0
  %v3476 = vadd.f32 %v3187, %v3475
  %v3477 = vpop.f32.mrb[0].mxu0
  %3478 = vmatprep.mubr.bf16.mxu0 %v2085
  %3479 = vmatmul.mubr.bf16.gmra.mrb[0].mxu0 %v1729
  %v3480 = vpop.f32.mrb[0].mxu0
  %v3481 = vadd.f32 %v3192, %v3480
  %v3482 = vpop.f32.mrb[0].mxu0
  %v3483 = vpop.f32.mrb[0].mxu0
  %v3484 = vadd.f32 %v3195, %v3483
  %v3485 = vpop.f32.mrb[0].mxu0
  %3486 = vmatprep.mubr.bf16.mxu0 %v2088
  %3487 = vmatmul.mubr.bf16.gmra.mrb[0].mxu0 %v1741
  %v3488 = vpop.f32.mrb[0].mxu0
  %v3489 = vadd.f32 %v3200, %v3488
  %v3490 = vpop.f32.mrb[0].mxu0
  %v3491 = vpop.f32.mrb[0].mxu0
  %v3492 = vadd.f32 %v3203, %v3491
  %v3493 = vpop.f32.mrb[0].mxu0
  %3494 = vmatprep.mubr.bf16.mxu0 %v2091
  %3495 = vmatmul.mubr.bf16.gmra.mrb[0].mxu0 %v1753
  %v3496 = vpop.f32.mrb[0].mxu0
  %v3497 = vadd.f32 %v3208, %v3496
  %v3498 = vpop.f32.mrb[0].mxu0
  %v3499 = vpop.f32.mrb[0].mxu0
  %v3500 = vadd.f32 %v3211, %v3499
  %v3501 = vpop.f32.mrb[0].mxu0
  %3502 = vmatprep.mubr.bf16.mxu0 %v2094
  %3503 = vmatmul.mubr.bf16.gmra.mrb[0].mxu0 %v1765
  %v3504 = vpop.f32.mrb[0].mxu0
  %v3505 = vadd.f32 %v3216, %v3504
  %v3506 = vpop.f32.mrb[0].mxu0
  %v3507 = vpop.f32.mrb[0].mxu0
  %v3508 = vadd.f32 %v3219, %v3507
  %v3509 = vpop.f32.mrb[0].mxu0
  %3510 = vmatprep.mubr.bf16.mxu0 %v2097
  %3511 = vmatmul.mubr.bf16.gmra.mrb[0].mxu0 %v1777
  %v3512 = vpop.f32.mrb[0].mxu0
  %v3513 = vadd.f32 %v3224, %v3512
  %v3514 = vpop.f32.mrb[0].mxu0
  %v3515 = vpop.f32.mrb[0].mxu0
  %v3516 = vadd.f32 %v3227, %v3515
  %v3517 = vpop.f32.mrb[0].mxu0
  %3518 = vmatprep.mubr.bf16.mxu0 %v2206
  %3519 = vmatmul.mubr.bf16.gmra.mrb[0].mxu0 %v2185
  %v3520 = vpop.f32.mrb[0].mxu0
  %v3521 = vadd.f32 %v3232, %v3520
  %v3522 = vpop.f32.mrb[0].mxu0
  %v3523 = vpop.f32.mrb[0].mxu0
  %v3524 = vadd.f32 %v3235, %v3523
  %v3525 = vpop.f32.mrb[0].mxu0
  %3526 = vmatprep.mubr.bf16.mxu0 %v2100
  %3527 = vmatmul.mubr.bf16.gmra.mrb[0].mxu0 %v1789
  %v3528 = vpop.f32.mrb[0].mxu0
  %v3529 = vadd.f32 %v3240, %v3528
  %v3530 = vpop.f32.mrb[0].mxu0
  %v3531 = vpop.f32.mrb[0].mxu0
  %v3532 = vadd.f32 %v3243, %v3531
  %v3533 = vpop.f32.mrb[0].mxu0
  %3534 = vmatprep.mubr.bf16.mxu0 %v2103
  %3535 = vmatmul.mubr.bf16.gmra.mrb[0].mxu0 %v1801
  %v3536 = vpop.f32.mrb[0].mxu0
  %v3537 = vadd.f32 %v3248, %v3536
  %v3538 = vpop.f32.mrb[0].mxu0
  %v3539 = vpop.f32.mrb[0].mxu0
  %v3540 = vadd.f32 %v3251, %v3539
  %v3541 = vpop.f32.mrb[0].mxu0
  %3542 = vmatprep.mubr.bf16.mxu0 %v2106
  %3543 = vmatmul.mubr.bf16.gmra.mrb[0].mxu0 %v1813
  %v3544 = vpop.f32.mrb[0].mxu0
  %v3545 = vadd.f32 %v3256, %v3544
  %v3546 = vpop.f32.mrb[0].mxu0
  %v3547 = vpop.f32.mrb[0].mxu0
  %v3548 = vadd.f32 %v3259, %v3547
  %v3549 = vpop.f32.mrb[0].mxu0
  %3550 = vmatprep.mubr.bf16.mxu0 %v2109
  %3551 = vmatmul.mubr.bf16.gmra.mrb[0].mxu0 %v1825
  %v3552 = vpop.f32.mrb[0].mxu0
  %v3553 = vadd.f32 %v3264, %v3552
  %v3554 = vpop.f32.mrb[0].mxu0
  %v3555 = vpop.f32.mrb[0].mxu0
  %v3556 = vadd.f32 %v3267, %v3555
  %v3557 = vpop.f32.mrb[0].mxu0
  %3558 = vmatprep.mubr.bf16.mxu0 %v2112
  %3559 = vmatmul.mubr.bf16.gmra.mrb[0].mxu0 %v1837
  %v3560 = vpop.f32.mrb[0].mxu0
  %v3561 = vadd.f32 %v3272, %v3560
  %v3562 = vpop.f32.mrb[0].mxu0
  %v3563 = vpop.f32.mrb[0].mxu0
  %v3564 = vadd.f32 %v3275, %v3563
  %v3565 = vpop.f32.mrb[0].mxu0
  %3566 = vmatprep.mubr.bf16.mxu0 %v2115
  %3567 = vmatmul.mubr.bf16.gmra.mrb[0].mxu0 %v1849
  %v3568 = vpop.f32.mrb[0].mxu0
  %v3569 = vadd.f32 %v3280, %v3568
  %v3570 = vpop.f32.mrb[0].mxu0
  %v3571 = vpop.f32.mrb[0].mxu0
  %v3572 = vadd.f32 %v3283, %v3571
  %v3573 = vpop.f32.mrb[0].mxu0
  %3574 = vmatprep.mubr.bf16.mxu0 %v2118
  %3575 = vmatmul.mubr.bf16.gmra.mrb[0].mxu0 %v1861
  %v3576 = vpop.f32.mrb[0].mxu0
  %v3577 = vadd.f32 %v3288, %v3576
  %v3578 = vpop.f32.mrb[0].mxu0
  %v3579 = vpop.f32.mrb[0].mxu0
  %v3580 = vadd.f32 %v3291, %v3579
  %v3581 = vpop.f32.mrb[0].mxu0
  %3582 = vmatprep.mubr.bf16.mxu0 %v2121
  %3583 = vmatmul.mubr.bf16.gmra.mrb[0].mxu0 %v1873
  %v3584 = vpop.f32.mrb[0].mxu0
  %v3585 = vadd.f32 %v3296, %v3584
  %v3586 = vpop.f32.mrb[0].mxu0
  %v3587 = vpop.f32.mrb[0].mxu0
  %v3588 = vadd.f32 %v3299, %v3587
  %v3589 = vpop.f32.mrb[0].mxu0
  %3590 = vmatprep.mubr.bf16.mxu0 %v2124
  %3591 = vmatmul.mubr.bf16.gmra.mrb[0].mxu0 %v1885
  %v3592 = vpop.f32.mrb[0].mxu0
  %v3593 = vadd.f32 %v3304, %v3592
  %v3594 = vpop.f32.mrb[0].mxu0
  %v3595 = vpop.f32.mrb[0].mxu0
  %v3596 = vadd.f32 %v3307, %v3595
  %v3597 = vpop.f32.mrb[0].mxu0
  %3598 = vmatprep.mubr.bf16.mxu0 %v2127
  %3599 = vmatmul.mubr.bf16.gmra.mrb[0].mxu0 %v1897
  %v3600 = vpop.f32.mrb[0].mxu0
  %v3601 = vadd.f32 %v3312, %v3600
  %v3602 = vpop.f32.mrb[0].mxu0
  %v3603 = vpop.f32.mrb[0].mxu0
  %v3604 = vadd.f32 %v3315, %v3603
  %v3605 = vpop.f32.mrb[0].mxu0
  %3606 = vmatprep.mubr.bf16.mxu0 %v2130
  %3607 = vmatmul.mubr.bf16.gmra.mrb[0].mxu0 %v1909
  %v3608 = vpop.f32.mrb[0].mxu0
  %v3609 = vadd.f32 %v3320, %v3608
  %v3610 = vpop.f32.mrb[0].mxu0
  %v3611 = vpop.f32.mrb[0].mxu0
  %v3612 = vadd.f32 %v3323, %v3611
  %v3613 = vpop.f32.mrb[0].mxu0
  %3614 = vmatprep.mubr.bf16.mxu0 %v2133
  %3615 = vmatmul.mubr.bf16.gmra.mrb[0].mxu0 %v1921
  %v3616 = vpop.f32.mrb[0].mxu0
  %v3617 = vadd.f32 %v3328, %v3616
  %v3618 = vpop.f32.mrb[0].mxu0
  %v3619 = vpop.f32.mrb[0].mxu0
  %v3620 = vadd.f32 %v3331, %v3619
  %v3621 = vpop.f32.mrb[0].mxu0
  %3622 = vmatprep.mubr.bf16.mxu0 %v2136
  %3623 = vmatmul.mubr.bf16.gmra.mrb[0].mxu0 %v1933
  %v3624 = vpop.f32.mrb[0].mxu0
  %v3625 = vadd.f32 %v3336, %v3624
  %v3626 = vpop.f32.mrb[0].mxu0
  %v3627 = vpop.f32.mrb[0].mxu0
  %v3628 = vadd.f32 %v3339, %v3627
  %v3629 = vpop.f32.mrb[0].mxu0
  %3630 = vmatprep.mubr.bf16.mxu0 %v2139
  %3631 = vmatmul.mubr.bf16.gmra.mrb[0].mxu0 %v1945
  %v3632 = vpop.f32.mrb[0].mxu0
  %v3633 = vadd.f32 %v3344, %v3632
  %v3634 = vpop.f32.mrb[0].mxu0
  %v3635 = vpop.f32.mrb[0].mxu0
  %v3636 = vadd.f32 %v3347, %v3635
  %v3637 = vpop.f32.mrb[0].mxu0
  %3638 = vmatprep.mubr.bf16.mxu0 %v2142
  %3639 = vmatmul.mubr.bf16.gmra.mrb[0].mxu0 %v1957
  %v3640 = vpop.f32.mrb[0].mxu0
  %v3641 = vadd.f32 %v3352, %v3640
  %v3642 = vpop.f32.mrb[0].mxu0
  %v3643 = vpop.f32.mrb[0].mxu0
  %v3644 = vadd.f32 %v3355, %v3643
  %v3645 = vpop.f32.mrb[0].mxu0
  %3646 = vmatprep.mubr.bf16.mxu0 %v2209
  %3647 = vmatmul.mubr.bf16.gmra.mrb[0].mxu0 %v2197
  %v3648 = vpop.f32.mrb[0].mxu0
  %v3649 = vadd.f32 %v3360, %v3648
  %v3650 = vpop.f32.mrb[0].mxu0
  %v3651 = vpop.f32.mrb[0].mxu0
  %v3652 = vadd.f32 %v3363, %v3651
  %v3653 = vpop.f32.mrb[0].mxu0
  %3654 = vdwg.mxu0
  %3655 = vmatprep.subr.bf16.mxu0 0
  %3656 = vmatpush1.bf16.msra.mxu0 %v2692
  %3657 = vmatprep.subr.bf16.mxu0 0
  %3658 = vmatpush1.bf16.msra.mxu0 %v2693
  %3659 = vmatprep.subr.bf16.mxu0 0
  %3660 = vmatpush1.bf16.msra.mxu0 %v2694
  %3661 = vmatprep.subr.bf16.mxu0 0
  %3662 = vmatpush1.bf16.msra.mxu0 %v2695
  %3663 = vmatprep.subr.bf16.mxu0 0
  %3664 = vmatpush1.bf16.msra.mxu0 %v2696
  %3665 = vmatprep.subr.bf16.mxu0 0
  %3666 = vmatpush1.bf16.msra.mxu0 %v2697
  %3667 = vmatprep.subr.bf16.mxu0 0
  %3668 = vmatpush1.bf16.msra.mxu0 %v2698
  %3669 = vmatprep.subr.bf16.mxu0 0
  %3670 = vmatpush1.bf16.msra.mxu0 %v2699
  %3671 = vmatprep.subr.bf16.mxu0 0
  %3672 = vmatpush1.bf16.msra.mxu0 %v2700
  %3673 = vmatprep.subr.bf16.mxu0 0
  %3674 = vmatpush1.bf16.msra.mxu0 %v2701
  %3675 = vmatprep.subr.bf16.mxu0 0
  %3676 = vmatpush1.bf16.msra.mxu0 %v2702
  %3677 = vmatprep.subr.bf16.mxu0 0
  %3678 = vmatpush1.bf16.msra.mxu0 %v2703
  %3679 = vmatprep.subr.bf16.mxu0 0
  %3680 = vmatpush1.bf16.msra.mxu0 %v2704
  %3681 = vmatprep.subr.bf16.mxu0 0
  %3682 = vmatpush1.bf16.msra.mxu0 %v2705
  %3683 = vmatprep.subr.bf16.mxu0 0
  %3684 = vmatpush1.bf16.msra.mxu0 %v2706
  %3685 = vmatprep.subr.bf16.mxu0 0
  %3686 = vmatpush1.bf16.msra.mxu0 %v2707
  %3687 = vmatprep.mubr.bf16.mxu0 %v1621
  %3688 = vmatmul.mubr.bf16.gmra.mrb[0].mxu0 %v1526
  %v3689 = vpop.f32.mrb[0].mxu0
  %v3690 = vadd.f32 %v3401, %v3689
  %v3691 = vpop.f32.mrb[0].mxu0
  %v3692 = vpop.f32.mrb[0].mxu0
  %v3693 = vadd.f32 %v3404, %v3692
  %v3694 = vpop.f32.mrb[0].mxu0
  %3695 = vmatprep.mubr.bf16.mxu0 %v1633
  %3696 = vmatmul.mubr.bf16.gmra.mrb[0].mxu0 %v1527
  %v3697 = vpop.f32.mrb[0].mxu0
  %v3698 = vadd.f32 %v3409, %v3697
  %v3699 = vpop.f32.mrb[0].mxu0
  %v3700 = vpop.f32.mrb[0].mxu0
  %v3701 = vadd.f32 %v3412, %v3700
  %v3702 = vpop.f32.mrb[0].mxu0
  %3703 = vmatprep.mubr.bf16.mxu0 %v1645
  %3704 = vmatmul.mubr.bf16.gmra.mrb[0].mxu0 %v1528
  %v3705 = vpop.f32.mrb[0].mxu0
  %v3706 = vadd.f32 %v3417, %v3705
  %v3707 = vpop.f32.mrb[0].mxu0
  %v3708 = vpop.f32.mrb[0].mxu0
  %v3709 = vadd.f32 %v3420, %v3708
  %v3710 = vpop.f32.mrb[0].mxu0
  %3711 = vmatprep.mubr.bf16.mxu0 %v1657
  %3712 = vmatmul.mubr.bf16.gmra.mrb[0].mxu0 %v1529
  %v3713 = vpop.f32.mrb[0].mxu0
  %v3714 = vadd.f32 %v3425, %v3713
  %v3715 = vpop.f32.mrb[0].mxu0
  %v3716 = vpop.f32.mrb[0].mxu0
  %v3717 = vadd.f32 %v3428, %v3716
  %v3718 = vpop.f32.mrb[0].mxu0
  %3719 = vmatprep.mubr.bf16.mxu0 %v1669
  %3720 = vmatmul.mubr.bf16.gmra.mrb[0].mxu0 %v1530
  %v3721 = vpop.f32.mrb[0].mxu0
  %v3722 = vadd.f32 %v3433, %v3721
  %v3723 = vpop.f32.mrb[0].mxu0
  %v3724 = vpop.f32.mrb[0].mxu0
  %v3725 = vadd.f32 %v3436, %v3724
  %v3726 = vpop.f32.mrb[0].mxu0
  %3727 = vmatprep.mubr.bf16.mxu0 %v1681
  %3728 = vmatmul.mubr.bf16.gmra.mrb[0].mxu0 %v1531
  %v3729 = vpop.f32.mrb[0].mxu0
  %v3730 = vadd.f32 %v3441, %v3729
  %v3731 = vpop.f32.mrb[0].mxu0
  %v3732 = vpop.f32.mrb[0].mxu0
  %v3733 = vadd.f32 %v3444, %v3732
  %v3734 = vpop.f32.mrb[0].mxu0
  %3735 = vmatprep.mubr.bf16.mxu0 %v1693
  %3736 = vmatmul.mubr.bf16.gmra.mrb[0].mxu0 %v1532
  %v3737 = vpop.f32.mrb[0].mxu0
  %v3738 = vadd.f32 %v3449, %v3737
  %v3739 = vpop.f32.mrb[0].mxu0
  %v3740 = vpop.f32.mrb[0].mxu0
  %v3741 = vadd.f32 %v3452, %v3740
  %v3742 = vpop.f32.mrb[0].mxu0
  %3743 = vmatprep.mubr.bf16.mxu0 %v1705
  %3744 = vmatmul.mubr.bf16.gmra.mrb[0].mxu0 %v1533
  %v3745 = vpop.f32.mrb[0].mxu0
  %v3746 = vadd.f32 %v3457, %v3745
  %v3747 = vpop.f32.mrb[0].mxu0
  %v3748 = vpop.f32.mrb[0].mxu0
  %v3749 = vadd.f32 %v3460, %v3748
  %v3750 = vpop.f32.mrb[0].mxu0
  %3751 = vmatprep.mubr.bf16.mxu0 %v1717
  %3752 = vmatmul.mubr.bf16.gmra.mrb[0].mxu0 %v1534
  %v3753 = vpop.f32.mrb[0].mxu0
  %v3754 = vadd.f32 %v3465, %v3753
  %v3755 = vpop.f32.mrb[0].mxu0
  %v3756 = vpop.f32.mrb[0].mxu0
  %v3757 = vadd.f32 %v3468, %v3756
  %v3758 = vpop.f32.mrb[0].mxu0
  %3759 = vmatprep.mubr.bf16.mxu0 %v1729
  %3760 = vmatmul.mubr.bf16.gmra.mrb[0].mxu0 %v1535
  %v3761 = vpop.f32.mrb[0].mxu0
  %v3762 = vadd.f32 %v3473, %v3761
  %v3763 = vpop.f32.mrb[0].mxu0
  %v3764 = vpop.f32.mrb[0].mxu0
  %v3765 = vadd.f32 %v3476, %v3764
  %v3766 = vpop.f32.mrb[0].mxu0
  %3767 = vmatprep.mubr.bf16.mxu0 %v1741
  %3768 = vmatmul.mubr.bf16.gmra.mrb[0].mxu0 %v1536
  %v3769 = vpop.f32.mrb[0].mxu0
  %v3770 = vadd.f32 %v3481, %v3769
  %v3771 = vpop.f32.mrb[0].mxu0
  %v3772 = vpop.f32.mrb[0].mxu0
  %v3773 = vadd.f32 %v3484, %v3772
  %v3774 = vpop.f32.mrb[0].mxu0
  %3775 = vmatprep.mubr.bf16.mxu0 %v1753
  %3776 = vmatmul.mubr.bf16.gmra.mrb[0].mxu0 %v1537
  %v3777 = vpop.f32.mrb[0].mxu0
  %v3778 = vadd.f32 %v3489, %v3777
  %v3779 = vpop.f32.mrb[0].mxu0
  %v3780 = vpop.f32.mrb[0].mxu0
  %v3781 = vadd.f32 %v3492, %v3780
  %v3782 = vpop.f32.mrb[0].mxu0
  %3783 = vmatprep.mubr.bf16.mxu0 %v1765
  %3784 = vmatmul.mubr.bf16.gmra.mrb[0].mxu0 %v1538
  %v3785 = vpop.f32.mrb[0].mxu0
  %v3786 = vadd.f32 %v3497, %v3785
  %v3787 = vpop.f32.mrb[0].mxu0
  %v3788 = vpop.f32.mrb[0].mxu0
  %v3789 = vadd.f32 %v3500, %v3788
  %v3790 = vpop.f32.mrb[0].mxu0
  %3791 = vmatprep.mubr.bf16.mxu0 %v1777
  %3792 = vmatmul.mubr.bf16.gmra.mrb[0].mxu0 %v1539
  %v3793 = vpop.f32.mrb[0].mxu0
  %v3794 = vadd.f32 %v3505, %v3793
  %v3795 = vpop.f32.mrb[0].mxu0
  %v3796 = vpop.f32.mrb[0].mxu0
  %v3797 = vadd.f32 %v3508, %v3796
  %v3798 = vpop.f32.mrb[0].mxu0
  %3799 = vmatprep.mubr.bf16.mxu0 %v2185
  %3800 = vmatmul.mubr.bf16.gmra.mrb[0].mxu0 %v1540
  %v3801 = vpop.f32.mrb[0].mxu0
  %v3802 = vadd.f32 %v3513, %v3801
  %v3803 = vpop.f32.mrb[0].mxu0
  %v3804 = vpop.f32.mrb[0].mxu0
  %v3805 = vadd.f32 %v3516, %v3804
  %v3806 = vpop.f32.mrb[0].mxu0
  %3807 = vmatprep.mubr.bf16.mxu0 %v1597
  %3808 = vmatmul.mubr.bf16.gmra.mrb[0].mxu0 0
  %v3809 = vpop.f32.mrb[0].mxu0
  %v3810 = vadd.f32 %v3521, %v3809
  %v3811 = vpop.f32.mrb[0].mxu0
  %v3812 = vpop.f32.mrb[0].mxu0
  %v3813 = vadd.f32 %v3524, %v3812
  %v3814 = vpop.f32.mrb[0].mxu0
  %3815 = vmatprep.mubr.bf16.mxu0 %v1801
  %3816 = vmatmul.mubr.bf16.gmra.mrb[0].mxu0 %v1542
  %v3817 = vpop.f32.mrb[0].mxu0
  %v3818 = vadd.f32 %v3529, %v3817
  %v3819 = vpop.f32.mrb[0].mxu0
  %v3820 = vpop.f32.mrb[0].mxu0
  %v3821 = vadd.f32 %v3532, %v3820
  %v3822 = vpop.f32.mrb[0].mxu0
  %3823 = vmatprep.mubr.bf16.mxu0 %v1813
  %3824 = vmatmul.mubr.bf16.gmra.mrb[0].mxu0 %v1543
  %v3825 = vpop.f32.mrb[0].mxu0
  %v3826 = vadd.f32 %v3537, %v3825
  %v3827 = vpop.f32.mrb[0].mxu0
  %v3828 = vpop.f32.mrb[0].mxu0
  %v3829 = vadd.f32 %v3540, %v3828
  %v3830 = vpop.f32.mrb[0].mxu0
  %3831 = vmatprep.mubr.bf16.mxu0 %v1825
  %3832 = vmatmul.mubr.bf16.gmra.mrb[0].mxu0 %v1544
  %v3833 = vpop.f32.mrb[0].mxu0
  %v3834 = vadd.f32 %v3545, %v3833
  %v3835 = vpop.f32.mrb[0].mxu0
  %v3836 = vpop.f32.mrb[0].mxu0
  %v3837 = vadd.f32 %v3548, %v3836
  %v3838 = vpop.f32.mrb[0].mxu0
  %3839 = vmatprep.mubr.bf16.mxu0 %v1837
  %3840 = vmatmul.mubr.bf16.gmra.mrb[0].mxu0 %v1545
  %v3841 = vpop.f32.mrb[0].mxu0
  %v3842 = vadd.f32 %v3553, %v3841
  %v3843 = vpop.f32.mrb[0].mxu0
  %v3844 = vpop.f32.mrb[0].mxu0
  %v3845 = vadd.f32 %v3556, %v3844
  %v3846 = vpop.f32.mrb[0].mxu0
  %3847 = vmatprep.mubr.bf16.mxu0 %v1849
  %3848 = vmatmul.mubr.bf16.gmra.mrb[0].mxu0 %v1546
  %v3849 = vpop.f32.mrb[0].mxu0
  %v3850 = vadd.f32 %v3561, %v3849
  %v3851 = vpop.f32.mrb[0].mxu0
  %v3852 = vpop.f32.mrb[0].mxu0
  %v3853 = vadd.f32 %v3564, %v3852
  %v3854 = vpop.f32.mrb[0].mxu0
  %3855 = vmatprep.mubr.bf16.mxu0 %v1861
  %3856 = vmatmul.mubr.bf16.gmra.mrb[0].mxu0 %v1547
  %v3857 = vpop.f32.mrb[0].mxu0
  %v3858 = vadd.f32 %v3569, %v3857
  %v3859 = vpop.f32.mrb[0].mxu0
  %v3860 = vpop.f32.mrb[0].mxu0
  %v3861 = vadd.f32 %v3572, %v3860
  %v3862 = vpop.f32.mrb[0].mxu0
  %3863 = vmatprep.mubr.bf16.mxu0 %v1873
  %3864 = vmatmul.mubr.bf16.gmra.mrb[0].mxu0 %v1548
  %v3865 = vpop.f32.mrb[0].mxu0
  %v3866 = vadd.f32 %v3577, %v3865
  %v3867 = vpop.f32.mrb[0].mxu0
  %v3868 = vpop.f32.mrb[0].mxu0
  %v3869 = vadd.f32 %v3580, %v3868
  %v3870 = vpop.f32.mrb[0].mxu0
  %3871 = vmatprep.mubr.bf16.mxu0 %v1885
  %3872 = vmatmul.mubr.bf16.gmra.mrb[0].mxu0 %v1549
  %v3873 = vpop.f32.mrb[0].mxu0
  %v3874 = vadd.f32 %v3585, %v3873
  %v3875 = vpop.f32.mrb[0].mxu0
  %v3876 = vpop.f32.mrb[0].mxu0
  %v3877 = vadd.f32 %v3588, %v3876
  %v3878 = vpop.f32.mrb[0].mxu0
  %3879 = vmatprep.mubr.bf16.mxu0 %v1897
  %3880 = vmatmul.mubr.bf16.gmra.mrb[0].mxu0 %v1550
  %v3881 = vpop.f32.mrb[0].mxu0
  %v3882 = vadd.f32 %v3593, %v3881
  %v3883 = vpop.f32.mrb[0].mxu0
  %v3884 = vpop.f32.mrb[0].mxu0
  %v3885 = vadd.f32 %v3596, %v3884
  %v3886 = vpop.f32.mrb[0].mxu0
  %3887 = vmatprep.mubr.bf16.mxu0 %v1909
  %3888 = vmatmul.mubr.bf16.gmra.mrb[0].mxu0 %v1551
  %v3889 = vpop.f32.mrb[0].mxu0
  %v3890 = vadd.f32 %v3601, %v3889
  %v3891 = vpop.f32.mrb[0].mxu0
  %v3892 = vpop.f32.mrb[0].mxu0
  %v3893 = vadd.f32 %v3604, %v3892
  %v3894 = vpop.f32.mrb[0].mxu0
  %3895 = vmatprep.mubr.bf16.mxu0 %v1921
  %3896 = vmatmul.mubr.bf16.gmra.mrb[0].mxu0 %v1552
  %v3897 = vpop.f32.mrb[0].mxu0
  %v3898 = vadd.f32 %v3609, %v3897
  %v3899 = vpop.f32.mrb[0].mxu0
  %v3900 = vpop.f32.mrb[0].mxu0
  %v3901 = vadd.f32 %v3612, %v3900
  %v3902 = vpop.f32.mrb[0].mxu0
  %3903 = vmatprep.mubr.bf16.mxu0 %v1933
  %3904 = vmatmul.mubr.bf16.gmra.mrb[0].mxu0 %v1553
  %v3905 = vpop.f32.mrb[0].mxu0
  %v3906 = vadd.f32 %v3617, %v3905
  %v3907 = vpop.f32.mrb[0].mxu0
  %v3908 = vpop.f32.mrb[0].mxu0
  %v3909 = vadd.f32 %v3620, %v3908
  %v3910 = vpop.f32.mrb[0].mxu0
  %3911 = vmatprep.mubr.bf16.mxu0 %v1945
  %3912 = vmatmul.mubr.bf16.gmra.mrb[0].mxu0 %v1554
  %v3913 = vpop.f32.mrb[0].mxu0
  %v3914 = vadd.f32 %v3625, %v3913
  %v3915 = vpop.f32.mrb[0].mxu0
  %v3916 = vpop.f32.mrb[0].mxu0
  %v3917 = vadd.f32 %v3628, %v3916
  %v3918 = vpop.f32.mrb[0].mxu0
  %3919 = vmatprep.mubr.bf16.mxu0 %v1957
  %3920 = vmatmul.mubr.bf16.gmra.mrb[0].mxu0 %v1555
  %v3921 = vpop.f32.mrb[0].mxu0
  %v3922 = vadd.f32 %v3633, %v3921
  %v3923 = vpop.f32.mrb[0].mxu0
  %v3924 = vpop.f32.mrb[0].mxu0
  %v3925 = vadd.f32 %v3636, %v3924
  %v3926 = vpop.f32.mrb[0].mxu0
  %3927 = vmatprep.mubr.bf16.mxu0 %v2197
  %3928 = vmatmul.mubr.bf16.gmra.mrb[0].mxu0 %v1556
  %v3929 = vpop.f32.mrb[0].mxu0
  %v3930 = vadd.f32 %v3641, %v3929
  %v3931 = vpop.f32.mrb[0].mxu0
  %v3932 = vpop.f32.mrb[0].mxu0
  %v3933 = vadd.f32 %v3644, %v3932
  %v3934 = vpop.f32.mrb[0].mxu0
  %3935 = vmatprep.mubr.bf16.mxu0 %v1597
  %3936 = vmatmul.mubr.bf16.gmra.mrb[0].mxu0 0
  %v3937 = vpop.f32.mrb[0].mxu0
  %v3938 = vadd.f32 %v3649, %v3937
  %v3939 = vpop.f32.mrb[0].mxu0
  %v3940 = vpop.f32.mrb[0].mxu0
  %v3941 = vadd.f32 %v3652, %v3940
  %v3942 = vpop.f32.mrb[0].mxu0
  %3943 = vdwg.mxu0
  %3944 = vmatprep.subr.bf16.mxu0 0
  %3945 = vmatpush1.bf16.msra.mxu0 %v2708
  %3946 = vmatprep.subr.bf16.mxu0 0
  %3947 = vmatpush1.bf16.msra.mxu0 %v2709
  %3948 = vmatprep.subr.bf16.mxu0 0
  %3949 = vmatpush1.bf16.msra.mxu0 %v2710
  %3950 = vmatprep.subr.bf16.mxu0 0
  %3951 = vmatpush1.bf16.msra.mxu0 %v2711
  %3952 = vmatprep.subr.bf16.mxu0 0
  %3953 = vmatpush1.bf16.msra.mxu0 %v2712
  %3954 = vmatprep.subr.bf16.mxu0 0
  %3955 = vmatpush1.bf16.msra.mxu0 %v2713
  %3956 = vmatprep.subr.bf16.mxu0 0
  %3957 = vmatpush1.bf16.msra.mxu0 %v2714
  %3958 = vmatprep.subr.bf16.mxu0 0
  %3959 = vmatpush1.bf16.msra.mxu0 %v2715
  %3960 = vmatprep.subr.bf16.mxu0 0
  %3961 = vmatpush1.bf16.msra.mxu0 0
  %3962 = vmatprep.subr.bf16.mxu0 0
  %3963 = vmatpush1.bf16.msra.mxu0 0
  %3964 = vmatprep.subr.bf16.mxu0 0
  %3965 = vmatpush1.bf16.msra.mxu0 0
  %3966 = vmatprep.subr.bf16.mxu0 0
  %3967 = vmatpush1.bf16.msra.mxu0 0
  %3968 = vmatprep.subr.bf16.mxu0 0
  %3969 = vmatpush1.bf16.msra.mxu0 0
  %3970 = vmatprep.subr.bf16.mxu0 0
  %3971 = vmatpush1.bf16.msra.mxu0 0
  %3972 = vmatprep.subr.bf16.mxu0 0
  %3973 = vmatpush1.bf16.msra.mxu0 0
  %3974 = vmatprep.subr.bf16.mxu0 0
  %3975 = vmatpush1.bf16.msra.mxu0 0
  %3976 = vmatprep.mubr.bf16.mxu0 0
  %3977 = vmatmul.mubr.bf16.gmra.mrb[0].mxu0 %v2058
  %v3978 = vpop.f32.mrb[0].mxu0
  %v3979 = vadd.f32 %v3690, %v3978
  %v3980 = vpop.f32.mrb[0].mxu0
  %v3981 = vpop.f32.mrb[0].mxu0
  %v3982 = vadd.f32 %v3693, %v3981
  %v3983 = vpop.f32.mrb[0].mxu0
  %3984 = vmatprep.mubr.bf16.mxu0 0
  %3985 = vmatmul.mubr.bf16.gmra.mrb[0].mxu0 %v2061
  %v3986 = vpop.f32.mrb[0].mxu0
  %v3987 = vadd.f32 %v3698, %v3986
  %v3988 = vpop.f32.mrb[0].mxu0
  %v3989 = vpop.f32.mrb[0].mxu0
  %v3990 = vadd.f32 %v3701, %v3989
  %v3991 = vpop.f32.mrb[0].mxu0
  %3992 = vmatprep.mubr.bf16.mxu0 0
  %3993 = vmatmul.mubr.bf16.gmra.mrb[0].mxu0 %v2064
  %v3994 = vpop.f32.mrb[0].mxu0
  %v3995 = vadd.f32 %v3706, %v3994
  %v3996 = vpop.f32.mrb[0].mxu0
  %v3997 = vpop.f32.mrb[0].mxu0
  %v3998 = vadd.f32 %v3709, %v3997
  %v3999 = vpop.f32.mrb[0].mxu0
  %4000 = vmatprep.mubr.bf16.mxu0 0
  %4001 = vmatmul.mubr.bf16.gmra.mrb[0].mxu0 %v2067
  %v4002 = vpop.f32.mrb[0].mxu0
  %v4003 = vadd.f32 %v3714, %v4002
  %v4004 = vpop.f32.mrb[0].mxu0
  %v4005 = vpop.f32.mrb[0].mxu0
  %v4006 = vadd.f32 %v3717, %v4005
  %v4007 = vpop.f32.mrb[0].mxu0
  %4008 = vmatprep.mubr.bf16.mxu0 0
  %4009 = vmatmul.mubr.bf16.gmra.mrb[0].mxu0 %v2070
  %v4010 = vpop.f32.mrb[0].mxu0
  %v4011 = vadd.f32 %v3722, %v4010
  %v4012 = vpop.f32.mrb[0].mxu0
  %v4013 = vpop.f32.mrb[0].mxu0
  %v4014 = vadd.f32 %v3725, %v4013
  %v4015 = vpop.f32.mrb[0].mxu0
  %4016 = vmatprep.mubr.bf16.mxu0 0
  %4017 = vmatmul.mubr.bf16.gmra.mrb[0].mxu0 %v2073
  %v4018 = vpop.f32.mrb[0].mxu0
  %v4019 = vadd.f32 %v3730, %v4018
  %v4020 = vpop.f32.mrb[0].mxu0
  %v4021 = vpop.f32.mrb[0].mxu0
  %v4022 = vadd.f32 %v3733, %v4021
  %v4023 = vpop.f32.mrb[0].mxu0
  %4024 = vmatprep.mubr.bf16.mxu0 0
  %4025 = vmatmul.mubr.bf16.gmra.mrb[0].mxu0 %v2076
  %v4026 = vpop.f32.mrb[0].mxu0
  %v4027 = vadd.f32 %v3738, %v4026
  %v4028 = vpop.f32.mrb[0].mxu0
  %v4029 = vpop.f32.mrb[0].mxu0
  %v4030 = vadd.f32 %v3741, %v4029
  %v4031 = vpop.f32.mrb[0].mxu0
  %4032 = vmatprep.mubr.bf16.mxu0 0
  %4033 = vmatmul.mubr.bf16.gmra.mrb[0].mxu0 %v2079
  %v4034 = vpop.f32.mrb[0].mxu0
  %v4035 = vadd.f32 %v3746, %v4034
  %v4036 = vpop.f32.mrb[0].mxu0
  %v4037 = vpop.f32.mrb[0].mxu0
  %v4038 = vadd.f32 %v3749, %v4037
  %v4039 = vpop.f32.mrb[0].mxu0
  %4040 = vmatprep.mubr.bf16.mxu0 0
  %4041 = vmatmul.mubr.bf16.gmra.mrb[0].mxu0 %v2082
  %v4042 = vpop.f32.mrb[0].mxu0
  %v4043 = vadd.f32 %v3754, %v4042
  %v4044 = vpop.f32.mrb[0].mxu0
  %v4045 = vpop.f32.mrb[0].mxu0
  %v4046 = vadd.f32 %v3757, %v4045
  %v4047 = vpop.f32.mrb[0].mxu0
  %4048 = vmatprep.mubr.bf16.mxu0 0
  %4049 = vmatmul.mubr.bf16.gmra.mrb[0].mxu0 %v2085
  %v4050 = vpop.f32.mrb[0].mxu0
  %v4051 = vadd.f32 %v3762, %v4050
  %v4052 = vpop.f32.mrb[0].mxu0
  %v4053 = vpop.f32.mrb[0].mxu0
  %v4054 = vadd.f32 %v3765, %v4053
  %v4055 = vpop.f32.mrb[0].mxu0
  %4056 = vmatprep.mubr.bf16.mxu0 0
  %4057 = vmatmul.mubr.bf16.gmra.mrb[0].mxu0 %v2088
  %v4058 = vpop.f32.mrb[0].mxu0
  %v4059 = vadd.f32 %v3770, %v4058
  %v4060 = vpop.f32.mrb[0].mxu0
  %v4061 = vpop.f32.mrb[0].mxu0
  %v4062 = vadd.f32 %v3773, %v4061
  %v4063 = vpop.f32.mrb[0].mxu0
  %4064 = vmatprep.mubr.bf16.mxu0 0
  %4065 = vmatmul.mubr.bf16.gmra.mrb[0].mxu0 %v2091
  %v4066 = vpop.f32.mrb[0].mxu0
  %v4067 = vadd.f32 %v3778, %v4066
  %v4068 = vpop.f32.mrb[0].mxu0
  %v4069 = vpop.f32.mrb[0].mxu0
  %v4070 = vadd.f32 %v3781, %v4069
  %v4071 = vpop.f32.mrb[0].mxu0
  %4072 = vmatprep.mubr.bf16.mxu0 0
  %4073 = vmatmul.mubr.bf16.gmra.mrb[0].mxu0 %v2094
  %v4074 = vpop.f32.mrb[0].mxu0
  %v4075 = vadd.f32 %v3786, %v4074
  %v4076 = vpop.f32.mrb[0].mxu0
  %v4077 = vpop.f32.mrb[0].mxu0
  %v4078 = vadd.f32 %v3789, %v4077
  %v4079 = vpop.f32.mrb[0].mxu0
  %4080 = vmatprep.mubr.bf16.mxu0 0
  %4081 = vmatmul.mubr.bf16.gmra.mrb[0].mxu0 %v2097
  %v4082 = vpop.f32.mrb[0].mxu0
  %v4083 = vadd.f32 %v3794, %v4082
  %v4084 = vpop.f32.mrb[0].mxu0
  %v4085 = vpop.f32.mrb[0].mxu0
  %v4086 = vadd.f32 %v3797, %v4085
  %v4087 = vpop.f32.mrb[0].mxu0
  %4088 = vmatprep.mubr.bf16.mxu0 0
  %4089 = vmatmul.mubr.bf16.gmra.mrb[0].mxu0 %v2206
  %v4090 = vpop.f32.mrb[0].mxu0
  %v4091 = vadd.f32 %v3802, %v4090
  %v4092 = vpop.f32.mrb[0].mxu0
  %v4093 = vpop.f32.mrb[0].mxu0
  %v4094 = vadd.f32 %v3805, %v4093
  %v4095 = vpop.f32.mrb[0].mxu0
  %4096 = vmatprep.mubr.bf16.mxu0 0
  %4097 = vmatmul.mubr.bf16.gmra.mrb[0].mxu0 %v2052
  %v4098 = vpop.f32.mrb[0].mxu0
  %v4099 = vadd.f32 %v3810, %v4098
  %v4100 = vpop.f32.mrb[0].mxu0
  %v4101 = vpop.f32.mrb[0].mxu0
  %v4102 = vadd.f32 %v3813, %v4101
  %v4103 = vpop.f32.mrb[0].mxu0
  %4104 = vmatprep.mubr.bf16.mxu0 0
  %4105 = vmatmul.mubr.bf16.gmra.mrb[0].mxu0 %v2103
  %v4106 = vpop.f32.mrb[0].mxu0
  %v4107 = vadd.f32 %v3818, %v4106
  %v4108 = vpop.f32.mrb[0].mxu0
  %v4109 = vpop.f32.mrb[0].mxu0
  %v4110 = vadd.f32 %v3821, %v4109
  %v4111 = vpop.f32.mrb[0].mxu0
  %4112 = vmatprep.mubr.bf16.mxu0 0
  %4113 = vmatmul.mubr.bf16.gmra.mrb[0].mxu0 %v2106
  %v4114 = vpop.f32.mrb[0].mxu0
  %v4115 = vadd.f32 %v3826, %v4114
  %v4116 = vpop.f32.mrb[0].mxu0
  %v4117 = vpop.f32.mrb[0].mxu0
  %v4118 = vadd.f32 %v3829, %v4117
  %v4119 = vpop.f32.mrb[0].mxu0
  %4120 = vmatprep.mubr.bf16.mxu0 0
  %4121 = vmatmul.mubr.bf16.gmra.mrb[0].mxu0 %v2109
  %v4122 = vpop.f32.mrb[0].mxu0
  %v4123 = vadd.f32 %v3834, %v4122
  %v4124 = vpop.f32.mrb[0].mxu0
  %v4125 = vpop.f32.mrb[0].mxu0
  %v4126 = vadd.f32 %v3837, %v4125
  %v4127 = vpop.f32.mrb[0].mxu0
  %4128 = vmatprep.mubr.bf16.mxu0 0
  %4129 = vmatmul.mubr.bf16.gmra.mrb[0].mxu0 %v2112
  %v4130 = vpop.f32.mrb[0].mxu0
  %v4131 = vadd.f32 %v3842, %v4130
  %v4132 = vpop.f32.mrb[0].mxu0
  %v4133 = vpop.f32.mrb[0].mxu0
  %v4134 = vadd.f32 %v3845, %v4133
  %v4135 = vpop.f32.mrb[0].mxu0
  %4136 = vmatprep.mubr.bf16.mxu0 0
  %4137 = vmatmul.mubr.bf16.gmra.mrb[0].mxu0 %v2115
  %v4138 = vpop.f32.mrb[0].mxu0
  %v4139 = vadd.f32 %v3850, %v4138
  %v4140 = vpop.f32.mrb[0].mxu0
  %v4141 = vpop.f32.mrb[0].mxu0
  %v4142 = vadd.f32 %v3853, %v4141
  %v4143 = vpop.f32.mrb[0].mxu0
  %4144 = vmatprep.mubr.bf16.mxu0 0
  %4145 = vmatmul.mubr.bf16.gmra.mrb[0].mxu0 %v2118
  %v4146 = vpop.f32.mrb[0].mxu0
  %v4147 = vadd.f32 %v3858, %v4146
  %v4148 = vpop.f32.mrb[0].mxu0
  %v4149 = vpop.f32.mrb[0].mxu0
  %v4150 = vadd.f32 %v3861, %v4149
  %v4151 = vpop.f32.mrb[0].mxu0
  %4152 = vmatprep.mubr.bf16.mxu0 0
  %4153 = vmatmul.mubr.bf16.gmra.mrb[0].mxu0 %v2121
  %v4154 = vpop.f32.mrb[0].mxu0
  %v4155 = vadd.f32 %v3866, %v4154
  %v4156 = vpop.f32.mrb[0].mxu0
  %v4157 = vpop.f32.mrb[0].mxu0
  %v4158 = vadd.f32 %v3869, %v4157
  %v4159 = vpop.f32.mrb[0].mxu0
  %4160 = vmatprep.mubr.bf16.mxu0 0
  %4161 = vmatmul.mubr.bf16.gmra.mrb[0].mxu0 %v2124
  %v4162 = vpop.f32.mrb[0].mxu0
  %v4163 = vadd.f32 %v3874, %v4162
  %v4164 = vpop.f32.mrb[0].mxu0
  %v4165 = vpop.f32.mrb[0].mxu0
  %v4166 = vadd.f32 %v3877, %v4165
  %v4167 = vpop.f32.mrb[0].mxu0
  %4168 = vmatprep.mubr.bf16.mxu0 0
  %4169 = vmatmul.mubr.bf16.gmra.mrb[0].mxu0 %v2127
  %v4170 = vpop.f32.mrb[0].mxu0
  %v4171 = vadd.f32 %v3882, %v4170
  %v4172 = vpop.f32.mrb[0].mxu0
  %v4173 = vpop.f32.mrb[0].mxu0
  %v4174 = vadd.f32 %v3885, %v4173
  %v4175 = vpop.f32.mrb[0].mxu0
  %4176 = vmatprep.mubr.bf16.mxu0 0
  %4177 = vmatmul.mubr.bf16.gmra.mrb[0].mxu0 %v2130
  %v4178 = vpop.f32.mrb[0].mxu0
  %v4179 = vadd.f32 %v3890, %v4178
  %v4180 = vpop.f32.mrb[0].mxu0
  %v4181 = vpop.f32.mrb[0].mxu0
  %v4182 = vadd.f32 %v3893, %v4181
  %v4183 = vpop.f32.mrb[0].mxu0
  %4184 = vmatprep.mubr.bf16.mxu0 0
  %4185 = vmatmul.mubr.bf16.gmra.mrb[0].mxu0 %v2133
  %v4186 = vpop.f32.mrb[0].mxu0
  %v4187 = vadd.f32 %v3898, %v4186
  %v4188 = vpop.f32.mrb[0].mxu0
  %v4189 = vpop.f32.mrb[0].mxu0
  %v4190 = vadd.f32 %v3901, %v4189
  %v4191 = vpop.f32.mrb[0].mxu0
  %4192 = vmatprep.mubr.bf16.mxu0 0
  %4193 = vmatmul.mubr.bf16.gmra.mrb[0].mxu0 %v2136
  %v4194 = vpop.f32.mrb[0].mxu0
  %v4195 = vadd.f32 %v3906, %v4194
  %v4196 = vpop.f32.mrb[0].mxu0
  %v4197 = vpop.f32.mrb[0].mxu0
  %v4198 = vadd.f32 %v3909, %v4197
  %v4199 = vpop.f32.mrb[0].mxu0
  %4200 = vmatprep.mubr.bf16.mxu0 0
  %4201 = vmatmul.mubr.bf16.gmra.mrb[0].mxu0 %v2139
  %v4202 = vpop.f32.mrb[0].mxu0
  %v4203 = vadd.f32 %v3914, %v4202
  %v4204 = vpop.f32.mrb[0].mxu0
  %v4205 = vpop.f32.mrb[0].mxu0
  %v4206 = vadd.f32 %v3917, %v4205
  %v4207 = vpop.f32.mrb[0].mxu0
  %4208 = vmatprep.mubr.bf16.mxu0 0
  %4209 = vmatmul.mubr.bf16.gmra.mrb[0].mxu0 %v2142
  %v4210 = vpop.f32.mrb[0].mxu0
  %v4211 = vadd.f32 %v3922, %v4210
  %v4212 = vpop.f32.mrb[0].mxu0
  %v4213 = vpop.f32.mrb[0].mxu0
  %v4214 = vadd.f32 %v3925, %v4213
  %v4215 = vpop.f32.mrb[0].mxu0
  %4216 = vmatprep.mubr.bf16.mxu0 0
  %4217 = vmatmul.mubr.bf16.gmra.mrb[0].mxu0 %v2209
  %v4218 = vpop.f32.mrb[0].mxu0
  %v4219 = vadd.f32 %v3930, %v4218
  %v4220 = vpop.f32.mrb[0].mxu0
  %v4221 = vpop.f32.mrb[0].mxu0
  %v4222 = vadd.f32 %v3933, %v4221
  %v4223 = vpop.f32.mrb[0].mxu0
  %4224 = vmatprep.mubr.bf16.mxu0 0
  %4225 = vmatmul.mubr.bf16.gmra.mrb[0].mxu0 %v2052
  %v4226 = vpop.f32.mrb[0].mxu0
  %v4227 = vadd.f32 %v3938, %v4226
  %v4228 = vpop.f32.mrb[0].mxu0
  %v4229 = vpop.f32.mrb[0].mxu0
  %v4230 = vadd.f32 %v3941, %v4229
  %v4231 = vpop.f32.mrb[0].mxu0
  %4232 = vdwg.mxu0
  %v4233 = vadd.f32 %v3979, %v3982
  %v4234 = vadd.f32 %v4233, %v3987
  %v4235 = vadd.f32 %v4234, %v3990
  %v4236 = vadd.f32 %v4235, %v3995
  %v4237 = vadd.f32 %v4236, %v3998
  %v4238 = vadd.f32 %v4237, %v4003
  %v4239 = vadd.f32 %v4238, %v4006
  %v4240 = vadd.f32 %v4239, %v4011
  %v4241 = vadd.f32 %v4240, %v4014
  %v4242 = vadd.f32 %v4241, %v4019
  %v4243 = vadd.f32 %v4242, %v4022
  %v4244 = vadd.f32 %v4243, %v4027
  %v4245 = vadd.f32 %v4244, %v4030
  %v4246 = vadd.f32 %v4245, %v4035
  %v4247 = vadd.f32 %v4246, %v4038
  %v4248 = vadd.f32 %v4247, %v4043
  %v4249 = vadd.f32 %v4248, %v4046
  %v4250 = vadd.f32 %v4249, %v4051
  %v4251 = vadd.f32 %v4250, %v4054
  %v4252 = vadd.f32 %v4251, %v4059
  %v4253 = vadd.f32 %v4252, %v4062
  %v4254 = vadd.f32 %v4253, %v4067
  %v4255 = vadd.f32 %v4254, %v4070
  %v4256 = vadd.f32 %v4255, %v4075
  %v4257 = vadd.f32 %v4256, %v4078
  %v4258 = vadd.f32 %v4257, %v4083
  %v4259 = vadd.f32 %v4258, %v4086
  %v4260 = vadd.f32 %v4259, %v4091
  %v4261 = vadd.f32 %v4260, %v4094
  %v4262 = vadd.f32 %v4261, %v4099
  %v4263 = vadd.f32 %v4262, %v4102
  %v4264 = vadd.f32 %v4263, %v4107
  %v4265 = vadd.f32 %v4264, %v4110
  %v4266 = vadd.f32 %v4265, %v4115
  %v4267 = vadd.f32 %v4266, %v4118
  %v4268 = vadd.f32 %v4267, %v4123
  %v4269 = vadd.f32 %v4268, %v4126
  %v4270 = vadd.f32 %v4269, %v4131
  %v4271 = vadd.f32 %v4270, %v4134
  %v4272 = vadd.f32 %v4271, %v4139
  %v4273 = vadd.f32 %v4272, %v4142
  %v4274 = vadd.f32 %v4273, %v4147
  %v4275 = vadd.f32 %v4274, %v4150
  %v4276 = vadd.f32 %v4275, %v4155
  %v4277 = vadd.f32 %v4276, %v4158
  %v4278 = vadd.f32 %v4277, %v4163
  %v4279 = vadd.f32 %v4278, %v4166
  %v4280 = vadd.f32 %v4279, %v4171
  %v4281 = vadd.f32 %v4280, %v4174
  %v4282 = vadd.f32 %v4281, %v4179
  %v4283 = vadd.f32 %v4282, %v4182
  %v4284 = vadd.f32 %v4283, %v4187
  %v4285 = vadd.f32 %v4284, %v4190
  %v4286 = vadd.f32 %v4285, %v4195
  %v4287 = vadd.f32 %v4286, %v4198
  %v4288 = vadd.f32 %v4287, %v4203
  %v4289 = vadd.f32 %v4288, %v4206
  %v4290 = vadd.f32 %v4289, %v4211
  %v4291 = vadd.f32 %v4290, %v4214
  %v4292 = vadd.f32 %v4291, %v4219
  %v4293 = vadd.f32 %v4292, %v4222
  %v4294 = vadd.f32 %v4293, %v4227
  %v4295 = vadd.f32 %v4294, %v4230
  %v4296 = vrot.slane %v4295, 4
  %v4297 = vadd.f32 %v4295, %v4296
  %v4298 = vrot.slane %v4297, 2
  %v4299 = vadd.f32 %v4297, %v4298
  %v4300 = vrot.slane %v4299, 1
  %v4301 = vadd.f32 %v4299, %v4300
  %v4302 = vmul.f32 %v4301, %v730
  %v4303 = vsub.f32 %v3979, %v4302
  %v4304 = vsub.f32 %v3982, %v4302
  %v4305 = vsub.f32 %v3987, %v4302
  %v4306 = vsub.f32 %v3990, %v4302
  %v4307 = vsub.f32 %v3995, %v4302
  %v4308 = vsub.f32 %v3998, %v4302
  %v4309 = vsub.f32 %v4003, %v4302
  %v4310 = vsub.f32 %v4006, %v4302
  %v4311 = vsub.f32 %v4011, %v4302
  %v4312 = vsub.f32 %v4014, %v4302
  %v4313 = vsub.f32 %v4019, %v4302
  %v4314 = vsub.f32 %v4022, %v4302
  %v4315 = vsub.f32 %v4027, %v4302
  %v4316 = vsub.f32 %v4030, %v4302
  %v4317 = vsub.f32 %v4035, %v4302
  %v4318 = vsub.f32 %v4038, %v4302
  %v4319 = vsub.f32 %v4043, %v4302
  %v4320 = vsub.f32 %v4046, %v4302
  %v4321 = vsub.f32 %v4051, %v4302
  %v4322 = vsub.f32 %v4054, %v4302
  %v4323 = vsub.f32 %v4059, %v4302
  %v4324 = vsub.f32 %v4062, %v4302
  %v4325 = vsub.f32 %v4067, %v4302
  %v4326 = vsub.f32 %v4070, %v4302
  %v4327 = vsub.f32 %v4075, %v4302
  %v4328 = vsub.f32 %v4078, %v4302
  %v4329 = vsub.f32 %v4083, %v4302
  %v4330 = vsub.f32 %v4086, %v4302
  %v4331 = vsub.f32 %v4091, %v4302
  %v4332 = vsub.f32 %v4094, %v4302
  %v4333 = vsub.f32 %v4099, %v4302
  %v4334 = vsub.f32 %v4102, %v4302
  %v4335 = vsub.f32 %v4107, %v4302
  %v4336 = vsub.f32 %v4110, %v4302
  %v4337 = vsub.f32 %v4115, %v4302
  %v4338 = vsub.f32 %v4118, %v4302
  %v4339 = vsub.f32 %v4123, %v4302
  %v4340 = vsub.f32 %v4126, %v4302
  %v4341 = vsub.f32 %v4131, %v4302
  %v4342 = vsub.f32 %v4134, %v4302
  %v4343 = vsub.f32 %v4139, %v4302
  %v4344 = vsub.f32 %v4142, %v4302
  %v4345 = vsub.f32 %v4147, %v4302
  %v4346 = vsub.f32 %v4150, %v4302
  %v4347 = vsub.f32 %v4155, %v4302
  %v4348 = vsub.f32 %v4158, %v4302
  %v4349 = vsub.f32 %v4163, %v4302
  %v4350 = vsub.f32 %v4166, %v4302
  %v4351 = vsub.f32 %v4171, %v4302
  %v4352 = vsub.f32 %v4174, %v4302
  %v4353 = vsub.f32 %v4179, %v4302
  %v4354 = vsub.f32 %v4182, %v4302
  %v4355 = vsub.f32 %v4187, %v4302
  %v4356 = vsub.f32 %v4190, %v4302
  %v4357 = vsub.f32 %v4195, %v4302
  %v4358 = vsub.f32 %v4198, %v4302
  %v4359 = vsub.f32 %v4203, %v4302
  %v4360 = vsub.f32 %v4206, %v4302
  %v4361 = vsub.f32 %v4211, %v4302
  %v4362 = vsub.f32 %v4214, %v4302
  %v4363 = vsub.f32 %v4219, %v4302
  %v4364 = vsub.f32 %v4222, %v4302
  %v4365 = vsub.f32 %v4227, %v4302
  %v4366 = vsub.f32 %v4230, %v4302
  %v4367 = vmul.f32 %v4303, %v4303
  %v4368 = vmul.f32 %v4304, %v4304
  %v4369 = vmul.f32 %v4305, %v4305
  %v4370 = vmul.f32 %v4306, %v4306
  %v4371 = vmul.f32 %v4307, %v4307
  %v4372 = vmul.f32 %v4308, %v4308
  %v4373 = vmul.f32 %v4309, %v4309
  %v4374 = vmul.f32 %v4310, %v4310
  %v4375 = vmul.f32 %v4311, %v4311
  %v4376 = vmul.f32 %v4312, %v4312
  %v4377 = vmul.f32 %v4313, %v4313
  %v4378 = vmul.f32 %v4314, %v4314
  %v4379 = vmul.f32 %v4315, %v4315
  %v4380 = vmul.f32 %v4316, %v4316
  %v4381 = vmul.f32 %v4317, %v4317
  %v4382 = vmul.f32 %v4318, %v4318
  %v4383 = vmul.f32 %v4319, %v4319
  %v4384 = vmul.f32 %v4320, %v4320
  %v4385 = vmul.f32 %v4321, %v4321
  %v4386 = vmul.f32 %v4322, %v4322
  %v4387 = vmul.f32 %v4323, %v4323
  %v4388 = vmul.f32 %v4324, %v4324
  %v4389 = vmul.f32 %v4325, %v4325
  %v4390 = vmul.f32 %v4326, %v4326
  %v4391 = vmul.f32 %v4327, %v4327
  %v4392 = vmul.f32 %v4328, %v4328
  %v4393 = vmul.f32 %v4329, %v4329
  %v4394 = vmul.f32 %v4330, %v4330
  %v4395 = vmul.f32 %v4331, %v4331
  %v4396 = vmul.f32 %v4332, %v4332
  %v4397 = vmul.f32 %v4333, %v4333
  %v4398 = vmul.f32 %v4334, %v4334
  %v4399 = vmul.f32 %v4335, %v4335
  %v4400 = vmul.f32 %v4336, %v4336
  %v4401 = vmul.f32 %v4337, %v4337
  %v4402 = vmul.f32 %v4338, %v4338
  %v4403 = vmul.f32 %v4339, %v4339
  %v4404 = vmul.f32 %v4340, %v4340
  %v4405 = vmul.f32 %v4341, %v4341
  %v4406 = vmul.f32 %v4342, %v4342
  %v4407 = vmul.f32 %v4343, %v4343
  %v4408 = vmul.f32 %v4344, %v4344
  %v4409 = vmul.f32 %v4345, %v4345
  %v4410 = vmul.f32 %v4346, %v4346
  %v4411 = vmul.f32 %v4347, %v4347
  %v4412 = vmul.f32 %v4348, %v4348
  %v4413 = vmul.f32 %v4349, %v4349
  %v4414 = vmul.f32 %v4350, %v4350
  %v4415 = vmul.f32 %v4351, %v4351
  %v4416 = vmul.f32 %v4352, %v4352
  %v4417 = vmul.f32 %v4353, %v4353
  %v4418 = vmul.f32 %v4354, %v4354
  %v4419 = vmul.f32 %v4355, %v4355
  %v4420 = vmul.f32 %v4356, %v4356
  %v4421 = vmul.f32 %v4357, %v4357
  %v4422 = vmul.f32 %v4358, %v4358
  %v4423 = vmul.f32 %v4359, %v4359
  %v4424 = vmul.f32 %v4360, %v4360
  %v4425 = vmul.f32 %v4361, %v4361
  %v4426 = vmul.f32 %v4362, %v4362
  %v4427 = vmul.f32 %v4363, %v4363
  %v4428 = vmul.f32 %v4364, %v4364
  %v4429 = vmul.f32 %v4365, %v4365
  %v4430 = vmul.f32 %v4366, %v4366
  %v4431 = vadd.f32 %v4367, %v4368
  %v4432 = vadd.f32 %v4431, %v4369
  %v4433 = vadd.f32 %v4432, %v4370
  %v4434 = vadd.f32 %v4433, %v4371
  %v4435 = vadd.f32 %v4434, %v4372
  %v4436 = vadd.f32 %v4435, %v4373
  %v4437 = vadd.f32 %v4436, %v4374
  %v4438 = vadd.f32 %v4437, %v4375
  %v4439 = vadd.f32 %v4438, %v4376
  %v4440 = vadd.f32 %v4439, %v4377
  %v4441 = vadd.f32 %v4440, %v4378
  %v4442 = vadd.f32 %v4441, %v4379
  %v4443 = vadd.f32 %v4442, %v4380
  %v4444 = vadd.f32 %v4443, %v4381
  %v4445 = vadd.f32 %v4444, %v4382
  %v4446 = vadd.f32 %v4445, %v4383
  %v4447 = vadd.f32 %v4446, %v4384
  %v4448 = vadd.f32 %v4447, %v4385
  %v4449 = vadd.f32 %v4448, %v4386
  %v4450 = vadd.f32 %v4449, %v4387
  %v4451 = vadd.f32 %v4450, %v4388
  %v4452 = vadd.f32 %v4451, %v4389
  %v4453 = vadd.f32 %v4452, %v4390
  %v4454 = vadd.f32 %v4453, %v4391
  %v4455 = vadd.f32 %v4454, %v4392
  %v4456 = vadd.f32 %v4455, %v4393
  %v4457 = vadd.f32 %v4456, %v4394
  %v4458 = vadd.f32 %v4457, %v4395
  %v4459 = vadd.f32 %v4458, %v4396
  %v4460 = vadd.f32 %v4459, %v4397
  %v4461 = vadd.f32 %v4460, %v4398
  %v4462 = vadd.f32 %v4461, %v4399
  %v4463 = vadd.f32 %v4462, %v4400
  %v4464 = vadd.f32 %v4463, %v4401
  %v4465 = vadd.f32 %v4464, %v4402
  %v4466 = vadd.f32 %v4465, %v4403
  %v4467 = vadd.f32 %v4466, %v4404
  %v4468 = vadd.f32 %v4467, %v4405
  %v4469 = vadd.f32 %v4468, %v4406
  %v4470 = vadd.f32 %v4469, %v4407
  %v4471 = vadd.f32 %v4470, %v4408
  %v4472 = vadd.f32 %v4471, %v4409
  %v4473 = vadd.f32 %v4472, %v4410
  %v4474 = vadd.f32 %v4473, %v4411
  %v4475 = vadd.f32 %v4474, %v4412
  %v4476 = vadd.f32 %v4475, %v4413
  %v4477 = vadd.f32 %v4476, %v4414
  %v4478 = vadd.f32 %v4477, %v4415
  %v4479 = vadd.f32 %v4478, %v4416
  %v4480 = vadd.f32 %v4479, %v4417
  %v4481 = vadd.f32 %v4480, %v4418
  %v4482 = vadd.f32 %v4481, %v4419
  %v4483 = vadd.f32 %v4482, %v4420
  %v4484 = vadd.f32 %v4483, %v4421
  %v4485 = vadd.f32 %v4484, %v4422
  %v4486 = vadd.f32 %v4485, %v4423
  %v4487 = vadd.f32 %v4486, %v4424
  %v4488 = vadd.f32 %v4487, %v4425
  %v4489 = vadd.f32 %v4488, %v4426
  %v4490 = vadd.f32 %v4489, %v4427
  %v4491 = vadd.f32 %v4490, %v4428
  %v4492 = vadd.f32 %v4491, %v4429
  %v4493 = vadd.f32 %v4492, %v4430
  %v4494 = vrot.slane %v4493, 4
  %v4495 = vadd.f32 %v4493, %v4494
  %v4496 = vrot.slane %v4495, 2
  %v4497 = vadd.f32 %v4495, %v4496
  %v4498 = vrot.slane %v4497, 1
  %v4499 = vadd.f32 %v4497, %v4498
  %v4500 = vmul.f32 %v4499, %v730
  %v4501 = vadd.f32 %v4500, 1e-05
  %v4502 = vrsqrt.pop %v4501
  %v4503 = vmul.f32 %v4303, %v4502
  %v4504 = vmul.f32 %v4304, %v4502
  %v4505 = vmul.f32 %v4305, %v4502
  %v4506 = vmul.f32 %v4306, %v4502
  %v4507 = vmul.f32 %v4307, %v4502
  %v4508 = vmul.f32 %v4308, %v4502
  %v4509 = vmul.f32 %v4309, %v4502
  %v4510 = vmul.f32 %v4310, %v4502
  %v4511 = vmul.f32 %v4311, %v4502
  %v4512 = vmul.f32 %v4312, %v4502
  %v4513 = vmul.f32 %v4313, %v4502
  %v4514 = vmul.f32 %v4314, %v4502
  %v4515 = vmul.f32 %v4315, %v4502
  %v4516 = vmul.f32 %v4316, %v4502
  %v4517 = vmul.f32 %v4317, %v4502
  %v4518 = vmul.f32 %v4318, %v4502
  %v4519 = vmul.f32 %v4319, %v4502
  %v4520 = vmul.f32 %v4320, %v4502
  %v4521 = vmul.f32 %v4321, %v4502
  %v4522 = vmul.f32 %v4322, %v4502
  %v4523 = vmul.f32 %v4323, %v4502
  %v4524 = vmul.f32 %v4324, %v4502
  %v4525 = vmul.f32 %v4325, %v4502
  %v4526 = vmul.f32 %v4326, %v4502
  %v4527 = vmul.f32 %v4327, %v4502
  %v4528 = vmul.f32 %v4328, %v4502
  %v4529 = vmul.f32 %v4329, %v4502
  %v4530 = vmul.f32 %v4330, %v4502
  %v4531 = vmul.f32 %v4331, %v4502
  %v4532 = vmul.f32 %v4332, %v4502
  %v4533 = vmul.f32 %v4333, %v4502
  %v4534 = vmul.f32 %v4334, %v4502
  %v4535 = vmul.f32 %v4335, %v4502
  %v4536 = vmul.f32 %v4336, %v4502
  %v4537 = vmul.f32 %v4337, %v4502
  %v4538 = vmul.f32 %v4338, %v4502
  %v4539 = vmul.f32 %v4339, %v4502
  %v4540 = vmul.f32 %v4340, %v4502
  %v4541 = vmul.f32 %v4341, %v4502
  %v4542 = vmul.f32 %v4342, %v4502
  %v4543 = vmul.f32 %v4343, %v4502
  %v4544 = vmul.f32 %v4344, %v4502
  %v4545 = vmul.f32 %v4345, %v4502
  %v4546 = vmul.f32 %v4346, %v4502
  %v4547 = vmul.f32 %v4347, %v4502
  %v4548 = vmul.f32 %v4348, %v4502
  %v4549 = vmul.f32 %v4349, %v4502
  %v4550 = vmul.f32 %v4350, %v4502
  %v4551 = vmul.f32 %v4351, %v4502
  %v4552 = vmul.f32 %v4352, %v4502
  %v4553 = vmul.f32 %v4353, %v4502
  %v4554 = vmul.f32 %v4354, %v4502
  %v4555 = vmul.f32 %v4355, %v4502
  %v4556 = vmul.f32 %v4356, %v4502
  %v4557 = vmul.f32 %v4357, %v4502
  %v4558 = vmul.f32 %v4358, %v4502
  %v4559 = vmul.f32 %v4359, %v4502
  %v4560 = vmul.f32 %v4360, %v4502
  %v4561 = vmul.f32 %v4361, %v4502
  %v4562 = vmul.f32 %v4362, %v4502
  %v4563 = vmul.f32 %v4363, %v4502
  %v4564 = vmul.f32 %v4364, %v4502
  %v4565 = vmul.f32 %v4365, %v4502
  %v4566 = vmul.f32 %v4366, %v4502
  %v4567 = vld [vmem:[%s5] sm:$0x1]
  %v4569 = vlaneseq
  %v4570 = vshrl.u32 %v4569, 7
  %v4571 = vsub.s32 0, %v4570
  %v4572 = vrot.slane %v4567, %v4571
  %v4574 = vmul.f32 %v4503, %v4572
  %v4575 = vmul.f32 %v4504, %v4572
  %v4576 = vmul.f32 %v4505, %v4572
  %v4577 = vmul.f32 %v4506, %v4572
  %v4578 = vmul.f32 %v4507, %v4572
  %v4579 = vmul.f32 %v4508, %v4572
  %v4580 = vmul.f32 %v4509, %v4572
  %v4581 = vmul.f32 %v4510, %v4572
  %v4582 = vmul.f32 %v4511, %v4572
  %v4583 = vmul.f32 %v4512, %v4572
  %v4584 = vmul.f32 %v4513, %v4572
  %v4585 = vmul.f32 %v4514, %v4572
  %v4586 = vmul.f32 %v4515, %v4572
  %v4587 = vmul.f32 %v4516, %v4572
  %v4588 = vmul.f32 %v4517, %v4572
  %v4589 = vmul.f32 %v4518, %v4572
  %v4590 = vmul.f32 %v4519, %v4572
  %v4591 = vmul.f32 %v4520, %v4572
  %v4592 = vmul.f32 %v4521, %v4572
  %v4593 = vmul.f32 %v4522, %v4572
  %v4594 = vmul.f32 %v4523, %v4572
  %v4595 = vmul.f32 %v4524, %v4572
  %v4596 = vmul.f32 %v4525, %v4572
  %v4597 = vmul.f32 %v4526, %v4572
  %v4598 = vmul.f32 %v4527, %v4572
  %v4599 = vmul.f32 %v4528, %v4572
  %v4600 = vmul.f32 %v4529, %v4572
  %v4601 = vmul.f32 %v4530, %v4572
  %v4602 = vmul.f32 %v4531, %v4572
  %v4603 = vmul.f32 %v4532, %v4572
  %v4604 = vmul.f32 %v4533, %v4572
  %v4605 = vmul.f32 %v4534, %v4572
  %v4606 = vmul.f32 %v4535, %v4572
  %v4607 = vmul.f32 %v4536, %v4572
  %v4608 = vmul.f32 %v4537, %v4572
  %v4609 = vmul.f32 %v4538, %v4572
  %v4610 = vmul.f32 %v4539, %v4572
  %v4611 = vmul.f32 %v4540, %v4572
  %v4612 = vmul.f32 %v4541, %v4572
  %v4613 = vmul.f32 %v4542, %v4572
  %v4614 = vmul.f32 %v4543, %v4572
  %v4615 = vmul.f32 %v4544, %v4572
  %v4616 = vmul.f32 %v4545, %v4572
  %v4617 = vmul.f32 %v4546, %v4572
  %v4618 = vmul.f32 %v4547, %v4572
  %v4619 = vmul.f32 %v4548, %v4572
  %v4620 = vmul.f32 %v4549, %v4572
  %v4621 = vmul.f32 %v4550, %v4572
  %v4622 = vmul.f32 %v4551, %v4572
  %v4623 = vmul.f32 %v4552, %v4572
  %v4624 = vmul.f32 %v4553, %v4572
  %v4625 = vmul.f32 %v4554, %v4572
  %v4626 = vmul.f32 %v4555, %v4572
  %v4627 = vmul.f32 %v4556, %v4572
  %v4628 = vmul.f32 %v4557, %v4572
  %v4629 = vmul.f32 %v4558, %v4572
  %v4630 = vmul.f32 %v4559, %v4572
  %v4631 = vmul.f32 %v4560, %v4572
  %v4632 = vmul.f32 %v4561, %v4572
  %v4633 = vmul.f32 %v4562, %v4572
  %v4634 = vmul.f32 %v4563, %v4572
  %v4635 = vmul.f32 %v4564, %v4572
  %v4636 = vmul.f32 %v4565, %v4572
  %v4637 = vmul.f32 %v4566, %v4572
  %v4638 = vld [vmem:[%s6] sm:$0x1]
  %v4640 = vlaneseq
  %v4641 = vshrl.u32 %v4640, 7
  %v4642 = vsub.s32 0, %v4641
  %v4643 = vrot.slane %v4638, %v4642
  %v4645 = vadd.f32 %v4574, %v4643
  %v4646 = vadd.f32 %v4575, %v4643
  %v4647 = vadd.f32 %v4576, %v4643
  %v4648 = vadd.f32 %v4577, %v4643
  %v4649 = vadd.f32 %v4578, %v4643
  %v4650 = vadd.f32 %v4579, %v4643
  %v4651 = vadd.f32 %v4580, %v4643
  %v4652 = vadd.f32 %v4581, %v4643
  %v4653 = vadd.f32 %v4582, %v4643
  %v4654 = vadd.f32 %v4583, %v4643
  %v4655 = vadd.f32 %v4584, %v4643
  %v4656 = vadd.f32 %v4585, %v4643
  %v4657 = vadd.f32 %v4586, %v4643
  %v4658 = vadd.f32 %v4587, %v4643
  %v4659 = vadd.f32 %v4588, %v4643
  %v4660 = vadd.f32 %v4589, %v4643
  %v4661 = vadd.f32 %v4590, %v4643
  %v4662 = vadd.f32 %v4591, %v4643
  %v4663 = vadd.f32 %v4592, %v4643
  %v4664 = vadd.f32 %v4593, %v4643
  %v4665 = vadd.f32 %v4594, %v4643
  %v4666 = vadd.f32 %v4595, %v4643
  %v4667 = vadd.f32 %v4596, %v4643
  %v4668 = vadd.f32 %v4597, %v4643
  %v4669 = vadd.f32 %v4598, %v4643
  %v4670 = vadd.f32 %v4599, %v4643
  %v4671 = vadd.f32 %v4600, %v4643
  %v4672 = vadd.f32 %v4601, %v4643
  %v4673 = vadd.f32 %v4602, %v4643
  %v4674 = vadd.f32 %v4603, %v4643
  %v4675 = vadd.f32 %v4604, %v4643
  %v4676 = vadd.f32 %v4605, %v4643
  %v4677 = vadd.f32 %v4606, %v4643
  %v4678 = vadd.f32 %v4607, %v4643
  %v4679 = vadd.f32 %v4608, %v4643
  %v4680 = vadd.f32 %v4609, %v4643
  %v4681 = vadd.f32 %v4610, %v4643
  %v4682 = vadd.f32 %v4611, %v4643
  %v4683 = vadd.f32 %v4612, %v4643
  %v4684 = vadd.f32 %v4613, %v4643
  %v4685 = vadd.f32 %v4614, %v4643
  %v4686 = vadd.f32 %v4615, %v4643
  %v4687 = vadd.f32 %v4616, %v4643
  %v4688 = vadd.f32 %v4617, %v4643
  %v4689 = vadd.f32 %v4618, %v4643
  %v4690 = vadd.f32 %v4619, %v4643
  %v4691 = vadd.f32 %v4620, %v4643
  %v4692 = vadd.f32 %v4621, %v4643
  %v4693 = vadd.f32 %v4622, %v4643
  %v4694 = vadd.f32 %v4623, %v4643
  %v4695 = vadd.f32 %v4624, %v4643
  %v4696 = vadd.f32 %v4625, %v4643
  %v4697 = vadd.f32 %v4626, %v4643
  %v4698 = vadd.f32 %v4627, %v4643
  %v4699 = vadd.f32 %v4628, %v4643
  %v4700 = vadd.f32 %v4629, %v4643
  %v4701 = vadd.f32 %v4630, %v4643
  %v4702 = vadd.f32 %v4631, %v4643
  %v4703 = vadd.f32 %v4632, %v4643
  %v4704 = vadd.f32 %v4633, %v4643
  %v4705 = vadd.f32 %v4634, %v4643
  %v4706 = vadd.f32 %v4635, %v4643
  %v4707 = vadd.f32 %v4636, %v4643
  %v4708 = vadd.f32 %v4637, %v4643
  %v4709 = vmax.f32 %v4645, 0.0
  %v4710 = vmax.f32 %v4646, 0.0
  %v4711 = vmax.f32 %v4647, 0.0
  %v4712 = vmax.f32 %v4648, 0.0
  %v4713 = vmax.f32 %v4649, 0.0
  %v4714 = vmax.f32 %v4650, 0.0
  %v4715 = vmax.f32 %v4651, 0.0
  %v4716 = vmax.f32 %v4652, 0.0
  %v4717 = vmax.f32 %v4653, 0.0
  %v4718 = vmax.f32 %v4654, 0.0
  %v4719 = vmax.f32 %v4655, 0.0
  %v4720 = vmax.f32 %v4656, 0.0
  %v4721 = vmax.f32 %v4657, 0.0
  %v4722 = vmax.f32 %v4658, 0.0
  %v4723 = vmax.f32 %v4659, 0.0
  %v4724 = vmax.f32 %v4660, 0.0
  %v4725 = vmax.f32 %v4661, 0.0
  %v4726 = vmax.f32 %v4662, 0.0
  %v4727 = vmax.f32 %v4663, 0.0
  %v4728 = vmax.f32 %v4664, 0.0
  %v4729 = vmax.f32 %v4665, 0.0
  %v4730 = vmax.f32 %v4666, 0.0
  %v4731 = vmax.f32 %v4667, 0.0
  %v4732 = vmax.f32 %v4668, 0.0
  %v4733 = vmax.f32 %v4669, 0.0
  %v4734 = vmax.f32 %v4670, 0.0
  %v4735 = vmax.f32 %v4671, 0.0
  %v4736 = vmax.f32 %v4672, 0.0
  %v4737 = vmax.f32 %v4673, 0.0
  %v4738 = vmax.f32 %v4674, 0.0
  %v4739 = vmax.f32 %v4675, 0.0
  %v4740 = vmax.f32 %v4676, 0.0
  %v4741 = vmax.f32 %v4677, 0.0
  %v4742 = vmax.f32 %v4678, 0.0
  %v4743 = vmax.f32 %v4679, 0.0
  %v4744 = vmax.f32 %v4680, 0.0
  %v4745 = vmax.f32 %v4681, 0.0
  %v4746 = vmax.f32 %v4682, 0.0
  %v4747 = vmax.f32 %v4683, 0.0
  %v4748 = vmax.f32 %v4684, 0.0
  %v4749 = vmax.f32 %v4685, 0.0
  %v4750 = vmax.f32 %v4686, 0.0
  %v4751 = vmax.f32 %v4687, 0.0
  %v4752 = vmax.f32 %v4688, 0.0
  %v4753 = vmax.f32 %v4689, 0.0
  %v4754 = vmax.f32 %v4690, 0.0
  %v4755 = vmax.f32 %v4691, 0.0
  %v4756 = vmax.f32 %v4692, 0.0
  %v4757 = vmax.f32 %v4693, 0.0
  %v4758 = vmax.f32 %v4694, 0.0
  %v4759 = vmax.f32 %v4695, 0.0
  %v4760 = vmax.f32 %v4696, 0.0
  %v4761 = vmax.f32 %v4697, 0.0
  %v4762 = vmax.f32 %v4698, 0.0
  %v4763 = vmax.f32 %v4699, 0.0
  %v4764 = vmax.f32 %v4700, 0.0
  %v4765 = vmax.f32 %v4701, 0.0
  %v4766 = vmax.f32 %v4702, 0.0
  %v4767 = vmax.f32 %v4703, 0.0
  %v4768 = vmax.f32 %v4704, 0.0
  %v4769 = vmax.f32 %v4705, 0.0
  %v4770 = vmax.f32 %v4706, 0.0
  %v4771 = vmax.f32 %v4707, 0.0
  %v4772 = vmax.f32 %v4708, 0.0
  %v4837 = vcombine.high %v4709, %v4709
  %v4839 = vunpack.c.l.s4 1983009808
  %v4840 = vunpack.c.0.s8 %v4839
  %v4841 = vlaneseq
  %v4842 = vshrl.u32 %v4841, 7
  %v4843 = vsub.s32 %v4840, %v4842
  %v4844 = vrot.slane %v4709, %v4843
  %v4846 = vunpack.c.l.s4 1983009808
  %v4847 = vunpack.c.0.s8 %v4846
  %v4848 = vlaneseq
  %v4849 = vshrl.u32 %v4848, 7
  %v4850 = vsub.s32 %v4847, %v4849
  %v4851 = vrot.slane %v4837, %v4850
  %v4852 = vcombine.high %v4844, %v4844
  %v4853 = vcombine.high %v4851, %v4851
  %v4854 = vcombine.high %v4710, %v4710
  %v4856 = vunpack.c.l.s4 1983009808
  %v4857 = vunpack.c.0.s8 %v4856
  %v4858 = vlaneseq
  %v4859 = vshrl.u32 %v4858, 7
  %v4860 = vsub.s32 %v4857, %v4859
  %v4861 = vrot.slane %v4710, %v4860
  %v4863 = vunpack.c.l.s4 1983009808
  %v4864 = vunpack.c.0.s8 %v4863
  %v4865 = vlaneseq
  %v4866 = vshrl.u32 %v4865, 7
  %v4867 = vsub.s32 %v4864, %v4866
  %v4868 = vrot.slane %v4854, %v4867
  %v4869 = vcombine.high %v4861, %v4861
  %v4870 = vcombine.high %v4868, %v4868
  %v4871 = vcombine.high %v4711, %v4711
  %v4873 = vunpack.c.l.s4 1983009808
  %v4874 = vunpack.c.0.s8 %v4873
  %v4875 = vlaneseq
  %v4876 = vshrl.u32 %v4875, 7
  %v4877 = vsub.s32 %v4874, %v4876
  %v4878 = vrot.slane %v4711, %v4877
  %v4880 = vunpack.c.l.s4 1983009808
  %v4881 = vunpack.c.0.s8 %v4880
  %v4882 = vlaneseq
  %v4883 = vshrl.u32 %v4882, 7
  %v4884 = vsub.s32 %v4881, %v4883
  %v4885 = vrot.slane %v4871, %v4884
  %v4886 = vcombine.high %v4878, %v4878
  %v4887 = vcombine.high %v4885, %v4885
  %v4888 = vcombine.high %v4712, %v4712
  %v4890 = vunpack.c.l.s4 1983009808
  %v4891 = vunpack.c.0.s8 %v4890
  %v4892 = vlaneseq
  %v4893 = vshrl.u32 %v4892, 7
  %v4894 = vsub.s32 %v4891, %v4893
  %v4895 = vrot.slane %v4712, %v4894
  %v4897 = vunpack.c.l.s4 1983009808
  %v4898 = vunpack.c.0.s8 %v4897
  %v4899 = vlaneseq
  %v4900 = vshrl.u32 %v4899, 7
  %v4901 = vsub.s32 %v4898, %v4900
  %v4902 = vrot.slane %v4888, %v4901
  %v4903 = vcombine.high %v4895, %v4895
  %v4904 = vcombine.high %v4902, %v4902
  %v4905 = vcombine.high %v4713, %v4713
  %v4907 = vunpack.c.l.s4 1983009808
  %v4908 = vunpack.c.0.s8 %v4907
  %v4909 = vlaneseq
  %v4910 = vshrl.u32 %v4909, 7
  %v4911 = vsub.s32 %v4908, %v4910
  %v4912 = vrot.slane %v4713, %v4911
  %v4914 = vunpack.c.l.s4 1983009808
  %v4915 = vunpack.c.0.s8 %v4914
  %v4916 = vlaneseq
  %v4917 = vshrl.u32 %v4916, 7
  %v4918 = vsub.s32 %v4915, %v4917
  %v4919 = vrot.slane %v4905, %v4918
  %v4920 = vcombine.high %v4912, %v4912
  %v4921 = vcombine.high %v4919, %v4919
  %v4922 = vcombine.high %v4714, %v4714
  %v4924 = vunpack.c.l.s4 1983009808
  %v4925 = vunpack.c.0.s8 %v4924
  %v4926 = vlaneseq
  %v4927 = vshrl.u32 %v4926, 7
  %v4928 = vsub.s32 %v4925, %v4927
  %v4929 = vrot.slane %v4714, %v4928
  %v4931 = vunpack.c.l.s4 1983009808
  %v4932 = vunpack.c.0.s8 %v4931
  %v4933 = vlaneseq
  %v4934 = vshrl.u32 %v4933, 7
  %v4935 = vsub.s32 %v4932, %v4934
  %v4936 = vrot.slane %v4922, %v4935
  %v4937 = vcombine.high %v4929, %v4929
  %v4938 = vcombine.high %v4936, %v4936
  %v4939 = vcombine.high %v4715, %v4715
  %v4941 = vunpack.c.l.s4 1983009808
  %v4942 = vunpack.c.0.s8 %v4941
  %v4943 = vlaneseq
  %v4944 = vshrl.u32 %v4943, 7
  %v4945 = vsub.s32 %v4942, %v4944
  %v4946 = vrot.slane %v4715, %v4945
  %v4948 = vunpack.c.l.s4 1983009808
  %v4949 = vunpack.c.0.s8 %v4948
  %v4950 = vlaneseq
  %v4951 = vshrl.u32 %v4950, 7
  %v4952 = vsub.s32 %v4949, %v4951
  %v4953 = vrot.slane %v4939, %v4952
  %v4954 = vcombine.high %v4946, %v4946
  %v4955 = vcombine.high %v4953, %v4953
  %v4956 = vcombine.high %v4716, %v4716
  %v4958 = vunpack.c.l.s4 1983009808
  %v4959 = vunpack.c.0.s8 %v4958
  %v4960 = vlaneseq
  %v4961 = vshrl.u32 %v4960, 7
  %v4962 = vsub.s32 %v4959, %v4961
  %v4963 = vrot.slane %v4716, %v4962
  %v4965 = vunpack.c.l.s4 1983009808
  %v4966 = vunpack.c.0.s8 %v4965
  %v4967 = vlaneseq
  %v4968 = vshrl.u32 %v4967, 7
  %v4969 = vsub.s32 %v4966, %v4968
  %v4970 = vrot.slane %v4956, %v4969
  %v4971 = vcombine.high %v4963, %v4963
  %v4972 = vcombine.high %v4970, %v4970
  %v4973 = vcombine.high %v4717, %v4717
  %v4975 = vunpack.c.l.s4 1983009808
  %v4976 = vunpack.c.0.s8 %v4975
  %v4977 = vlaneseq
  %v4978 = vshrl.u32 %v4977, 7
  %v4979 = vsub.s32 %v4976, %v4978
  %v4980 = vrot.slane %v4717, %v4979
  %v4982 = vunpack.c.l.s4 1983009808
  %v4983 = vunpack.c.0.s8 %v4982
  %v4984 = vlaneseq
  %v4985 = vshrl.u32 %v4984, 7
  %v4986 = vsub.s32 %v4983, %v4985
  %v4987 = vrot.slane %v4973, %v4986
  %v4988 = vcombine.high %v4980, %v4980
  %v4989 = vcombine.high %v4987, %v4987
  %v4990 = vcombine.high %v4718, %v4718
  %v4992 = vunpack.c.l.s4 1983009808
  %v4993 = vunpack.c.0.s8 %v4992
  %v4994 = vlaneseq
  %v4995 = vshrl.u32 %v4994, 7
  %v4996 = vsub.s32 %v4993, %v4995
  %v4997 = vrot.slane %v4718, %v4996
  %v4999 = vunpack.c.l.s4 1983009808
  %v5000 = vunpack.c.0.s8 %v4999
  %v5001 = vlaneseq
  %v5002 = vshrl.u32 %v5001, 7
  %v5003 = vsub.s32 %v5000, %v5002
  %v5004 = vrot.slane %v4990, %v5003
  %v5005 = vcombine.high %v4997, %v4997
  %v5006 = vcombine.high %v5004, %v5004
  %v5007 = vcombine.high %v4719, %v4719
  %v5009 = vunpack.c.l.s4 1983009808
  %v5010 = vunpack.c.0.s8 %v5009
  %v5011 = vlaneseq
  %v5012 = vshrl.u32 %v5011, 7
  %v5013 = vsub.s32 %v5010, %v5012
  %v5014 = vrot.slane %v4719, %v5013
  %v5016 = vunpack.c.l.s4 1983009808
  %v5017 = vunpack.c.0.s8 %v5016
  %v5018 = vlaneseq
  %v5019 = vshrl.u32 %v5018, 7
  %v5020 = vsub.s32 %v5017, %v5019
  %v5021 = vrot.slane %v5007, %v5020
  %v5022 = vcombine.high %v5014, %v5014
  %v5023 = vcombine.high %v5021, %v5021
  %v5024 = vcombine.high %v4720, %v4720
  %v5026 = vunpack.c.l.s4 1983009808
  %v5027 = vunpack.c.0.s8 %v5026
  %v5028 = vlaneseq
  %v5029 = vshrl.u32 %v5028, 7
  %v5030 = vsub.s32 %v5027, %v5029
  %v5031 = vrot.slane %v4720, %v5030
  %v5033 = vunpack.c.l.s4 1983009808
  %v5034 = vunpack.c.0.s8 %v5033
  %v5035 = vlaneseq
  %v5036 = vshrl.u32 %v5035, 7
  %v5037 = vsub.s32 %v5034, %v5036
  %v5038 = vrot.slane %v5024, %v5037
  %v5039 = vcombine.high %v5031, %v5031
  %v5040 = vcombine.high %v5038, %v5038
  %v5041 = vcombine.high %v4721, %v4721
  %v5043 = vunpack.c.l.s4 1983009808
  %v5044 = vunpack.c.0.s8 %v5043
  %v5045 = vlaneseq
  %v5046 = vshrl.u32 %v5045, 7
  %v5047 = vsub.s32 %v5044, %v5046
  %v5048 = vrot.slane %v4721, %v5047
  %v5050 = vunpack.c.l.s4 1983009808
  %v5051 = vunpack.c.0.s8 %v5050
  %v5052 = vlaneseq
  %v5053 = vshrl.u32 %v5052, 7
  %v5054 = vsub.s32 %v5051, %v5053
  %v5055 = vrot.slane %v5041, %v5054
  %v5056 = vcombine.high %v5048, %v5048
  %v5057 = vcombine.high %v5055, %v5055
  %v5058 = vcombine.high %v4722, %v4722
  %v5060 = vunpack.c.l.s4 1983009808
  %v5061 = vunpack.c.0.s8 %v5060
  %v5062 = vlaneseq
  %v5063 = vshrl.u32 %v5062, 7
  %v5064 = vsub.s32 %v5061, %v5063
  %v5065 = vrot.slane %v4722, %v5064
  %v5067 = vunpack.c.l.s4 1983009808
  %v5068 = vunpack.c.0.s8 %v5067
  %v5069 = vlaneseq
  %v5070 = vshrl.u32 %v5069, 7
  %v5071 = vsub.s32 %v5068, %v5070
  %v5072 = vrot.slane %v5058, %v5071
  %v5073 = vcombine.high %v5065, %v5065
  %v5074 = vcombine.high %v5072, %v5072
  %v5075 = vcombine.high %v4723, %v4723
  %v5077 = vunpack.c.l.s4 1983009808
  %v5078 = vunpack.c.0.s8 %v5077
  %v5079 = vlaneseq
  %v5080 = vshrl.u32 %v5079, 7
  %v5081 = vsub.s32 %v5078, %v5080
  %v5082 = vrot.slane %v4723, %v5081
  %v5084 = vunpack.c.l.s4 1983009808
  %v5085 = vunpack.c.0.s8 %v5084
  %v5086 = vlaneseq
  %v5087 = vshrl.u32 %v5086, 7
  %v5088 = vsub.s32 %v5085, %v5087
  %v5089 = vrot.slane %v5075, %v5088
  %v5090 = vcombine.high %v5082, %v5082
  %v5091 = vcombine.high %v5089, %v5089
  %v5092 = vcombine.high %v4724, %v4724
  %v5094 = vunpack.c.l.s4 1983009808
  %v5095 = vunpack.c.0.s8 %v5094
  %v5096 = vlaneseq
  %v5097 = vshrl.u32 %v5096, 7
  %v5098 = vsub.s32 %v5095, %v5097
  %v5099 = vrot.slane %v4724, %v5098
  %v5101 = vunpack.c.l.s4 1983009808
  %v5102 = vunpack.c.0.s8 %v5101
  %v5103 = vlaneseq
  %v5104 = vshrl.u32 %v5103, 7
  %v5105 = vsub.s32 %v5102, %v5104
  %v5106 = vrot.slane %v5092, %v5105
  %v5107 = vcombine.high %v5099, %v5099
  %v5108 = vcombine.high %v5106, %v5106
  %v5109 = vcombine.high %v4725, %v4725
  %v5111 = vunpack.c.l.s4 1983009808
  %v5112 = vunpack.c.0.s8 %v5111
  %v5113 = vlaneseq
  %v5114 = vshrl.u32 %v5113, 7
  %v5115 = vsub.s32 %v5112, %v5114
  %v5116 = vrot.slane %v4725, %v5115
  %v5118 = vunpack.c.l.s4 1983009808
  %v5119 = vunpack.c.0.s8 %v5118
  %v5120 = vlaneseq
  %v5121 = vshrl.u32 %v5120, 7
  %v5122 = vsub.s32 %v5119, %v5121
  %v5123 = vrot.slane %v5109, %v5122
  %v5124 = vcombine.high %v5116, %v5116
  %v5125 = vcombine.high %v5123, %v5123
  %v5126 = vcombine.high %v4726, %v4726
  %v5128 = vunpack.c.l.s4 1983009808
  %v5129 = vunpack.c.0.s8 %v5128
  %v5130 = vlaneseq
  %v5131 = vshrl.u32 %v5130, 7
  %v5132 = vsub.s32 %v5129, %v5131
  %v5133 = vrot.slane %v4726, %v5132
  %v5135 = vunpack.c.l.s4 1983009808
  %v5136 = vunpack.c.0.s8 %v5135
  %v5137 = vlaneseq
  %v5138 = vshrl.u32 %v5137, 7
  %v5139 = vsub.s32 %v5136, %v5138
  %v5140 = vrot.slane %v5126, %v5139
  %v5141 = vcombine.high %v5133, %v5133
  %v5142 = vcombine.high %v5140, %v5140
  %v5143 = vcombine.high %v4727, %v4727
  %v5145 = vunpack.c.l.s4 1983009808
  %v5146 = vunpack.c.0.s8 %v5145
  %v5147 = vlaneseq
  %v5148 = vshrl.u32 %v5147, 7
  %v5149 = vsub.s32 %v5146, %v5148
  %v5150 = vrot.slane %v4727, %v5149
  %v5152 = vunpack.c.l.s4 1983009808
  %v5153 = vunpack.c.0.s8 %v5152
  %v5154 = vlaneseq
  %v5155 = vshrl.u32 %v5154, 7
  %v5156 = vsub.s32 %v5153, %v5155
  %v5157 = vrot.slane %v5143, %v5156
  %v5158 = vcombine.high %v5150, %v5150
  %v5159 = vcombine.high %v5157, %v5157
  %v5160 = vcombine.high %v4728, %v4728
  %v5162 = vunpack.c.l.s4 1983009808
  %v5163 = vunpack.c.0.s8 %v5162
  %v5164 = vlaneseq
  %v5165 = vshrl.u32 %v5164, 7
  %v5166 = vsub.s32 %v5163, %v5165
  %v5167 = vrot.slane %v4728, %v5166
  %v5169 = vunpack.c.l.s4 1983009808
  %v5170 = vunpack.c.0.s8 %v5169
  %v5171 = vlaneseq
  %v5172 = vshrl.u32 %v5171, 7
  %v5173 = vsub.s32 %v5170, %v5172
  %v5174 = vrot.slane %v5160, %v5173
  %v5175 = vcombine.high %v5167, %v5167
  %v5176 = vcombine.high %v5174, %v5174
  %v5177 = vcombine.high %v4729, %v4729
  %v5179 = vunpack.c.l.s4 1983009808
  %v5180 = vunpack.c.0.s8 %v5179
  %v5181 = vlaneseq
  %v5182 = vshrl.u32 %v5181, 7
  %v5183 = vsub.s32 %v5180, %v5182
  %v5184 = vrot.slane %v4729, %v5183
  %v5186 = vunpack.c.l.s4 1983009808
  %v5187 = vunpack.c.0.s8 %v5186
  %v5188 = vlaneseq
  %v5189 = vshrl.u32 %v5188, 7
  %v5190 = vsub.s32 %v5187, %v5189
  %v5191 = vrot.slane %v5177, %v5190
  %v5192 = vcombine.high %v5184, %v5184
  %v5193 = vcombine.high %v5191, %v5191
  %v5194 = vcombine.high %v4730, %v4730
  %v5196 = vunpack.c.l.s4 1983009808
  %v5197 = vunpack.c.0.s8 %v5196
  %v5198 = vlaneseq
  %v5199 = vshrl.u32 %v5198, 7
  %v5200 = vsub.s32 %v5197, %v5199
  %v5201 = vrot.slane %v4730, %v5200
  %v5203 = vunpack.c.l.s4 1983009808
  %v5204 = vunpack.c.0.s8 %v5203
  %v5205 = vlaneseq
  %v5206 = vshrl.u32 %v5205, 7
  %v5207 = vsub.s32 %v5204, %v5206
  %v5208 = vrot.slane %v5194, %v5207
  %v5209 = vcombine.high %v5201, %v5201
  %v5210 = vcombine.high %v5208, %v5208
  %v5211 = vcombine.high %v4731, %v4731
  %v5213 = vunpack.c.l.s4 1983009808
  %v5214 = vunpack.c.0.s8 %v5213
  %v5215 = vlaneseq
  %v5216 = vshrl.u32 %v5215, 7
  %v5217 = vsub.s32 %v5214, %v5216
  %v5218 = vrot.slane %v4731, %v5217
  %v5220 = vunpack.c.l.s4 1983009808
  %v5221 = vunpack.c.0.s8 %v5220
  %v5222 = vlaneseq
  %v5223 = vshrl.u32 %v5222, 7
  %v5224 = vsub.s32 %v5221, %v5223
  %v5225 = vrot.slane %v5211, %v5224
  %v5226 = vcombine.high %v5218, %v5218
  %v5227 = vcombine.high %v5225, %v5225
  %v5228 = vcombine.high %v4732, %v4732
  %v5230 = vunpack.c.l.s4 1983009808
  %v5231 = vunpack.c.0.s8 %v5230
  %v5232 = vlaneseq
  %v5233 = vshrl.u32 %v5232, 7
  %v5234 = vsub.s32 %v5231, %v5233
  %v5235 = vrot.slane %v4732, %v5234
  %v5237 = vunpack.c.l.s4 1983009808
  %v5238 = vunpack.c.0.s8 %v5237
  %v5239 = vlaneseq
  %v5240 = vshrl.u32 %v5239, 7
  %v5241 = vsub.s32 %v5238, %v5240
  %v5242 = vrot.slane %v5228, %v5241
  %v5243 = vcombine.high %v5235, %v5235
  %v5244 = vcombine.high %v5242, %v5242
  %v5245 = vcombine.high %v4733, %v4733
  %v5247 = vunpack.c.l.s4 1983009808
  %v5248 = vunpack.c.0.s8 %v5247
  %v5249 = vlaneseq
  %v5250 = vshrl.u32 %v5249, 7
  %v5251 = vsub.s32 %v5248, %v5250
  %v5252 = vrot.slane %v4733, %v5251
  %v5254 = vunpack.c.l.s4 1983009808
  %v5255 = vunpack.c.0.s8 %v5254
  %v5256 = vlaneseq
  %v5257 = vshrl.u32 %v5256, 7
  %v5258 = vsub.s32 %v5255, %v5257
  %v5259 = vrot.slane %v5245, %v5258
  %v5260 = vcombine.high %v5252, %v5252
  %v5261 = vcombine.high %v5259, %v5259
  %v5262 = vcombine.high %v4734, %v4734
  %v5264 = vunpack.c.l.s4 1983009808
  %v5265 = vunpack.c.0.s8 %v5264
  %v5266 = vlaneseq
  %v5267 = vshrl.u32 %v5266, 7
  %v5268 = vsub.s32 %v5265, %v5267
  %v5269 = vrot.slane %v4734, %v5268
  %v5271 = vunpack.c.l.s4 1983009808
  %v5272 = vunpack.c.0.s8 %v5271
  %v5273 = vlaneseq
  %v5274 = vshrl.u32 %v5273, 7
  %v5275 = vsub.s32 %v5272, %v5274
  %v5276 = vrot.slane %v5262, %v5275
  %v5277 = vcombine.high %v5269, %v5269
  %v5278 = vcombine.high %v5276, %v5276
  %v5279 = vcombine.high %v4735, %v4735
  %v5281 = vunpack.c.l.s4 1983009808
  %v5282 = vunpack.c.0.s8 %v5281
  %v5283 = vlaneseq
  %v5284 = vshrl.u32 %v5283, 7
  %v5285 = vsub.s32 %v5282, %v5284
  %v5286 = vrot.slane %v4735, %v5285
  %v5288 = vunpack.c.l.s4 1983009808
  %v5289 = vunpack.c.0.s8 %v5288
  %v5290 = vlaneseq
  %v5291 = vshrl.u32 %v5290, 7
  %v5292 = vsub.s32 %v5289, %v5291
  %v5293 = vrot.slane %v5279, %v5292
  %v5294 = vcombine.high %v5286, %v5286
  %v5295 = vcombine.high %v5293, %v5293
  %v5296 = vcombine.high %v4736, %v4736
  %v5298 = vunpack.c.l.s4 1983009808
  %v5299 = vunpack.c.0.s8 %v5298
  %v5300 = vlaneseq
  %v5301 = vshrl.u32 %v5300, 7
  %v5302 = vsub.s32 %v5299, %v5301
  %v5303 = vrot.slane %v4736, %v5302
  %v5305 = vunpack.c.l.s4 1983009808
  %v5306 = vunpack.c.0.s8 %v5305
  %v5307 = vlaneseq
  %v5308 = vshrl.u32 %v5307, 7
  %v5309 = vsub.s32 %v5306, %v5308
  %v5310 = vrot.slane %v5296, %v5309
  %v5311 = vcombine.high %v5303, %v5303
  %v5312 = vcombine.high %v5310, %v5310
  %v5313 = vcombine.high %v4737, %v4737
  %v5315 = vunpack.c.l.s4 1983009808
  %v5316 = vunpack.c.0.s8 %v5315
  %v5317 = vlaneseq
  %v5318 = vshrl.u32 %v5317, 7
  %v5319 = vsub.s32 %v5316, %v5318
  %v5320 = vrot.slane %v4737, %v5319
  %v5322 = vunpack.c.l.s4 1983009808
  %v5323 = vunpack.c.0.s8 %v5322
  %v5324 = vlaneseq
  %v5325 = vshrl.u32 %v5324, 7
  %v5326 = vsub.s32 %v5323, %v5325
  %v5327 = vrot.slane %v5313, %v5326
  %v5328 = vcombine.high %v5320, %v5320
  %v5329 = vcombine.high %v5327, %v5327
  %v5330 = vcombine.high %v4738, %v4738
  %v5332 = vunpack.c.l.s4 1983009808
  %v5333 = vunpack.c.0.s8 %v5332
  %v5334 = vlaneseq
  %v5335 = vshrl.u32 %v5334, 7
  %v5336 = vsub.s32 %v5333, %v5335
  %v5337 = vrot.slane %v4738, %v5336
  %v5339 = vunpack.c.l.s4 1983009808
  %v5340 = vunpack.c.0.s8 %v5339
  %v5341 = vlaneseq
  %v5342 = vshrl.u32 %v5341, 7
  %v5343 = vsub.s32 %v5340, %v5342
  %v5344 = vrot.slane %v5330, %v5343
  %v5345 = vcombine.high %v5337, %v5337
  %v5346 = vcombine.high %v5344, %v5344
  %v5347 = vcombine.high %v4739, %v4739
  %v5349 = vunpack.c.l.s4 1983009808
  %v5350 = vunpack.c.0.s8 %v5349
  %v5351 = vlaneseq
  %v5352 = vshrl.u32 %v5351, 7
  %v5353 = vsub.s32 %v5350, %v5352
  %v5354 = vrot.slane %v4739, %v5353
  %v5356 = vunpack.c.l.s4 1983009808
  %v5357 = vunpack.c.0.s8 %v5356
  %v5358 = vlaneseq
  %v5359 = vshrl.u32 %v5358, 7
  %v5360 = vsub.s32 %v5357, %v5359
  %v5361 = vrot.slane %v5347, %v5360
  %v5362 = vcombine.high %v5354, %v5354
  %v5363 = vcombine.high %v5361, %v5361
  %v5364 = vcombine.high %v4740, %v4740
  %v5366 = vunpack.c.l.s4 1983009808
  %v5367 = vunpack.c.0.s8 %v5366
  %v5368 = vlaneseq
  %v5369 = vshrl.u32 %v5368, 7
  %v5370 = vsub.s32 %v5367, %v5369
  %v5371 = vrot.slane %v4740, %v5370
  %v5373 = vunpack.c.l.s4 1983009808
  %v5374 = vunpack.c.0.s8 %v5373
  %v5375 = vlaneseq
  %v5376 = vshrl.u32 %v5375, 7
  %v5377 = vsub.s32 %v5374, %v5376
  %v5378 = vrot.slane %v5364, %v5377
  %v5379 = vcombine.high %v5371, %v5371
  %v5380 = vcombine.high %v5378, %v5378
  %v5381 = vcombine.high %v4741, %v4741
  %v5383 = vunpack.c.l.s4 1983009808
  %v5384 = vunpack.c.0.s8 %v5383
  %v5385 = vlaneseq
  %v5386 = vshrl.u32 %v5385, 7
  %v5387 = vsub.s32 %v5384, %v5386
  %v5388 = vrot.slane %v4741, %v5387
  %v5390 = vunpack.c.l.s4 1983009808
  %v5391 = vunpack.c.0.s8 %v5390
  %v5392 = vlaneseq
  %v5393 = vshrl.u32 %v5392, 7
  %v5394 = vsub.s32 %v5391, %v5393
  %v5395 = vrot.slane %v5381, %v5394
  %v5396 = vcombine.high %v5388, %v5388
  %v5397 = vcombine.high %v5395, %v5395
  %v5398 = vcombine.high %v4742, %v4742
  %v5400 = vunpack.c.l.s4 1983009808
  %v5401 = vunpack.c.0.s8 %v5400
  %v5402 = vlaneseq
  %v5403 = vshrl.u32 %v5402, 7
  %v5404 = vsub.s32 %v5401, %v5403
  %v5405 = vrot.slane %v4742, %v5404
  %v5407 = vunpack.c.l.s4 1983009808
  %v5408 = vunpack.c.0.s8 %v5407
  %v5409 = vlaneseq
  %v5410 = vshrl.u32 %v5409, 7
  %v5411 = vsub.s32 %v5408, %v5410
  %v5412 = vrot.slane %v5398, %v5411
  %v5413 = vcombine.high %v5405, %v5405
  %v5414 = vcombine.high %v5412, %v5412
  %v5415 = vcombine.high %v4743, %v4743
  %v5417 = vunpack.c.l.s4 1983009808
  %v5418 = vunpack.c.0.s8 %v5417
  %v5419 = vlaneseq
  %v5420 = vshrl.u32 %v5419, 7
  %v5421 = vsub.s32 %v5418, %v5420
  %v5422 = vrot.slane %v4743, %v5421
  %v5424 = vunpack.c.l.s4 1983009808
  %v5425 = vunpack.c.0.s8 %v5424
  %v5426 = vlaneseq
  %v5427 = vshrl.u32 %v5426, 7
  %v5428 = vsub.s32 %v5425, %v5427
  %v5429 = vrot.slane %v5415, %v5428
  %v5430 = vcombine.high %v5422, %v5422
  %v5431 = vcombine.high %v5429, %v5429
  %v5432 = vcombine.high %v4744, %v4744
  %v5434 = vunpack.c.l.s4 1983009808
  %v5435 = vunpack.c.0.s8 %v5434
  %v5436 = vlaneseq
  %v5437 = vshrl.u32 %v5436, 7
  %v5438 = vsub.s32 %v5435, %v5437
  %v5439 = vrot.slane %v4744, %v5438
  %v5441 = vunpack.c.l.s4 1983009808
  %v5442 = vunpack.c.0.s8 %v5441
  %v5443 = vlaneseq
  %v5444 = vshrl.u32 %v5443, 7
  %v5445 = vsub.s32 %v5442, %v5444
  %v5446 = vrot.slane %v5432, %v5445
  %v5447 = vcombine.high %v5439, %v5439
  %v5448 = vcombine.high %v5446, %v5446
  %v5449 = vcombine.high %v4745, %v4745
  %v5451 = vunpack.c.l.s4 1983009808
  %v5452 = vunpack.c.0.s8 %v5451
  %v5453 = vlaneseq
  %v5454 = vshrl.u32 %v5453, 7
  %v5455 = vsub.s32 %v5452, %v5454
  %v5456 = vrot.slane %v4745, %v5455
  %v5458 = vunpack.c.l.s4 1983009808
  %v5459 = vunpack.c.0.s8 %v5458
  %v5460 = vlaneseq
  %v5461 = vshrl.u32 %v5460, 7
  %v5462 = vsub.s32 %v5459, %v5461
  %v5463 = vrot.slane %v5449, %v5462
  %v5464 = vcombine.high %v5456, %v5456
  %v5465 = vcombine.high %v5463, %v5463
  %v5466 = vcombine.high %v4746, %v4746
  %v5468 = vunpack.c.l.s4 1983009808
  %v5469 = vunpack.c.0.s8 %v5468
  %v5470 = vlaneseq
  %v5471 = vshrl.u32 %v5470, 7
  %v5472 = vsub.s32 %v5469, %v5471
  %v5473 = vrot.slane %v4746, %v5472
  %v5475 = vunpack.c.l.s4 1983009808
  %v5476 = vunpack.c.0.s8 %v5475
  %v5477 = vlaneseq
  %v5478 = vshrl.u32 %v5477, 7
  %v5479 = vsub.s32 %v5476, %v5478
  %v5480 = vrot.slane %v5466, %v5479
  %v5481 = vcombine.high %v5473, %v5473
  %v5482 = vcombine.high %v5480, %v5480
  %v5483 = vcombine.high %v4747, %v4747
  %v5485 = vunpack.c.l.s4 1983009808
  %v5486 = vunpack.c.0.s8 %v5485
  %v5487 = vlaneseq
  %v5488 = vshrl.u32 %v5487, 7
  %v5489 = vsub.s32 %v5486, %v5488
  %v5490 = vrot.slane %v4747, %v5489
  %v5492 = vunpack.c.l.s4 1983009808
  %v5493 = vunpack.c.0.s8 %v5492
  %v5494 = vlaneseq
  %v5495 = vshrl.u32 %v5494, 7
  %v5496 = vsub.s32 %v5493, %v5495
  %v5497 = vrot.slane %v5483, %v5496
  %v5498 = vcombine.high %v5490, %v5490
  %v5499 = vcombine.high %v5497, %v5497
  %v5500 = vcombine.high %v4748, %v4748
  %v5502 = vunpack.c.l.s4 1983009808
  %v5503 = vunpack.c.0.s8 %v5502
  %v5504 = vlaneseq
  %v5505 = vshrl.u32 %v5504, 7
  %v5506 = vsub.s32 %v5503, %v5505
  %v5507 = vrot.slane %v4748, %v5506
  %v5509 = vunpack.c.l.s4 1983009808
  %v5510 = vunpack.c.0.s8 %v5509
  %v5511 = vlaneseq
  %v5512 = vshrl.u32 %v5511, 7
  %v5513 = vsub.s32 %v5510, %v5512
  %v5514 = vrot.slane %v5500, %v5513
  %v5515 = vcombine.high %v5507, %v5507
  %v5516 = vcombine.high %v5514, %v5514
  %v5517 = vcombine.high %v4749, %v4749
  %v5519 = vunpack.c.l.s4 1983009808
  %v5520 = vunpack.c.0.s8 %v5519
  %v5521 = vlaneseq
  %v5522 = vshrl.u32 %v5521, 7
  %v5523 = vsub.s32 %v5520, %v5522
  %v5524 = vrot.slane %v4749, %v5523
  %v5526 = vunpack.c.l.s4 1983009808
  %v5527 = vunpack.c.0.s8 %v5526
  %v5528 = vlaneseq
  %v5529 = vshrl.u32 %v5528, 7
  %v5530 = vsub.s32 %v5527, %v5529
  %v5531 = vrot.slane %v5517, %v5530
  %v5532 = vcombine.high %v5524, %v5524
  %v5533 = vcombine.high %v5531, %v5531
  %v5534 = vcombine.high %v4750, %v4750
  %v5536 = vunpack.c.l.s4 1983009808
  %v5537 = vunpack.c.0.s8 %v5536
  %v5538 = vlaneseq
  %v5539 = vshrl.u32 %v5538, 7
  %v5540 = vsub.s32 %v5537, %v5539
  %v5541 = vrot.slane %v4750, %v5540
  %v5543 = vunpack.c.l.s4 1983009808
  %v5544 = vunpack.c.0.s8 %v5543
  %v5545 = vlaneseq
  %v5546 = vshrl.u32 %v5545, 7
  %v5547 = vsub.s32 %v5544, %v5546
  %v5548 = vrot.slane %v5534, %v5547
  %v5549 = vcombine.high %v5541, %v5541
  %v5550 = vcombine.high %v5548, %v5548
  %v5551 = vcombine.high %v4751, %v4751
  %v5553 = vunpack.c.l.s4 1983009808
  %v5554 = vunpack.c.0.s8 %v5553
  %v5555 = vlaneseq
  %v5556 = vshrl.u32 %v5555, 7
  %v5557 = vsub.s32 %v5554, %v5556
  %v5558 = vrot.slane %v4751, %v5557
  %v5560 = vunpack.c.l.s4 1983009808
  %v5561 = vunpack.c.0.s8 %v5560
  %v5562 = vlaneseq
  %v5563 = vshrl.u32 %v5562, 7
  %v5564 = vsub.s32 %v5561, %v5563
  %v5565 = vrot.slane %v5551, %v5564
  %v5566 = vcombine.high %v5558, %v5558
  %v5567 = vcombine.high %v5565, %v5565
  %v5568 = vcombine.high %v4752, %v4752
  %v5570 = vunpack.c.l.s4 1983009808
  %v5571 = vunpack.c.0.s8 %v5570
  %v5572 = vlaneseq
  %v5573 = vshrl.u32 %v5572, 7
  %v5574 = vsub.s32 %v5571, %v5573
  %v5575 = vrot.slane %v4752, %v5574
  %v5577 = vunpack.c.l.s4 1983009808
  %v5578 = vunpack.c.0.s8 %v5577
  %v5579 = vlaneseq
  %v5580 = vshrl.u32 %v5579, 7
  %v5581 = vsub.s32 %v5578, %v5580
  %v5582 = vrot.slane %v5568, %v5581
  %v5583 = vcombine.high %v5575, %v5575
  %v5584 = vcombine.high %v5582, %v5582
  %v5585 = vcombine.high %v4753, %v4753
  %v5587 = vunpack.c.l.s4 1983009808
  %v5588 = vunpack.c.0.s8 %v5587
  %v5589 = vlaneseq
  %v5590 = vshrl.u32 %v5589, 7
  %v5591 = vsub.s32 %v5588, %v5590
  %v5592 = vrot.slane %v4753, %v5591
  %v5594 = vunpack.c.l.s4 1983009808
  %v5595 = vunpack.c.0.s8 %v5594
  %v5596 = vlaneseq
  %v5597 = vshrl.u32 %v5596, 7
  %v5598 = vsub.s32 %v5595, %v5597
  %v5599 = vrot.slane %v5585, %v5598
  %v5600 = vcombine.high %v5592, %v5592
  %v5601 = vcombine.high %v5599, %v5599
  %v5602 = vcombine.high %v4754, %v4754
  %v5604 = vunpack.c.l.s4 1983009808
  %v5605 = vunpack.c.0.s8 %v5604
  %v5606 = vlaneseq
  %v5607 = vshrl.u32 %v5606, 7
  %v5608 = vsub.s32 %v5605, %v5607
  %v5609 = vrot.slane %v4754, %v5608
  %v5611 = vunpack.c.l.s4 1983009808
  %v5612 = vunpack.c.0.s8 %v5611
  %v5613 = vlaneseq
  %v5614 = vshrl.u32 %v5613, 7
  %v5615 = vsub.s32 %v5612, %v5614
  %v5616 = vrot.slane %v5602, %v5615
  %v5617 = vcombine.high %v5609, %v5609
  %v5618 = vcombine.high %v5616, %v5616
  %v5619 = vcombine.high %v4755, %v4755
  %v5621 = vunpack.c.l.s4 1983009808
  %v5622 = vunpack.c.0.s8 %v5621
  %v5623 = vlaneseq
  %v5624 = vshrl.u32 %v5623, 7
  %v5625 = vsub.s32 %v5622, %v5624
  %v5626 = vrot.slane %v4755, %v5625
  %v5628 = vunpack.c.l.s4 1983009808
  %v5629 = vunpack.c.0.s8 %v5628
  %v5630 = vlaneseq
  %v5631 = vshrl.u32 %v5630, 7
  %v5632 = vsub.s32 %v5629, %v5631
  %v5633 = vrot.slane %v5619, %v5632
  %v5634 = vcombine.high %v5626, %v5626
  %v5635 = vcombine.high %v5633, %v5633
  %v5636 = vcombine.high %v4756, %v4756
  %v5638 = vunpack.c.l.s4 1983009808
  %v5639 = vunpack.c.0.s8 %v5638
  %v5640 = vlaneseq
  %v5641 = vshrl.u32 %v5640, 7
  %v5642 = vsub.s32 %v5639, %v5641
  %v5643 = vrot.slane %v4756, %v5642
  %v5645 = vunpack.c.l.s4 1983009808
  %v5646 = vunpack.c.0.s8 %v5645
  %v5647 = vlaneseq
  %v5648 = vshrl.u32 %v5647, 7
  %v5649 = vsub.s32 %v5646, %v5648
  %v5650 = vrot.slane %v5636, %v5649
  %v5651 = vcombine.high %v5643, %v5643
  %v5652 = vcombine.high %v5650, %v5650
  %v5653 = vcombine.high %v4757, %v4757
  %v5655 = vunpack.c.l.s4 1983009808
  %v5656 = vunpack.c.0.s8 %v5655
  %v5657 = vlaneseq
  %v5658 = vshrl.u32 %v5657, 7
  %v5659 = vsub.s32 %v5656, %v5658
  %v5660 = vrot.slane %v4757, %v5659
  %v5662 = vunpack.c.l.s4 1983009808
  %v5663 = vunpack.c.0.s8 %v5662
  %v5664 = vlaneseq
  %v5665 = vshrl.u32 %v5664, 7
  %v5666 = vsub.s32 %v5663, %v5665
  %v5667 = vrot.slane %v5653, %v5666
  %v5668 = vcombine.high %v5660, %v5660
  %v5669 = vcombine.high %v5667, %v5667
  %v5670 = vcombine.high %v4758, %v4758
  %v5672 = vunpack.c.l.s4 1983009808
  %v5673 = vunpack.c.0.s8 %v5672
  %v5674 = vlaneseq
  %v5675 = vshrl.u32 %v5674, 7
  %v5676 = vsub.s32 %v5673, %v5675
  %v5677 = vrot.slane %v4758, %v5676
  %v5679 = vunpack.c.l.s4 1983009808
  %v5680 = vunpack.c.0.s8 %v5679
  %v5681 = vlaneseq
  %v5682 = vshrl.u32 %v5681, 7
  %v5683 = vsub.s32 %v5680, %v5682
  %v5684 = vrot.slane %v5670, %v5683
  %v5685 = vcombine.high %v5677, %v5677
  %v5686 = vcombine.high %v5684, %v5684
  %v5687 = vcombine.high %v4759, %v4759
  %v5689 = vunpack.c.l.s4 1983009808
  %v5690 = vunpack.c.0.s8 %v5689
  %v5691 = vlaneseq
  %v5692 = vshrl.u32 %v5691, 7
  %v5693 = vsub.s32 %v5690, %v5692
  %v5694 = vrot.slane %v4759, %v5693
  %v5696 = vunpack.c.l.s4 1983009808
  %v5697 = vunpack.c.0.s8 %v5696
  %v5698 = vlaneseq
  %v5699 = vshrl.u32 %v5698, 7
  %v5700 = vsub.s32 %v5697, %v5699
  %v5701 = vrot.slane %v5687, %v5700
  %v5702 = vcombine.high %v5694, %v5694
  %v5703 = vcombine.high %v5701, %v5701
  %v5704 = vcombine.high %v4760, %v4760
  %v5706 = vunpack.c.l.s4 1983009808
  %v5707 = vunpack.c.0.s8 %v5706
  %v5708 = vlaneseq
  %v5709 = vshrl.u32 %v5708, 7
  %v5710 = vsub.s32 %v5707, %v5709
  %v5711 = vrot.slane %v4760, %v5710
  %v5713 = vunpack.c.l.s4 1983009808
  %v5714 = vunpack.c.0.s8 %v5713
  %v5715 = vlaneseq
  %v5716 = vshrl.u32 %v5715, 7
  %v5717 = vsub.s32 %v5714, %v5716
  %v5718 = vrot.slane %v5704, %v5717
  %v5719 = vcombine.high %v5711, %v5711
  %v5720 = vcombine.high %v5718, %v5718
  %v5721 = vcombine.high %v4761, %v4761
  %v5723 = vunpack.c.l.s4 1983009808
  %v5724 = vunpack.c.0.s8 %v5723
  %v5725 = vlaneseq
  %v5726 = vshrl.u32 %v5725, 7
  %v5727 = vsub.s32 %v5724, %v5726
  %v5728 = vrot.slane %v4761, %v5727
  %v5730 = vunpack.c.l.s4 1983009808
  %v5731 = vunpack.c.0.s8 %v5730
  %v5732 = vlaneseq
  %v5733 = vshrl.u32 %v5732, 7
  %v5734 = vsub.s32 %v5731, %v5733
  %v5735 = vrot.slane %v5721, %v5734
  %v5736 = vcombine.high %v5728, %v5728
  %v5737 = vcombine.high %v5735, %v5735
  %v5738 = vcombine.high %v4762, %v4762
  %v5740 = vunpack.c.l.s4 1983009808
  %v5741 = vunpack.c.0.s8 %v5740
  %v5742 = vlaneseq
  %v5743 = vshrl.u32 %v5742, 7
  %v5744 = vsub.s32 %v5741, %v5743
  %v5745 = vrot.slane %v4762, %v5744
  %v5747 = vunpack.c.l.s4 1983009808
  %v5748 = vunpack.c.0.s8 %v5747
  %v5749 = vlaneseq
  %v5750 = vshrl.u32 %v5749, 7
  %v5751 = vsub.s32 %v5748, %v5750
  %v5752 = vrot.slane %v5738, %v5751
  %v5753 = vcombine.high %v5745, %v5745
  %v5754 = vcombine.high %v5752, %v5752
  %v5755 = vcombine.high %v4763, %v4763
  %v5757 = vunpack.c.l.s4 1983009808
  %v5758 = vunpack.c.0.s8 %v5757
  %v5759 = vlaneseq
  %v5760 = vshrl.u32 %v5759, 7
  %v5761 = vsub.s32 %v5758, %v5760
  %v5762 = vrot.slane %v4763, %v5761
  %v5764 = vunpack.c.l.s4 1983009808
  %v5765 = vunpack.c.0.s8 %v5764
  %v5766 = vlaneseq
  %v5767 = vshrl.u32 %v5766, 7
  %v5768 = vsub.s32 %v5765, %v5767
  %v5769 = vrot.slane %v5755, %v5768
  %v5770 = vcombine.high %v5762, %v5762
  %v5771 = vcombine.high %v5769, %v5769
  %v5772 = vcombine.high %v4764, %v4764
  %v5774 = vunpack.c.l.s4 1983009808
  %v5775 = vunpack.c.0.s8 %v5774
  %v5776 = vlaneseq
  %v5777 = vshrl.u32 %v5776, 7
  %v5778 = vsub.s32 %v5775, %v5777
  %v5779 = vrot.slane %v4764, %v5778
  %v5781 = vunpack.c.l.s4 1983009808
  %v5782 = vunpack.c.0.s8 %v5781
  %v5783 = vlaneseq
  %v5784 = vshrl.u32 %v5783, 7
  %v5785 = vsub.s32 %v5782, %v5784
  %v5786 = vrot.slane %v5772, %v5785
  %v5787 = vcombine.high %v5779, %v5779
  %v5788 = vcombine.high %v5786, %v5786
  %v5789 = vcombine.high %v4765, %v4765
  %v5791 = vunpack.c.l.s4 1983009808
  %v5792 = vunpack.c.0.s8 %v5791
  %v5793 = vlaneseq
  %v5794 = vshrl.u32 %v5793, 7
  %v5795 = vsub.s32 %v5792, %v5794
  %v5796 = vrot.slane %v4765, %v5795
  %v5798 = vunpack.c.l.s4 1983009808
  %v5799 = vunpack.c.0.s8 %v5798
  %v5800 = vlaneseq
  %v5801 = vshrl.u32 %v5800, 7
  %v5802 = vsub.s32 %v5799, %v5801
  %v5803 = vrot.slane %v5789, %v5802
  %v5804 = vcombine.high %v5796, %v5796
  %v5805 = vcombine.high %v5803, %v5803
  %v5806 = vcombine.high %v4766, %v4766
  %v5808 = vunpack.c.l.s4 1983009808
  %v5809 = vunpack.c.0.s8 %v5808
  %v5810 = vlaneseq
  %v5811 = vshrl.u32 %v5810, 7
  %v5812 = vsub.s32 %v5809, %v5811
  %v5813 = vrot.slane %v4766, %v5812
  %v5815 = vunpack.c.l.s4 1983009808
  %v5816 = vunpack.c.0.s8 %v5815
  %v5817 = vlaneseq
  %v5818 = vshrl.u32 %v5817, 7
  %v5819 = vsub.s32 %v5816, %v5818
  %v5820 = vrot.slane %v5806, %v5819
  %v5821 = vcombine.high %v5813, %v5813
  %v5822 = vcombine.high %v5820, %v5820
  %v5823 = vcombine.high %v4767, %v4767
  %v5825 = vunpack.c.l.s4 1983009808
  %v5826 = vunpack.c.0.s8 %v5825
  %v5827 = vlaneseq
  %v5828 = vshrl.u32 %v5827, 7
  %v5829 = vsub.s32 %v5826, %v5828
  %v5830 = vrot.slane %v4767, %v5829
  %v5832 = vunpack.c.l.s4 1983009808
  %v5833 = vunpack.c.0.s8 %v5832
  %v5834 = vlaneseq
  %v5835 = vshrl.u32 %v5834, 7
  %v5836 = vsub.s32 %v5833, %v5835
  %v5837 = vrot.slane %v5823, %v5836
  %v5838 = vcombine.high %v5830, %v5830
  %v5839 = vcombine.high %v5837, %v5837
  %v5840 = vcombine.high %v4768, %v4768
  %v5842 = vunpack.c.l.s4 1983009808
  %v5843 = vunpack.c.0.s8 %v5842
  %v5844 = vlaneseq
  %v5845 = vshrl.u32 %v5844, 7
  %v5846 = vsub.s32 %v5843, %v5845
  %v5847 = vrot.slane %v4768, %v5846
  %v5849 = vunpack.c.l.s4 1983009808
  %v5850 = vunpack.c.0.s8 %v5849
  %v5851 = vlaneseq
  %v5852 = vshrl.u32 %v5851, 7
  %v5853 = vsub.s32 %v5850, %v5852
  %v5854 = vrot.slane %v5840, %v5853
  %v5855 = vcombine.high %v5847, %v5847
  %v5856 = vcombine.high %v5854, %v5854
  %v5857 = vcombine.high %v4769, %v4769
  %v5859 = vunpack.c.l.s4 1983009808
  %v5860 = vunpack.c.0.s8 %v5859
  %v5861 = vlaneseq
  %v5862 = vshrl.u32 %v5861, 7
  %v5863 = vsub.s32 %v5860, %v5862
  %v5864 = vrot.slane %v4769, %v5863
  %v5866 = vunpack.c.l.s4 1983009808
  %v5867 = vunpack.c.0.s8 %v5866
  %v5868 = vlaneseq
  %v5869 = vshrl.u32 %v5868, 7
  %v5870 = vsub.s32 %v5867, %v5869
  %v5871 = vrot.slane %v5857, %v5870
  %v5872 = vcombine.high %v5864, %v5864
  %v5873 = vcombine.high %v5871, %v5871
  %v5874 = vcombine.high %v4770, %v4770
  %v5876 = vunpack.c.l.s4 1983009808
  %v5877 = vunpack.c.0.s8 %v5876
  %v5878 = vlaneseq
  %v5879 = vshrl.u32 %v5878, 7
  %v5880 = vsub.s32 %v5877, %v5879
  %v5881 = vrot.slane %v4770, %v5880
  %v5883 = vunpack.c.l.s4 1983009808
  %v5884 = vunpack.c.0.s8 %v5883
  %v5885 = vlaneseq
  %v5886 = vshrl.u32 %v5885, 7
  %v5887 = vsub.s32 %v5884, %v5886
  %v5888 = vrot.slane %v5874, %v5887
  %v5889 = vcombine.high %v5881, %v5881
  %v5890 = vcombine.high %v5888, %v5888
  %v5891 = vcombine.high %v4771, %v4771
  %v5893 = vunpack.c.l.s4 1983009808
  %v5894 = vunpack.c.0.s8 %v5893
  %v5895 = vlaneseq
  %v5896 = vshrl.u32 %v5895, 7
  %v5897 = vsub.s32 %v5894, %v5896
  %v5898 = vrot.slane %v4771, %v5897
  %v5900 = vunpack.c.l.s4 1983009808
  %v5901 = vunpack.c.0.s8 %v5900
  %v5902 = vlaneseq
  %v5903 = vshrl.u32 %v5902, 7
  %v5904 = vsub.s32 %v5901, %v5903
  %v5905 = vrot.slane %v5891, %v5904
  %v5906 = vcombine.high %v5898, %v5898
  %v5907 = vcombine.high %v5905, %v5905
  %v5908 = vcombine.high %v4772, %v4772
  %v5910 = vunpack.c.l.s4 1983009808
  %v5911 = vunpack.c.0.s8 %v5910
  %v5912 = vlaneseq
  %v5913 = vshrl.u32 %v5912, 7
  %v5914 = vsub.s32 %v5911, %v5913
  %v5915 = vrot.slane %v4772, %v5914
  %v5917 = vunpack.c.l.s4 1983009808
  %v5918 = vunpack.c.0.s8 %v5917
  %v5919 = vlaneseq
  %v5920 = vshrl.u32 %v5919, 7
  %v5921 = vsub.s32 %v5918, %v5920
  %v5922 = vrot.slane %v5908, %v5921
  %v5923 = vcombine.high %v5915, %v5915
  %v5924 = vcombine.high %v5922, %v5922
  %v6181 = vrot.slane %v4844, 7
  %v6182 = vrot.slane %v6181, 2
  %v6183 = vrot.slane %v4852, 7
  %v6184 = vrot.slane %v6183, 2
  %v6185 = vrot.slane %v4851, 7
  %v6186 = vrot.slane %v6185, 2
  %v6187 = vrot.slane %v4853, 7
  %v6188 = vrot.slane %v6187, 2
  %v6189 = vrot.slane %v4861, 7
  %v6190 = vrot.slane %v6189, 2
  %v6191 = vrot.slane %v4869, 7
  %v6192 = vrot.slane %v6191, 2
  %v6193 = vrot.slane %v4868, 7
  %v6194 = vrot.slane %v6193, 2
  %v6195 = vrot.slane %v4870, 7
  %v6196 = vrot.slane %v6195, 2
  %v6197 = vrot.slane %v4878, 7
  %v6198 = vrot.slane %v6197, 2
  %v6199 = vrot.slane %v4886, 7
  %v6200 = vrot.slane %v6199, 2
  %v6201 = vrot.slane %v4885, 7
  %v6202 = vrot.slane %v6201, 2
  %v6203 = vrot.slane %v4887, 7
  %v6204 = vrot.slane %v6203, 2
  %v6205 = vrot.slane %v4895, 7
  %v6206 = vrot.slane %v6205, 2
  %v6207 = vrot.slane %v4903, 7
  %v6208 = vrot.slane %v6207, 2
  %v6209 = vrot.slane %v4902, 7
  %v6210 = vrot.slane %v6209, 2
  %v6211 = vrot.slane %v4904, 7
  %v6212 = vrot.slane %v6211, 2
  %v6213 = vrot.slane %v4912, 7
  %v6214 = vrot.slane %v6213, 2
  %v6215 = vrot.slane %v4920, 7
  %v6216 = vrot.slane %v6215, 2
  %v6217 = vrot.slane %v4919, 7
  %v6218 = vrot.slane %v6217, 2
  %v6219 = vrot.slane %v4921, 7
  %v6220 = vrot.slane %v6219, 2
  %v6221 = vrot.slane %v4929, 7
  %v6222 = vrot.slane %v6221, 2
  %v6223 = vrot.slane %v4937, 7
  %v6224 = vrot.slane %v6223, 2
  %v6225 = vrot.slane %v4936, 7
  %v6226 = vrot.slane %v6225, 2
  %v6227 = vrot.slane %v4938, 7
  %v6228 = vrot.slane %v6227, 2
  %v6229 = vrot.slane %v4946, 7
  %v6230 = vrot.slane %v6229, 2
  %v6231 = vrot.slane %v4954, 7
  %v6232 = vrot.slane %v6231, 2
  %v6233 = vrot.slane %v4953, 7
  %v6234 = vrot.slane %v6233, 2
  %v6235 = vrot.slane %v4955, 7
  %v6236 = vrot.slane %v6235, 2
  %v6237 = vrot.slane %v4963, 7
  %v6238 = vrot.slane %v6237, 2
  %v6239 = vrot.slane %v4971, 7
  %v6240 = vrot.slane %v6239, 2
  %v6241 = vrot.slane %v4970, 7
  %v6242 = vrot.slane %v6241, 2
  %v6243 = vrot.slane %v4972, 7
  %v6244 = vrot.slane %v6243, 2
  %v6245 = vrot.slane %v4980, 7
  %v6246 = vrot.slane %v6245, 2
  %v6247 = vrot.slane %v4988, 7
  %v6248 = vrot.slane %v6247, 2
  %v6249 = vrot.slane %v4987, 7
  %v6250 = vrot.slane %v6249, 2
  %v6251 = vrot.slane %v4989, 7
  %v6252 = vrot.slane %v6251, 2
  %v6253 = vrot.slane %v4997, 7
  %v6254 = vrot.slane %v6253, 2
  %v6255 = vrot.slane %v5005, 7
  %v6256 = vrot.slane %v6255, 2
  %v6257 = vrot.slane %v5004, 7
  %v6258 = vrot.slane %v6257, 2
  %v6259 = vrot.slane %v5006, 7
  %v6260 = vrot.slane %v6259, 2
  %v6261 = vrot.slane %v5014, 7
  %v6262 = vrot.slane %v6261, 2
  %v6263 = vrot.slane %v5022, 7
  %v6264 = vrot.slane %v6263, 2
  %v6265 = vrot.slane %v5021, 7
  %v6266 = vrot.slane %v6265, 2
  %v6267 = vrot.slane %v5023, 7
  %v6268 = vrot.slane %v6267, 2
  %v6269 = vrot.slane %v5031, 7
  %v6270 = vrot.slane %v6269, 2
  %v6271 = vrot.slane %v5039, 7
  %v6272 = vrot.slane %v6271, 2
  %v6273 = vrot.slane %v5038, 7
  %v6274 = vrot.slane %v6273, 2
  %v6275 = vrot.slane %v5040, 7
  %v6276 = vrot.slane %v6275, 2
  %v6277 = vrot.slane %v5048, 7
  %v6278 = vrot.slane %v6277, 2
  %v6279 = vrot.slane %v5056, 7
  %v6280 = vrot.slane %v6279, 2
  %v6281 = vrot.slane %v5055, 7
  %v6282 = vrot.slane %v6281, 2
  %v6283 = vrot.slane %v5057, 7
  %v6284 = vrot.slane %v6283, 2
  %v6285 = vrot.slane %v5065, 7
  %v6286 = vrot.slane %v6285, 2
  %v6287 = vrot.slane %v5073, 7
  %v6288 = vrot.slane %v6287, 2
  %v6289 = vrot.slane %v5072, 7
  %v6290 = vrot.slane %v6289, 2
  %v6291 = vrot.slane %v5074, 7
  %v6292 = vrot.slane %v6291, 2
  %v6293 = vrot.slane %v5082, 7
  %v6294 = vrot.slane %v6293, 2
  %v6295 = vrot.slane %v5090, 7
  %v6296 = vrot.slane %v6295, 2
  %v6297 = vrot.slane %v5089, 7
  %v6298 = vrot.slane %v6297, 2
  %v6299 = vrot.slane %v5091, 7
  %v6300 = vrot.slane %v6299, 2
  %v6301 = vrot.slane %v5099, 7
  %v6302 = vrot.slane %v6301, 2
  %v6303 = vrot.slane %v5107, 7
  %v6304 = vrot.slane %v6303, 2
  %v6305 = vrot.slane %v5106, 7
  %v6306 = vrot.slane %v6305, 2
  %v6307 = vrot.slane %v5108, 7
  %v6308 = vrot.slane %v6307, 2
  %v6309 = vrot.slane %v5116, 7
  %v6310 = vrot.slane %v6309, 2
  %v6311 = vrot.slane %v5124, 7
  %v6312 = vrot.slane %v6311, 2
  %v6313 = vrot.slane %v5123, 7
  %v6314 = vrot.slane %v6313, 2
  %v6315 = vrot.slane %v5125, 7
  %v6316 = vrot.slane %v6315, 2
  %v6317 = vrot.slane %v5133, 7
  %v6318 = vrot.slane %v6317, 2
  %v6319 = vrot.slane %v5141, 7
  %v6320 = vrot.slane %v6319, 2
  %v6321 = vrot.slane %v5140, 7
  %v6322 = vrot.slane %v6321, 2
  %v6323 = vrot.slane %v5142, 7
  %v6324 = vrot.slane %v6323, 2
  %v6325 = vrot.slane %v5150, 7
  %v6326 = vrot.slane %v6325, 2
  %v6327 = vrot.slane %v5158, 7
  %v6328 = vrot.slane %v6327, 2
  %v6329 = vrot.slane %v5157, 7
  %v6330 = vrot.slane %v6329, 2
  %v6331 = vrot.slane %v5159, 7
  %v6332 = vrot.slane %v6331, 2
  %v6333 = vrot.slane %v5167, 7
  %v6334 = vrot.slane %v6333, 2
  %v6335 = vrot.slane %v5175, 7
  %v6336 = vrot.slane %v6335, 2
  %v6337 = vrot.slane %v5174, 7
  %v6338 = vrot.slane %v6337, 2
  %v6339 = vrot.slane %v5176, 7
  %v6340 = vrot.slane %v6339, 2
  %v6341 = vrot.slane %v5184, 7
  %v6342 = vrot.slane %v6341, 2
  %v6343 = vrot.slane %v5192, 7
  %v6344 = vrot.slane %v6343, 2
  %v6345 = vrot.slane %v5191, 7
  %v6346 = vrot.slane %v6345, 2
  %v6347 = vrot.slane %v5193, 7
  %v6348 = vrot.slane %v6347, 2
  %v6349 = vrot.slane %v5201, 7
  %v6350 = vrot.slane %v6349, 2
  %v6351 = vrot.slane %v5209, 7
  %v6352 = vrot.slane %v6351, 2
  %v6353 = vrot.slane %v5208, 7
  %v6354 = vrot.slane %v6353, 2
  %v6355 = vrot.slane %v5210, 7
  %v6356 = vrot.slane %v6355, 2
  %v6357 = vrot.slane %v5218, 7
  %v6358 = vrot.slane %v6357, 2
  %v6359 = vrot.slane %v5226, 7
  %v6360 = vrot.slane %v6359, 2
  %v6361 = vrot.slane %v5225, 7
  %v6362 = vrot.slane %v6361, 2
  %v6363 = vrot.slane %v5227, 7
  %v6364 = vrot.slane %v6363, 2
  %v6365 = vrot.slane %v5235, 7
  %v6366 = vrot.slane %v6365, 2
  %v6367 = vrot.slane %v5243, 7
  %v6368 = vrot.slane %v6367, 2
  %v6369 = vrot.slane %v5242, 7
  %v6370 = vrot.slane %v6369, 2
  %v6371 = vrot.slane %v5244, 7
  %v6372 = vrot.slane %v6371, 2
  %v6373 = vrot.slane %v5252, 7
  %v6374 = vrot.slane %v6373, 2
  %v6375 = vrot.slane %v5260, 7
  %v6376 = vrot.slane %v6375, 2
  %v6377 = vrot.slane %v5259, 7
  %v6378 = vrot.slane %v6377, 2
  %v6379 = vrot.slane %v5261, 7
  %v6380 = vrot.slane %v6379, 2
  %v6381 = vrot.slane %v5269, 7
  %v6382 = vrot.slane %v6381, 2
  %v6383 = vrot.slane %v5277, 7
  %v6384 = vrot.slane %v6383, 2
  %v6385 = vrot.slane %v5276, 7
  %v6386 = vrot.slane %v6385, 2
  %v6387 = vrot.slane %v5278, 7
  %v6388 = vrot.slane %v6387, 2
  %v6389 = vrot.slane %v5286, 7
  %v6390 = vrot.slane %v6389, 2
  %v6391 = vrot.slane %v5294, 7
  %v6392 = vrot.slane %v6391, 2
  %v6393 = vrot.slane %v5293, 7
  %v6394 = vrot.slane %v6393, 2
  %v6395 = vrot.slane %v5295, 7
  %v6396 = vrot.slane %v6395, 2
  %v6397 = vrot.slane %v5303, 7
  %v6398 = vrot.slane %v6397, 2
  %v6399 = vrot.slane %v5311, 7
  %v6400 = vrot.slane %v6399, 2
  %v6401 = vrot.slane %v5310, 7
  %v6402 = vrot.slane %v6401, 2
  %v6403 = vrot.slane %v5312, 7
  %v6404 = vrot.slane %v6403, 2
  %v6405 = vrot.slane %v5320, 7
  %v6406 = vrot.slane %v6405, 2
  %v6407 = vrot.slane %v5328, 7
  %v6408 = vrot.slane %v6407, 2
  %v6409 = vrot.slane %v5327, 7
  %v6410 = vrot.slane %v6409, 2
  %v6411 = vrot.slane %v5329, 7
  %v6412 = vrot.slane %v6411, 2
  %v6413 = vrot.slane %v5337, 7
  %v6414 = vrot.slane %v6413, 2
  %v6415 = vrot.slane %v5345, 7
  %v6416 = vrot.slane %v6415, 2
  %v6417 = vrot.slane %v5344, 7
  %v6418 = vrot.slane %v6417, 2
  %v6419 = vrot.slane %v5346, 7
  %v6420 = vrot.slane %v6419, 2
  %v6421 = vrot.slane %v5354, 7
  %v6422 = vrot.slane %v6421, 2
  %v6423 = vrot.slane %v5362, 7
  %v6424 = vrot.slane %v6423, 2
  %v6425 = vrot.slane %v5361, 7
  %v6426 = vrot.slane %v6425, 2
  %v6427 = vrot.slane %v5363, 7
  %v6428 = vrot.slane %v6427, 2
  %v6429 = vrot.slane %v5371, 7
  %v6430 = vrot.slane %v6429, 2
  %v6431 = vrot.slane %v5379, 7
  %v6432 = vrot.slane %v6431, 2
  %v6433 = vrot.slane %v5378, 7
  %v6434 = vrot.slane %v6433, 2
  %v6435 = vrot.slane %v5380, 7
  %v6436 = vrot.slane %v6435, 2
  %v6437 = vrot.slane %v5388, 7
  %v6438 = vrot.slane %v6437, 2
  %v6439 = vrot.slane %v5396, 7
  %v6440 = vrot.slane %v6439, 2
  %v6441 = vrot.slane %v5395, 7
  %v6442 = vrot.slane %v6441, 2
  %v6443 = vrot.slane %v5397, 7
  %v6444 = vrot.slane %v6443, 2
  %v6445 = vrot.slane %v5405, 7
  %v6446 = vrot.slane %v6445, 2
  %v6447 = vrot.slane %v5413, 7
  %v6448 = vrot.slane %v6447, 2
  %v6449 = vrot.slane %v5412, 7
  %v6450 = vrot.slane %v6449, 2
  %v6451 = vrot.slane %v5414, 7
  %v6452 = vrot.slane %v6451, 2
  %v6453 = vrot.slane %v5422, 7
  %v6454 = vrot.slane %v6453, 2
  %v6455 = vrot.slane %v5430, 7
  %v6456 = vrot.slane %v6455, 2
  %v6457 = vrot.slane %v5429, 7
  %v6458 = vrot.slane %v6457, 2
  %v6459 = vrot.slane %v5431, 7
  %v6460 = vrot.slane %v6459, 2
  %v6461 = vrot.slane %v5439, 7
  %v6462 = vrot.slane %v6461, 2
  %v6463 = vrot.slane %v5447, 7
  %v6464 = vrot.slane %v6463, 2
  %v6465 = vrot.slane %v5446, 7
  %v6466 = vrot.slane %v6465, 2
  %v6467 = vrot.slane %v5448, 7
  %v6468 = vrot.slane %v6467, 2
  %v6469 = vrot.slane %v5456, 7
  %v6470 = vrot.slane %v6469, 2
  %v6471 = vrot.slane %v5464, 7
  %v6472 = vrot.slane %v6471, 2
  %v6473 = vrot.slane %v5463, 7
  %v6474 = vrot.slane %v6473, 2
  %v6475 = vrot.slane %v5465, 7
  %v6476 = vrot.slane %v6475, 2
  %v6477 = vrot.slane %v5473, 7
  %v6478 = vrot.slane %v6477, 2
  %v6479 = vrot.slane %v5481, 7
  %v6480 = vrot.slane %v6479, 2
  %v6481 = vrot.slane %v5480, 7
  %v6482 = vrot.slane %v6481, 2
  %v6483 = vrot.slane %v5482, 7
  %v6484 = vrot.slane %v6483, 2
  %v6485 = vrot.slane %v5490, 7
  %v6486 = vrot.slane %v6485, 2
  %v6487 = vrot.slane %v5498, 7
  %v6488 = vrot.slane %v6487, 2
  %v6489 = vrot.slane %v5497, 7
  %v6490 = vrot.slane %v6489, 2
  %v6491 = vrot.slane %v5499, 7
  %v6492 = vrot.slane %v6491, 2
  %v6493 = vrot.slane %v5507, 7
  %v6494 = vrot.slane %v6493, 2
  %v6495 = vrot.slane %v5515, 7
  %v6496 = vrot.slane %v6495, 2
  %v6497 = vrot.slane %v5514, 7
  %v6498 = vrot.slane %v6497, 2
  %v6499 = vrot.slane %v5516, 7
  %v6500 = vrot.slane %v6499, 2
  %v6501 = vrot.slane %v5524, 7
  %v6502 = vrot.slane %v6501, 2
  %v6503 = vrot.slane %v5532, 7
  %v6504 = vrot.slane %v6503, 2
  %v6505 = vrot.slane %v5531, 7
  %v6506 = vrot.slane %v6505, 2
  %v6507 = vrot.slane %v5533, 7
  %v6508 = vrot.slane %v6507, 2
  %v6509 = vrot.slane %v5541, 7
  %v6510 = vrot.slane %v6509, 2
  %v6511 = vrot.slane %v5549, 7
  %v6512 = vrot.slane %v6511, 2
  %v6513 = vrot.slane %v5548, 7
  %v6514 = vrot.slane %v6513, 2
  %v6515 = vrot.slane %v5550, 7
  %v6516 = vrot.slane %v6515, 2
  %v6517 = vrot.slane %v5558, 7
  %v6518 = vrot.slane %v6517, 2
  %v6519 = vrot.slane %v5566, 7
  %v6520 = vrot.slane %v6519, 2
  %v6521 = vrot.slane %v5565, 7
  %v6522 = vrot.slane %v6521, 2
  %v6523 = vrot.slane %v5567, 7
  %v6524 = vrot.slane %v6523, 2
  %v6525 = vrot.slane %v5575, 7
  %v6526 = vrot.slane %v6525, 2
  %v6527 = vrot.slane %v5583, 7
  %v6528 = vrot.slane %v6527, 2
  %v6529 = vrot.slane %v5582, 7
  %v6530 = vrot.slane %v6529, 2
  %v6531 = vrot.slane %v5584, 7
  %v6532 = vrot.slane %v6531, 2
  %v6533 = vrot.slane %v5592, 7
  %v6534 = vrot.slane %v6533, 2
  %v6535 = vrot.slane %v5600, 7
  %v6536 = vrot.slane %v6535, 2
  %v6537 = vrot.slane %v5599, 7
  %v6538 = vrot.slane %v6537, 2
  %v6539 = vrot.slane %v5601, 7
  %v6540 = vrot.slane %v6539, 2
  %v6541 = vrot.slane %v5609, 7
  %v6542 = vrot.slane %v6541, 2
  %v6543 = vrot.slane %v5617, 7
  %v6544 = vrot.slane %v6543, 2
  %v6545 = vrot.slane %v5616, 7
  %v6546 = vrot.slane %v6545, 2
  %v6547 = vrot.slane %v5618, 7
  %v6548 = vrot.slane %v6547, 2
  %v6549 = vrot.slane %v5626, 7
  %v6550 = vrot.slane %v6549, 2
  %v6551 = vrot.slane %v5634, 7
  %v6552 = vrot.slane %v6551, 2
  %v6553 = vrot.slane %v5633, 7
  %v6554 = vrot.slane %v6553, 2
  %v6555 = vrot.slane %v5635, 7
  %v6556 = vrot.slane %v6555, 2
  %v6557 = vrot.slane %v5643, 7
  %v6558 = vrot.slane %v6557, 2
  %v6559 = vrot.slane %v5651, 7
  %v6560 = vrot.slane %v6559, 2
  %v6561 = vrot.slane %v5650, 7
  %v6562 = vrot.slane %v6561, 2
  %v6563 = vrot.slane %v5652, 7
  %v6564 = vrot.slane %v6563, 2
  %v6565 = vrot.slane %v5660, 7
  %v6566 = vrot.slane %v6565, 2
  %v6567 = vrot.slane %v5668, 7
  %v6568 = vrot.slane %v6567, 2
  %v6569 = vrot.slane %v5667, 7
  %v6570 = vrot.slane %v6569, 2
  %v6571 = vrot.slane %v5669, 7
  %v6572 = vrot.slane %v6571, 2
  %v6573 = vrot.slane %v5677, 7
  %v6574 = vrot.slane %v6573, 2
  %v6575 = vrot.slane %v5685, 7
  %v6576 = vrot.slane %v6575, 2
  %v6577 = vrot.slane %v5684, 7
  %v6578 = vrot.slane %v6577, 2
  %v6579 = vrot.slane %v5686, 7
  %v6580 = vrot.slane %v6579, 2
  %v6581 = vrot.slane %v5694, 7
  %v6582 = vrot.slane %v6581, 2
  %v6583 = vrot.slane %v5702, 7
  %v6584 = vrot.slane %v6583, 2
  %v6585 = vrot.slane %v5701, 7
  %v6586 = vrot.slane %v6585, 2
  %v6587 = vrot.slane %v5703, 7
  %v6588 = vrot.slane %v6587, 2
  %v6589 = vrot.slane %v5711, 7
  %v6590 = vrot.slane %v6589, 2
  %v6591 = vrot.slane %v5719, 7
  %v6592 = vrot.slane %v6591, 2
  %v6593 = vrot.slane %v5718, 7
  %v6594 = vrot.slane %v6593, 2
  %v6595 = vrot.slane %v5720, 7
  %v6596 = vrot.slane %v6595, 2
  %v6597 = vrot.slane %v5728, 7
  %v6598 = vrot.slane %v6597, 2
  %v6599 = vrot.slane %v5736, 7
  %v6600 = vrot.slane %v6599, 2
  %v6601 = vrot.slane %v5735, 7
  %v6602 = vrot.slane %v6601, 2
  %v6603 = vrot.slane %v5737, 7
  %v6604 = vrot.slane %v6603, 2
  %v6605 = vrot.slane %v5745, 7
  %v6606 = vrot.slane %v6605, 2
  %v6607 = vrot.slane %v5753, 7
  %v6608 = vrot.slane %v6607, 2
  %v6609 = vrot.slane %v5752, 7
  %v6610 = vrot.slane %v6609, 2
  %v6611 = vrot.slane %v5754, 7
  %v6612 = vrot.slane %v6611, 2
  %v6613 = vrot.slane %v5762, 7
  %v6614 = vrot.slane %v6613, 2
  %v6615 = vrot.slane %v5770, 7
  %v6616 = vrot.slane %v6615, 2
  %v6617 = vrot.slane %v5769, 7
  %v6618 = vrot.slane %v6617, 2
  %v6619 = vrot.slane %v5771, 7
  %v6620 = vrot.slane %v6619, 2
  %v6621 = vrot.slane %v5779, 7
  %v6622 = vrot.slane %v6621, 2
  %v6623 = vrot.slane %v5787, 7
  %v6624 = vrot.slane %v6623, 2
  %v6625 = vrot.slane %v5786, 7
  %v6626 = vrot.slane %v6625, 2
  %v6627 = vrot.slane %v5788, 7
  %v6628 = vrot.slane %v6627, 2
  %v6629 = vrot.slane %v5796, 7
  %v6630 = vrot.slane %v6629, 2
  %v6631 = vrot.slane %v5804, 7
  %v6632 = vrot.slane %v6631, 2
  %v6633 = vrot.slane %v5803, 7
  %v6634 = vrot.slane %v6633, 2
  %v6635 = vrot.slane %v5805, 7
  %v6636 = vrot.slane %v6635, 2
  %v6637 = vrot.slane %v5813, 7
  %v6638 = vrot.slane %v6637, 2
  %v6639 = vrot.slane %v5821, 7
  %v6640 = vrot.slane %v6639, 2
  %v6641 = vrot.slane %v5820, 7
  %v6642 = vrot.slane %v6641, 2
  %v6643 = vrot.slane %v5822, 7
  %v6644 = vrot.slane %v6643, 2
  %v6645 = vrot.slane %v5830, 7
  %v6646 = vrot.slane %v6645, 2
  %v6647 = vrot.slane %v5838, 7
  %v6648 = vrot.slane %v6647, 2
  %v6649 = vrot.slane %v5837, 7
  %v6650 = vrot.slane %v6649, 2
  %v6651 = vrot.slane %v5839, 7
  %v6652 = vrot.slane %v6651, 2
  %v6653 = vrot.slane %v5847, 7
  %v6654 = vrot.slane %v6653, 2
  %v6655 = vrot.slane %v5855, 7
  %v6656 = vrot.slane %v6655, 2
  %v6657 = vrot.slane %v5854, 7
  %v6658 = vrot.slane %v6657, 2
  %v6659 = vrot.slane %v5856, 7
  %v6660 = vrot.slane %v6659, 2
  %v6661 = vrot.slane %v5864, 7
  %v6662 = vrot.slane %v6661, 2
  %v6663 = vrot.slane %v5872, 7
  %v6664 = vrot.slane %v6663, 2
  %v6665 = vrot.slane %v5871, 7
  %v6666 = vrot.slane %v6665, 2
  %v6667 = vrot.slane %v5873, 7
  %v6668 = vrot.slane %v6667, 2
  %v6669 = vrot.slane %v5881, 7
  %v6670 = vrot.slane %v6669, 2
  %v6671 = vrot.slane %v5889, 7
  %v6672 = vrot.slane %v6671, 2
  %v6673 = vrot.slane %v5888, 7
  %v6674 = vrot.slane %v6673, 2
  %v6675 = vrot.slane %v5890, 7
  %v6676 = vrot.slane %v6675, 2
  %v6677 = vrot.slane %v5898, 7
  %v6678 = vrot.slane %v6677, 2
  %v6679 = vrot.slane %v5906, 7
  %v6680 = vrot.slane %v6679, 2
  %v6681 = vrot.slane %v5905, 7
  %v6682 = vrot.slane %v6681, 2
  %v6683 = vrot.slane %v5907, 7
  %v6684 = vrot.slane %v6683, 2
  %v6685 = vrot.slane %v5915, 7
  %v6686 = vrot.slane %v6685, 2
  %v6687 = vrot.slane %v5923, 7
  %v6688 = vrot.slane %v6687, 2
  %v6689 = vrot.slane %v5922, 7
  %v6690 = vrot.slane %v6689, 2
  %v6691 = vrot.slane %v5924, 7
  %v6692 = vrot.slane %v6691, 2
  %v6949 = vadd.f32 %v4844, %v6182
  %v6950 = vadd.f32 %v4852, %v6184
  %v6951 = vadd.f32 %v4851, %v6186
  %v6952 = vadd.f32 %v4853, %v6188
  %v6953 = vadd.f32 %v4861, %v6190
  %v6954 = vadd.f32 %v4869, %v6192
  %v6955 = vadd.f32 %v4868, %v6194
  %v6956 = vadd.f32 %v4870, %v6196
  %v6957 = vadd.f32 %v4878, %v6198
  %v6958 = vadd.f32 %v4886, %v6200
  %v6959 = vadd.f32 %v4885, %v6202
  %v6960 = vadd.f32 %v4887, %v6204
  %v6961 = vadd.f32 %v4895, %v6206
  %v6962 = vadd.f32 %v4903, %v6208
  %v6963 = vadd.f32 %v4902, %v6210
  %v6964 = vadd.f32 %v4904, %v6212
  %v6965 = vadd.f32 %v4912, %v6214
  %v6966 = vadd.f32 %v4920, %v6216
  %v6967 = vadd.f32 %v4919, %v6218
  %v6968 = vadd.f32 %v4921, %v6220
  %v6969 = vadd.f32 %v4929, %v6222
  %v6970 = vadd.f32 %v4937, %v6224
  %v6971 = vadd.f32 %v4936, %v6226
  %v6972 = vadd.f32 %v4938, %v6228
  %v6973 = vadd.f32 %v4946, %v6230
  %v6974 = vadd.f32 %v4954, %v6232
  %v6975 = vadd.f32 %v4953, %v6234
  %v6976 = vadd.f32 %v4955, %v6236
  %v6977 = vadd.f32 %v4963, %v6238
  %v6978 = vadd.f32 %v4971, %v6240
  %v6979 = vadd.f32 %v4970, %v6242
  %v6980 = vadd.f32 %v4972, %v6244
  %v6981 = vadd.f32 %v4980, %v6246
  %v6982 = vadd.f32 %v4988, %v6248
  %v6983 = vadd.f32 %v4987, %v6250
  %v6984 = vadd.f32 %v4989, %v6252
  %v6985 = vadd.f32 %v4997, %v6254
  %v6986 = vadd.f32 %v5005, %v6256
  %v6987 = vadd.f32 %v5004, %v6258
  %v6988 = vadd.f32 %v5006, %v6260
  %v6989 = vadd.f32 %v5014, %v6262
  %v6990 = vadd.f32 %v5022, %v6264
  %v6991 = vadd.f32 %v5021, %v6266
  %v6992 = vadd.f32 %v5023, %v6268
  %v6993 = vadd.f32 %v5031, %v6270
  %v6994 = vadd.f32 %v5039, %v6272
  %v6995 = vadd.f32 %v5038, %v6274
  %v6996 = vadd.f32 %v5040, %v6276
  %v6997 = vadd.f32 %v5048, %v6278
  %v6998 = vadd.f32 %v5056, %v6280
  %v6999 = vadd.f32 %v5055, %v6282
  %v7000 = vadd.f32 %v5057, %v6284
  %v7001 = vadd.f32 %v5065, %v6286
  %v7002 = vadd.f32 %v5073, %v6288
  %v7003 = vadd.f32 %v5072, %v6290
  %v7004 = vadd.f32 %v5074, %v6292
  %v7005 = vadd.f32 %v5082, %v6294
  %v7006 = vadd.f32 %v5090, %v6296
  %v7007 = vadd.f32 %v5089, %v6298
  %v7008 = vadd.f32 %v5091, %v6300
  %v7009 = vadd.f32 %v5099, %v6302
  %v7010 = vadd.f32 %v5107, %v6304
  %v7011 = vadd.f32 %v5106, %v6306
  %v7012 = vadd.f32 %v5108, %v6308
  %v7013 = vadd.f32 %v5116, %v6310
  %v7014 = vadd.f32 %v5124, %v6312
  %v7015 = vadd.f32 %v5123, %v6314
  %v7016 = vadd.f32 %v5125, %v6316
  %v7017 = vadd.f32 %v5133, %v6318
  %v7018 = vadd.f32 %v5141, %v6320
  %v7019 = vadd.f32 %v5140, %v6322
  %v7020 = vadd.f32 %v5142, %v6324
  %v7021 = vadd.f32 %v5150, %v6326
  %v7022 = vadd.f32 %v5158, %v6328
  %v7023 = vadd.f32 %v5157, %v6330
  %v7024 = vadd.f32 %v5159, %v6332
  %v7025 = vadd.f32 %v5167, %v6334
  %v7026 = vadd.f32 %v5175, %v6336
  %v7027 = vadd.f32 %v5174, %v6338
  %v7028 = vadd.f32 %v5176, %v6340
  %v7029 = vadd.f32 %v5184, %v6342
  %v7030 = vadd.f32 %v5192, %v6344
  %v7031 = vadd.f32 %v5191, %v6346
  %v7032 = vadd.f32 %v5193, %v6348
  %v7033 = vadd.f32 %v5201, %v6350
  %v7034 = vadd.f32 %v5209, %v6352
  %v7035 = vadd.f32 %v5208, %v6354
  %v7036 = vadd.f32 %v5210, %v6356
  %v7037 = vadd.f32 %v5218, %v6358
  %v7038 = vadd.f32 %v5226, %v6360
  %v7039 = vadd.f32 %v5225, %v6362
  %v7040 = vadd.f32 %v5227, %v6364
  %v7041 = vadd.f32 %v5235, %v6366
  %v7042 = vadd.f32 %v5243, %v6368
  %v7043 = vadd.f32 %v5242, %v6370
  %v7044 = vadd.f32 %v5244, %v6372
  %v7045 = vadd.f32 %v5252, %v6374
  %v7046 = vadd.f32 %v5260, %v6376
  %v7047 = vadd.f32 %v5259, %v6378
  %v7048 = vadd.f32 %v5261, %v6380
  %v7049 = vadd.f32 %v5269, %v6382
  %v7050 = vadd.f32 %v5277, %v6384
  %v7051 = vadd.f32 %v5276, %v6386
  %v7052 = vadd.f32 %v5278, %v6388
  %v7053 = vadd.f32 %v5286, %v6390
  %v7054 = vadd.f32 %v5294, %v6392
  %v7055 = vadd.f32 %v5293, %v6394
  %v7056 = vadd.f32 %v5295, %v6396
  %v7057 = vadd.f32 %v5303, %v6398
  %v7058 = vadd.f32 %v5311, %v6400
  %v7059 = vadd.f32 %v5310, %v6402
  %v7060 = vadd.f32 %v5312, %v6404
  %v7061 = vadd.f32 %v5320, %v6406
  %v7062 = vadd.f32 %v5328, %v6408
  %v7063 = vadd.f32 %v5327, %v6410
  %v7064 = vadd.f32 %v5329, %v6412
  %v7065 = vadd.f32 %v5337, %v6414
  %v7066 = vadd.f32 %v5345, %v6416
  %v7067 = vadd.f32 %v5344, %v6418
  %v7068 = vadd.f32 %v5346, %v6420
  %v7069 = vadd.f32 %v5354, %v6422
  %v7070 = vadd.f32 %v5362, %v6424
  %v7071 = vadd.f32 %v5361, %v6426
  %v7072 = vadd.f32 %v5363, %v6428
  %v7073 = vadd.f32 %v5371, %v6430
  %v7074 = vadd.f32 %v5379, %v6432
  %v7075 = vadd.f32 %v5378, %v6434
  %v7076 = vadd.f32 %v5380, %v6436
  %v7077 = vadd.f32 %v5388, %v6438
  %v7078 = vadd.f32 %v5396, %v6440
  %v7079 = vadd.f32 %v5395, %v6442
  %v7080 = vadd.f32 %v5397, %v6444
  %v7081 = vadd.f32 %v5405, %v6446
  %v7082 = vadd.f32 %v5413, %v6448
  %v7083 = vadd.f32 %v5412, %v6450
  %v7084 = vadd.f32 %v5414, %v6452
  %v7085 = vadd.f32 %v5422, %v6454
  %v7086 = vadd.f32 %v5430, %v6456
  %v7087 = vadd.f32 %v5429, %v6458
  %v7088 = vadd.f32 %v5431, %v6460
  %v7089 = vadd.f32 %v5439, %v6462
  %v7090 = vadd.f32 %v5447, %v6464
  %v7091 = vadd.f32 %v5446, %v6466
  %v7092 = vadd.f32 %v5448, %v6468
  %v7093 = vadd.f32 %v5456, %v6470
  %v7094 = vadd.f32 %v5464, %v6472
  %v7095 = vadd.f32 %v5463, %v6474
  %v7096 = vadd.f32 %v5465, %v6476
  %v7097 = vadd.f32 %v5473, %v6478
  %v7098 = vadd.f32 %v5481, %v6480
  %v7099 = vadd.f32 %v5480, %v6482
  %v7100 = vadd.f32 %v5482, %v6484
  %v7101 = vadd.f32 %v5490, %v6486
  %v7102 = vadd.f32 %v5498, %v6488
  %v7103 = vadd.f32 %v5497, %v6490
  %v7104 = vadd.f32 %v5499, %v6492
  %v7105 = vadd.f32 %v5507, %v6494
  %v7106 = vadd.f32 %v5515, %v6496
  %v7107 = vadd.f32 %v5514, %v6498
  %v7108 = vadd.f32 %v5516, %v6500
  %v7109 = vadd.f32 %v5524, %v6502
  %v7110 = vadd.f32 %v5532, %v6504
  %v7111 = vadd.f32 %v5531, %v6506
  %v7112 = vadd.f32 %v5533, %v6508
  %v7113 = vadd.f32 %v5541, %v6510
  %v7114 = vadd.f32 %v5549, %v6512
  %v7115 = vadd.f32 %v5548, %v6514
  %v7116 = vadd.f32 %v5550, %v6516
  %v7117 = vadd.f32 %v5558, %v6518
  %v7118 = vadd.f32 %v5566, %v6520
  %v7119 = vadd.f32 %v5565, %v6522
  %v7120 = vadd.f32 %v5567, %v6524
  %v7121 = vadd.f32 %v5575, %v6526
  %v7122 = vadd.f32 %v5583, %v6528
  %v7123 = vadd.f32 %v5582, %v6530
  %v7124 = vadd.f32 %v5584, %v6532
  %v7125 = vadd.f32 %v5592, %v6534
  %v7126 = vadd.f32 %v5600, %v6536
  %v7127 = vadd.f32 %v5599, %v6538
  %v7128 = vadd.f32 %v5601, %v6540
  %v7129 = vadd.f32 %v5609, %v6542
  %v7130 = vadd.f32 %v5617, %v6544
  %v7131 = vadd.f32 %v5616, %v6546
  %v7132 = vadd.f32 %v5618, %v6548
  %v7133 = vadd.f32 %v5626, %v6550
  %v7134 = vadd.f32 %v5634, %v6552
  %v7135 = vadd.f32 %v5633, %v6554
  %v7136 = vadd.f32 %v5635, %v6556
  %v7137 = vadd.f32 %v5643, %v6558
  %v7138 = vadd.f32 %v5651, %v6560
  %v7139 = vadd.f32 %v5650, %v6562
  %v7140 = vadd.f32 %v5652, %v6564
  %v7141 = vadd.f32 %v5660, %v6566
  %v7142 = vadd.f32 %v5668, %v6568
  %v7143 = vadd.f32 %v5667, %v6570
  %v7144 = vadd.f32 %v5669, %v6572
  %v7145 = vadd.f32 %v5677, %v6574
  %v7146 = vadd.f32 %v5685, %v6576
  %v7147 = vadd.f32 %v5684, %v6578
  %v7148 = vadd.f32 %v5686, %v6580
  %v7149 = vadd.f32 %v5694, %v6582
  %v7150 = vadd.f32 %v5702, %v6584
  %v7151 = vadd.f32 %v5701, %v6586
  %v7152 = vadd.f32 %v5703, %v6588
  %v7153 = vadd.f32 %v5711, %v6590
  %v7154 = vadd.f32 %v5719, %v6592
  %v7155 = vadd.f32 %v5718, %v6594
  %v7156 = vadd.f32 %v5720, %v6596
  %v7157 = vadd.f32 %v5728, %v6598
  %v7158 = vadd.f32 %v5736, %v6600
  %v7159 = vadd.f32 %v5735, %v6602
  %v7160 = vadd.f32 %v5737, %v6604
  %v7161 = vadd.f32 %v5745, %v6606
  %v7162 = vadd.f32 %v5753, %v6608
  %v7163 = vadd.f32 %v5752, %v6610
  %v7164 = vadd.f32 %v5754, %v6612
  %v7165 = vadd.f32 %v5762, %v6614
  %v7166 = vadd.f32 %v5770, %v6616
  %v7167 = vadd.f32 %v5769, %v6618
  %v7168 = vadd.f32 %v5771, %v6620
  %v7169 = vadd.f32 %v5779, %v6622
  %v7170 = vadd.f32 %v5787, %v6624
  %v7171 = vadd.f32 %v5786, %v6626
  %v7172 = vadd.f32 %v5788, %v6628
  %v7173 = vadd.f32 %v5796, %v6630
  %v7174 = vadd.f32 %v5804, %v6632
  %v7175 = vadd.f32 %v5803, %v6634
  %v7176 = vadd.f32 %v5805, %v6636
  %v7177 = vadd.f32 %v5813, %v6638
  %v7178 = vadd.f32 %v5821, %v6640
  %v7179 = vadd.f32 %v5820, %v6642
  %v7180 = vadd.f32 %v5822, %v6644
  %v7181 = vadd.f32 %v5830, %v6646
  %v7182 = vadd.f32 %v5838, %v6648
  %v7183 = vadd.f32 %v5837, %v6650
  %v7184 = vadd.f32 %v5839, %v6652
  %v7185 = vadd.f32 %v5847, %v6654
  %v7186 = vadd.f32 %v5855, %v6656
  %v7187 = vadd.f32 %v5854, %v6658
  %v7188 = vadd.f32 %v5856, %v6660
  %v7189 = vadd.f32 %v5864, %v6662
  %v7190 = vadd.f32 %v5872, %v6664
  %v7191 = vadd.f32 %v5871, %v6666
  %v7192 = vadd.f32 %v5873, %v6668
  %v7193 = vadd.f32 %v5881, %v6670
  %v7194 = vadd.f32 %v5889, %v6672
  %v7195 = vadd.f32 %v5888, %v6674
  %v7196 = vadd.f32 %v5890, %v6676
  %v7197 = vadd.f32 %v5898, %v6678
  %v7198 = vadd.f32 %v5906, %v6680
  %v7199 = vadd.f32 %v5905, %v6682
  %v7200 = vadd.f32 %v5907, %v6684
  %v7201 = vadd.f32 %v5915, %v6686
  %v7202 = vadd.f32 %v5923, %v6688
  %v7203 = vadd.f32 %v5922, %v6690
  %v7204 = vadd.f32 %v5924, %v6692
  %v7205 = vadd.f32 %v6949, %v6957
  %v7206 = vadd.f32 %v6950, %v6958
  %v7207 = vadd.f32 %v6951, %v6959
  %v7208 = vadd.f32 %v6952, %v6960
  %v7209 = vadd.f32 %v6953, %v6961
  %v7210 = vadd.f32 %v6954, %v6962
  %v7211 = vadd.f32 %v6955, %v6963
  %v7212 = vadd.f32 %v6956, %v6964
  %v7213 = vadd.f32 %v6965, %v6973
  %v7214 = vadd.f32 %v6966, %v6974
  %v7215 = vadd.f32 %v6967, %v6975
  %v7216 = vadd.f32 %v6968, %v6976
  %v7217 = vadd.f32 %v6969, %v6977
  %v7218 = vadd.f32 %v6970, %v6978
  %v7219 = vadd.f32 %v6971, %v6979
  %v7220 = vadd.f32 %v6972, %v6980
  %v7221 = vadd.f32 %v6981, %v6989
  %v7222 = vadd.f32 %v6982, %v6990
  %v7223 = vadd.f32 %v6983, %v6991
  %v7224 = vadd.f32 %v6984, %v6992
  %v7225 = vadd.f32 %v6985, %v6993
  %v7226 = vadd.f32 %v6986, %v6994
  %v7227 = vadd.f32 %v6987, %v6995
  %v7228 = vadd.f32 %v6988, %v6996
  %v7229 = vadd.f32 %v6997, %v7005
  %v7230 = vadd.f32 %v6998, %v7006
  %v7231 = vadd.f32 %v6999, %v7007
  %v7232 = vadd.f32 %v7000, %v7008
  %v7233 = vadd.f32 %v7001, %v7009
  %v7234 = vadd.f32 %v7002, %v7010
  %v7235 = vadd.f32 %v7003, %v7011
  %v7236 = vadd.f32 %v7004, %v7012
  %v7237 = vadd.f32 %v7013, %v7021
  %v7238 = vadd.f32 %v7014, %v7022
  %v7239 = vadd.f32 %v7015, %v7023
  %v7240 = vadd.f32 %v7016, %v7024
  %v7241 = vadd.f32 %v7017, %v7025
  %v7242 = vadd.f32 %v7018, %v7026
  %v7243 = vadd.f32 %v7019, %v7027
  %v7244 = vadd.f32 %v7020, %v7028
  %v7245 = vadd.f32 %v7029, %v7037
  %v7246 = vadd.f32 %v7030, %v7038
  %v7247 = vadd.f32 %v7031, %v7039
  %v7248 = vadd.f32 %v7032, %v7040
  %v7249 = vadd.f32 %v7033, %v7041
  %v7250 = vadd.f32 %v7034, %v7042
  %v7251 = vadd.f32 %v7035, %v7043
  %v7252 = vadd.f32 %v7036, %v7044
  %v7253 = vadd.f32 %v7045, %v7053
  %v7254 = vadd.f32 %v7046, %v7054
  %v7255 = vadd.f32 %v7047, %v7055
  %v7256 = vadd.f32 %v7048, %v7056
  %v7257 = vadd.f32 %v7049, %v7057
  %v7258 = vadd.f32 %v7050, %v7058
  %v7259 = vadd.f32 %v7051, %v7059
  %v7260 = vadd.f32 %v7052, %v7060
  %v7261 = vadd.f32 %v7061, %v7069
  %v7262 = vadd.f32 %v7062, %v7070
  %v7263 = vadd.f32 %v7063, %v7071
  %v7264 = vadd.f32 %v7064, %v7072
  %v7265 = vadd.f32 %v7065, %v7073
  %v7266 = vadd.f32 %v7066, %v7074
  %v7267 = vadd.f32 %v7067, %v7075
  %v7268 = vadd.f32 %v7068, %v7076
  %v7269 = vadd.f32 %v7077, %v7085
  %v7270 = vadd.f32 %v7078, %v7086
  %v7271 = vadd.f32 %v7079, %v7087
  %v7272 = vadd.f32 %v7080, %v7088
  %v7273 = vadd.f32 %v7081, %v7089
  %v7274 = vadd.f32 %v7082, %v7090
  %v7275 = vadd.f32 %v7083, %v7091
  %v7276 = vadd.f32 %v7084, %v7092
  %v7277 = vadd.f32 %v7093, %v7101
  %v7278 = vadd.f32 %v7094, %v7102
  %v7279 = vadd.f32 %v7095, %v7103
  %v7280 = vadd.f32 %v7096, %v7104
  %v7281 = vadd.f32 %v7097, %v7105
  %v7282 = vadd.f32 %v7098, %v7106
  %v7283 = vadd.f32 %v7099, %v7107
  %v7284 = vadd.f32 %v7100, %v7108
  %v7285 = vadd.f32 %v7109, %v7117
  %v7286 = vadd.f32 %v7110, %v7118
  %v7287 = vadd.f32 %v7111, %v7119
  %v7288 = vadd.f32 %v7112, %v7120
  %v7289 = vadd.f32 %v7113, %v7121
  %v7290 = vadd.f32 %v7114, %v7122
  %v7291 = vadd.f32 %v7115, %v7123
  %v7292 = vadd.f32 %v7116, %v7124
  %v7293 = vadd.f32 %v7125, %v7133
  %v7294 = vadd.f32 %v7126, %v7134
  %v7295 = vadd.f32 %v7127, %v7135
  %v7296 = vadd.f32 %v7128, %v7136
  %v7297 = vadd.f32 %v7129, %v7137
  %v7298 = vadd.f32 %v7130, %v7138
  %v7299 = vadd.f32 %v7131, %v7139
  %v7300 = vadd.f32 %v7132, %v7140
  %v7301 = vadd.f32 %v7141, %v7149
  %v7302 = vadd.f32 %v7142, %v7150
  %v7303 = vadd.f32 %v7143, %v7151
  %v7304 = vadd.f32 %v7144, %v7152
  %v7305 = vadd.f32 %v7145, %v7153
  %v7306 = vadd.f32 %v7146, %v7154
  %v7307 = vadd.f32 %v7147, %v7155
  %v7308 = vadd.f32 %v7148, %v7156
  %v7309 = vadd.f32 %v7157, %v7165
  %v7310 = vadd.f32 %v7158, %v7166
  %v7311 = vadd.f32 %v7159, %v7167
  %v7312 = vadd.f32 %v7160, %v7168
  %v7313 = vadd.f32 %v7161, %v7169
  %v7314 = vadd.f32 %v7162, %v7170
  %v7315 = vadd.f32 %v7163, %v7171
  %v7316 = vadd.f32 %v7164, %v7172
  %v7317 = vadd.f32 %v7173, %v7181
  %v7318 = vadd.f32 %v7174, %v7182
  %v7319 = vadd.f32 %v7175, %v7183
  %v7320 = vadd.f32 %v7176, %v7184
  %v7321 = vadd.f32 %v7177, %v7185
  %v7322 = vadd.f32 %v7178, %v7186
  %v7323 = vadd.f32 %v7179, %v7187
  %v7324 = vadd.f32 %v7180, %v7188
  %v7325 = vadd.f32 %v7189, %v7197
  %v7326 = vadd.f32 %v7190, %v7198
  %v7327 = vadd.f32 %v7191, %v7199
  %v7328 = vadd.f32 %v7192, %v7200
  %v7329 = vadd.f32 %v7193, %v7201
  %v7330 = vadd.f32 %v7194, %v7202
  %v7331 = vadd.f32 %v7195, %v7203
  %v7332 = vadd.f32 %v7196, %v7204
  %v7333 = vmul.f32 %v7205, 0.25
  %v7334 = vmul.f32 %v7206, 0.25
  %v7335 = vmul.f32 %v7207, 0.25
  %v7336 = vmul.f32 %v7208, 0.25
  %v7337 = vmul.f32 %v7209, 0.25
  %v7338 = vmul.f32 %v7210, 0.25
  %v7339 = vmul.f32 %v7211, 0.25
  %v7340 = vmul.f32 %v7212, 0.25
  %v7341 = vmul.f32 %v7213, 0.25
  %v7342 = vmul.f32 %v7214, 0.25
  %v7343 = vmul.f32 %v7215, 0.25
  %v7344 = vmul.f32 %v7216, 0.25
  %v7345 = vmul.f32 %v7217, 0.25
  %v7346 = vmul.f32 %v7218, 0.25
  %v7347 = vmul.f32 %v7219, 0.25
  %v7348 = vmul.f32 %v7220, 0.25
  %v7349 = vmul.f32 %v7221, 0.25
  %v7350 = vmul.f32 %v7222, 0.25
  %v7351 = vmul.f32 %v7223, 0.25
  %v7352 = vmul.f32 %v7224, 0.25
  %v7353 = vmul.f32 %v7225, 0.25
  %v7354 = vmul.f32 %v7226, 0.25
  %v7355 = vmul.f32 %v7227, 0.25
  %v7356 = vmul.f32 %v7228, 0.25
  %v7357 = vmul.f32 %v7229, 0.25
  %v7358 = vmul.f32 %v7230, 0.25
  %v7359 = vmul.f32 %v7231, 0.25
  %v7360 = vmul.f32 %v7232, 0.25
  %v7361 = vmul.f32 %v7233, 0.25
  %v7362 = vmul.f32 %v7234, 0.25
  %v7363 = vmul.f32 %v7235, 0.25
  %v7364 = vmul.f32 %v7236, 0.25
  %v7365 = vmul.f32 %v7237, 0.25
  %v7366 = vmul.f32 %v7238, 0.25
  %v7367 = vmul.f32 %v7239, 0.25
  %v7368 = vmul.f32 %v7240, 0.25
  %v7369 = vmul.f32 %v7241, 0.25
  %v7370 = vmul.f32 %v7242, 0.25
  %v7371 = vmul.f32 %v7243, 0.25
  %v7372 = vmul.f32 %v7244, 0.25
  %v7373 = vmul.f32 %v7245, 0.25
  %v7374 = vmul.f32 %v7246, 0.25
  %v7375 = vmul.f32 %v7247, 0.25
  %v7376 = vmul.f32 %v7248, 0.25
  %v7377 = vmul.f32 %v7249, 0.25
  %v7378 = vmul.f32 %v7250, 0.25
  %v7379 = vmul.f32 %v7251, 0.25
  %v7380 = vmul.f32 %v7252, 0.25
  %v7381 = vmul.f32 %v7253, 0.25
  %v7382 = vmul.f32 %v7254, 0.25
  %v7383 = vmul.f32 %v7255, 0.25
  %v7384 = vmul.f32 %v7256, 0.25
  %v7385 = vmul.f32 %v7257, 0.25
  %v7386 = vmul.f32 %v7258, 0.25
  %v7387 = vmul.f32 %v7259, 0.25
  %v7388 = vmul.f32 %v7260, 0.25
  %v7389 = vmul.f32 %v7261, 0.25
  %v7390 = vmul.f32 %v7262, 0.25
  %v7391 = vmul.f32 %v7263, 0.25
  %v7392 = vmul.f32 %v7264, 0.25
  %v7393 = vmul.f32 %v7265, 0.25
  %v7394 = vmul.f32 %v7266, 0.25
  %v7395 = vmul.f32 %v7267, 0.25
  %v7396 = vmul.f32 %v7268, 0.25
  %v7397 = vmul.f32 %v7269, 0.25
  %v7398 = vmul.f32 %v7270, 0.25
  %v7399 = vmul.f32 %v7271, 0.25
  %v7400 = vmul.f32 %v7272, 0.25
  %v7401 = vmul.f32 %v7273, 0.25
  %v7402 = vmul.f32 %v7274, 0.25
  %v7403 = vmul.f32 %v7275, 0.25
  %v7404 = vmul.f32 %v7276, 0.25
  %v7405 = vmul.f32 %v7277, 0.25
  %v7406 = vmul.f32 %v7278, 0.25
  %v7407 = vmul.f32 %v7279, 0.25
  %v7408 = vmul.f32 %v7280, 0.25
  %v7409 = vmul.f32 %v7281, 0.25
  %v7410 = vmul.f32 %v7282, 0.25
  %v7411 = vmul.f32 %v7283, 0.25
  %v7412 = vmul.f32 %v7284, 0.25
  %v7413 = vmul.f32 %v7285, 0.25
  %v7414 = vmul.f32 %v7286, 0.25
  %v7415 = vmul.f32 %v7287, 0.25
  %v7416 = vmul.f32 %v7288, 0.25
  %v7417 = vmul.f32 %v7289, 0.25
  %v7418 = vmul.f32 %v7290, 0.25
  %v7419 = vmul.f32 %v7291, 0.25
  %v7420 = vmul.f32 %v7292, 0.25
  %v7421 = vmul.f32 %v7293, 0.25
  %v7422 = vmul.f32 %v7294, 0.25
  %v7423 = vmul.f32 %v7295, 0.25
  %v7424 = vmul.f32 %v7296, 0.25
  %v7425 = vmul.f32 %v7297, 0.25
  %v7426 = vmul.f32 %v7298, 0.25
  %v7427 = vmul.f32 %v7299, 0.25
  %v7428 = vmul.f32 %v7300, 0.25
  %v7429 = vmul.f32 %v7301, 0.25
  %v7430 = vmul.f32 %v7302, 0.25
  %v7431 = vmul.f32 %v7303, 0.25
  %v7432 = vmul.f32 %v7304, 0.25
  %v7433 = vmul.f32 %v7305, 0.25
  %v7434 = vmul.f32 %v7306, 0.25
  %v7435 = vmul.f32 %v7307, 0.25
  %v7436 = vmul.f32 %v7308, 0.25
  %v7437 = vmul.f32 %v7309, 0.25
  %v7438 = vmul.f32 %v7310, 0.25
  %v7439 = vmul.f32 %v7311, 0.25
  %v7440 = vmul.f32 %v7312, 0.25
  %v7441 = vmul.f32 %v7313, 0.25
  %v7442 = vmul.f32 %v7314, 0.25
  %v7443 = vmul.f32 %v7315, 0.25
  %v7444 = vmul.f32 %v7316, 0.25
  %v7445 = vmul.f32 %v7317, 0.25
  %v7446 = vmul.f32 %v7318, 0.25
  %v7447 = vmul.f32 %v7319, 0.25
  %v7448 = vmul.f32 %v7320, 0.25
  %v7449 = vmul.f32 %v7321, 0.25
  %v7450 = vmul.f32 %v7322, 0.25
  %v7451 = vmul.f32 %v7323, 0.25
  %v7452 = vmul.f32 %v7324, 0.25
  %v7453 = vmul.f32 %v7325, 0.25
  %v7454 = vmul.f32 %v7326, 0.25
  %v7455 = vmul.f32 %v7327, 0.25
  %v7456 = vmul.f32 %v7328, 0.25
  %v7457 = vmul.f32 %v7329, 0.25
  %v7458 = vmul.f32 %v7330, 0.25
  %v7459 = vmul.f32 %v7331, 0.25
  %v7460 = vmul.f32 %v7332, 0.25
  %v7589 = vlaneseq
  %v7590 = vshrl.u32 %v7589, 7
  %v7591 = vsub.s32 0, %v7590
  %v7592 = vrot.slane %v7333, %v7591
  %v7593 = vlaneseq
  %v7594 = vshrl.u32 %v7593, 7
  %v7595 = vsub.s32 0, %v7594
  %v7596 = vrot.slane %v7334, %v7595
  %v7597 = vlaneseq
  %v7598 = vshrl.u32 %v7597, 7
  %v7599 = vsub.s32 0, %v7598
  %v7600 = vrot.slane %v7335, %v7599
  %v7601 = vlaneseq
  %v7602 = vshrl.u32 %v7601, 7
  %v7603 = vsub.s32 0, %v7602
  %v7604 = vrot.slane %v7336, %v7603
  %v7605 = vlaneseq
  %v7606 = vshrl.u32 %v7605, 7
  %v7607 = vsub.s32 0, %v7606
  %v7608 = vrot.slane %v7337, %v7607
  %v7609 = vlaneseq
  %v7610 = vshrl.u32 %v7609, 7
  %v7611 = vsub.s32 0, %v7610
  %v7612 = vrot.slane %v7338, %v7611
  %v7613 = vlaneseq
  %v7614 = vshrl.u32 %v7613, 7
  %v7615 = vsub.s32 0, %v7614
  %v7616 = vrot.slane %v7339, %v7615
  %v7617 = vlaneseq
  %v7618 = vshrl.u32 %v7617, 7
  %v7619 = vsub.s32 0, %v7618
  %v7620 = vrot.slane %v7340, %v7619
  %v7621 = vlaneseq
  %v7622 = vshrl.u32 %v7621, 7
  %v7623 = vsub.s32 0, %v7622
  %v7624 = vrot.slane %v7341, %v7623
  %v7625 = vlaneseq
  %v7626 = vshrl.u32 %v7625, 7
  %v7627 = vsub.s32 0, %v7626
  %v7628 = vrot.slane %v7342, %v7627
  %v7629 = vlaneseq
  %v7630 = vshrl.u32 %v7629, 7
  %v7631 = vsub.s32 0, %v7630
  %v7632 = vrot.slane %v7343, %v7631
  %v7633 = vlaneseq
  %v7634 = vshrl.u32 %v7633, 7
  %v7635 = vsub.s32 0, %v7634
  %v7636 = vrot.slane %v7344, %v7635
  %v7637 = vlaneseq
  %v7638 = vshrl.u32 %v7637, 7
  %v7639 = vsub.s32 0, %v7638
  %v7640 = vrot.slane %v7345, %v7639
  %v7641 = vlaneseq
  %v7642 = vshrl.u32 %v7641, 7
  %v7643 = vsub.s32 0, %v7642
  %v7644 = vrot.slane %v7346, %v7643
  %v7645 = vlaneseq
  %v7646 = vshrl.u32 %v7645, 7
  %v7647 = vsub.s32 0, %v7646
  %v7648 = vrot.slane %v7347, %v7647
  %v7649 = vlaneseq
  %v7650 = vshrl.u32 %v7649, 7
  %v7651 = vsub.s32 0, %v7650
  %v7652 = vrot.slane %v7348, %v7651
  %v7653 = vlaneseq
  %v7654 = vshrl.u32 %v7653, 7
  %v7655 = vsub.s32 0, %v7654
  %v7656 = vrot.slane %v7349, %v7655
  %v7657 = vlaneseq
  %v7658 = vshrl.u32 %v7657, 7
  %v7659 = vsub.s32 0, %v7658
  %v7660 = vrot.slane %v7350, %v7659
  %v7661 = vlaneseq
  %v7662 = vshrl.u32 %v7661, 7
  %v7663 = vsub.s32 0, %v7662
  %v7664 = vrot.slane %v7351, %v7663
  %v7665 = vlaneseq
  %v7666 = vshrl.u32 %v7665, 7
  %v7667 = vsub.s32 0, %v7666
  %v7668 = vrot.slane %v7352, %v7667
  %v7669 = vlaneseq
  %v7670 = vshrl.u32 %v7669, 7
  %v7671 = vsub.s32 0, %v7670
  %v7672 = vrot.slane %v7353, %v7671
  %v7673 = vlaneseq
  %v7674 = vshrl.u32 %v7673, 7
  %v7675 = vsub.s32 0, %v7674
  %v7676 = vrot.slane %v7354, %v7675
  %v7677 = vlaneseq
  %v7678 = vshrl.u32 %v7677, 7
  %v7679 = vsub.s32 0, %v7678
  %v7680 = vrot.slane %v7355, %v7679
  %v7681 = vlaneseq
  %v7682 = vshrl.u32 %v7681, 7
  %v7683 = vsub.s32 0, %v7682
  %v7684 = vrot.slane %v7356, %v7683
  %v7685 = vlaneseq
  %v7686 = vshrl.u32 %v7685, 7
  %v7687 = vsub.s32 0, %v7686
  %v7688 = vrot.slane %v7357, %v7687
  %v7689 = vlaneseq
  %v7690 = vshrl.u32 %v7689, 7
  %v7691 = vsub.s32 0, %v7690
  %v7692 = vrot.slane %v7358, %v7691
  %v7693 = vlaneseq
  %v7694 = vshrl.u32 %v7693, 7
  %v7695 = vsub.s32 0, %v7694
  %v7696 = vrot.slane %v7359, %v7695
  %v7697 = vlaneseq
  %v7698 = vshrl.u32 %v7697, 7
  %v7699 = vsub.s32 0, %v7698
  %v7700 = vrot.slane %v7360, %v7699
  %v7701 = vlaneseq
  %v7702 = vshrl.u32 %v7701, 7
  %v7703 = vsub.s32 0, %v7702
  %v7704 = vrot.slane %v7361, %v7703
  %v7705 = vlaneseq
  %v7706 = vshrl.u32 %v7705, 7
  %v7707 = vsub.s32 0, %v7706
  %v7708 = vrot.slane %v7362, %v7707
  %v7709 = vlaneseq
  %v7710 = vshrl.u32 %v7709, 7
  %v7711 = vsub.s32 0, %v7710
  %v7712 = vrot.slane %v7363, %v7711
  %v7713 = vlaneseq
  %v7714 = vshrl.u32 %v7713, 7
  %v7715 = vsub.s32 0, %v7714
  %v7716 = vrot.slane %v7364, %v7715
  %v7717 = vlaneseq
  %v7718 = vshrl.u32 %v7717, 7
  %v7719 = vsub.s32 0, %v7718
  %v7720 = vrot.slane %v7365, %v7719
  %v7721 = vlaneseq
  %v7722 = vshrl.u32 %v7721, 7
  %v7723 = vsub.s32 0, %v7722
  %v7724 = vrot.slane %v7366, %v7723
  %v7725 = vlaneseq
  %v7726 = vshrl.u32 %v7725, 7
  %v7727 = vsub.s32 0, %v7726
  %v7728 = vrot.slane %v7367, %v7727
  %v7729 = vlaneseq
  %v7730 = vshrl.u32 %v7729, 7
  %v7731 = vsub.s32 0, %v7730
  %v7732 = vrot.slane %v7368, %v7731
  %v7733 = vlaneseq
  %v7734 = vshrl.u32 %v7733, 7
  %v7735 = vsub.s32 0, %v7734
  %v7736 = vrot.slane %v7369, %v7735
  %v7737 = vlaneseq
  %v7738 = vshrl.u32 %v7737, 7
  %v7739 = vsub.s32 0, %v7738
  %v7740 = vrot.slane %v7370, %v7739
  %v7741 = vlaneseq
  %v7742 = vshrl.u32 %v7741, 7
  %v7743 = vsub.s32 0, %v7742
  %v7744 = vrot.slane %v7371, %v7743
  %v7745 = vlaneseq
  %v7746 = vshrl.u32 %v7745, 7
  %v7747 = vsub.s32 0, %v7746
  %v7748 = vrot.slane %v7372, %v7747
  %v7749 = vlaneseq
  %v7750 = vshrl.u32 %v7749, 7
  %v7751 = vsub.s32 0, %v7750
  %v7752 = vrot.slane %v7373, %v7751
  %v7753 = vlaneseq
  %v7754 = vshrl.u32 %v7753, 7
  %v7755 = vsub.s32 0, %v7754
  %v7756 = vrot.slane %v7374, %v7755
  %v7757 = vlaneseq
  %v7758 = vshrl.u32 %v7757, 7
  %v7759 = vsub.s32 0, %v7758
  %v7760 = vrot.slane %v7375, %v7759
  %v7761 = vlaneseq
  %v7762 = vshrl.u32 %v7761, 7
  %v7763 = vsub.s32 0, %v7762
  %v7764 = vrot.slane %v7376, %v7763
  %v7765 = vlaneseq
  %v7766 = vshrl.u32 %v7765, 7
  %v7767 = vsub.s32 0, %v7766
  %v7768 = vrot.slane %v7377, %v7767
  %v7769 = vlaneseq
  %v7770 = vshrl.u32 %v7769, 7
  %v7771 = vsub.s32 0, %v7770
  %v7772 = vrot.slane %v7378, %v7771
  %v7773 = vlaneseq
  %v7774 = vshrl.u32 %v7773, 7
  %v7775 = vsub.s32 0, %v7774
  %v7776 = vrot.slane %v7379, %v7775
  %v7777 = vlaneseq
  %v7778 = vshrl.u32 %v7777, 7
  %v7779 = vsub.s32 0, %v7778
  %v7780 = vrot.slane %v7380, %v7779
  %v7781 = vlaneseq
  %v7782 = vshrl.u32 %v7781, 7
  %v7783 = vsub.s32 0, %v7782
  %v7784 = vrot.slane %v7381, %v7783
  %v7785 = vlaneseq
  %v7786 = vshrl.u32 %v7785, 7
  %v7787 = vsub.s32 0, %v7786
  %v7788 = vrot.slane %v7382, %v7787
  %v7789 = vlaneseq
  %v7790 = vshrl.u32 %v7789, 7
  %v7791 = vsub.s32 0, %v7790
  %v7792 = vrot.slane %v7383, %v7791
  %v7793 = vlaneseq
  %v7794 = vshrl.u32 %v7793, 7
  %v7795 = vsub.s32 0, %v7794
  %v7796 = vrot.slane %v7384, %v7795
  %v7797 = vlaneseq
  %v7798 = vshrl.u32 %v7797, 7
  %v7799 = vsub.s32 0, %v7798
  %v7800 = vrot.slane %v7385, %v7799
  %v7801 = vlaneseq
  %v7802 = vshrl.u32 %v7801, 7
  %v7803 = vsub.s32 0, %v7802
  %v7804 = vrot.slane %v7386, %v7803
  %v7805 = vlaneseq
  %v7806 = vshrl.u32 %v7805, 7
  %v7807 = vsub.s32 0, %v7806
  %v7808 = vrot.slane %v7387, %v7807
  %v7809 = vlaneseq
  %v7810 = vshrl.u32 %v7809, 7
  %v7811 = vsub.s32 0, %v7810
  %v7812 = vrot.slane %v7388, %v7811
  %v7813 = vlaneseq
  %v7814 = vshrl.u32 %v7813, 7
  %v7815 = vsub.s32 0, %v7814
  %v7816 = vrot.slane %v7389, %v7815
  %v7817 = vlaneseq
  %v7818 = vshrl.u32 %v7817, 7
  %v7819 = vsub.s32 0, %v7818
  %v7820 = vrot.slane %v7390, %v7819
  %v7821 = vlaneseq
  %v7822 = vshrl.u32 %v7821, 7
  %v7823 = vsub.s32 0, %v7822
  %v7824 = vrot.slane %v7391, %v7823
  %v7825 = vlaneseq
  %v7826 = vshrl.u32 %v7825, 7
  %v7827 = vsub.s32 0, %v7826
  %v7828 = vrot.slane %v7392, %v7827
  %v7829 = vlaneseq
  %v7830 = vshrl.u32 %v7829, 7
  %v7831 = vsub.s32 0, %v7830
  %v7832 = vrot.slane %v7393, %v7831
  %v7833 = vlaneseq
  %v7834 = vshrl.u32 %v7833, 7
  %v7835 = vsub.s32 0, %v7834
  %v7836 = vrot.slane %v7394, %v7835
  %v7837 = vlaneseq
  %v7838 = vshrl.u32 %v7837, 7
  %v7839 = vsub.s32 0, %v7838
  %v7840 = vrot.slane %v7395, %v7839
  %v7841 = vlaneseq
  %v7842 = vshrl.u32 %v7841, 7
  %v7843 = vsub.s32 0, %v7842
  %v7844 = vrot.slane %v7396, %v7843
  %v7845 = vlaneseq
  %v7846 = vshrl.u32 %v7845, 7
  %v7847 = vsub.s32 0, %v7846
  %v7848 = vrot.slane %v7397, %v7847
  %v7849 = vlaneseq
  %v7850 = vshrl.u32 %v7849, 7
  %v7851 = vsub.s32 0, %v7850
  %v7852 = vrot.slane %v7398, %v7851
  %v7853 = vlaneseq
  %v7854 = vshrl.u32 %v7853, 7
  %v7855 = vsub.s32 0, %v7854
  %v7856 = vrot.slane %v7399, %v7855
  %v7857 = vlaneseq
  %v7858 = vshrl.u32 %v7857, 7
  %v7859 = vsub.s32 0, %v7858
  %v7860 = vrot.slane %v7400, %v7859
  %v7861 = vlaneseq
  %v7862 = vshrl.u32 %v7861, 7
  %v7863 = vsub.s32 0, %v7862
  %v7864 = vrot.slane %v7401, %v7863
  %v7865 = vlaneseq
  %v7866 = vshrl.u32 %v7865, 7
  %v7867 = vsub.s32 0, %v7866
  %v7868 = vrot.slane %v7402, %v7867
  %v7869 = vlaneseq
  %v7870 = vshrl.u32 %v7869, 7
  %v7871 = vsub.s32 0, %v7870
  %v7872 = vrot.slane %v7403, %v7871
  %v7873 = vlaneseq
  %v7874 = vshrl.u32 %v7873, 7
  %v7875 = vsub.s32 0, %v7874
  %v7876 = vrot.slane %v7404, %v7875
  %v7877 = vlaneseq
  %v7878 = vshrl.u32 %v7877, 7
  %v7879 = vsub.s32 0, %v7878
  %v7880 = vrot.slane %v7405, %v7879
  %v7881 = vlaneseq
  %v7882 = vshrl.u32 %v7881, 7
  %v7883 = vsub.s32 0, %v7882
  %v7884 = vrot.slane %v7406, %v7883
  %v7885 = vlaneseq
  %v7886 = vshrl.u32 %v7885, 7
  %v7887 = vsub.s32 0, %v7886
  %v7888 = vrot.slane %v7407, %v7887
  %v7889 = vlaneseq
  %v7890 = vshrl.u32 %v7889, 7
  %v7891 = vsub.s32 0, %v7890
  %v7892 = vrot.slane %v7408, %v7891
  %v7893 = vlaneseq
  %v7894 = vshrl.u32 %v7893, 7
  %v7895 = vsub.s32 0, %v7894
  %v7896 = vrot.slane %v7409, %v7895
  %v7897 = vlaneseq
  %v7898 = vshrl.u32 %v7897, 7
  %v7899 = vsub.s32 0, %v7898
  %v7900 = vrot.slane %v7410, %v7899
  %v7901 = vlaneseq
  %v7902 = vshrl.u32 %v7901, 7
  %v7903 = vsub.s32 0, %v7902
  %v7904 = vrot.slane %v7411, %v7903
  %v7905 = vlaneseq
  %v7906 = vshrl.u32 %v7905, 7
  %v7907 = vsub.s32 0, %v7906
  %v7908 = vrot.slane %v7412, %v7907
  %v7909 = vlaneseq
  %v7910 = vshrl.u32 %v7909, 7
  %v7911 = vsub.s32 0, %v7910
  %v7912 = vrot.slane %v7413, %v7911
  %v7913 = vlaneseq
  %v7914 = vshrl.u32 %v7913, 7
  %v7915 = vsub.s32 0, %v7914
  %v7916 = vrot.slane %v7414, %v7915
  %v7917 = vlaneseq
  %v7918 = vshrl.u32 %v7917, 7
  %v7919 = vsub.s32 0, %v7918
  %v7920 = vrot.slane %v7415, %v7919
  %v7921 = vlaneseq
  %v7922 = vshrl.u32 %v7921, 7
  %v7923 = vsub.s32 0, %v7922
  %v7924 = vrot.slane %v7416, %v7923
  %v7925 = vlaneseq
  %v7926 = vshrl.u32 %v7925, 7
  %v7927 = vsub.s32 0, %v7926
  %v7928 = vrot.slane %v7417, %v7927
  %v7929 = vlaneseq
  %v7930 = vshrl.u32 %v7929, 7
  %v7931 = vsub.s32 0, %v7930
  %v7932 = vrot.slane %v7418, %v7931
  %v7933 = vlaneseq
  %v7934 = vshrl.u32 %v7933, 7
  %v7935 = vsub.s32 0, %v7934
  %v7936 = vrot.slane %v7419, %v7935
  %v7937 = vlaneseq
  %v7938 = vshrl.u32 %v7937, 7
  %v7939 = vsub.s32 0, %v7938
  %v7940 = vrot.slane %v7420, %v7939
  %v7941 = vlaneseq
  %v7942 = vshrl.u32 %v7941, 7
  %v7943 = vsub.s32 0, %v7942
  %v7944 = vrot.slane %v7421, %v7943
  %v7945 = vlaneseq
  %v7946 = vshrl.u32 %v7945, 7
  %v7947 = vsub.s32 0, %v7946
  %v7948 = vrot.slane %v7422, %v7947
  %v7949 = vlaneseq
  %v7950 = vshrl.u32 %v7949, 7
  %v7951 = vsub.s32 0, %v7950
  %v7952 = vrot.slane %v7423, %v7951
  %v7953 = vlaneseq
  %v7954 = vshrl.u32 %v7953, 7
  %v7955 = vsub.s32 0, %v7954
  %v7956 = vrot.slane %v7424, %v7955
  %v7957 = vlaneseq
  %v7958 = vshrl.u32 %v7957, 7
  %v7959 = vsub.s32 0, %v7958
  %v7960 = vrot.slane %v7425, %v7959
  %v7961 = vlaneseq
  %v7962 = vshrl.u32 %v7961, 7
  %v7963 = vsub.s32 0, %v7962
  %v7964 = vrot.slane %v7426, %v7963
  %v7965 = vlaneseq
  %v7966 = vshrl.u32 %v7965, 7
  %v7967 = vsub.s32 0, %v7966
  %v7968 = vrot.slane %v7427, %v7967
  %v7969 = vlaneseq
  %v7970 = vshrl.u32 %v7969, 7
  %v7971 = vsub.s32 0, %v7970
  %v7972 = vrot.slane %v7428, %v7971
  %v7973 = vlaneseq
  %v7974 = vshrl.u32 %v7973, 7
  %v7975 = vsub.s32 0, %v7974
  %v7976 = vrot.slane %v7429, %v7975
  %v7977 = vlaneseq
  %v7978 = vshrl.u32 %v7977, 7
  %v7979 = vsub.s32 0, %v7978
  %v7980 = vrot.slane %v7430, %v7979
  %v7981 = vlaneseq
  %v7982 = vshrl.u32 %v7981, 7
  %v7983 = vsub.s32 0, %v7982
  %v7984 = vrot.slane %v7431, %v7983
  %v7985 = vlaneseq
  %v7986 = vshrl.u32 %v7985, 7
  %v7987 = vsub.s32 0, %v7986
  %v7988 = vrot.slane %v7432, %v7987
  %v7989 = vlaneseq
  %v7990 = vshrl.u32 %v7989, 7
  %v7991 = vsub.s32 0, %v7990
  %v7992 = vrot.slane %v7433, %v7991
  %v7993 = vlaneseq
  %v7994 = vshrl.u32 %v7993, 7
  %v7995 = vsub.s32 0, %v7994
  %v7996 = vrot.slane %v7434, %v7995
  %v7997 = vlaneseq
  %v7998 = vshrl.u32 %v7997, 7
  %v7999 = vsub.s32 0, %v7998
  %v8000 = vrot.slane %v7435, %v7999
  %v8001 = vlaneseq
  %v8002 = vshrl.u32 %v8001, 7
  %v8003 = vsub.s32 0, %v8002
  %v8004 = vrot.slane %v7436, %v8003
  %v8005 = vlaneseq
  %v8006 = vshrl.u32 %v8005, 7
  %v8007 = vsub.s32 0, %v8006
  %v8008 = vrot.slane %v7437, %v8007
  %v8009 = vlaneseq
  %v8010 = vshrl.u32 %v8009, 7
  %v8011 = vsub.s32 0, %v8010
  %v8012 = vrot.slane %v7438, %v8011
  %v8013 = vlaneseq
  %v8014 = vshrl.u32 %v8013, 7
  %v8015 = vsub.s32 0, %v8014
  %v8016 = vrot.slane %v7439, %v8015
  %v8017 = vlaneseq
  %v8018 = vshrl.u32 %v8017, 7
  %v8019 = vsub.s32 0, %v8018
  %v8020 = vrot.slane %v7440, %v8019
  %v8021 = vlaneseq
  %v8022 = vshrl.u32 %v8021, 7
  %v8023 = vsub.s32 0, %v8022
  %v8024 = vrot.slane %v7441, %v8023
  %v8025 = vlaneseq
  %v8026 = vshrl.u32 %v8025, 7
  %v8027 = vsub.s32 0, %v8026
  %v8028 = vrot.slane %v7442, %v8027
  %v8029 = vlaneseq
  %v8030 = vshrl.u32 %v8029, 7
  %v8031 = vsub.s32 0, %v8030
  %v8032 = vrot.slane %v7443, %v8031
  %v8033 = vlaneseq
  %v8034 = vshrl.u32 %v8033, 7
  %v8035 = vsub.s32 0, %v8034
  %v8036 = vrot.slane %v7444, %v8035
  %v8037 = vlaneseq
  %v8038 = vshrl.u32 %v8037, 7
  %v8039 = vsub.s32 0, %v8038
  %v8040 = vrot.slane %v7445, %v8039
  %v8041 = vlaneseq
  %v8042 = vshrl.u32 %v8041, 7
  %v8043 = vsub.s32 0, %v8042
  %v8044 = vrot.slane %v7446, %v8043
  %v8045 = vlaneseq
  %v8046 = vshrl.u32 %v8045, 7
  %v8047 = vsub.s32 0, %v8046
  %v8048 = vrot.slane %v7447, %v8047
  %v8049 = vlaneseq
  %v8050 = vshrl.u32 %v8049, 7
  %v8051 = vsub.s32 0, %v8050
  %v8052 = vrot.slane %v7448, %v8051
  %v8053 = vlaneseq
  %v8054 = vshrl.u32 %v8053, 7
  %v8055 = vsub.s32 0, %v8054
  %v8056 = vrot.slane %v7449, %v8055
  %v8057 = vlaneseq
  %v8058 = vshrl.u32 %v8057, 7
  %v8059 = vsub.s32 0, %v8058
  %v8060 = vrot.slane %v7450, %v8059
  %v8061 = vlaneseq
  %v8062 = vshrl.u32 %v8061, 7
  %v8063 = vsub.s32 0, %v8062
  %v8064 = vrot.slane %v7451, %v8063
  %v8065 = vlaneseq
  %v8066 = vshrl.u32 %v8065, 7
  %v8067 = vsub.s32 0, %v8066
  %v8068 = vrot.slane %v7452, %v8067
  %v8069 = vlaneseq
  %v8070 = vshrl.u32 %v8069, 7
  %v8071 = vsub.s32 0, %v8070
  %v8072 = vrot.slane %v7453, %v8071
  %v8073 = vlaneseq
  %v8074 = vshrl.u32 %v8073, 7
  %v8075 = vsub.s32 0, %v8074
  %v8076 = vrot.slane %v7454, %v8075
  %v8077 = vlaneseq
  %v8078 = vshrl.u32 %v8077, 7
  %v8079 = vsub.s32 0, %v8078
  %v8080 = vrot.slane %v7455, %v8079
  %v8081 = vlaneseq
  %v8082 = vshrl.u32 %v8081, 7
  %v8083 = vsub.s32 0, %v8082
  %v8084 = vrot.slane %v7456, %v8083
  %v8085 = vlaneseq
  %v8086 = vshrl.u32 %v8085, 7
  %v8087 = vsub.s32 0, %v8086
  %v8088 = vrot.slane %v7457, %v8087
  %v8089 = vlaneseq
  %v8090 = vshrl.u32 %v8089, 7
  %v8091 = vsub.s32 0, %v8090
  %v8092 = vrot.slane %v7458, %v8091
  %v8093 = vlaneseq
  %v8094 = vshrl.u32 %v8093, 7
  %v8095 = vsub.s32 0, %v8094
  %v8096 = vrot.slane %v7459, %v8095
  %v8097 = vlaneseq
  %v8098 = vshrl.u32 %v8097, 7
  %v8099 = vsub.s32 0, %v8098
  %v8100 = vrot.slane %v7460, %v8099
  %vm8101 = vcmask 1041409
  %v8102 = vsel %vm8101, %v7596, %v7592
  %vm8103 = vcmask 1042434
  %v8104 = vsel %vm8103, %v7600, %v8102
  %vm8105 = vcmask 1043459
  %v8106 = vsel %vm8105, %v7604, %v8104
  %vm8107 = vcmask 1044484
  %v8108 = vsel %vm8107, %v7608, %v8106
  %vm8109 = vcmask 1045509
  %v8110 = vsel %vm8109, %v7612, %v8108
  %vm8111 = vcmask 1046534
  %v8112 = vsel %vm8111, %v7616, %v8110
  %vm8113 = vcmask 1047559
  %v8114 = vsel %vm8113, %v7620, %v8112
  %v8115 = vsel %vm8101, %v7628, %v7624
  %v8116 = vsel %vm8103, %v7632, %v8115
  %v8117 = vsel %vm8105, %v7636, %v8116
  %v8118 = vsel %vm8107, %v7640, %v8117
  %v8119 = vsel %vm8109, %v7644, %v8118
  %v8120 = vsel %vm8111, %v7648, %v8119
  %v8121 = vsel %vm8113, %v7652, %v8120
  %v8122 = vsel %vm8101, %v7660, %v7656
  %v8123 = vsel %vm8103, %v7664, %v8122
  %v8124 = vsel %vm8105, %v7668, %v8123
  %v8125 = vsel %vm8107, %v7672, %v8124
  %v8126 = vsel %vm8109, %v7676, %v8125
  %v8127 = vsel %vm8111, %v7680, %v8126
  %v8128 = vsel %vm8113, %v7684, %v8127
  %v8129 = vsel %vm8101, %v7692, %v7688
  %v8130 = vsel %vm8103, %v7696, %v8129
  %v8131 = vsel %vm8105, %v7700, %v8130
  %v8132 = vsel %vm8107, %v7704, %v8131
  %v8133 = vsel %vm8109, %v7708, %v8132
  %v8134 = vsel %vm8111, %v7712, %v8133
  %v8135 = vsel %vm8113, %v7716, %v8134
  %v8136 = vsel %vm8101, %v7724, %v7720
  %v8137 = vsel %vm8103, %v7728, %v8136
  %v8138 = vsel %vm8105, %v7732, %v8137
  %v8139 = vsel %vm8107, %v7736, %v8138
  %v8140 = vsel %vm8109, %v7740, %v8139
  %v8141 = vsel %vm8111, %v7744, %v8140
  %v8142 = vsel %vm8113, %v7748, %v8141
  %v8143 = vsel %vm8101, %v7756, %v7752
  %v8144 = vsel %vm8103, %v7760, %v8143
  %v8145 = vsel %vm8105, %v7764, %v8144
  %v8146 = vsel %vm8107, %v7768, %v8145
  %v8147 = vsel %vm8109, %v7772, %v8146
  %v8148 = vsel %vm8111, %v7776, %v8147
  %v8149 = vsel %vm8113, %v7780, %v8148
  %v8150 = vsel %vm8101, %v7788, %v7784
  %v8151 = vsel %vm8103, %v7792, %v8150
  %v8152 = vsel %vm8105, %v7796, %v8151
  %v8153 = vsel %vm8107, %v7800, %v8152
  %v8154 = vsel %vm8109, %v7804, %v8153
  %v8155 = vsel %vm8111, %v7808, %v8154
  %v8156 = vsel %vm8113, %v7812, %v8155
  %v8157 = vsel %vm8101, %v7820, %v7816
  %v8158 = vsel %vm8103, %v7824, %v8157
  %v8159 = vsel %vm8105, %v7828, %v8158
  %v8160 = vsel %vm8107, %v7832, %v8159
  %v8161 = vsel %vm8109, %v7836, %v8160
  %v8162 = vsel %vm8111, %v7840, %v8161
  %v8163 = vsel %vm8113, %v7844, %v8162
  %v8164 = vsel %vm8101, %v7852, %v7848
  %v8165 = vsel %vm8103, %v7856, %v8164
  %v8166 = vsel %vm8105, %v7860, %v8165
  %v8167 = vsel %vm8107, %v7864, %v8166
  %v8168 = vsel %vm8109, %v7868, %v8167
  %v8169 = vsel %vm8111, %v7872, %v8168
  %v8170 = vsel %vm8113, %v7876, %v8169
  %v8171 = vsel %vm8101, %v7884, %v7880
  %v8172 = vsel %vm8103, %v7888, %v8171
  %v8173 = vsel %vm8105, %v7892, %v8172
  %v8174 = vsel %vm8107, %v7896, %v8173
  %v8175 = vsel %vm8109, %v7900, %v8174
  %v8176 = vsel %vm8111, %v7904, %v8175
  %v8177 = vsel %vm8113, %v7908, %v8176
  %v8178 = vsel %vm8101, %v7916, %v7912
  %v8179 = vsel %vm8103, %v7920, %v8178
  %v8180 = vsel %vm8105, %v7924, %v8179
  %v8181 = vsel %vm8107, %v7928, %v8180
  %v8182 = vsel %vm8109, %v7932, %v8181
  %v8183 = vsel %vm8111, %v7936, %v8182
  %v8184 = vsel %vm8113, %v7940, %v8183
  %v8185 = vsel %vm8101, %v7948, %v7944
  %v8186 = vsel %vm8103, %v7952, %v8185
  %v8187 = vsel %vm8105, %v7956, %v8186
  %v8188 = vsel %vm8107, %v7960, %v8187
  %v8189 = vsel %vm8109, %v7964, %v8188
  %v8190 = vsel %vm8111, %v7968, %v8189
  %v8191 = vsel %vm8113, %v7972, %v8190
  %v8192 = vsel %vm8101, %v7980, %v7976
  %v8193 = vsel %vm8103, %v7984, %v8192
  %v8194 = vsel %vm8105, %v7988, %v8193
  %v8195 = vsel %vm8107, %v7992, %v8194
  %v8196 = vsel %vm8109, %v7996, %v8195
  %v8197 = vsel %vm8111, %v8000, %v8196
  %v8198 = vsel %vm8113, %v8004, %v8197
  %v8199 = vsel %vm8101, %v8012, %v8008
  %v8200 = vsel %vm8103, %v8016, %v8199
  %v8201 = vsel %vm8105, %v8020, %v8200
  %v8202 = vsel %vm8107, %v8024, %v8201
  %v8203 = vsel %vm8109, %v8028, %v8202
  %v8204 = vsel %vm8111, %v8032, %v8203
  %v8205 = vsel %vm8113, %v8036, %v8204
  %v8206 = vsel %vm8101, %v8044, %v8040
  %v8207 = vsel %vm8103, %v8048, %v8206
  %v8208 = vsel %vm8105, %v8052, %v8207
  %v8209 = vsel %vm8107, %v8056, %v8208
  %v8210 = vsel %vm8109, %v8060, %v8209
  %v8211 = vsel %vm8111, %v8064, %v8210
  %v8212 = vsel %vm8113, %v8068, %v8211
  %v8213 = vsel %vm8101, %v8076, %v8072
  %v8214 = vsel %vm8103, %v8080, %v8213
  %v8215 = vsel %vm8105, %v8084, %v8214
  %v8216 = vsel %vm8107, %v8088, %v8215
  %v8217 = vsel %vm8109, %v8092, %v8216
  %v8218 = vsel %vm8111, %v8096, %v8217
  %v8219 = vsel %vm8113, %v8100, %v8218
  %8236 = vst [vmem:[%s7] sm:$0xff] %v8114
  %8237 = vst [vmem:[%s7 + $0x8] sm:$0xff] %v8121
  %8238 = vst [vmem:[%s7 + $0x10] sm:$0xff] %v8128
  %8239 = vst [vmem:[%s7 + $0x18] sm:$0xff] %v8135
  %8240 = vst [vmem:[%s7 + $0x20] sm:$0xff] %v8142
  %8241 = vst [vmem:[%s7 + $0x28] sm:$0xff] %v8149
  %8242 = vst [vmem:[%s7 + $0x30] sm:$0xff] %v8156
  %8243 = vst [vmem:[%s7 + $0x38] sm:$0xff] %v8163
  %8244 = vst [vmem:[%s7 + $0x40] sm:$0xff] %v8170
  %8245 = vst [vmem:[%s7 + $0x48] sm:$0xff] %v8177
  %8246 = vst [vmem:[%s7 + $0x50] sm:$0xff] %v8184
  %8247 = vst [vmem:[%s7 + $0x58] sm:$0xff] %v8191
  %8248 = vst [vmem:[%s7 + $0x60] sm:$0xff] %v8198
  %8249 = vst [vmem:[%s7 + $0x68] sm:$0xff] %v8205
  %8250 = vst [vmem:[%s7 + $0x70] sm:$0xff] %v8212
  %8251 = vst [vmem:[%s7 + $0x78] sm:$0xff] %v8219
  // Predicated region
  $region30: #{conv_block_forward.1} parent=0 // pred_check
    _
  $region31: #{conv_block_forward.1} parent=0 // pred_check_branch
    %8253 = sbr.rel (0) target = $region33
  $region32: #{conv_block_forward.1} parent=0 // pred_region
    _
  $region33: #{conv_block_forward.1} parent=0 // pred_fallthru
    _
  // Predicated region
  $region34: #{conv_block_forward.1} parent=0 // pred_check
    _
  $region35: #{conv_block_forward.1} parent=0 // pred_check_branch
    %8255 = sbr.rel (0) target = $region37
  $region36: #{conv_block_forward.1} parent=0 // pred_region
    _
  $region37: #{conv_block_forward.1} parent=0 // pred_fallthru
    _

</llo_original>
